<compile_context>
chip_gen: v6e
topology: v6e:2x2x1
jax: 0.10.0
libtpu: 0.0.40
codegen_flags: <defaults>
</compile_context>

<pallas_src>
import functools

import jax
import jax.numpy as jnp
from jax import lax
from jax.experimental import pallas as pl
from jax.experimental.pallas import tpu as pltpu


VMEM_LIMIT = 32 * 1024 * 1024   # safe on v5e/v6e (128 MiB) and v7x (64 MiB)
_TAIL = 8                       # scratch tail rows (read only by cropped junk)


def _round_up(x, m):
    return (x + m - 1) // m * m


def _pick_band_rows(HH, PITCH, row_budget=512):
    """Even TB dividing HH; prefer >=2 (and even) band count, bounded rows."""
    cands = [tb for tb in range(2, HH + 1, 2) if HH % tb == 0]
    for need_even, need_multi in ((True, True), (False, True), (False, False)):
        fit = [tb for tb in cands
               if tb * PITCH <= row_budget
               and (not need_multi or HH // tb >= 2)
               and (not need_even or (HH // tb) % 2 == 0)]
        if fit:
            return max(fit)
    return 2


def _pick_rows_tile(total, target=1024):
    """Multiple-of-8 divisor of `total`, >=2 steps, prefer an even step count."""
    cands = [d for d in range(8, min(target, total) + 1, 8)
             if total % d == 0 and total // d >= 2]
    if not cands:
        return total
    even = [d for d in cands if (total // d) % 2 == 0]
    return max(even) if even else max(cands)


# ---------------------------------------------------------------------------
# Kernel 1: fused deconv(2x2,s2) + sub-pixel interleave + conv3x3 'same'
#           + per-band BatchNorm partial statistics
# ---------------------------------------------------------------------------
def _deconv_conv_stats_kernel(prev_ref, cur_ref, next_ref, wd_ref, wc_ref,
                              bc_ref, mask_ref, z_ref, s_ref, ss_ref, pad_ref,
                              *, TB, PITCH, C):
    t = pl.program_id(1)
    nT = pl.num_programs(1)
    half = TB // 2
    f32 = jnp.float32

    # --- Deconv of the band's input rows straight into the padded band buffer.
    #     The X3 packing gives the dj interleave and the zero ring (the
    #     constant-1 bias column is zero in the pad columns), the store offsets
    #     give the di (row) interleave.  No upsampled HBM intermediate.
    y0 = jnp.dot(cur_ref[...], wd_ref[0], preferred_element_type=f32)   # di = 0
    y1 = jnp.dot(cur_ref[...], wd_ref[1], preferred_element_type=f32)   # di = 1
    for j in range(half):
        pad_ref[(2 * j + 1) * PITCH:(2 * j + 2) * PITCH, :] = (
            y0[j * PITCH:(j + 1) * PITCH, :])
        pad_ref[(2 * j + 2) * PITCH:(2 * j + 3) * PITCH, :] = (
            y1[j * PITCH:(j + 1) * PITCH, :])

    # Top halo row (upsampled row t*TB - 1, parity 1) or zeros at the image top.
    @pl.when(t > 0)
    def _():
        pad_ref[0:PITCH, :] = jnp.dot(prev_ref[...], wd_ref[1],
                                      preferred_element_type=f32)

    @pl.when(t == 0)
    def _():
        pad_ref[0:PITCH, :] = jnp.zeros((PITCH, C), f32)

    # Bottom halo row (upsampled row t*TB + TB, parity 0) or zeros at the bottom.
    @pl.when(t < nT - 1)
    def _():
        pad_ref[(TB + 1) * PITCH:(TB + 2) * PITCH, :] = jnp.dot(
            next_ref[...], wd_ref[0], preferred_element_type=f32)

    @pl.when(t == nT - 1)
    def _():
        pad_ref[(TB + 1) * PITCH:(TB + 2) * PITCH, :] = jnp.zeros((PITCH, C), f32)

    # Tail rows are only read by the (cropped) junk columns; keep deterministic.
    pad_ref[(TB + 2) * PITCH:(TB + 2) * PITCH + _TAIL, :] = (
        jnp.zeros((_TAIL, C), f32))

    # --- 3x3 'same' conv: nine contiguous tap windows of the flattened band.
    #     No slice+reshape materialization; channels stay on lanes.
    acc = jnp.zeros((TB * PITCH, C), f32)
    for dy in range(3):
        for dx in range(3):
            off = dy * PITCH + dx
            tap = pad_ref[off:off + TB * PITCH, :]
            acc = acc + jnp.dot(tap, wc_ref[dy, dx],
                                preferred_element_type=f32)
    acc = acc + bc_ref[...]
    z_ref[0] = acc.astype(z_ref.dtype)        # bf16 store (halves z HBM traffic)

    # --- Fused per-band BatchNorm partial statistics (junk columns masked).
    ym = acc * mask_ref[...]
    s_ref[0, 0] = jnp.sum(ym, axis=0, keepdims=True)
    ss_ref[0, 0] = jnp.sum(ym * acc, axis=0, keepdims=True)


def fused_deconv_conv_bnstats(x3_2d, wd3, wck, bck, N, H, W, TB, PITCH):
    C = wck.shape[-1]
    K = x3_2d.shape[-1]
    HH, WW = 2 * H, 2 * W
    half = TB // 2
    nT = HH // TB
    R = nT * TB * PITCH
    L = (TB + 2) * PITCH + _TAIL

    mask = (jnp.arange(TB * PITCH, dtype=jnp.int32) % PITCH) < WW
    mask = mask.astype(jnp.float32).reshape(TB * PITCH, 1)

    kern = functools.partial(_deconv_conv_stats_kernel, TB=TB, PITCH=PITCH, C=C)
    cost = pl.CostEstimate(
        flops=4 * N * H * PITCH * K * C + 18 * N * HH * PITCH * C * C,
        transcendentals=0,
        bytes_accessed=(N * H * PITCH * K * 4 + 2 * N * nT * PITCH * K * 4
                        + N * R * C * 2 + N * nT * TB * PITCH * 4
                        + 2 * N * nT * C * 4),
    )

    z, s, ss = pl.pallas_call(
        kern,
        grid=(N, nT),
        in_specs=[
            # top halo input row (clamped at the border, zero-masked in-kernel)
            pl.BlockSpec((PITCH, K),
                         lambda n, t: (n * H + jnp.maximum(t * half - 1, 0), 0)),
            # the band's own input rows
            pl.BlockSpec((half * PITCH, K), lambda n, t: (n * nT + t, 0)),
            # bottom halo input row
            pl.BlockSpec((PITCH, K),
                         lambda n, t: (n * H + jnp.minimum(t * half + half,
                                                           H - 1), 0)),
            pl.BlockSpec((2, K, C), lambda n, t: (0, 0, 0)),        # deconv W+b
            pl.BlockSpec((3, 3, C, C), lambda n, t: (0, 0, 0, 0)),  # conv W
            pl.BlockSpec((1, C), lambda n, t: (0, 0)),              # conv bias
            pl.BlockSpec((TB * PITCH, 1), lambda n, t: (0, 0)),     # valid mask
        ],
        out_specs=[
            pl.BlockSpec((1, TB * PITCH, C), lambda n, t: (n, t, 0)),
            pl.BlockSpec((1, 1, 1, C), lambda n, t: (n, t, 0, 0)),
            pl.BlockSpec((1, 1, 1, C), lambda n, t: (n, t, 0, 0)),
        ],
        out_shape=[
            jax.ShapeDtypeStruct((N, R, C), jnp.bfloat16),
            jax.ShapeDtypeStruct((N, nT, 1, C), jnp.float32),
            jax.ShapeDtypeStruct((N, nT, 1, C), jnp.float32),
        ],
        scratch_shapes=[pltpu.VMEM((L, C), jnp.float32)],
        compiler_params=pltpu.CompilerParams(
            dimension_semantics=("parallel", "parallel"),
            vmem_limit_bytes=VMEM_LIMIT,
        ),
        cost_estimate=cost,
    )(x3_2d, x3_2d, x3_2d, wd3, wck, bck, mask)
    return z, s, ss


# ---------------------------------------------------------------------------
# Kernel 2: BatchNorm apply (precomputed scale/shift) + ReLU, row-tiled
# ---------------------------------------------------------------------------
def _bn_relu_kernel(z_ref, scale_ref, shift_ref, o_ref):
    z = z_ref[...].astype(jnp.float32)
    o_ref[...] = jnp.maximum(z * scale_ref[...] + shift_ref[...], 0.0)


def bn_apply_relu(z2d, scale, shift):
    Rall, C = z2d.shape
    TR = _pick_rows_tile(Rall, 1024)
    cost = pl.CostEstimate(flops=3 * Rall * C, transcendentals=0,
                           bytes_accessed=Rall * C * 2 + Rall * C * 4 + 2 * C * 4)
    return pl.pallas_call(
        _bn_relu_kernel,
        grid=(Rall // TR,),
        in_specs=[
            pl.BlockSpec((TR, C), lambda i: (i, 0)),
            pl.BlockSpec((1, C), lambda i: (0, 0)),
            pl.BlockSpec((1, C), lambda i: (0, 0)),
        ],
        out_specs=pl.BlockSpec((TR, C), lambda i: (i, 0)),
        out_shape=jax.ShapeDtypeStruct((Rall, C), jnp.float32),
        compiler_params=pltpu.CompilerParams(
            dimension_semantics=("parallel",),
            vmem_limit_bytes=VMEM_LIMIT,
        ),
        cost_estimate=cost,
    )(z2d, scale, shift)


# ---------------------------------------------------------------------------
# DecoderBlock forward (PyTorch NCHW in / NCHW out)
# ---------------------------------------------------------------------------
def decoder_block_forward(x_nchw, params, eps=1e-5):
    N, Cin, H, W = x_nchw.shape
    wd = params["deconv_w"]            # (Cin, Cout, 2, 2)  torch ConvTranspose2d
    bd = params["deconv_b"]            # (Cout,)
    wc = params["conv_w"]              # (Cout, Cout, 3, 3) torch Conv2d
    bc = params["conv_b"]              # (Cout,)
    Cout = wd.shape[1]
    HH, WW = 2 * H, 2 * W
    PITCH = _round_up(WW + 2, 8)       # padded row pitch (left zero + right pad)
    TB = _pick_band_rows(HH, PITCH)
    nT = HH // TB
    K = 2 * Cin + 1

    # Input packing (tiny, XLA): NCHW->NHWC, dj-duplicated/masked pixels plus a
    # constant-1 column (carries the deconv bias so pad columns stay exactly 0),
    # width left-padded by 1 and right-padded to PITCH with zeros.
    x = jnp.transpose(x_nchw, (0, 2, 3, 1)).astype(jnp.float32)   # (N,H,W,Cin)
    zeros = jnp.zeros_like(x)
    ones = jnp.ones(x.shape[:-1] + (1,), jnp.float32)
    f0 = jnp.concatenate([x, zeros, ones], axis=-1)               # dj = 0
    f1 = jnp.concatenate([zeros, x, ones], axis=-1)               # dj = 1
    fi = jnp.stack([f0, f1], axis=3).reshape(N, H, WW, K)
    x3 = jnp.pad(fi, ((0, 0), (0, 0), (1, PITCH - WW - 1), (0, 0)))
    x3_2d = x3.reshape(N * H * PITCH, K)

    # Deconv weights -> (di, [dj=0 rows | dj=1 rows | bias row], Cout).
    wdp = jnp.transpose(wd, (2, 3, 0, 1)).astype(jnp.float32)     # (di,dj,ci,co)
    wd3 = jnp.concatenate(
        [wdp[:, 0], wdp[:, 1],
         jnp.tile(bd.reshape(1, 1, Cout).astype(jnp.float32), (2, 1, 1))],
        axis=1)                                                   # (2, K, Cout)

    # Conv weights (kh, kw, cin, cout), bias (1, Cout).
    wck = jnp.transpose(wc, (2, 3, 1, 0)).astype(jnp.float32)
    bck = bc.reshape(1, Cout).astype(jnp.float32)

    z, s, ss = fused_deconv_conv_bnstats(x3_2d, wd3, wck, bck, N, H, W, TB, PITCH)

    # BatchNorm finalize (training-mode batch stats, biased variance): tiny
    # per-channel math in plain JAX; the heavy apply is fused with ReLU below.
    cnt = jnp.float32(N * HH * WW)
    mean = jnp.sum(s, axis=(0, 1, 2)) / cnt
    var = jnp.maximum(jnp.sum(ss, axis=(0, 1, 2)) / cnt - mean * mean, 0.0)
    gamma = params["bn_gamma"].astype(jnp.float32)
    beta = params["bn_beta"].astype(jnp.float32)
    scale = gamma * lax.rsqrt(var + eps)
    shift = beta - mean * scale

    out2d = bn_apply_relu(z.reshape(N * nT * TB * PITCH, Cout),
                          scale.reshape(1, Cout), shift.reshape(1, Cout))

    # Layout boundary: drop the pitch padding, NHWC -> NCHW.
    out = out2d.reshape(N, HH, PITCH, Cout)[:, :, :WW, :]
    return jnp.transpose(out, (0, 3, 1, 2))


# ---------------------------------------------------------------------------
# Pure-JAX reference (f32) for a numerical sanity check
# ---------------------------------------------------------------------------
def _reference_forward(x_nchw, params, eps=1e-5):
    wd, bd = params["deconv_w"], params["deconv_b"]
    wc, bc = params["conv_w"], params["conv_b"]
    g, be = params["bn_gamma"], params["bn_beta"]
    N, C, H, W = x_nchw.shape
    O = wd.shape[1]
    t = jnp.einsum("ncij,coab->noiajb", x_nchw, wd)
    y = t.reshape(N, O, 2 * H, 2 * W) + bd[None, :, None, None]
    z = lax.conv_general_dilated(
        y, wc, window_strides=(1, 1), padding="SAME",
        dimension_numbers=("NCHW", "OIHW", "NCHW")) + bc[None, :, None, None]
    mean = jnp.mean(z, axis=(0, 2, 3), keepdims=True)
    var = jnp.mean((z - mean) ** 2, axis=(0, 2, 3), keepdims=True)
    zn = (z - mean) * lax.rsqrt(var + eps)
    zn = zn * g[None, :, None, None] + be[None, :, None, None]
    return jnp.maximum(zn, 0.0)


if __name__ == "__main__":
    key = jax.random.PRNGKey(0)
    N, Cin, Cout = 2, 4, 8
    H = W = 16

    kx, kp = jax.random.split(key)
    x = jax.random.normal(kx, (N, Cin, H, W), jnp.float32)

    ks = jax.random.split(kp, 6)
    sd = 1.0 / jnp.sqrt(jnp.float32(Cin * 4))
    sc = 1.0 / jnp.sqrt(jnp.float32(Cout * 9))
    params = {
        "deconv_w": jax.random.normal(ks[0], (Cin, Cout, 2, 2), jnp.float32) * sd,
        "deconv_b": jax.random.normal(ks[1], (Cout,), jnp.float32) * sd,
        "conv_w": jax.random.normal(ks[2], (Cout, Cout, 3, 3), jnp.float32) * sc,
        "conv_b": jax.random.normal(ks[3], (Cout,), jnp.float32) * sc,
        "bn_gamma": 1.0 + 0.1 * jax.random.normal(ks[4], (Cout,), jnp.float32),
        "bn_beta": 0.1 * jax.random.normal(ks[5], (Cout,), jnp.float32),
    }

    out = jax.jit(decoder_block_forward)(x, params)
    out = jax.block_until_ready(out)
    assert out.shape == (N, Cout, 2 * H, 2 * W), out.shape
    assert out.dtype == jnp.float32

    # Compute is f32 end-to-end; only the conv output z is rounded to bf16 in HBM.
    ref = _reference_forward(x, params)
    max_err = float(jnp.max(jnp.abs(out - ref)))
    assert max_err < 0.15, f"max abs error vs reference too large: {max_err}"

    print("KERNEL_OK")
</pallas_src>

<mosaic_0001>
module attributes {stable_mosaic.version = 11 : i64} {
  func.func @_bn_relu_kernel(%arg0: i32, %arg1: memref<640x8xbf16, #tpu.memory_space<vmem>>, %arg2: memref<1x8xf32, #tpu.memory_space<vmem>>, %arg3: memref<1x8xf32, #tpu.memory_space<vmem>>, %arg4: memref<640x8xf32, #tpu.memory_space<vmem>>) attributes {dimension_semantics = [#tpu.dimension_semantics<parallel>], iteration_bounds = array<i64: 4>, scalar_prefetch = 0 : i64, scratch_operands = 0 : i64, tpu.core_type = #tpu.core_type<tc>, window_params = [{transform_indices = @transform_0, window_bounds = array<i64: 640, 8>}, {pipeline_mode = #tpu.pipeline_mode<synchronous>, transform_indices = @transform_1, window_bounds = array<i64: 1, 8>}, {pipeline_mode = #tpu.pipeline_mode<synchronous>, transform_indices = @transform_2, window_bounds = array<i64: 1, 8>}, {transform_indices = @transform_3, window_bounds = array<i64: 640, 8>}]} {
    %c0 = arith.constant 0 : index
    %c0_0 = arith.constant 0 : index
    %0 = vector.load %arg1[%c0, %c0_0] : memref<640x8xbf16, #tpu.memory_space<vmem>>, vector<640x8xbf16>
    %1 = arith.extf %0 : vector<640x8xbf16> to vector<640x8xf32>
    %c0_1 = arith.constant 0 : index
    %c0_2 = arith.constant 0 : index
    %2 = vector.load %arg2[%c0_1, %c0_2] : memref<1x8xf32, #tpu.memory_space<vmem>>, vector<1x8xf32>
    %3 = vector.broadcast %2 : vector<1x8xf32> to vector<640x8xf32>
    %4 = arith.mulf %1, %3 : vector<640x8xf32>
    %c0_3 = arith.constant 0 : index
    %c0_4 = arith.constant 0 : index
    %5 = vector.load %arg3[%c0_3, %c0_4] : memref<1x8xf32, #tpu.memory_space<vmem>>, vector<1x8xf32>
    %6 = vector.broadcast %5 : vector<1x8xf32> to vector<640x8xf32>
    %7 = arith.addf %4, %6 : vector<640x8xf32>
    %cst = arith.constant 0.000000e+00 : f32
    %8 = vector.broadcast %cst : f32 to vector<640x8xf32>
    %9 = arith.maximumf %7, %8 : vector<640x8xf32>
    %c0_5 = arith.constant 0 : index
    %c0_6 = arith.constant 0 : index
    %10 = vector.load %arg4[%c0_5, %c0_6] : memref<640x8xf32, #tpu.memory_space<vmem>>, vector<640x8xf32>
    tpu.vector_store %arg4[%c0_5, %c0_6], %9 {strides = array<i32>} : memref<640x8xf32, #tpu.memory_space<vmem>>, vector<640x8xf32>,
    return
  }
  func.func @transform_0(%arg0: i32) -> (i32, i32) {
    %c0_i32 = arith.constant 0 : i32
    %c0_i32_0 = arith.constant 0 : i32
    return %arg0, %c0_i32 : i32, i32
  }
  func.func @transform_1(%arg0: i32) -> (i32, i32) {
    %c0_i32 = arith.constant 0 : i32
    %c0_i32_0 = arith.constant 0 : i32
    %c0_i32_1 = arith.constant 0 : i32
    return %c0_i32, %c0_i32_0 : i32, i32
  }
  func.func @transform_2(%arg0: i32) -> (i32, i32) {
    %c0_i32 = arith.constant 0 : i32
    %c0_i32_0 = arith.constant 0 : i32
    %c0_i32_1 = arith.constant 0 : i32
    return %c0_i32, %c0_i32_0 : i32, i32
  }
  func.func @transform_3(%arg0: i32) -> (i32, i32) {
    %c0_i32 = arith.constant 0 : i32
    %c0_i32_0 = arith.constant 0 : i32
    return %arg0, %c0_i32 : i32, i32
  }
}

module attributes {stable_mosaic.version = 11 : i64} {
  func.func @_deconv_conv_stats_kernel(%arg0: i32, %arg1: i32, %arg2: memref<40x9xf32, #tpu.memory_space<vmem>>, %arg3: memref<160x9xf32, #tpu.memory_space<vmem>>, %arg4: memref<40x9xf32, #tpu.memory_space<vmem>>, %arg5: memref<2x9x8xf32, #tpu.memory_space<vmem>>, %arg6: memref<3x3x8x8xf32, #tpu.memory_space<vmem>>, %arg7: memref<1x8xf32, #tpu.memory_space<vmem>>, %arg8: memref<320x1xf32, #tpu.memory_space<vmem>>, %arg9: memref<1x320x8xbf16, #tpu.memory_space<vmem>>, %arg10: memref<1x1x1x8xf32, #tpu.memory_space<vmem>>, %arg11: memref<1x1x1x8xf32, #tpu.memory_space<vmem>>, %arg12: memref<408x8xf32, #tpu.memory_space<vmem>>) attributes {dimension_semantics = [#tpu.dimension_semantics<parallel>, #tpu.dimension_semantics<parallel>], iteration_bounds = array<i64: 2, 4>, scalar_prefetch = 0 : i64, scratch_operands = 1 : i64, tpu.core_type = #tpu.core_type<tc>, window_params = [{transform_indices = @transform_0, window_bounds = array<i64: 40, 9>}, {transform_indices = @transform_1, window_bounds = array<i64: 160, 9>}, {transform_indices = @transform_2, window_bounds = array<i64: 40, 9>}, {pipeline_mode = #tpu.pipeline_mode<synchronous>, transform_indices = @transform_3, window_bounds = array<i64: 2, 9, 8>}, {pipeline_mode = #tpu.pipeline_mode<synchronous>, transform_indices = @transform_4, window_bounds = array<i64: 3, 3, 8, 8>}, {pipeline_mode = #tpu.pipeline_mode<synchronous>, transform_indices = @transform_5, window_bounds = array<i64: 1, 8>}, {pipeline_mode = #tpu.pipeline_mode<synchronous>, transform_indices = @transform_6, window_bounds = array<i64: 320, 1>}, {transform_indices = @transform_7, window_bounds = array<i64: 1, 320, 8>}, {transform_indices = @transform_8, window_bounds = array<i64: 1, 1, 1, 8>}, {transform_indices = @transform_9, window_bounds = array<i64: 1, 1, 1, 8>}]} {
    %c0 = arith.constant 0 : index
    %c0_0 = arith.constant 0 : index
    %0 = vector.load %arg3[%c0, %c0_0] : memref<160x9xf32, #tpu.memory_space<vmem>>, vector<160x9xf32>
    %c0_1 = arith.constant 0 : index
    %c0_2 = arith.constant 0 : index
    %c0_3 = arith.constant 0 : index
    %1 = vector.load %arg5[%c0_1, %c0_2, %c0_3] : memref<2x9x8xf32, #tpu.memory_space<vmem>>, vector<1x9x8xf32>
    %2 = vector.shape_cast %1 : vector<1x9x8xf32> to vector<9x8xf32>
    %cst = arith.constant dense<0.000000e+00> : vector<160x8xf32>
    %3 = tpu.matmul %0, %2, %cst {dimension_numbers = #tpu.dot_dimension_numbers<[1], [0], [0], [1], [0, 0, 1, 1], [], []>} : vector<160x9xf32>, vector<9x8xf32>, vector<160x8xf32> -> vector<160x8xf32>
    %c0_4 = arith.constant 0 : index
    %c0_5 = arith.constant 0 : index
    %4 = vector.load %arg3[%c0_4, %c0_5] : memref<160x9xf32, #tpu.memory_space<vmem>>, vector<160x9xf32>
    %c1 = arith.constant 1 : index
    %c0_6 = arith.constant 0 : index
    %c0_7 = arith.constant 0 : index
    %5 = vector.load %arg5[%c1, %c0_6, %c0_7] : memref<2x9x8xf32, #tpu.memory_space<vmem>>, vector<1x9x8xf32>
    %6 = vector.shape_cast %5 : vector<1x9x8xf32> to vector<9x8xf32>
    %cst_8 = arith.constant dense<0.000000e+00> : vector<160x8xf32>
    %7 = tpu.matmul %4, %6, %cst_8 {dimension_numbers = #tpu.dot_dimension_numbers<[1], [0], [0], [1], [0, 0, 1, 1], [], []>} : vector<160x9xf32>, vector<9x8xf32>, vector<160x8xf32> -> vector<160x8xf32>
    %8 = vector.extract_strided_slice %3 {offsets = [0, 0], sizes = [40, 8], strides = [1, 1]} : vector<160x8xf32> to vector<40x8xf32>
    %c40 = arith.constant 40 : index
    %c0_9 = arith.constant 0 : index
    %9 = vector.load %arg12[%c40, %c0_9] : memref<408x8xf32, #tpu.memory_space<vmem>>, vector<40x8xf32>
    tpu.vector_store %arg12[%c40, %c0_9], %8 {strides = array<i32>} : memref<408x8xf32, #tpu.memory_space<vmem>>, vector<40x8xf32>,
    %10 = vector.extract_strided_slice %7 {offsets = [0, 0], sizes = [40, 8], strides = [1, 1]} : vector<160x8xf32> to vector<40x8xf32>
    %c80 = arith.constant 80 : index
    %c0_10 = arith.constant 0 : index
    %11 = vector.load %arg12[%c80, %c0_10] : memref<408x8xf32, #tpu.memory_space<vmem>>, vector<40x8xf32>
    tpu.vector_store %arg12[%c80, %c0_10], %10 {strides = array<i32>} : memref<408x8xf32, #tpu.memory_space<vmem>>, vector<40x8xf32>,
    %12 = vector.extract_strided_slice %3 {offsets = [40, 0], sizes = [40, 8], strides = [1, 1]} : vector<160x8xf32> to vector<40x8xf32>
    %c120 = arith.constant 120 : index
    %c0_11 = arith.constant 0 : index
    %13 = vector.load %arg12[%c120, %c0_11] : memref<408x8xf32, #tpu.memory_space<vmem>>, vector<40x8xf32>
    tpu.vector_store %arg12[%c120, %c0_11], %12 {strides = array<i32>} : memref<408x8xf32, #tpu.memory_space<vmem>>, vector<40x8xf32>,
    %14 = vector.extract_strided_slice %7 {offsets = [40, 0], sizes = [40, 8], strides = [1, 1]} : vector<160x8xf32> to vector<40x8xf32>
    %c160 = arith.constant 160 : index
    %c0_12 = arith.constant 0 : index
    %15 = vector.load %arg12[%c160, %c0_12] : memref<408x8xf32, #tpu.memory_space<vmem>>, vector<40x8xf32>
    tpu.vector_store %arg12[%c160, %c0_12], %14 {strides = array<i32>} : memref<408x8xf32, #tpu.memory_space<vmem>>, vector<40x8xf32>,
    %16 = vector.extract_strided_slice %3 {offsets = [80, 0], sizes = [40, 8], strides = [1, 1]} : vector<160x8xf32> to vector<40x8xf32>
    %c200 = arith.constant 200 : index
    %c0_13 = arith.constant 0 : index
    %17 = vector.load %arg12[%c200, %c0_13] : memref<408x8xf32, #tpu.memory_space<vmem>>, vector<40x8xf32>
    tpu.vector_store %arg12[%c200, %c0_13], %16 {strides = array<i32>} : memref<408x8xf32, #tpu.memory_space<vmem>>, vector<40x8xf32>,
    %18 = vector.extract_strided_slice %7 {offsets = [80, 0], sizes = [40, 8], strides = [1, 1]} : vector<160x8xf32> to vector<40x8xf32>
    %c240 = arith.constant 240 : index
    %c0_14 = arith.constant 0 : index
    %19 = vector.load %arg12[%c240, %c0_14] : memref<408x8xf32, #tpu.memory_space<vmem>>, vector<40x8xf32>
    tpu.vector_store %arg12[%c240, %c0_14], %18 {strides = array<i32>} : memref<408x8xf32, #tpu.memory_space<vmem>>, vector<40x8xf32>,
    %20 = vector.extract_strided_slice %3 {offsets = [120, 0], sizes = [40, 8], strides = [1, 1]} : vector<160x8xf32> to vector<40x8xf32>
    %c280 = arith.constant 280 : index
    %c0_15 = arith.constant 0 : index
    %21 = vector.load %arg12[%c280, %c0_15] : memref<408x8xf32, #tpu.memory_space<vmem>>, vector<40x8xf32>
    tpu.vector_store %arg12[%c280, %c0_15], %20 {strides = array<i32>} : memref<408x8xf32, #tpu.memory_space<vmem>>, vector<40x8xf32>,
    %22 = vector.extract_strided_slice %7 {offsets = [120, 0], sizes = [40, 8], strides = [1, 1]} : vector<160x8xf32> to vector<40x8xf32>
    %c320 = arith.constant 320 : index
    %c0_16 = arith.constant 0 : index
    %23 = vector.load %arg12[%c320, %c0_16] : memref<408x8xf32, #tpu.memory_space<vmem>>, vector<40x8xf32>
    tpu.vector_store %arg12[%c320, %c0_16], %22 {strides = array<i32>} : memref<408x8xf32, #tpu.memory_space<vmem>>, vector<40x8xf32>,
    %c0_i32 = arith.constant 0 : i32
    %24 = arith.cmpi sgt, %arg1, %c0_i32 : i32
    %25 = arith.extui %24 : i1 to i32
    %c0_i32_17 = arith.constant 0 : i32
    %26 = arith.cmpi ne, %25, %c0_i32_17 : i32
    scf.if %26 {
      %c0_101 = arith.constant 0 : index
      %c0_102 = arith.constant 0 : index
      %105 = vector.load %arg2[%c0_101, %c0_102] : memref<40x9xf32, #tpu.memory_space<vmem>>, vector<40x9xf32>
      %c1_103 = arith.constant 1 : index
      %c0_104 = arith.constant 0 : index
      %c0_105 = arith.constant 0 : index
      %106 = vector.load %arg5[%c1_103, %c0_104, %c0_105] : memref<2x9x8xf32, #tpu.memory_space<vmem>>, vector<1x9x8xf32>
      %107 = vector.shape_cast %106 : vector<1x9x8xf32> to vector<9x8xf32>
      %cst_106 = arith.constant dense<0.000000e+00> : vector<40x8xf32>
      %108 = tpu.matmul %105, %107, %cst_106 {dimension_numbers = #tpu.dot_dimension_numbers<[1], [0], [0], [1], [0, 0, 1, 1], [], []>} : vector<40x9xf32>, vector<9x8xf32>, vector<40x8xf32> -> vector<40x8xf32>
      %c0_107 = arith.constant 0 : index
      %c0_108 = arith.constant 0 : index
      %109 = vector.load %arg12[%c0_107, %c0_108] : memref<408x8xf32, #tpu.memory_space<vmem>>, vector<40x8xf32>
      tpu.vector_store %arg12[%c0_107, %c0_108], %108 {strides = array<i32>} : memref<408x8xf32, #tpu.memory_space<vmem>>, vector<40x8xf32>,
    } else {
    }
    %c0_i32_18 = arith.constant 0 : i32
    %27 = arith.cmpi eq, %arg1, %c0_i32_18 : i32
    %28 = arith.extui %27 : i1 to i32
    %c0_i32_19 = arith.constant 0 : i32
    %29 = arith.cmpi ne, %28, %c0_i32_19 : i32
    scf.if %29 {
      %cst_101 = arith.constant 0.000000e+00 : f32
      %105 = vector.broadcast %cst_101 : f32 to vector<40x8xf32>
      %c0_102 = arith.constant 0 : index
      %c0_103 = arith.constant 0 : index
      %106 = vector.load %arg12[%c0_102, %c0_103] : memref<408x8xf32, #tpu.memory_space<vmem>>, vector<40x8xf32>
      tpu.vector_store %arg12[%c0_102, %c0_103], %105 {strides = array<i32>} : memref<408x8xf32, #tpu.memory_space<vmem>>, vector<40x8xf32>,
    } else {
    }
    %c3_i32 = arith.constant 3 : i32
    %30 = arith.cmpi slt, %arg1, %c3_i32 : i32
    %31 = arith.extui %30 : i1 to i32
    %c0_i32_20 = arith.constant 0 : i32
    %32 = arith.cmpi ne, %31, %c0_i32_20 : i32
    scf.if %32 {
      %c0_101 = arith.constant 0 : index
      %c0_102 = arith.constant 0 : index
      %105 = vector.load %arg4[%c0_101, %c0_102] : memref<40x9xf32, #tpu.memory_space<vmem>>, vector<40x9xf32>
      %c0_103 = arith.constant 0 : index
      %c0_104 = arith.constant 0 : index
      %c0_105 = arith.constant 0 : index
      %106 = vector.load %arg5[%c0_103, %c0_104, %c0_105] : memref<2x9x8xf32, #tpu.memory_space<vmem>>, vector<1x9x8xf32>
      %107 = vector.shape_cast %106 : vector<1x9x8xf32> to vector<9x8xf32>
      %cst_106 = arith.constant dense<0.000000e+00> : vector<40x8xf32>
      %108 = tpu.matmul %105, %107, %cst_106 {dimension_numbers = #tpu.dot_dimension_numbers<[1], [0], [0], [1], [0, 0, 1, 1], [], []>} : vector<40x9xf32>, vector<9x8xf32>, vector<40x8xf32> -> vector<40x8xf32>
      %c360 = arith.constant 360 : index
      %c0_107 = arith.constant 0 : index
      %109 = vector.load %arg12[%c360, %c0_107] : memref<408x8xf32, #tpu.memory_space<vmem>>, vector<40x8xf32>
      tpu.vector_store %arg12[%c360, %c0_107], %108 {strides = array<i32>} : memref<408x8xf32, #tpu.memory_space<vmem>>, vector<40x8xf32>,
    } else {
    }
    %c3_i32_21 = arith.constant 3 : i32
    %33 = arith.cmpi eq, %arg1, %c3_i32_21 : i32
    %34 = arith.extui %33 : i1 to i32
    %c0_i32_22 = arith.constant 0 : i32
    %35 = arith.cmpi ne, %34, %c0_i32_22 : i32
    scf.if %35 {
      %cst_101 = arith.constant 0.000000e+00 : f32
      %105 = vector.broadcast %cst_101 : f32 to vector<40x8xf32>
      %c360 = arith.constant 360 : index
      %c0_102 = arith.constant 0 : index
      %106 = vector.load %arg12[%c360, %c0_102] : memref<408x8xf32, #tpu.memory_space<vmem>>, vector<40x8xf32>
      tpu.vector_store %arg12[%c360, %c0_102], %105 {strides = array<i32>} : memref<408x8xf32, #tpu.memory_space<vmem>>, vector<40x8xf32>,
    } else {
    }
    %cst_23 = arith.constant 0.000000e+00 : f32
    %36 = vector.broadcast %cst_23 : f32 to vector<8x8xf32>
    %c400 = arith.constant 400 : index
    %c0_24 = arith.constant 0 : index
    %37 = vector.load %arg12[%c400, %c0_24] : memref<408x8xf32, #tpu.memory_space<vmem>>, vector<8x8xf32>
    tpu.vector_store %arg12[%c400, %c0_24], %36 {strides = array<i32>} : memref<408x8xf32, #tpu.memory_space<vmem>>, vector<8x8xf32>,
    %cst_25 = arith.constant 0.000000e+00 : f32
    %38 = vector.broadcast %cst_25 : f32 to vector<320x8xf32>
    %c0_26 = arith.constant 0 : index
    %c0_27 = arith.constant 0 : index
    %39 = vector.load %arg12[%c0_26, %c0_27] : memref<408x8xf32, #tpu.memory_space<vmem>>, vector<320x8xf32>
    %c0_28 = arith.constant 0 : index
    %c0_29 = arith.constant 0 : index
    %c0_30 = arith.constant 0 : index
    %c0_31 = arith.constant 0 : index
    %40 = vector.load %arg6[%c0_28, %c0_29, %c0_30, %c0_31] : memref<3x3x8x8xf32, #tpu.memory_space<vmem>>, vector<1x1x8x8xf32>
    %41 = vector.shape_cast %40 : vector<1x1x8x8xf32> to vector<8x8xf32>
    %cst_32 = arith.constant dense<0.000000e+00> : vector<320x8xf32>
    %42 = tpu.matmul %39, %41, %cst_32 {dimension_numbers = #tpu.dot_dimension_numbers<[1], [0], [0], [1], [0, 0, 1, 1], [], []>} : vector<320x8xf32>, vector<8x8xf32>, vector<320x8xf32> -> vector<320x8xf32>
    %43 = arith.addf %38, %42 : vector<320x8xf32>
    %c1_33 = arith.constant 1 : index
    %c0_34 = arith.constant 0 : index
    %44 = vector.load %arg12[%c1_33, %c0_34] : memref<408x8xf32, #tpu.memory_space<vmem>>, vector<320x8xf32>
    %c0_35 = arith.constant 0 : index
    %c1_36 = arith.constant 1 : index
    %c0_37 = arith.constant 0 : index
    %c0_38 = arith.constant 0 : index
    %45 = vector.load %arg6[%c0_35, %c1_36, %c0_37, %c0_38] : memref<3x3x8x8xf32, #tpu.memory_space<vmem>>, vector<1x1x8x8xf32>
    %46 = vector.shape_cast %45 : vector<1x1x8x8xf32> to vector<8x8xf32>
    %cst_39 = arith.constant dense<0.000000e+00> : vector<320x8xf32>
    %47 = tpu.matmul %44, %46, %cst_39 {dimension_numbers = #tpu.dot_dimension_numbers<[1], [0], [0], [1], [0, 0, 1, 1], [], []>} : vector<320x8xf32>, vector<8x8xf32>, vector<320x8xf32> -> vector<320x8xf32>
    %48 = arith.addf %43, %47 : vector<320x8xf32>
    %c2 = arith.constant 2 : index
    %c0_40 = arith.constant 0 : index
    %49 = vector.load %arg12[%c2, %c0_40] : memref<408x8xf32, #tpu.memory_space<vmem>>, vector<320x8xf32>
    %c0_41 = arith.constant 0 : index
    %c2_42 = arith.constant 2 : index
    %c0_43 = arith.constant 0 : index
    %c0_44 = arith.constant 0 : index
    %50 = vector.load %arg6[%c0_41, %c2_42, %c0_43, %c0_44] : memref<3x3x8x8xf32, #tpu.memory_space<vmem>>, vector<1x1x8x8xf32>
    %51 = vector.shape_cast %50 : vector<1x1x8x8xf32> to vector<8x8xf32>
    %cst_45 = arith.constant dense<0.000000e+00> : vector<320x8xf32>
    %52 = tpu.matmul %49, %51, %cst_45 {dimension_numbers = #tpu.dot_dimension_numbers<[1], [0], [0], [1], [0, 0, 1, 1], [], []>} : vector<320x8xf32>, vector<8x8xf32>, vector<320x8xf32> -> vector<320x8xf32>
    %53 = arith.addf %48, %52 : vector<320x8xf32>
    %c40_46 = arith.constant 40 : index
    %c0_47 = arith.constant 0 : index
    %54 = vector.load %arg12[%c40_46, %c0_47] : memref<408x8xf32, #tpu.memory_space<vmem>>, vector<320x8xf32>
    %c1_48 = arith.constant 1 : index
    %c0_49 = arith.constant 0 : index
    %c0_50 = arith.constant 0 : index
    %c0_51 = arith.constant 0 : index
    %55 = vector.load %arg6[%c1_48, %c0_49, %c0_50, %c0_51] : memref<3x3x8x8xf32, #tpu.memory_space<vmem>>, vector<1x1x8x8xf32>
    %56 = vector.shape_cast %55 : vector<1x1x8x8xf32> to vector<8x8xf32>
    %cst_52 = arith.constant dense<0.000000e+00> : vector<320x8xf32>
    %57 = tpu.matmul %54, %56, %cst_52 {dimension_numbers = #tpu.dot_dimension_numbers<[1], [0], [0], [1], [0, 0, 1, 1], [], []>} : vector<320x8xf32>, vector<8x8xf32>, vector<320x8xf32> -> vector<320x8xf32>
    %58 = arith.addf %53, %57 : vector<320x8xf32>
    %c41 = arith.constant 41 : index
    %c0_53 = arith.constant 0 : index
    %59 = vector.load %arg12[%c41, %c0_53] : memref<408x8xf32, #tpu.memory_space<vmem>>, vector<320x8xf32>
    %c1_54 = arith.constant 1 : index
    %c1_55 = arith.constant 1 : index
    %c0_56 = arith.constant 0 : index
    %c0_57 = arith.constant 0 : index
    %60 = vector.load %arg6[%c1_54, %c1_55, %c0_56, %c0_57] : memref<3x3x8x8xf32, #tpu.memory_space<vmem>>, vector<1x1x8x8xf32>
    %61 = vector.shape_cast %60 : vector<1x1x8x8xf32> to vector<8x8xf32>
    %cst_58 = arith.constant dense<0.000000e+00> : vector<320x8xf32>
    %62 = tpu.matmul %59, %61, %cst_58 {dimension_numbers = #tpu.dot_dimension_numbers<[1], [0], [0], [1], [0, 0, 1, 1], [], []>} : vector<320x8xf32>, vector<8x8xf32>, vector<320x8xf32> -> vector<320x8xf32>
    %63 = arith.addf %58, %62 : vector<320x8xf32>
    %c42 = arith.constant 42 : index
    %c0_59 = arith.constant 0 : index
    %64 = vector.load %arg12[%c42, %c0_59] : memref<408x8xf32, #tpu.memory_space<vmem>>, vector<320x8xf32>
    %c1_60 = arith.constant 1 : index
    %c2_61 = arith.constant 2 : index
    %c0_62 = arith.constant 0 : index
    %c0_63 = arith.constant 0 : index
    %65 = vector.load %arg6[%c1_60, %c2_61, %c0_62, %c0_63] : memref<3x3x8x8xf32, #tpu.memory_space<vmem>>, vector<1x1x8x8xf32>
    %66 = vector.shape_cast %65 : vector<1x1x8x8xf32> to vector<8x8xf32>
    %cst_64 = arith.constant dense<0.000000e+00> : vector<320x8xf32>
    %67 = tpu.matmul %64, %66, %cst_64 {dimension_numbers = #tpu.dot_dimension_numbers<[1], [0], [0], [1], [0, 0, 1, 1], [], []>} : vector<320x8xf32>, vector<8x8xf32>, vector<320x8xf32> -> vector<320x8xf32>
    %68 = arith.addf %63, %67 : vector<320x8xf32>
    %c80_65 = arith.constant 80 : index
    %c0_66 = arith.constant 0 : index
    %69 = vector.load %arg12[%c80_65, %c0_66] : memref<408x8xf32, #tpu.memory_space<vmem>>, vector<320x8xf32>
    %c2_67 = arith.constant 2 : index
    %c0_68 = arith.constant 0 : index
    %c0_69 = arith.constant 0 : index
    %c0_70 = arith.constant 0 : index
    %70 = vector.load %arg6[%c2_67, %c0_68, %c0_69, %c0_70] : memref<3x3x8x8xf32, #tpu.memory_space<vmem>>, vector<1x1x8x8xf32>
    %71 = vector.shape_cast %70 : vector<1x1x8x8xf32> to vector<8x8xf32>
    %cst_71 = arith.constant dense<0.000000e+00> : vector<320x8xf32>
    %72 = tpu.matmul %69, %71, %cst_71 {dimension_numbers = #tpu.dot_dimension_numbers<[1], [0], [0], [1], [0, 0, 1, 1], [], []>} : vector<320x8xf32>, vector<8x8xf32>, vector<320x8xf32> -> vector<320x8xf32>
    %73 = arith.addf %68, %72 : vector<320x8xf32>
    %c81 = arith.constant 81 : index
    %c0_72 = arith.constant 0 : index
    %74 = vector.load %arg12[%c81, %c0_72] : memref<408x8xf32, #tpu.memory_space<vmem>>, vector<320x8xf32>
    %c2_73 = arith.constant 2 : index
    %c1_74 = arith.constant 1 : index
    %c0_75 = arith.constant 0 : index
    %c0_76 = arith.constant 0 : index
    %75 = vector.load %arg6[%c2_73, %c1_74, %c0_75, %c0_76] : memref<3x3x8x8xf32, #tpu.memory_space<vmem>>, vector<1x1x8x8xf32>
    %76 = vector.shape_cast %75 : vector<1x1x8x8xf32> to vector<8x8xf32>
    %cst_77 = arith.constant dense<0.000000e+00> : vector<320x8xf32>
    %77 = tpu.matmul %74, %76, %cst_77 {dimension_numbers = #tpu.dot_dimension_numbers<[1], [0], [0], [1], [0, 0, 1, 1], [], []>} : vector<320x8xf32>, vector<8x8xf32>, vector<320x8xf32> -> vector<320x8xf32>
    %78 = arith.addf %73, %77 : vector<320x8xf32>
    %c82 = arith.constant 82 : index
    %c0_78 = arith.constant 0 : index
    %79 = vector.load %arg12[%c82, %c0_78] : memref<408x8xf32, #tpu.memory_space<vmem>>, vector<320x8xf32>
    %c2_79 = arith.constant 2 : index
    %c2_80 = arith.constant 2 : index
    %c0_81 = arith.constant 0 : index
    %c0_82 = arith.constant 0 : index
    %80 = vector.load %arg6[%c2_79, %c2_80, %c0_81, %c0_82] : memref<3x3x8x8xf32, #tpu.memory_space<vmem>>, vector<1x1x8x8xf32>
    %81 = vector.shape_cast %80 : vector<1x1x8x8xf32> to vector<8x8xf32>
    %cst_83 = arith.constant dense<0.000000e+00> : vector<320x8xf32>
    %82 = tpu.matmul %79, %81, %cst_83 {dimension_numbers = #tpu.dot_dimension_numbers<[1], [0], [0], [1], [0, 0, 1, 1], [], []>} : vector<320x8xf32>, vector<8x8xf32>, vector<320x8xf32> -> vector<320x8xf32>
    %83 = arith.addf %78, %82 : vector<320x8xf32>
    %c0_84 = arith.constant 0 : index
    %c0_85 = arith.constant 0 : index
    %84 = vector.load %arg7[%c0_84, %c0_85] : memref<1x8xf32, #tpu.memory_space<vmem>>, vector<1x8xf32>
    %85 = vector.broadcast %84 : vector<1x8xf32> to vector<320x8xf32>
    %86 = arith.addf %83, %85 : vector<320x8xf32>
    %87 = arith.truncf %86 : vector<320x8xf32> to vector<320x8xbf16>
    %c0_86 = arith.constant 0 : index
    %c0_87 = arith.constant 0 : index
    %c0_88 = arith.constant 0 : index
    %88 = vector.load %arg9[%c0_86, %c0_87, %c0_88] : memref<1x320x8xbf16, #tpu.memory_space<vmem>>, vector<1x320x8xbf16>
    %89 = vector.shape_cast %88 : vector<1x320x8xbf16> to vector<320x8xbf16>
    %90 = vector.shape_cast %87 : vector<320x8xbf16> to vector<1x320x8xbf16>
    tpu.vector_store %arg9[%c0_86, %c0_87, %c0_88], %90 {strides = array<i32>} : memref<1x320x8xbf16, #tpu.memory_space<vmem>>, vector<1x320x8xbf16>,
    %c0_89 = arith.constant 0 : index
    %c0_90 = arith.constant 0 : index
    %91 = vector.load %arg8[%c0_89, %c0_90] : memref<320x1xf32, #tpu.memory_space<vmem>>, vector<320x1xf32>
    %92 = vector.broadcast %91 : vector<320x1xf32> to vector<320x8xf32>
    %93 = arith.mulf %86, %92 : vector<320x8xf32>
    %cst_91 = arith.constant dense<0.000000e+00> : vector<8xf32>
    %94 = vector.multi_reduction <add>, %93, %cst_91 [0] : vector<320x8xf32> to vector<8xf32>
    %95 = vector.shape_cast %94 : vector<8xf32> to vector<1x8xf32>
    %c0_92 = arith.constant 0 : index
    %c0_93 = arith.constant 0 : index
    %c0_94 = arith.constant 0 : index
    %c0_95 = arith.constant 0 : index
    %96 = vector.load %arg10[%c0_92, %c0_93, %c0_94, %c0_95] : memref<1x1x1x8xf32, #tpu.memory_space<vmem>>, vector<1x1x1x8xf32>
    %97 = vector.shape_cast %96 : vector<1x1x1x8xf32> to vector<1x8xf32>
    %98 = vector.shape_cast %95 : vector<1x8xf32> to vector<1x1x1x8xf32>
    tpu.vector_store %arg10[%c0_92, %c0_93, %c0_94, %c0_95], %98 {strides = array<i32>} : memref<1x1x1x8xf32, #tpu.memory_space<vmem>>, vector<1x1x1x8xf32>,
    %99 = arith.mulf %93, %86 : vector<320x8xf32>
    %cst_96 = arith.constant dense<0.000000e+00> : vector<8xf32>
    %100 = vector.multi_reduction <add>, %99, %cst_96 [0] : vector<320x8xf32> to vector<8xf32>
    %101 = vector.shape_cast %100 : vector<8xf32> to vector<1x8xf32>
    %c0_97 = arith.constant 0 : index
    %c0_98 = arith.constant 0 : index
    %c0_99 = arith.constant 0 : index
    %c0_100 = arith.constant 0 : index
    %102 = vector.load %arg11[%c0_97, %c0_98, %c0_99, %c0_100] : memref<1x1x1x8xf32, #tpu.memory_space<vmem>>, vector<1x1x1x8xf32>
    %103 = vector.shape_cast %102 : vector<1x1x1x8xf32> to vector<1x8xf32>
    %104 = vector.shape_cast %101 : vector<1x8xf32> to vector<1x1x1x8xf32>
    tpu.vector_store %arg11[%c0_97, %c0_98, %c0_99, %c0_100], %104 {strides = array<i32>} : memref<1x1x1x8xf32, #tpu.memory_space<vmem>>, vector<1x1x1x8xf32>,
    return
  }
  func.func @transform_0(%arg0: i32, %arg1: i32) -> (i32, i32) {
    %c16_i32 = arith.constant 16 : i32
    %0 = arith.muli %arg0, %c16_i32 : i32
    %c4_i32 = arith.constant 4 : i32
    %1 = arith.muli %arg1, %c4_i32 : i32
    %c1_i32 = arith.constant 1 : i32
    %2 = arith.subi %1, %c1_i32 : i32
    %c0_i32 = arith.constant 0 : i32
    %3 = arith.maxsi %2, %c0_i32 : i32
    %4 = arith.addi %0, %3 : i32
    %c0_i32_0 = arith.constant 0 : i32
    %c0_i32_1 = arith.constant 0 : i32
    return %4, %c0_i32_0 : i32, i32
  }
  func.func @transform_1(%arg0: i32, %arg1: i32) -> (i32, i32) {
    %c4_i32 = arith.constant 4 : i32
    %0 = arith.muli %arg0, %c4_i32 : i32
    %1 = arith.addi %0, %arg1 : i32
    %c0_i32 = arith.constant 0 : i32
    %c0_i32_0 = arith.constant 0 : i32
    return %1, %c0_i32 : i32, i32
  }
  func.func @transform_2(%arg0: i32, %arg1: i32) -> (i32, i32) {
    %c16_i32 = arith.constant 16 : i32
    %0 = arith.muli %arg0, %c16_i32 : i32
    %c4_i32 = arith.constant 4 : i32
    %1 = arith.muli %arg1, %c4_i32 : i32
    %c4_i32_0 = arith.constant 4 : i32
    %2 = arith.addi %1, %c4_i32_0 : i32
    %c15_i32 = arith.constant 15 : i32
    %3 = arith.minsi %2, %c15_i32 : i32
    %4 = arith.addi %0, %3 : i32
    %c0_i32 = arith.constant 0 : i32
    %c0_i32_1 = arith.constant 0 : i32
    return %4, %c0_i32 : i32, i32
  }
  func.func @transform_3(%arg0: i32, %arg1: i32) -> (i32, i32, i32) {
    %c0_i32 = arith.constant 0 : i32
    %c0_i32_0 = arith.constant 0 : i32
    %c0_i32_1 = arith.constant 0 : i32
    %c0_i32_2 = arith.constant 0 : i32
    return %c0_i32, %c0_i32_0, %c0_i32_1 : i32, i32, i32
  }
  func.func @transform_4(%arg0: i32, %arg1: i32) -> (i32, i32, i32, i32) {
    %c0_i32 = arith.constant 0 : i32
    %c0_i32_0 = arith.constant 0 : i32
    %c0_i32_1 = arith.constant 0 : i32
    %c0_i32_2 = arith.constant 0 : i32
    %c0_i32_3 = arith.constant 0 : i32
    return %c0_i32, %c0_i32_0, %c0_i32_1, %c0_i32_2 : i32, i32, i32, i32
  }
  func.func @transform_5(%arg0: i32, %arg1: i32) -> (i32, i32) {
    %c0_i32 = arith.constant 0 : i32
    %c0_i32_0 = arith.constant 0 : i32
    %c0_i32_1 = arith.constant 0 : i32
    return %c0_i32, %c0_i32_0 : i32, i32
  }
  func.func @transform_6(%arg0: i32, %arg1: i32) -> (i32, i32) {
    %c0_i32 = arith.constant 0 : i32
    %c0_i32_0 = arith.constant 0 : i32
    %c0_i32_1 = arith.constant 0 : i32
    return %c0_i32, %c0_i32_0 : i32, i32
  }
  func.func @transform_7(%arg0: i32, %arg1: i32) -> (i32, i32, i32) {
    %c0_i32 = arith.constant 0 : i32
    %c0_i32_0 = arith.constant 0 : i32
    return %arg0, %arg1, %c0_i32 : i32, i32, i32
  }
  func.func @transform_8(%arg0: i32, %arg1: i32) -> (i32, i32, i32, i32) {
    %c0_i32 = arith.constant 0 : i32
    %c0_i32_0 = arith.constant 0 : i32
    %c0_i32_1 = arith.constant 0 : i32
    return %arg0, %arg1, %c0_i32, %c0_i32_0 : i32, i32, i32, i32
  }
  func.func @transform_9(%arg0: i32, %arg1: i32) -> (i32, i32, i32, i32) {
    %c0_i32 = arith.constant 0 : i32
    %c0_i32_0 = arith.constant 0 : i32
    %c0_i32_1 = arith.constant 0 : i32
    return %arg0, %arg1, %c0_i32, %c0_i32_0 : i32, i32, i32, i32
  }
}

</mosaic_0001>

<llo_original>
// kernel: decoder_block_forward.3
$region0: #{decoder_block_forward.3}
  #allocation0 [shape = 'u32[]', space=smem, size = 0x4, offset = 0x4, fixed_abs, tag = 'smem constant byte address 0x4 - core index']
  #allocation1 [shape = 'u32[144,128]{1,0:T(1,128)}', space=vmem, size = 0x12000, scoped, tag = 'internal scratch']
  %s0 = inlined_call_operand.vmem [shape: bf16[2560,8], index: 0, kind: input, shape index: {}]
  %s1 = inlined_call_operand.vmem [shape: f32[1,8], index: 1, kind: input, shape index: {}]
  %s2 = inlined_call_operand.vmem [shape: f32[1,8], index: 2, kind: input, shape index: {}]
  %s3 = inlined_call_operand.vmem [shape: f32[2560,8], index: 3, kind: output, shape index: {}]
  %s4 = sld [smem:[#allocation0]]
  $region45: #{decoder_block_forward.3} parent=0
    _
  %s6 = ssub.s32 1, %s4
  %s7 = scalar_select 0, %s6, %s4
  loop: start=0, step=1, limit=6
  $region2: #{decoder_block_forward.3} parent=0 // loop_pre_header
    _
  $region3: #{decoder_block_forward.3} parent=0 // loop_header
    %s9 = sphi 0, %s13
    %p10 = scmp.ge.s32.totalorder %s9, 6
    %s19 = sphi 0, %s21
    %s22 = sphi 0, %s19
    %s23 = sphi 0, %s22
    %s39 = sphi 0, %s23
    %s43 = sphi 0, %s43
    %s45 = sphi 0, %s43
    %s46 = sphi 0, %s45
    %s60 = sphi 0, %s46
    %s64 = sphi 0, %s64
    %s66 = sphi 0, %s64
    %s67 = sphi 0, %s66
    %s81 = sphi 0, %s67
    %s87 = sphi 0, %s89
    %s90 = sphi 0, %s87
    %s91 = sphi 0, %s90
    %s107 = sphi 0, %s91
  $region4: #{decoder_block_forward.3} parent=0 // loop_header_branch
    %12 = sbr.rel (%p10) target = $region8
  $region5: #{decoder_block_forward.3} parent=0 // loop_body
    %s14 = ssub.s32 %s9, 1
    %s15 = ssub.s32 %s9, 2
    %s16 = sadd.s32 %s9, 1
    %s17 = ssub.s32 %s9, %s16
    %p18 = scmp.eq.s32.totalorder %s17, 0
    %s20 = sadd.s32 %s19, 1
    %s21 = scalar_select %p18, %s19, %s20
    %p24 = pneg %p18
    %p25 = scmp.eq.s32.totalorder %s9, 3
    %p26 = por %p24, %p25
    %p27 = scmp.ne.s32.totalorder %s19, %s22
    %p28 = scmp.eq.s32.totalorder %s9, 0
    %p29 = por %p27, %p28
    %p30 = scmp.ne.s32.totalorder %s19, %s22
    %p31 = scmp.eq.s32.totalorder %s14, 3
    %p32 = por %p30, %p31
    %p33 = scmp.ne.s32.totalorder %s22, %s23
    %p34 = scmp.eq.s32.totalorder %s14, 0
    %p35 = por %p33, %p34
    %p36 = scmp.ne.s32.totalorder %s22, %s23
    %p37 = scmp.eq.s32.totalorder %s15, 3
    %p38 = por %p36, %p37
    %p40 = scmp.ne.s32.totalorder %s23, %s39
    %p41 = scmp.eq.s32.totalorder %s15, 0
    %p42 = por %p40, %p41
    %s44 = sadd.s32 %s43, 1
    %p47 = scmp.eq.s32.totalorder %s9, 3
    %p48 = scmp.ne.s32.totalorder %s43, %s45
    %p49 = scmp.eq.s32.totalorder %s9, 0
    %p50 = por %p48, %p49
    %p51 = scmp.ne.s32.totalorder %s43, %s45
    %p52 = scmp.eq.s32.totalorder %s14, 3
    %p53 = por %p51, %p52
    %p54 = scmp.ne.s32.totalorder %s45, %s46
    %p55 = scmp.eq.s32.totalorder %s14, 0
    %p56 = por %p54, %p55
    %p57 = scmp.ne.s32.totalorder %s45, %s46
    %p58 = scmp.eq.s32.totalorder %s15, 3
    %p59 = por %p57, %p58
    %p61 = scmp.ne.s32.totalorder %s46, %s60
    %p62 = scmp.eq.s32.totalorder %s15, 0
    %p63 = por %p61, %p62
    %s65 = sadd.s32 %s64, 1
    %p68 = scmp.eq.s32.totalorder %s9, 3
    %p69 = scmp.ne.s32.totalorder %s64, %s66
    %p70 = scmp.eq.s32.totalorder %s9, 0
    %p71 = por %p69, %p70
    %p72 = scmp.ne.s32.totalorder %s64, %s66
    %p73 = scmp.eq.s32.totalorder %s14, 3
    %p74 = por %p72, %p73
    %p75 = scmp.ne.s32.totalorder %s66, %s67
    %p76 = scmp.eq.s32.totalorder %s14, 0
    %p77 = por %p75, %p76
    %p78 = scmp.ne.s32.totalorder %s66, %s67
    %p79 = scmp.eq.s32.totalorder %s15, 3
    %p80 = por %p78, %p79
    %p82 = scmp.ne.s32.totalorder %s67, %s81
    %p83 = scmp.eq.s32.totalorder %s15, 0
    %p84 = por %p82, %p83
    %s85 = ssub.s32 %s9, %s16
    %p86 = scmp.eq.s32.totalorder %s85, 0
    %s88 = sadd.s32 %s87, 1
    %s89 = scalar_select %p86, %s87, %s88
    %p92 = pneg %p86
    %p93 = scmp.eq.s32.totalorder %s9, 3
    %p94 = por %p92, %p93
    %p95 = scmp.ne.s32.totalorder %s87, %s90
    %p96 = scmp.eq.s32.totalorder %s9, 0
    %p97 = por %p95, %p96
    %p98 = scmp.ne.s32.totalorder %s87, %s90
    %p99 = scmp.eq.s32.totalorder %s14, 3
    %p100 = por %p98, %p99
    %p101 = scmp.ne.s32.totalorder %s90, %s91
    %p102 = scmp.eq.s32.totalorder %s14, 0
    %p103 = por %p101, %p102
    %p104 = scmp.ne.s32.totalorder %s90, %s91
    %p105 = scmp.eq.s32.totalorder %s15, 3
    %p106 = por %p104, %p105
    %p108 = scmp.ne.s32.totalorder %s91, %s107
    %p109 = scmp.eq.s32.totalorder %s15, 0
    %p110 = por %p108, %p109
    %p111 = scmp.le.s32.totalorder 1, %s9
    %p112 = scmp.lt.s32.totalorder %s9, 5
    %p113 = pnand %p111, %p112
    %p114 = pneg %p113
    // Predicated region
    $region9: #{decoder_block_forward.3} parent=5 // pred_check
      _
    $region10: #{decoder_block_forward.3} parent=5 // pred_check_branch
      %116 = sbr.rel (%p113) target = $region12
    $region11: #{decoder_block_forward.3} parent=5 // pred_region
      %s117 = ssub.s32 %s9, 1
      // Predicated region
      $region13: #{decoder_block_forward.3} parent=11 // pred_check
        %p118 = pneg %p56
      $region14: #{decoder_block_forward.3} parent=11 // pred_check_branch
        %120 = sbr.rel (%p118) target = $region16
      $region15: #{decoder_block_forward.3} parent=11 // pred_region
        _
      $region16: #{decoder_block_forward.3} parent=11 // pred_fallthru
        _
      // Predicated region
      $region17: #{decoder_block_forward.3} parent=11 // pred_check
        %p121 = pneg %p77
      $region18: #{decoder_block_forward.3} parent=11 // pred_check_branch
        %123 = sbr.rel (%p121) target = $region20
      $region19: #{decoder_block_forward.3} parent=11 // pred_region
        _
      $region20: #{decoder_block_forward.3} parent=11 // pred_fallthru
        _
    $region12: #{decoder_block_forward.3} parent=5 // pred_fallthru
      _
    %p124 = scmp.lt.s32.totalorder %s9, 4
    // Predicated region
    $region21: #{decoder_block_forward.3} parent=5 // pred_check
      %p125 = pneg %p124
    $region22: #{decoder_block_forward.3} parent=5 // pred_check_branch
      %127 = sbr.rel (%p125) target = $region24
    $region23: #{decoder_block_forward.3} parent=5 // pred_region
      // Predicated region
      $region25: #{decoder_block_forward.3} parent=23 // pred_check
        %p128 = pneg %p29
      $region26: #{decoder_block_forward.3} parent=23 // pred_check_branch
        %130 = sbr.rel (%p128) target = $region28
      $region27: #{decoder_block_forward.3} parent=23 // pred_region
        %s131 = smul.u32 80, %s9
        %p132 = scmp.lt.s32.totalorder %s131, 319
        %s133 = scalar_select %p132, %s131, 319
        %s134 = smul.addr %s133, 4
        %s135 = scalar_lea.vmem %s0, %s134
        %s136 = smul.u32 80, %s9
      $region28: #{decoder_block_forward.3} parent=23 // pred_fallthru
        _
    $region24: #{decoder_block_forward.3} parent=5 // pred_fallthru
      _
    %p137 = scmp.le.s32.totalorder 1, %s9
    %p138 = scmp.lt.s32.totalorder %s9, 5
    %p139 = pnand %p137, %p138
    %p140 = pneg %p139
    // Predicated region
    $region29: #{decoder_block_forward.3} parent=5 // pred_check
      _
    $region30: #{decoder_block_forward.3} parent=5 // pred_check_branch
      %142 = sbr.rel (%p139) target = $region32
    $region31: #{decoder_block_forward.3} parent=5 // pred_region
      %s143 = ssub.s32 %s9, 1
      %s144 = smul.u32 80, %s14
      %p145 = scmp.lt.s32.totalorder %s144, 319
      %s146 = scalar_select %p145, %s144, 319
      %s147 = smul.addr %s146, 4
      %s148 = scalar_lea.vmem %s0, %s147
      %p149 = pneg %p35
      %p150 = pneg %p32
      %p151 = pneg %p56
      %p152 = pneg %p53
      %p153 = pneg %p77
      %p154 = pneg %p74
      %p155 = pneg %p103
      %p156 = pneg %p100
      %s157 = smul.u32 80, %s14
      %p158 = scmp.lt.s32.totalorder %s157, 319
      %s159 = scalar_select %p158, %s157, 319
      %s160 = smul.addr %s159, 8
      %s161 = scalar_lea.vmem %s3, %s160
      %s162 = smul.u32 80, %s14
      %p163 = scmp.lt.s32.totalorder %s162, 319
      %s164 = scalar_select %p163, %s162, 319
      %s165 = smul.addr %s164, 4
      %s166 = scalar_lea.vmem %s0, %s165
      %s167 = smul.u32 80, %s14
      %s168 = smul.u32 80, %s14
      %p169 = scmp.lt.s32.totalorder %s168, 319
      %s170 = scalar_select %p169, %s168, 319
      %s171 = smul.addr %s170, 8
      %s172 = scalar_lea.vmem %s3, %s171
      %s173 = smul.u32 80, %s14
      %v174 = vld [vmem:[%s166] sm:$0xf]
      %v175 = vld [vmem:[%s166 + $0x4] sm:$0xf]
      %v176 = vld [vmem:[%s166 + $0x8] sm:$0xf]
      %v177 = vld [vmem:[%s166 + $0xc] sm:$0xf]
      %v178 = vld [vmem:[%s166 + $0x10] sm:$0xf]
      %v179 = vld [vmem:[%s166 + $0x14] sm:$0xf]
      %v180 = vld [vmem:[%s166 + $0x18] sm:$0xf]
      %v181 = vld [vmem:[%s166 + $0x1c] sm:$0xf]
      %v182 = vld [vmem:[%s166 + $0x20] sm:$0xf]
      %v183 = vld [vmem:[%s166 + $0x24] sm:$0xf]
      %v184 = vld [vmem:[%s166 + $0x28] sm:$0xf]
      %v185 = vld [vmem:[%s166 + $0x2c] sm:$0xf]
      %v186 = vld [vmem:[%s166 + $0x30] sm:$0xf]
      %v187 = vld [vmem:[%s166 + $0x34] sm:$0xf]
      %v188 = vld [vmem:[%s166 + $0x38] sm:$0xf]
      %v189 = vld [vmem:[%s166 + $0x3c] sm:$0xf]
      %v190 = vld [vmem:[%s166 + $0x40] sm:$0xf]
      %v191 = vld [vmem:[%s166 + $0x44] sm:$0xf]
      %v192 = vld [vmem:[%s166 + $0x48] sm:$0xf]
      %v193 = vld [vmem:[%s166 + $0x4c] sm:$0xf]
      %v194 = vld [vmem:[%s166 + $0x50] sm:$0xf]
      %v195 = vld [vmem:[%s166 + $0x54] sm:$0xf]
      %v196 = vld [vmem:[%s166 + $0x58] sm:$0xf]
      %v197 = vld [vmem:[%s166 + $0x5c] sm:$0xf]
      %v198 = vld [vmem:[%s166 + $0x60] sm:$0xf]
      %v199 = vld [vmem:[%s166 + $0x64] sm:$0xf]
      %v200 = vld [vmem:[%s166 + $0x68] sm:$0xf]
      %v201 = vld [vmem:[%s166 + $0x6c] sm:$0xf]
      %v202 = vld [vmem:[%s166 + $0x70] sm:$0xf]
      %v203 = vld [vmem:[%s166 + $0x74] sm:$0xf]
      %v204 = vld [vmem:[%s166 + $0x78] sm:$0xf]
      %v205 = vld [vmem:[%s166 + $0x7c] sm:$0xf]
      %v206 = vld [vmem:[%s166 + $0x80] sm:$0xf]
      %v207 = vld [vmem:[%s166 + $0x84] sm:$0xf]
      %v208 = vld [vmem:[%s166 + $0x88] sm:$0xf]
      %v209 = vld [vmem:[%s166 + $0x8c] sm:$0xf]
      %v210 = vld [vmem:[%s166 + $0x90] sm:$0xf]
      %v211 = vld [vmem:[%s166 + $0x94] sm:$0xf]
      %v212 = vld [vmem:[%s166 + $0x98] sm:$0xf]
      %v213 = vld [vmem:[%s166 + $0x9c] sm:$0xf]
      %v214 = vld [vmem:[%s166 + $0xa0] sm:$0xf]
      %v215 = vld [vmem:[%s166 + $0xa4] sm:$0xf]
      %v216 = vld [vmem:[%s166 + $0xa8] sm:$0xf]
      %v217 = vld [vmem:[%s166 + $0xac] sm:$0xf]
      %v218 = vld [vmem:[%s166 + $0xb0] sm:$0xf]
      %v219 = vld [vmem:[%s166 + $0xb4] sm:$0xf]
      %v220 = vld [vmem:[%s166 + $0xb8] sm:$0xf]
      %v221 = vld [vmem:[%s166 + $0xbc] sm:$0xf]
      %v222 = vld [vmem:[%s166 + $0xc0] sm:$0xf]
      %v223 = vld [vmem:[%s166 + $0xc4] sm:$0xf]
      %v224 = vld [vmem:[%s166 + $0xc8] sm:$0xf]
      %v225 = vld [vmem:[%s166 + $0xcc] sm:$0xf]
      %v226 = vld [vmem:[%s166 + $0xd0] sm:$0xf]
      %v227 = vld [vmem:[%s166 + $0xd4] sm:$0xf]
      %v228 = vld [vmem:[%s166 + $0xd8] sm:$0xf]
      %v229 = vld [vmem:[%s166 + $0xdc] sm:$0xf]
      %v230 = vld [vmem:[%s166 + $0xe0] sm:$0xf]
      %v231 = vld [vmem:[%s166 + $0xe4] sm:$0xf]
      %v232 = vld [vmem:[%s166 + $0xe8] sm:$0xf]
      %v233 = vld [vmem:[%s166 + $0xec] sm:$0xf]
      %v234 = vld [vmem:[%s166 + $0xf0] sm:$0xf]
      %v235 = vld [vmem:[%s166 + $0xf4] sm:$0xf]
      %v236 = vld [vmem:[%s166 + $0xf8] sm:$0xf]
      %v237 = vld [vmem:[%s166 + $0xfc] sm:$0xf]
      %v238 = vld [vmem:[%s166 + $0x100] sm:$0xf]
      %v239 = vld [vmem:[%s166 + $0x104] sm:$0xf]
      %v240 = vld [vmem:[%s166 + $0x108] sm:$0xf]
      %v241 = vld [vmem:[%s166 + $0x10c] sm:$0xf]
      %v242 = vld [vmem:[%s166 + $0x110] sm:$0xf]
      %v243 = vld [vmem:[%s166 + $0x114] sm:$0xf]
      %v244 = vld [vmem:[%s166 + $0x118] sm:$0xf]
      %v245 = vld [vmem:[%s166 + $0x11c] sm:$0xf]
      %v246 = vld [vmem:[%s166 + $0x120] sm:$0xf]
      %v247 = vld [vmem:[%s166 + $0x124] sm:$0xf]
      %v248 = vld [vmem:[%s166 + $0x128] sm:$0xf]
      %v249 = vld [vmem:[%s166 + $0x12c] sm:$0xf]
      %v250 = vld [vmem:[%s166 + $0x130] sm:$0xf]
      %v251 = vld [vmem:[%s166 + $0x134] sm:$0xf]
      %v252 = vld [vmem:[%s166 + $0x138] sm:$0xf]
      %v253 = vld [vmem:[%s166 + $0x13c] sm:$0xf]
      %v254 = vunpack.c.l.bf16 %v174
      %v255 = vunpack.c.l.bf16 %v175
      %v256 = vunpack.c.l.bf16 %v176
      %v257 = vunpack.c.l.bf16 %v177
      %v258 = vunpack.c.l.bf16 %v178
      %v259 = vunpack.c.l.bf16 %v179
      %v260 = vunpack.c.l.bf16 %v180
      %v261 = vunpack.c.l.bf16 %v181
      %v262 = vunpack.c.l.bf16 %v182
      %v263 = vunpack.c.l.bf16 %v183
      %v264 = vunpack.c.l.bf16 %v184
      %v265 = vunpack.c.l.bf16 %v185
      %v266 = vunpack.c.l.bf16 %v186
      %v267 = vunpack.c.l.bf16 %v187
      %v268 = vunpack.c.l.bf16 %v188
      %v269 = vunpack.c.l.bf16 %v189
      %v270 = vunpack.c.l.bf16 %v190
      %v271 = vunpack.c.l.bf16 %v191
      %v272 = vunpack.c.l.bf16 %v192
      %v273 = vunpack.c.l.bf16 %v193
      %v274 = vunpack.c.l.bf16 %v194
      %v275 = vunpack.c.l.bf16 %v195
      %v276 = vunpack.c.l.bf16 %v196
      %v277 = vunpack.c.l.bf16 %v197
      %v278 = vunpack.c.l.bf16 %v198
      %v279 = vunpack.c.l.bf16 %v199
      %v280 = vunpack.c.l.bf16 %v200
      %v281 = vunpack.c.l.bf16 %v201
      %v282 = vunpack.c.l.bf16 %v202
      %v283 = vunpack.c.l.bf16 %v203
      %v284 = vunpack.c.l.bf16 %v204
      %v285 = vunpack.c.l.bf16 %v205
      %v286 = vunpack.c.l.bf16 %v206
      %v287 = vunpack.c.l.bf16 %v207
      %v288 = vunpack.c.l.bf16 %v208
      %v289 = vunpack.c.l.bf16 %v209
      %v290 = vunpack.c.l.bf16 %v210
      %v291 = vunpack.c.l.bf16 %v211
      %v292 = vunpack.c.l.bf16 %v212
      %v293 = vunpack.c.l.bf16 %v213
      %v294 = vunpack.c.l.bf16 %v214
      %v295 = vunpack.c.l.bf16 %v215
      %v296 = vunpack.c.l.bf16 %v216
      %v297 = vunpack.c.l.bf16 %v217
      %v298 = vunpack.c.l.bf16 %v218
      %v299 = vunpack.c.l.bf16 %v219
      %v300 = vunpack.c.l.bf16 %v220
      %v301 = vunpack.c.l.bf16 %v221
      %v302 = vunpack.c.l.bf16 %v222
      %v303 = vunpack.c.l.bf16 %v223
      %v304 = vunpack.c.l.bf16 %v224
      %v305 = vunpack.c.l.bf16 %v225
      %v306 = vunpack.c.l.bf16 %v226
      %v307 = vunpack.c.l.bf16 %v227
      %v308 = vunpack.c.l.bf16 %v228
      %v309 = vunpack.c.l.bf16 %v229
      %v310 = vunpack.c.l.bf16 %v230
      %v311 = vunpack.c.l.bf16 %v231
      %v312 = vunpack.c.l.bf16 %v232
      %v313 = vunpack.c.l.bf16 %v233
      %v314 = vunpack.c.l.bf16 %v234
      %v315 = vunpack.c.l.bf16 %v235
      %v316 = vunpack.c.l.bf16 %v236
      %v317 = vunpack.c.l.bf16 %v237
      %v318 = vunpack.c.l.bf16 %v238
      %v319 = vunpack.c.l.bf16 %v239
      %v320 = vunpack.c.l.bf16 %v240
      %v321 = vunpack.c.l.bf16 %v241
      %v322 = vunpack.c.l.bf16 %v242
      %v323 = vunpack.c.l.bf16 %v243
      %v324 = vunpack.c.l.bf16 %v244
      %v325 = vunpack.c.l.bf16 %v245
      %v326 = vunpack.c.l.bf16 %v246
      %v327 = vunpack.c.l.bf16 %v247
      %v328 = vunpack.c.l.bf16 %v248
      %v329 = vunpack.c.l.bf16 %v249
      %v330 = vunpack.c.l.bf16 %v250
      %v331 = vunpack.c.l.bf16 %v251
      %v332 = vunpack.c.l.bf16 %v252
      %v333 = vunpack.c.l.bf16 %v253
      %v334 = vld [vmem:[%s1] sm:$0x1]
      %v336 = vlaneseq
      %v337 = vshrl.u32 %v336, 7
      %v338 = vsub.s32 0, %v337
      %v339 = vrot.slane %v334, %v338
      %v341 = vmul.f32 %v254, %v339
      %v342 = vmul.f32 %v255, %v339
      %v343 = vmul.f32 %v256, %v339
      %v344 = vmul.f32 %v257, %v339
      %v345 = vmul.f32 %v258, %v339
      %v346 = vmul.f32 %v259, %v339
      %v347 = vmul.f32 %v260, %v339
      %v348 = vmul.f32 %v261, %v339
      %v349 = vmul.f32 %v262, %v339
      %v350 = vmul.f32 %v263, %v339
      %v351 = vmul.f32 %v264, %v339
      %v352 = vmul.f32 %v265, %v339
      %v353 = vmul.f32 %v266, %v339
      %v354 = vmul.f32 %v267, %v339
      %v355 = vmul.f32 %v268, %v339
      %v356 = vmul.f32 %v269, %v339
      %v357 = vmul.f32 %v270, %v339
      %v358 = vmul.f32 %v271, %v339
      %v359 = vmul.f32 %v272, %v339
      %v360 = vmul.f32 %v273, %v339
      %v361 = vmul.f32 %v274, %v339
      %v362 = vmul.f32 %v275, %v339
      %v363 = vmul.f32 %v276, %v339
      %v364 = vmul.f32 %v277, %v339
      %v365 = vmul.f32 %v278, %v339
      %v366 = vmul.f32 %v279, %v339
      %v367 = vmul.f32 %v280, %v339
      %v368 = vmul.f32 %v281, %v339
      %v369 = vmul.f32 %v282, %v339
      %v370 = vmul.f32 %v283, %v339
      %v371 = vmul.f32 %v284, %v339
      %v372 = vmul.f32 %v285, %v339
      %v373 = vmul.f32 %v286, %v339
      %v374 = vmul.f32 %v287, %v339
      %v375 = vmul.f32 %v288, %v339
      %v376 = vmul.f32 %v289, %v339
      %v377 = vmul.f32 %v290, %v339
      %v378 = vmul.f32 %v291, %v339
      %v379 = vmul.f32 %v292, %v339
      %v380 = vmul.f32 %v293, %v339
      %v381 = vmul.f32 %v294, %v339
      %v382 = vmul.f32 %v295, %v339
      %v383 = vmul.f32 %v296, %v339
      %v384 = vmul.f32 %v297, %v339
      %v385 = vmul.f32 %v298, %v339
      %v386 = vmul.f32 %v299, %v339
      %v387 = vmul.f32 %v300, %v339
      %v388 = vmul.f32 %v301, %v339
      %v389 = vmul.f32 %v302, %v339
      %v390 = vmul.f32 %v303, %v339
      %v391 = vmul.f32 %v304, %v339
      %v392 = vmul.f32 %v305, %v339
      %v393 = vmul.f32 %v306, %v339
      %v394 = vmul.f32 %v307, %v339
      %v395 = vmul.f32 %v308, %v339
      %v396 = vmul.f32 %v309, %v339
      %v397 = vmul.f32 %v310, %v339
      %v398 = vmul.f32 %v311, %v339
      %v399 = vmul.f32 %v312, %v339
      %v400 = vmul.f32 %v313, %v339
      %v401 = vmul.f32 %v314, %v339
      %v402 = vmul.f32 %v315, %v339
      %v403 = vmul.f32 %v316, %v339
      %v404 = vmul.f32 %v317, %v339
      %v405 = vmul.f32 %v318, %v339
      %v406 = vmul.f32 %v319, %v339
      %v407 = vmul.f32 %v320, %v339
      %v408 = vmul.f32 %v321, %v339
      %v409 = vmul.f32 %v322, %v339
      %v410 = vmul.f32 %v323, %v339
      %v411 = vmul.f32 %v324, %v339
      %v412 = vmul.f32 %v325, %v339
      %v413 = vmul.f32 %v326, %v339
      %v414 = vmul.f32 %v327, %v339
      %v415 = vmul.f32 %v328, %v339
      %v416 = vmul.f32 %v329, %v339
      %v417 = vmul.f32 %v330, %v339
      %v418 = vmul.f32 %v331, %v339
      %v419 = vmul.f32 %v332, %v339
      %v420 = vmul.f32 %v333, %v339
      %v421 = vld [vmem:[%s2] sm:$0x1]
      %v423 = vlaneseq
      %v424 = vshrl.u32 %v423, 7
      %v425 = vsub.s32 0, %v424
      %v426 = vrot.slane %v421, %v425
      %v428 = vadd.f32 %v341, %v426
      %v429 = vadd.f32 %v342, %v426
      %v430 = vadd.f32 %v343, %v426
      %v431 = vadd.f32 %v344, %v426
      %v432 = vadd.f32 %v345, %v426
      %v433 = vadd.f32 %v346, %v426
      %v434 = vadd.f32 %v347, %v426
      %v435 = vadd.f32 %v348, %v426
      %v436 = vadd.f32 %v349, %v426
      %v437 = vadd.f32 %v350, %v426
      %v438 = vadd.f32 %v351, %v426
      %v439 = vadd.f32 %v352, %v426
      %v440 = vadd.f32 %v353, %v426
      %v441 = vadd.f32 %v354, %v426
      %v442 = vadd.f32 %v355, %v426
      %v443 = vadd.f32 %v356, %v426
      %v444 = vadd.f32 %v357, %v426
      %v445 = vadd.f32 %v358, %v426
      %v446 = vadd.f32 %v359, %v426
      %v447 = vadd.f32 %v360, %v426
      %v448 = vadd.f32 %v361, %v426
      %v449 = vadd.f32 %v362, %v426
      %v450 = vadd.f32 %v363, %v426
      %v451 = vadd.f32 %v364, %v426
      %v452 = vadd.f32 %v365, %v426
      %v453 = vadd.f32 %v366, %v426
      %v454 = vadd.f32 %v367, %v426
      %v455 = vadd.f32 %v368, %v426
      %v456 = vadd.f32 %v369, %v426
      %v457 = vadd.f32 %v370, %v426
      %v458 = vadd.f32 %v371, %v426
      %v459 = vadd.f32 %v372, %v426
      %v460 = vadd.f32 %v373, %v426
      %v461 = vadd.f32 %v374, %v426
      %v462 = vadd.f32 %v375, %v426
      %v463 = vadd.f32 %v376, %v426
      %v464 = vadd.f32 %v377, %v426
      %v465 = vadd.f32 %v378, %v426
      %v466 = vadd.f32 %v379, %v426
      %v467 = vadd.f32 %v380, %v426
      %v468 = vadd.f32 %v381, %v426
      %v469 = vadd.f32 %v382, %v426
      %v470 = vadd.f32 %v383, %v426
      %v471 = vadd.f32 %v384, %v426
      %v472 = vadd.f32 %v385, %v426
      %v473 = vadd.f32 %v386, %v426
      %v474 = vadd.f32 %v387, %v426
      %v475 = vadd.f32 %v388, %v426
      %v476 = vadd.f32 %v389, %v426
      %v477 = vadd.f32 %v390, %v426
      %v478 = vadd.f32 %v391, %v426
      %v479 = vadd.f32 %v392, %v426
      %v480 = vadd.f32 %v393, %v426
      %v481 = vadd.f32 %v394, %v426
      %v482 = vadd.f32 %v395, %v426
      %v483 = vadd.f32 %v396, %v426
      %v484 = vadd.f32 %v397, %v426
      %v485 = vadd.f32 %v398, %v426
      %v486 = vadd.f32 %v399, %v426
      %v487 = vadd.f32 %v400, %v426
      %v488 = vadd.f32 %v401, %v426
      %v489 = vadd.f32 %v402, %v426
      %v490 = vadd.f32 %v403, %v426
      %v491 = vadd.f32 %v404, %v426
      %v492 = vadd.f32 %v405, %v426
      %v493 = vadd.f32 %v406, %v426
      %v494 = vadd.f32 %v407, %v426
      %v495 = vadd.f32 %v408, %v426
      %v496 = vadd.f32 %v409, %v426
      %v497 = vadd.f32 %v410, %v426
      %v498 = vadd.f32 %v411, %v426
      %v499 = vadd.f32 %v412, %v426
      %v500 = vadd.f32 %v413, %v426
      %v501 = vadd.f32 %v414, %v426
      %v502 = vadd.f32 %v415, %v426
      %v503 = vadd.f32 %v416, %v426
      %v504 = vadd.f32 %v417, %v426
      %v505 = vadd.f32 %v418, %v426
      %v506 = vadd.f32 %v419, %v426
      %v507 = vadd.f32 %v420, %v426
      %v508 = vmax.f32 %v428, 0.0
      %v509 = vmax.f32 %v429, 0.0
      %v510 = vmax.f32 %v430, 0.0
      %v511 = vmax.f32 %v431, 0.0
      %v512 = vmax.f32 %v432, 0.0
      %v513 = vmax.f32 %v433, 0.0
      %v514 = vmax.f32 %v434, 0.0
      %v515 = vmax.f32 %v435, 0.0
      %v516 = vmax.f32 %v436, 0.0
      %v517 = vmax.f32 %v437, 0.0
      %v518 = vmax.f32 %v438, 0.0
      %v519 = vmax.f32 %v439, 0.0
      %v520 = vmax.f32 %v440, 0.0
      %v521 = vmax.f32 %v441, 0.0
      %v522 = vmax.f32 %v442, 0.0
      %v523 = vmax.f32 %v443, 0.0
      %v524 = vmax.f32 %v444, 0.0
      %v525 = vmax.f32 %v445, 0.0
      %v526 = vmax.f32 %v446, 0.0
      %v527 = vmax.f32 %v447, 0.0
      %v528 = vmax.f32 %v448, 0.0
      %v529 = vmax.f32 %v449, 0.0
      %v530 = vmax.f32 %v450, 0.0
      %v531 = vmax.f32 %v451, 0.0
      %v532 = vmax.f32 %v452, 0.0
      %v533 = vmax.f32 %v453, 0.0
      %v534 = vmax.f32 %v454, 0.0
      %v535 = vmax.f32 %v455, 0.0
      %v536 = vmax.f32 %v456, 0.0
      %v537 = vmax.f32 %v457, 0.0
      %v538 = vmax.f32 %v458, 0.0
      %v539 = vmax.f32 %v459, 0.0
      %v540 = vmax.f32 %v460, 0.0
      %v541 = vmax.f32 %v461, 0.0
      %v542 = vmax.f32 %v462, 0.0
      %v543 = vmax.f32 %v463, 0.0
      %v544 = vmax.f32 %v464, 0.0
      %v545 = vmax.f32 %v465, 0.0
      %v546 = vmax.f32 %v466, 0.0
      %v547 = vmax.f32 %v467, 0.0
      %v548 = vmax.f32 %v468, 0.0
      %v549 = vmax.f32 %v469, 0.0
      %v550 = vmax.f32 %v470, 0.0
      %v551 = vmax.f32 %v471, 0.0
      %v552 = vmax.f32 %v472, 0.0
      %v553 = vmax.f32 %v473, 0.0
      %v554 = vmax.f32 %v474, 0.0
      %v555 = vmax.f32 %v475, 0.0
      %v556 = vmax.f32 %v476, 0.0
      %v557 = vmax.f32 %v477, 0.0
      %v558 = vmax.f32 %v478, 0.0
      %v559 = vmax.f32 %v479, 0.0
      %v560 = vmax.f32 %v480, 0.0
      %v561 = vmax.f32 %v481, 0.0
      %v562 = vmax.f32 %v482, 0.0
      %v563 = vmax.f32 %v483, 0.0
      %v564 = vmax.f32 %v484, 0.0
      %v565 = vmax.f32 %v485, 0.0
      %v566 = vmax.f32 %v486, 0.0
      %v567 = vmax.f32 %v487, 0.0
      %v568 = vmax.f32 %v488, 0.0
      %v569 = vmax.f32 %v489, 0.0
      %v570 = vmax.f32 %v490, 0.0
      %v571 = vmax.f32 %v491, 0.0
      %v572 = vmax.f32 %v492, 0.0
      %v573 = vmax.f32 %v493, 0.0
      %v574 = vmax.f32 %v494, 0.0
      %v575 = vmax.f32 %v495, 0.0
      %v576 = vmax.f32 %v496, 0.0
      %v577 = vmax.f32 %v497, 0.0
      %v578 = vmax.f32 %v498, 0.0
      %v579 = vmax.f32 %v499, 0.0
      %v580 = vmax.f32 %v500, 0.0
      %v581 = vmax.f32 %v501, 0.0
      %v582 = vmax.f32 %v502, 0.0
      %v583 = vmax.f32 %v503, 0.0
      %v584 = vmax.f32 %v504, 0.0
      %v585 = vmax.f32 %v505, 0.0
      %v586 = vmax.f32 %v506, 0.0
      %v587 = vmax.f32 %v507, 0.0
      %vm588 = vcmask 64512
      %589 = vst.msk [vmem:[%s172] sm:$0xff] %vm588, %v508
      %590 = vst.msk [vmem:[%s172 + $0x8] sm:$0xff] %vm588, %v509
      %591 = vst.msk [vmem:[%s172 + $0x10] sm:$0xff] %vm588, %v510
      %592 = vst.msk [vmem:[%s172 + $0x18] sm:$0xff] %vm588, %v511
      %593 = vst.msk [vmem:[%s172 + $0x20] sm:$0xff] %vm588, %v512
      %594 = vst.msk [vmem:[%s172 + $0x28] sm:$0xff] %vm588, %v513
      %595 = vst.msk [vmem:[%s172 + $0x30] sm:$0xff] %vm588, %v514
      %596 = vst.msk [vmem:[%s172 + $0x38] sm:$0xff] %vm588, %v515
      %597 = vst.msk [vmem:[%s172 + $0x40] sm:$0xff] %vm588, %v516
      %598 = vst.msk [vmem:[%s172 + $0x48] sm:$0xff] %vm588, %v517
      %599 = vst.msk [vmem:[%s172 + $0x50] sm:$0xff] %vm588, %v518
      %600 = vst.msk [vmem:[%s172 + $0x58] sm:$0xff] %vm588, %v519
      %601 = vst.msk [vmem:[%s172 + $0x60] sm:$0xff] %vm588, %v520
      %602 = vst.msk [vmem:[%s172 + $0x68] sm:$0xff] %vm588, %v521
      %603 = vst.msk [vmem:[%s172 + $0x70] sm:$0xff] %vm588, %v522
      %604 = vst.msk [vmem:[%s172 + $0x78] sm:$0xff] %vm588, %v523
      %605 = vst.msk [vmem:[%s172 + $0x80] sm:$0xff] %vm588, %v524
      %606 = vst.msk [vmem:[%s172 + $0x88] sm:$0xff] %vm588, %v525
      %607 = vst.msk [vmem:[%s172 + $0x90] sm:$0xff] %vm588, %v526
      %608 = vst.msk [vmem:[%s172 + $0x98] sm:$0xff] %vm588, %v527
      %609 = vst.msk [vmem:[%s172 + $0xa0] sm:$0xff] %vm588, %v528
      %610 = vst.msk [vmem:[%s172 + $0xa8] sm:$0xff] %vm588, %v529
      %611 = vst.msk [vmem:[%s172 + $0xb0] sm:$0xff] %vm588, %v530
      %612 = vst.msk [vmem:[%s172 + $0xb8] sm:$0xff] %vm588, %v531
      %613 = vst.msk [vmem:[%s172 + $0xc0] sm:$0xff] %vm588, %v532
      %614 = vst.msk [vmem:[%s172 + $0xc8] sm:$0xff] %vm588, %v533
      %615 = vst.msk [vmem:[%s172 + $0xd0] sm:$0xff] %vm588, %v534
      %616 = vst.msk [vmem:[%s172 + $0xd8] sm:$0xff] %vm588, %v535
      %617 = vst.msk [vmem:[%s172 + $0xe0] sm:$0xff] %vm588, %v536
      %618 = vst.msk [vmem:[%s172 + $0xe8] sm:$0xff] %vm588, %v537
      %619 = vst.msk [vmem:[%s172 + $0xf0] sm:$0xff] %vm588, %v538
      %620 = vst.msk [vmem:[%s172 + $0xf8] sm:$0xff] %vm588, %v539
      %621 = vst.msk [vmem:[%s172 + $0x100] sm:$0xff] %vm588, %v540
      %622 = vst.msk [vmem:[%s172 + $0x108] sm:$0xff] %vm588, %v541
      %623 = vst.msk [vmem:[%s172 + $0x110] sm:$0xff] %vm588, %v542
      %624 = vst.msk [vmem:[%s172 + $0x118] sm:$0xff] %vm588, %v543
      %625 = vst.msk [vmem:[%s172 + $0x120] sm:$0xff] %vm588, %v544
      %626 = vst.msk [vmem:[%s172 + $0x128] sm:$0xff] %vm588, %v545
      %627 = vst.msk [vmem:[%s172 + $0x130] sm:$0xff] %vm588, %v546
      %628 = vst.msk [vmem:[%s172 + $0x138] sm:$0xff] %vm588, %v547
      %629 = vst.msk [vmem:[%s172 + $0x140] sm:$0xff] %vm588, %v548
      %630 = vst.msk [vmem:[%s172 + $0x148] sm:$0xff] %vm588, %v549
      %631 = vst.msk [vmem:[%s172 + $0x150] sm:$0xff] %vm588, %v550
      %632 = vst.msk [vmem:[%s172 + $0x158] sm:$0xff] %vm588, %v551
      %633 = vst.msk [vmem:[%s172 + $0x160] sm:$0xff] %vm588, %v552
      %634 = vst.msk [vmem:[%s172 + $0x168] sm:$0xff] %vm588, %v553
      %635 = vst.msk [vmem:[%s172 + $0x170] sm:$0xff] %vm588, %v554
      %636 = vst.msk [vmem:[%s172 + $0x178] sm:$0xff] %vm588, %v555
      %637 = vst.msk [vmem:[%s172 + $0x180] sm:$0xff] %vm588, %v556
      %638 = vst.msk [vmem:[%s172 + $0x188] sm:$0xff] %vm588, %v557
      %639 = vst.msk [vmem:[%s172 + $0x190] sm:$0xff] %vm588, %v558
      %640 = vst.msk [vmem:[%s172 + $0x198] sm:$0xff] %vm588, %v559
      %641 = vst.msk [vmem:[%s172 + $0x1a0] sm:$0xff] %vm588, %v560
      %642 = vst.msk [vmem:[%s172 + $0x1a8] sm:$0xff] %vm588, %v561
      %643 = vst.msk [vmem:[%s172 + $0x1b0] sm:$0xff] %vm588, %v562
      %644 = vst.msk [vmem:[%s172 + $0x1b8] sm:$0xff] %vm588, %v563
      %645 = vst.msk [vmem:[%s172 + $0x1c0] sm:$0xff] %vm588, %v564
      %646 = vst.msk [vmem:[%s172 + $0x1c8] sm:$0xff] %vm588, %v565
      %647 = vst.msk [vmem:[%s172 + $0x1d0] sm:$0xff] %vm588, %v566
      %648 = vst.msk [vmem:[%s172 + $0x1d8] sm:$0xff] %vm588, %v567
      %649 = vst.msk [vmem:[%s172 + $0x1e0] sm:$0xff] %vm588, %v568
      %650 = vst.msk [vmem:[%s172 + $0x1e8] sm:$0xff] %vm588, %v569
      %651 = vst.msk [vmem:[%s172 + $0x1f0] sm:$0xff] %vm588, %v570
      %652 = vst.msk [vmem:[%s172 + $0x1f8] sm:$0xff] %vm588, %v571
      %653 = vst.msk [vmem:[%s172 + $0x200] sm:$0xff] %vm588, %v572
      %654 = vst.msk [vmem:[%s172 + $0x208] sm:$0xff] %vm588, %v573
      %655 = vst.msk [vmem:[%s172 + $0x210] sm:$0xff] %vm588, %v574
      %656 = vst.msk [vmem:[%s172 + $0x218] sm:$0xff] %vm588, %v575
      %657 = vst.msk [vmem:[%s172 + $0x220] sm:$0xff] %vm588, %v576
      %658 = vst.msk [vmem:[%s172 + $0x228] sm:$0xff] %vm588, %v577
      %659 = vst.msk [vmem:[%s172 + $0x230] sm:$0xff] %vm588, %v578
      %660 = vst.msk [vmem:[%s172 + $0x238] sm:$0xff] %vm588, %v579
      %661 = vst.msk [vmem:[%s172 + $0x240] sm:$0xff] %vm588, %v580
      %662 = vst.msk [vmem:[%s172 + $0x248] sm:$0xff] %vm588, %v581
      %663 = vst.msk [vmem:[%s172 + $0x250] sm:$0xff] %vm588, %v582
      %664 = vst.msk [vmem:[%s172 + $0x258] sm:$0xff] %vm588, %v583
      %665 = vst.msk [vmem:[%s172 + $0x260] sm:$0xff] %vm588, %v584
      %666 = vst.msk [vmem:[%s172 + $0x268] sm:$0xff] %vm588, %v585
      %667 = vst.msk [vmem:[%s172 + $0x270] sm:$0xff] %vm588, %v586
      %668 = vst.msk [vmem:[%s172 + $0x278] sm:$0xff] %vm588, %v587
      %s669 = smul.u32 80, %s14
      %p670 = scmp.lt.s32.totalorder %s669, 319
      %s671 = scalar_select %p670, %s669, 319
      %s672 = smul.addr %s671, 8
      %s673 = scalar_lea.vmem %s3, %s672
      // Predicated region
      $region33: #{decoder_block_forward.3} parent=31 // pred_check
        %p674 = pneg %p100
      $region34: #{decoder_block_forward.3} parent=31 // pred_check_branch
        %676 = sbr.rel (%p674) target = $region36
      $region35: #{decoder_block_forward.3} parent=31 // pred_region
        %s677 = smul.u32 80, %s14
      $region36: #{decoder_block_forward.3} parent=31 // pred_fallthru
        _
    $region32: #{decoder_block_forward.3} parent=5 // pred_fallthru
      _
    %p678 = scmp.le.s32.totalorder 2, %s9
    // Predicated region
    $region37: #{decoder_block_forward.3} parent=5 // pred_check
      %p679 = pneg %p678
    $region38: #{decoder_block_forward.3} parent=5 // pred_check_branch
      %681 = sbr.rel (%p679) target = $region40
    $region39: #{decoder_block_forward.3} parent=5 // pred_region
      %s682 = ssub.s32 %s9, 2
      // Predicated region
      $region41: #{decoder_block_forward.3} parent=39 // pred_check
        %p683 = pneg %p106
      $region42: #{decoder_block_forward.3} parent=39 // pred_check_branch
        %685 = sbr.rel (%p683) target = $region44
      $region43: #{decoder_block_forward.3} parent=39 // pred_region
        %s686 = smul.u32 80, %s15
        %p687 = scmp.lt.s32.totalorder %s686, 319
        %s688 = scalar_select %p687, %s686, 319
        %s689 = smul.addr %s688, 8
        %s690 = scalar_lea.vmem %s3, %s689
      $region44: #{decoder_block_forward.3} parent=39 // pred_fallthru
        _
    $region40: #{decoder_block_forward.3} parent=5 // pred_fallthru
      _
  $region6: #{decoder_block_forward.3} parent=0 // loop_footer
    %s13 = sadd.s32 1, %s9
  $region7: #{decoder_block_forward.3} parent=0 // loop_footer_branch
    %8 = sbr.rel target = $region3
  $region8: #{decoder_block_forward.3} parent=0 // loop_exit
    _

// kernel: decoder_block_forward.2
$region0: #{decoder_block_forward.2}
  #allocation0 [shape = 'u32[]', space=smem, size = 0x4, offset = 0x4, fixed_abs, tag = 'smem constant byte address 0x4 - core index']
  #allocation1 [shape = 'u32[144,128]{1,0:T(1,128)}', space=vmem, size = 0x12000, scoped, tag = 'internal scratch']
  #allocation2 [shape = 'f32[408,8]{1,0:T(8,128)}', space=vmem, size = 0x33000, scoped, tag = 'scratch operand']
  %s0 = inlined_call_operand.vmem [shape: f32[1280,9], index: 0, kind: input, shape index: {}, may-alias: {0,1,2}]
  %s1 = inlined_call_operand.vmem [shape: f32[1280,9], index: 1, kind: input, shape index: {}, may-alias: {0,1,2}]
  %s2 = inlined_call_operand.vmem [shape: f32[1280,9], index: 2, kind: input, shape index: {}, may-alias: {0,1,2}]
  %s3 = inlined_call_operand.vmem [shape: f32[2,9,8], index: 3, kind: input, shape index: {}]
  %s4 = inlined_call_operand.vmem [shape: f32[3,3,8,8], index: 4, kind: input, shape index: {}]
  %s5 = inlined_call_operand.vmem [shape: f32[1,8], index: 5, kind: input, shape index: {}]
  %s6 = inlined_call_operand.vmem [shape: f32[320,1], index: 6, kind: input, shape index: {}]
  %s7 = inlined_call_operand.vmem [shape: bf16[2,1280,8], index: 7, kind: output, shape index: {0}]
  %s8 = inlined_call_operand.vmem [shape: f32[2,4,1,8], index: 8, kind: output, shape index: {1}]
  %s9 = inlined_call_operand.vmem [shape: f32[2,4,1,8], index: 9, kind: output, shape index: {2}]
  %10 = xla_tuple %s7, %s8, %s9
  %s11 = sld [smem:[#allocation0]]
  $region93: #{decoder_block_forward.2} parent=0
    _
  %s13 = ssub.s32 1, %s11
  %s14 = scalar_select 0, %s13, %s11
  loop: start=0, step=1, limit=10
  $region2: #{decoder_block_forward.2} parent=0 // loop_pre_header
    _
  $region3: #{decoder_block_forward.2} parent=0 // loop_header
    %s16 = sphi 0, %s20
    %p17 = scmp.ge.s32.totalorder %s16, 10
    %s23 = sphi 0, %s35
    %s24 = sphi 0, %s31
    %s25 = sphi 0, %s23
    %s26 = sphi 0, %s24
    %s27 = sphi 0, %s25
    %s28 = sphi 0, %s26
    %s50 = sphi 0, %s52
    %s53 = sphi 0, %s50
    %s54 = sphi 0, %s53
    %s70 = sphi 0, %s54
    %s80 = sphi 0, %s82
    %s83 = sphi 0, %s80
    %s84 = sphi 0, %s83
    %s100 = sphi 0, %s84
    %s118 = sphi 0, %s120
    %s121 = sphi 0, %s118
    %s122 = sphi 0, %s121
    %s138 = sphi 0, %s122
    %s142 = sphi 0, %s142
    %s144 = sphi 0, %s142
    %s145 = sphi 0, %s144
    %s159 = sphi 0, %s145
    %s163 = sphi 0, %s163
    %s165 = sphi 0, %s163
    %s166 = sphi 0, %s165
    %s180 = sphi 0, %s166
    %s184 = sphi 0, %s184
    %s186 = sphi 0, %s184
    %s187 = sphi 0, %s186
    %s201 = sphi 0, %s187
    %s205 = sphi 0, %s205
    %s207 = sphi 0, %s205
    %s208 = sphi 0, %s207
    %s222 = sphi 0, %s208
    %s230 = sphi 0, %s232
    %s233 = sphi 0, %s230
    %s234 = sphi 0, %s233
    %s250 = sphi 0, %s234
    %s258 = sphi 0, %s260
    %s261 = sphi 0, %s258
    %s262 = sphi 0, %s261
    %s278 = sphi 0, %s262
    %s286 = sphi 0, %s288
    %s289 = sphi 0, %s286
    %s290 = sphi 0, %s289
    %s306 = sphi 0, %s290
  $region4: #{decoder_block_forward.2} parent=0 // loop_header_branch
    %19 = sbr.rel (%p17) target = $region8
  $region5: #{decoder_block_forward.2} parent=0 // loop_body
    %s21 = ssub.s32 %s16, 1
    %s22 = ssub.s32 %s16, 2
    %s29 = sadd.s32 1, %s24
    %p30 = scmp.ge.s32.totalorder %s29, 4
    %s31 = scalar_select %p30, 0, %s29
    %s32 = sadd.s32 1, %s23
    %s33 = scalar_select %p30, %s32, %s23
    %p34 = scmp.ge.s32.totalorder %s33, 2
    %s35 = scalar_select %p34, 0, %s33
    %s36 = smul.u32 %s23, 16
    %s37 = smul.u32 %s24, 4
    %s38 = ssub.s32 %s37, 1
    %p39 = scmp.gt.s32.totalorder %s38, 0
    %s40 = scalar_select %p39, %s38, 0
    %s41 = sadd.s32 %s36, %s40
    %s42 = smul.u32 %s35, 16
    %s43 = smul.u32 %s31, 4
    %s44 = ssub.s32 %s43, 1
    %p45 = scmp.gt.s32.totalorder %s44, 0
    %s46 = scalar_select %p45, %s44, 0
    %s47 = sadd.s32 %s42, %s46
    %s48 = ssub.s32 %s41, %s47
    %p49 = scmp.eq.s32.totalorder %s48, 0
    %s51 = sadd.s32 %s50, 1
    %s52 = scalar_select %p49, %s50, %s51
    %p55 = pneg %p49
    %p56 = scmp.eq.s32.totalorder %s16, 7
    %p57 = por %p55, %p56
    %p58 = scmp.ne.s32.totalorder %s50, %s53
    %p59 = scmp.eq.s32.totalorder %s16, 0
    %p60 = por %p58, %p59
    %p61 = scmp.ne.s32.totalorder %s50, %s53
    %p62 = scmp.eq.s32.totalorder %s21, 7
    %p63 = por %p61, %p62
    %p64 = scmp.ne.s32.totalorder %s53, %s54
    %p65 = scmp.eq.s32.totalorder %s21, 0
    %p66 = por %p64, %p65
    %p67 = scmp.ne.s32.totalorder %s53, %s54
    %p68 = scmp.eq.s32.totalorder %s22, 7
    %p69 = por %p67, %p68
    %p71 = scmp.ne.s32.totalorder %s54, %s70
    %p72 = scmp.eq.s32.totalorder %s22, 0
    %p73 = por %p71, %p72
    %s74 = smul.u32 %s23, 4
    %s75 = sadd.s32 %s74, %s24
    %s76 = smul.u32 %s35, 4
    %s77 = sadd.s32 %s76, %s31
    %s78 = ssub.s32 %s75, %s77
    %p79 = scmp.eq.s32.totalorder %s78, 0
    %s81 = sadd.s32 %s80, 1
    %s82 = scalar_select %p79, %s80, %s81
    %p85 = pneg %p79
    %p86 = scmp.eq.s32.totalorder %s16, 7
    %p87 = por %p85, %p86
    %p88 = scmp.ne.s32.totalorder %s80, %s83
    %p89 = scmp.eq.s32.totalorder %s16, 0
    %p90 = por %p88, %p89
    %p91 = scmp.ne.s32.totalorder %s80, %s83
    %p92 = scmp.eq.s32.totalorder %s21, 7
    %p93 = por %p91, %p92
    %p94 = scmp.ne.s32.totalorder %s83, %s84
    %p95 = scmp.eq.s32.totalorder %s21, 0
    %p96 = por %p94, %p95
    %p97 = scmp.ne.s32.totalorder %s83, %s84
    %p98 = scmp.eq.s32.totalorder %s22, 7
    %p99 = por %p97, %p98
    %p101 = scmp.ne.s32.totalorder %s84, %s100
    %p102 = scmp.eq.s32.totalorder %s22, 0
    %p103 = por %p101, %p102
    %s104 = smul.u32 %s23, 16
    %s105 = smul.u32 %s24, 4
    %s106 = sadd.s32 %s105, 4
    %p107 = scmp.lt.s32.totalorder %s106, 15
    %s108 = scalar_select %p107, %s106, 15
    %s109 = sadd.s32 %s104, %s108
    %s110 = smul.u32 %s35, 16
    %s111 = smul.u32 %s31, 4
    %s112 = sadd.s32 %s111, 4
    %p113 = scmp.lt.s32.totalorder %s112, 15
    %s114 = scalar_select %p113, %s112, 15
    %s115 = sadd.s32 %s110, %s114
    %s116 = ssub.s32 %s109, %s115
    %p117 = scmp.eq.s32.totalorder %s116, 0
    %s119 = sadd.s32 %s118, 1
    %s120 = scalar_select %p117, %s118, %s119
    %p123 = pneg %p117
    %p124 = scmp.eq.s32.totalorder %s16, 7
    %p125 = por %p123, %p124
    %p126 = scmp.ne.s32.totalorder %s118, %s121
    %p127 = scmp.eq.s32.totalorder %s16, 0
    %p128 = por %p126, %p127
    %p129 = scmp.ne.s32.totalorder %s118, %s121
    %p130 = scmp.eq.s32.totalorder %s21, 7
    %p131 = por %p129, %p130
    %p132 = scmp.ne.s32.totalorder %s121, %s122
    %p133 = scmp.eq.s32.totalorder %s21, 0
    %p134 = por %p132, %p133
    %p135 = scmp.ne.s32.totalorder %s121, %s122
    %p136 = scmp.eq.s32.totalorder %s22, 7
    %p137 = por %p135, %p136
    %p139 = scmp.ne.s32.totalorder %s122, %s138
    %p140 = scmp.eq.s32.totalorder %s22, 0
    %p141 = por %p139, %p140
    %s143 = sadd.s32 %s142, 1
    %p146 = scmp.eq.s32.totalorder %s16, 7
    %p147 = scmp.ne.s32.totalorder %s142, %s144
    %p148 = scmp.eq.s32.totalorder %s16, 0
    %p149 = por %p147, %p148
    %p150 = scmp.ne.s32.totalorder %s142, %s144
    %p151 = scmp.eq.s32.totalorder %s21, 7
    %p152 = por %p150, %p151
    %p153 = scmp.ne.s32.totalorder %s144, %s145
    %p154 = scmp.eq.s32.totalorder %s21, 0
    %p155 = por %p153, %p154
    %p156 = scmp.ne.s32.totalorder %s144, %s145
    %p157 = scmp.eq.s32.totalorder %s22, 7
    %p158 = por %p156, %p157
    %p160 = scmp.ne.s32.totalorder %s145, %s159
    %p161 = scmp.eq.s32.totalorder %s22, 0
    %p162 = por %p160, %p161
    %s164 = sadd.s32 %s163, 1
    %p167 = scmp.eq.s32.totalorder %s16, 7
    %p168 = scmp.ne.s32.totalorder %s163, %s165
    %p169 = scmp.eq.s32.totalorder %s16, 0
    %p170 = por %p168, %p169
    %p171 = scmp.ne.s32.totalorder %s163, %s165
    %p172 = scmp.eq.s32.totalorder %s21, 7
    %p173 = por %p171, %p172
    %p174 = scmp.ne.s32.totalorder %s165, %s166
    %p175 = scmp.eq.s32.totalorder %s21, 0
    %p176 = por %p174, %p175
    %p177 = scmp.ne.s32.totalorder %s165, %s166
    %p178 = scmp.eq.s32.totalorder %s22, 7
    %p179 = por %p177, %p178
    %p181 = scmp.ne.s32.totalorder %s166, %s180
    %p182 = scmp.eq.s32.totalorder %s22, 0
    %p183 = por %p181, %p182
    %s185 = sadd.s32 %s184, 1
    %p188 = scmp.eq.s32.totalorder %s16, 7
    %p189 = scmp.ne.s32.totalorder %s184, %s186
    %p190 = scmp.eq.s32.totalorder %s16, 0
    %p191 = por %p189, %p190
    %p192 = scmp.ne.s32.totalorder %s184, %s186
    %p193 = scmp.eq.s32.totalorder %s21, 7
    %p194 = por %p192, %p193
    %p195 = scmp.ne.s32.totalorder %s186, %s187
    %p196 = scmp.eq.s32.totalorder %s21, 0
    %p197 = por %p195, %p196
    %p198 = scmp.ne.s32.totalorder %s186, %s187
    %p199 = scmp.eq.s32.totalorder %s22, 7
    %p200 = por %p198, %p199
    %p202 = scmp.ne.s32.totalorder %s187, %s201
    %p203 = scmp.eq.s32.totalorder %s22, 0
    %p204 = por %p202, %p203
    %s206 = sadd.s32 %s205, 1
    %p209 = scmp.eq.s32.totalorder %s16, 7
    %p210 = scmp.ne.s32.totalorder %s205, %s207
    %p211 = scmp.eq.s32.totalorder %s16, 0
    %p212 = por %p210, %p211
    %p213 = scmp.ne.s32.totalorder %s205, %s207
    %p214 = scmp.eq.s32.totalorder %s21, 7
    %p215 = por %p213, %p214
    %p216 = scmp.ne.s32.totalorder %s207, %s208
    %p217 = scmp.eq.s32.totalorder %s21, 0
    %p218 = por %p216, %p217
    %p219 = scmp.ne.s32.totalorder %s207, %s208
    %p220 = scmp.eq.s32.totalorder %s22, 7
    %p221 = por %p219, %p220
    %p223 = scmp.ne.s32.totalorder %s208, %s222
    %p224 = scmp.eq.s32.totalorder %s22, 0
    %p225 = por %p223, %p224
    %s226 = ssub.s32 %s23, %s35
    %s227 = ssub.s32 %s24, %s31
    %s228 = sor.u32 %s226, %s227
    %p229 = scmp.eq.s32.totalorder %s228, 0
    %s231 = sadd.s32 %s230, 1
    %s232 = scalar_select %p229, %s230, %s231
    %p235 = pneg %p229
    %p236 = scmp.eq.s32.totalorder %s16, 7
    %p237 = por %p235, %p236
    %p238 = scmp.ne.s32.totalorder %s230, %s233
    %p239 = scmp.eq.s32.totalorder %s16, 0
    %p240 = por %p238, %p239
    %p241 = scmp.ne.s32.totalorder %s230, %s233
    %p242 = scmp.eq.s32.totalorder %s21, 7
    %p243 = por %p241, %p242
    %p244 = scmp.ne.s32.totalorder %s233, %s234
    %p245 = scmp.eq.s32.totalorder %s21, 0
    %p246 = por %p244, %p245
    %p247 = scmp.ne.s32.totalorder %s233, %s234
    %p248 = scmp.eq.s32.totalorder %s22, 7
    %p249 = por %p247, %p248
    %p251 = scmp.ne.s32.totalorder %s234, %s250
    %p252 = scmp.eq.s32.totalorder %s22, 0
    %p253 = por %p251, %p252
    %s254 = ssub.s32 %s23, %s35
    %s255 = ssub.s32 %s24, %s31
    %s256 = sor.u32 %s254, %s255
    %p257 = scmp.eq.s32.totalorder %s256, 0
    %s259 = sadd.s32 %s258, 1
    %s260 = scalar_select %p257, %s258, %s259
    %p263 = pneg %p257
    %p264 = scmp.eq.s32.totalorder %s16, 7
    %p265 = por %p263, %p264
    %p266 = scmp.ne.s32.totalorder %s258, %s261
    %p267 = scmp.eq.s32.totalorder %s16, 0
    %p268 = por %p266, %p267
    %p269 = scmp.ne.s32.totalorder %s258, %s261
    %p270 = scmp.eq.s32.totalorder %s21, 7
    %p271 = por %p269, %p270
    %p272 = scmp.ne.s32.totalorder %s261, %s262
    %p273 = scmp.eq.s32.totalorder %s21, 0
    %p274 = por %p272, %p273
    %p275 = scmp.ne.s32.totalorder %s261, %s262
    %p276 = scmp.eq.s32.totalorder %s22, 7
    %p277 = por %p275, %p276
    %p279 = scmp.ne.s32.totalorder %s262, %s278
    %p280 = scmp.eq.s32.totalorder %s22, 0
    %p281 = por %p279, %p280
    %s282 = ssub.s32 %s23, %s35
    %s283 = ssub.s32 %s24, %s31
    %s284 = sor.u32 %s282, %s283
    %p285 = scmp.eq.s32.totalorder %s284, 0
    %s287 = sadd.s32 %s286, 1
    %s288 = scalar_select %p285, %s286, %s287
    %p291 = pneg %p285
    %p292 = scmp.eq.s32.totalorder %s16, 7
    %p293 = por %p291, %p292
    %p294 = scmp.ne.s32.totalorder %s286, %s289
    %p295 = scmp.eq.s32.totalorder %s16, 0
    %p296 = por %p294, %p295
    %p297 = scmp.ne.s32.totalorder %s286, %s289
    %p298 = scmp.eq.s32.totalorder %s21, 7
    %p299 = por %p297, %p298
    %p300 = scmp.ne.s32.totalorder %s289, %s290
    %p301 = scmp.eq.s32.totalorder %s21, 0
    %p302 = por %p300, %p301
    %p303 = scmp.ne.s32.totalorder %s289, %s290
    %p304 = scmp.eq.s32.totalorder %s22, 7
    %p305 = por %p303, %p304
    %p307 = scmp.ne.s32.totalorder %s290, %s306
    %p308 = scmp.eq.s32.totalorder %s22, 0
    %p309 = por %p307, %p308
    %p310 = scmp.le.s32.totalorder 1, %s16
    %p311 = scmp.lt.s32.totalorder %s16, 9
    %p312 = pnand %p310, %p311
    %p313 = pneg %p312
    // Predicated region
    $region9: #{decoder_block_forward.2} parent=5 // pred_check
      _
    $region10: #{decoder_block_forward.2} parent=5 // pred_check_branch
      %315 = sbr.rel (%p312) target = $region12
    $region11: #{decoder_block_forward.2} parent=5 // pred_region
      %s316 = ssub.s32 %s16, 1
      // Predicated region
      $region13: #{decoder_block_forward.2} parent=11 // pred_check
        %p317 = pneg %p155
      $region14: #{decoder_block_forward.2} parent=11 // pred_check_branch
        %319 = sbr.rel (%p317) target = $region16
      $region15: #{decoder_block_forward.2} parent=11 // pred_region
        _
      $region16: #{decoder_block_forward.2} parent=11 // pred_fallthru
        _
      // Predicated region
      $region17: #{decoder_block_forward.2} parent=11 // pred_check
        %p320 = pneg %p176
      $region18: #{decoder_block_forward.2} parent=11 // pred_check_branch
        %322 = sbr.rel (%p320) target = $region20
      $region19: #{decoder_block_forward.2} parent=11 // pred_region
        _
      $region20: #{decoder_block_forward.2} parent=11 // pred_fallthru
        _
      // Predicated region
      $region21: #{decoder_block_forward.2} parent=11 // pred_check
        %p323 = pneg %p197
      $region22: #{decoder_block_forward.2} parent=11 // pred_check_branch
        %325 = sbr.rel (%p323) target = $region24
      $region23: #{decoder_block_forward.2} parent=11 // pred_region
        _
      $region24: #{decoder_block_forward.2} parent=11 // pred_fallthru
        _
      // Predicated region
      $region25: #{decoder_block_forward.2} parent=11 // pred_check
        %p326 = pneg %p218
      $region26: #{decoder_block_forward.2} parent=11 // pred_check_branch
        %328 = sbr.rel (%p326) target = $region28
      $region27: #{decoder_block_forward.2} parent=11 // pred_region
        _
      $region28: #{decoder_block_forward.2} parent=11 // pred_fallthru
        _
    $region12: #{decoder_block_forward.2} parent=5 // pred_fallthru
      _
    %p329 = scmp.lt.s32.totalorder %s16, 8
    // Predicated region
    $region29: #{decoder_block_forward.2} parent=5 // pred_check
      %p330 = pneg %p329
    $region30: #{decoder_block_forward.2} parent=5 // pred_check_branch
      %332 = sbr.rel (%p330) target = $region32
    $region31: #{decoder_block_forward.2} parent=5 // pred_region
      // Predicated region
      $region33: #{decoder_block_forward.2} parent=31 // pred_check
        %p333 = pneg %p60
      $region34: #{decoder_block_forward.2} parent=31 // pred_check_branch
        %335 = sbr.rel (%p333) target = $region36
      $region35: #{decoder_block_forward.2} parent=31 // pred_region
        %s336 = smul.u32 %s23, 16
        %s337 = smul.u32 %s24, 4
        %s338 = ssub.s32 %s337, 1
        %p339 = scmp.gt.s32.totalorder %s338, 0
        %s340 = scalar_select %p339, %s338, 0
        %s341 = sadd.s32 %s336, %s340
        %s342 = smul.u32 5, %s341
        %p343 = scmp.lt.s32.totalorder %s342, 159
        %s344 = scalar_select %p343, %s342, 159
        %s345 = smul.addr %s344, 8
        %s346 = scalar_lea.vmem %s0, %s345
        %s347 = smul.u32 %s23, 16
        %s348 = smul.u32 %s24, 4
        %s349 = ssub.s32 %s348, 1
        %p350 = scmp.gt.s32.totalorder %s349, 0
        %s351 = scalar_select %p350, %s349, 0
        %s352 = sadd.s32 %s347, %s351
        %s353 = smul.u32 5, %s352
      $region36: #{decoder_block_forward.2} parent=31 // pred_fallthru
        _
      // Predicated region
      $region37: #{decoder_block_forward.2} parent=31 // pred_check
        %p354 = pneg %p90
      $region38: #{decoder_block_forward.2} parent=31 // pred_check_branch
        %356 = sbr.rel (%p354) target = $region40
      $region39: #{decoder_block_forward.2} parent=31 // pred_region
        %s357 = smul.u32 %s23, 4
        %s358 = sadd.s32 %s357, %s24
        %s359 = smul.u32 20, %s358
        %p360 = scmp.lt.s32.totalorder %s359, 159
        %s361 = scalar_select %p360, %s359, 159
        %s362 = smul.addr %s361, 8
        %s363 = scalar_lea.vmem %s1, %s362
        %s364 = smul.u32 %s23, 4
        %s365 = sadd.s32 %s364, %s24
        %s366 = smul.u32 20, %s365
      $region40: #{decoder_block_forward.2} parent=31 // pred_fallthru
        _
      // Predicated region
      $region41: #{decoder_block_forward.2} parent=31 // pred_check
        %p367 = pneg %p128
      $region42: #{decoder_block_forward.2} parent=31 // pred_check_branch
        %369 = sbr.rel (%p367) target = $region44
      $region43: #{decoder_block_forward.2} parent=31 // pred_region
        %s370 = smul.u32 %s23, 16
        %s371 = smul.u32 %s24, 4
        %s372 = sadd.s32 %s371, 4
        %p373 = scmp.lt.s32.totalorder %s372, 15
        %s374 = scalar_select %p373, %s372, 15
        %s375 = sadd.s32 %s370, %s374
        %s376 = smul.u32 5, %s375
        %p377 = scmp.lt.s32.totalorder %s376, 159
        %s378 = scalar_select %p377, %s376, 159
        %s379 = smul.addr %s378, 8
        %s380 = scalar_lea.vmem %s2, %s379
        %s381 = smul.u32 %s23, 16
        %s382 = smul.u32 %s24, 4
        %s383 = sadd.s32 %s382, 4
        %p384 = scmp.lt.s32.totalorder %s383, 15
        %s385 = scalar_select %p384, %s383, 15
        %s386 = sadd.s32 %s381, %s385
        %s387 = smul.u32 5, %s386
      $region44: #{decoder_block_forward.2} parent=31 // pred_fallthru
        _
    $region32: #{decoder_block_forward.2} parent=5 // pred_fallthru
      _
    %p388 = scmp.le.s32.totalorder 1, %s16
    %p389 = scmp.lt.s32.totalorder %s16, 9
    %p390 = pnand %p388, %p389
    %p391 = pneg %p390
    // Predicated region
    $region45: #{decoder_block_forward.2} parent=5 // pred_check
      _
    $region46: #{decoder_block_forward.2} parent=5 // pred_check_branch
      %393 = sbr.rel (%p390) target = $region48
    $region47: #{decoder_block_forward.2} parent=5 // pred_region
      %s394 = ssub.s32 %s16, 1
      %s395 = smul.u32 %s25, 16
      %s396 = smul.u32 %s26, 4
      %s397 = ssub.s32 %s396, 1
      %p398 = scmp.gt.s32.totalorder %s397, 0
      %s399 = scalar_select %p398, %s397, 0
      %s400 = sadd.s32 %s395, %s399
      %s401 = smul.u32 5, %s400
      %p402 = scmp.lt.s32.totalorder %s401, 159
      %s403 = scalar_select %p402, %s401, 159
      %s404 = smul.addr %s403, 8
      %s405 = scalar_lea.vmem %s0, %s404
      %p406 = pneg %p66
      %p407 = pneg %p63
      %s408 = smul.u32 %s25, 4
      %s409 = sadd.s32 %s408, %s26
      %s410 = smul.u32 20, %s409
      %p411 = scmp.lt.s32.totalorder %s410, 159
      %s412 = scalar_select %p411, %s410, 159
      %s413 = smul.addr %s412, 8
      %s414 = scalar_lea.vmem %s1, %s413
      %p415 = pneg %p96
      %p416 = pneg %p93
      %s417 = smul.u32 %s25, 16
      %s418 = smul.u32 %s26, 4
      %s419 = sadd.s32 %s418, 4
      %p420 = scmp.lt.s32.totalorder %s419, 15
      %s421 = scalar_select %p420, %s419, 15
      %s422 = sadd.s32 %s417, %s421
      %s423 = smul.u32 5, %s422
      %p424 = scmp.lt.s32.totalorder %s423, 159
      %s425 = scalar_select %p424, %s423, 159
      %s426 = smul.addr %s425, 8
      %s427 = scalar_lea.vmem %s2, %s426
      %p428 = pneg %p134
      %p429 = pneg %p131
      %p430 = pneg %p155
      %p431 = pneg %p152
      %p432 = pneg %p176
      %p433 = pneg %p173
      %p434 = pneg %p197
      %p435 = pneg %p194
      %p436 = pneg %p218
      %p437 = pneg %p215
      %p438 = pneg %p246
      %p439 = pneg %p243
      %s440 = smul.u32 40, %s26
      %p441 = scmp.lt.s32.totalorder %s25, 1
      %s442 = scalar_select %p441, %s25, 1
      %p443 = scmp.lt.s32.totalorder %s440, 159
      %s444 = scalar_select %p443, %s440, 159
      %s445 = smul.addr %s442, 160
      %s446 = sadd.s32 %s444, %s445
      %s447 = smul.addr %s446, 4
      %s448 = scalar_lea.vmem %s7, %s447
      %p449 = pneg %p274
      %p450 = pneg %p271
      %p451 = scmp.lt.s32.totalorder %s25, 1
      %s452 = scalar_select %p451, %s25, 1
      %p453 = scmp.lt.s32.totalorder %s26, 3
      %s454 = scalar_select %p453, %s26, 3
      %s455 = smul.addr %s452, 4
      %s456 = sadd.s32 %s454, %s455
      %s457 = scalar_lea.vmem %s8, %s456
      %p458 = pneg %p302
      %p459 = pneg %p299
      %p460 = scmp.lt.s32.totalorder %s25, 1
      %s461 = scalar_select %p460, %s25, 1
      %p462 = scmp.lt.s32.totalorder %s26, 3
      %s463 = scalar_select %p462, %s26, 3
      %s464 = smul.addr %s461, 4
      %s465 = sadd.s32 %s463, %s464
      %s466 = scalar_lea.vmem %s9, %s465
      %s467 = smul.u32 %s25, 16
      %s468 = smul.u32 %s26, 4
      %s469 = ssub.s32 %s468, 1
      %p470 = scmp.gt.s32.totalorder %s469, 0
      %s471 = scalar_select %p470, %s469, 0
      %s472 = sadd.s32 %s467, %s471
      %s473 = smul.u32 5, %s472
      %p474 = scmp.lt.s32.totalorder %s473, 159
      %s475 = scalar_select %p474, %s473, 159
      %s476 = smul.addr %s475, 8
      %s477 = scalar_lea.vmem %s0, %s476
      %s478 = smul.u32 %s25, 16
      %s479 = smul.u32 %s26, 4
      %s480 = ssub.s32 %s479, 1
      %p481 = scmp.gt.s32.totalorder %s480, 0
      %s482 = scalar_select %p481, %s480, 0
      %s483 = sadd.s32 %s478, %s482
      %s484 = smul.u32 5, %s483
      %s485 = smul.u32 %s25, 4
      %s486 = sadd.s32 %s485, %s26
      %s487 = smul.u32 20, %s486
      %p488 = scmp.lt.s32.totalorder %s487, 159
      %s489 = scalar_select %p488, %s487, 159
      %s490 = smul.addr %s489, 8
      %s491 = scalar_lea.vmem %s1, %s490
      %s492 = smul.u32 %s25, 4
      %s493 = sadd.s32 %s492, %s26
      %s494 = smul.u32 20, %s493
      %s495 = smul.u32 %s25, 16
      %s496 = smul.u32 %s26, 4
      %s497 = sadd.s32 %s496, 4
      %p498 = scmp.lt.s32.totalorder %s497, 15
      %s499 = scalar_select %p498, %s497, 15
      %s500 = sadd.s32 %s495, %s499
      %s501 = smul.u32 5, %s500
      %p502 = scmp.lt.s32.totalorder %s501, 159
      %s503 = scalar_select %p502, %s501, 159
      %s504 = smul.addr %s503, 8
      %s505 = scalar_lea.vmem %s2, %s504
      %s506 = smul.u32 %s25, 16
      %s507 = smul.u32 %s26, 4
      %s508 = sadd.s32 %s507, 4
      %p509 = scmp.lt.s32.totalorder %s508, 15
      %s510 = scalar_select %p509, %s508, 15
      %s511 = sadd.s32 %s506, %s510
      %s512 = smul.u32 5, %s511
      %s513 = smul.u32 40, %s26
      %p514 = scmp.lt.s32.totalorder %s25, 1
      %s515 = scalar_select %p514, %s25, 1
      %p516 = scmp.lt.s32.totalorder %s513, 159
      %s517 = scalar_select %p516, %s513, 159
      %s518 = smul.addr %s515, 160
      %s519 = sadd.s32 %s517, %s518
      %s520 = smul.addr %s519, 4
      %s521 = scalar_lea.vmem %s7, %s520
      %s522 = smul.u32 40, %s26
      %p523 = scmp.lt.s32.totalorder %s25, 1
      %s524 = scalar_select %p523, %s25, 1
      %p525 = scmp.lt.s32.totalorder %s26, 3
      %s526 = scalar_select %p525, %s26, 3
      %s527 = smul.addr %s524, 4
      %s528 = sadd.s32 %s526, %s527
      %s529 = scalar_lea.vmem %s8, %s528
      %p530 = scmp.lt.s32.totalorder %s25, 1
      %s531 = scalar_select %p530, %s25, 1
      %p532 = scmp.lt.s32.totalorder %s26, 3
      %s533 = scalar_select %p532, %s26, 3
      %s534 = smul.addr %s531, 4
      %s535 = sadd.s32 %s533, %s534
      %s536 = scalar_lea.vmem %s9, %s535
      %v537 = vld [vmem:[%s491] sm:$0xff]
      %v538 = vld [vmem:[%s491 + $0x8] sm:$0xff]
      %v539 = vld [vmem:[%s491 + $0x10] sm:$0xff]
      %v540 = vld [vmem:[%s491 + $0x18] sm:$0xff]
      %v541 = vld [vmem:[%s491 + $0x20] sm:$0xff]
      %v542 = vld [vmem:[%s491 + $0x28] sm:$0xff]
      %v543 = vld [vmem:[%s491 + $0x30] sm:$0xff]
      %v544 = vld [vmem:[%s491 + $0x38] sm:$0xff]
      %v545 = vld [vmem:[%s491 + $0x40] sm:$0xff]
      %v546 = vld [vmem:[%s491 + $0x48] sm:$0xff]
      %v547 = vld [vmem:[%s491 + $0x50] sm:$0xff]
      %v548 = vld [vmem:[%s491 + $0x58] sm:$0xff]
      %v549 = vld [vmem:[%s491 + $0x60] sm:$0xff]
      %v550 = vld [vmem:[%s491 + $0x68] sm:$0xff]
      %v551 = vld [vmem:[%s491 + $0x70] sm:$0xff]
      %v552 = vld [vmem:[%s491 + $0x78] sm:$0xff]
      %v553 = vld [vmem:[%s491 + $0x80] sm:$0xff]
      %v554 = vld [vmem:[%s491 + $0x88] sm:$0xff]
      %v555 = vld [vmem:[%s491 + $0x90] sm:$0xff]
      %v556 = vld [vmem:[%s491 + $0x98] sm:$0xff]
      %v557 = vld [vmem:[%s3] sm:$0xff]
      %v558 = vld [vmem:[%s3 + $0x8] sm:$0x1]
      %vm559 = vcmask 72704
      %v561 = vsel %vm559, %v537, 0
      %v564 = vsel %vm559, %v538, 0
      %v567 = vsel %vm559, %v539, 0
      %v570 = vsel %vm559, %v540, 0
      %v573 = vsel %vm559, %v541, 0
      %v576 = vsel %vm559, %v542, 0
      %v579 = vsel %vm559, %v543, 0
      %v582 = vsel %vm559, %v544, 0
      %v585 = vsel %vm559, %v545, 0
      %v588 = vsel %vm559, %v546, 0
      %v591 = vsel %vm559, %v547, 0
      %v594 = vsel %vm559, %v548, 0
      %v597 = vsel %vm559, %v549, 0
      %v600 = vsel %vm559, %v550, 0
      %v603 = vsel %vm559, %v551, 0
      %v606 = vsel %vm559, %v552, 0
      %v609 = vsel %vm559, %v553, 0
      %v612 = vsel %vm559, %v554, 0
      %v615 = vsel %vm559, %v555, 0
      %v618 = vsel %vm559, %v556, 0
      %vm620 = vcmask 1040384
      %v622 = vsel %vm620, %v558, 0
      %624 = vmatprep.subr.mxu0 0.0
      %625 = vmatpush1.msra.mxu0 0.0
      %626 = vmatprep.subr.mxu0 0.0
      %627 = vmatpush1.msra.mxu0 0.0
      %628 = vmatprep.subr.mxu0 0.0
      %629 = vmatpush1.msra.mxu0 0.0
      %630 = vmatprep.subr.mxu0 0.0
      %631 = vmatpush1.msra.mxu0 0.0
      %632 = vmatprep.subr.mxu0 0.0
      %633 = vmatpush1.msra.mxu0 0.0
      %634 = vmatprep.subr.mxu0 0.0
      %635 = vmatpush1.msra.mxu0 0.0
      %636 = vmatprep.subr.mxu0 0.0
      %637 = vmatpush1.msra.mxu0 0.0
      %638 = vmatprep.subr.mxu0 0.0
      %639 = vmatpush1.msra.mxu0 0.0
      %640 = vmatprep.subr.mxu0 0.0
      %641 = vmatpush1.msra.mxu0 0.0
      %642 = vmatprep.subr.mxu0 0.0
      %643 = vmatpush1.msra.mxu0 0.0
      %644 = vmatprep.subr.mxu0 0.0
      %645 = vmatpush1.msra.mxu0 0.0
      %646 = vmatprep.subr.mxu0 0.0
      %647 = vmatpush1.msra.mxu0 0.0
      %648 = vmatprep.subr.mxu0 0.0
      %649 = vmatpush1.msra.mxu0 0.0
      %650 = vmatprep.subr.mxu0 0.0
      %651 = vmatpush1.msra.mxu0 0.0
      %652 = vmatprep.subr.mxu0 0.0
      %653 = vmatpush1.msra.mxu0 %v622
      %654 = vmatprep.subr.mxu0 0.0
      %655 = vmatpush1.msra.mxu0 %v557
      %656 = vmatprep.subr.mxu0 0.0
      %657 = vmatpush2.msra.mxu0 0.0
      %658 = vmatprep.subr.mxu0 0.0
      %659 = vmatpush2.msra.mxu0 0.0
      %660 = vmatprep.subr.mxu0 0.0
      %661 = vmatpush2.msra.mxu0 0.0
      %662 = vmatprep.subr.mxu0 0.0
      %663 = vmatpush2.msra.mxu0 0.0
      %664 = vmatprep.subr.mxu0 0.0
      %665 = vmatpush2.msra.mxu0 0.0
      %666 = vmatprep.subr.mxu0 0.0
      %667 = vmatpush2.msra.mxu0 0.0
      %668 = vmatprep.subr.mxu0 0.0
      %669 = vmatpush2.msra.mxu0 0.0
      %670 = vmatprep.subr.mxu0 0.0
      %671 = vmatpush2.msra.mxu0 0.0
      %672 = vmatprep.subr.mxu0 0.0
      %673 = vmatpush2.msra.mxu0 0.0
      %674 = vmatprep.subr.mxu0 0.0
      %675 = vmatpush2.msra.mxu0 0.0
      %676 = vmatprep.subr.mxu0 0.0
      %677 = vmatpush2.msra.mxu0 0.0
      %678 = vmatprep.subr.mxu0 0.0
      %679 = vmatpush2.msra.mxu0 0.0
      %680 = vmatprep.subr.mxu0 0.0
      %681 = vmatpush2.msra.mxu0 0.0
      %682 = vmatprep.subr.mxu0 0.0
      %683 = vmatpush2.msra.mxu0 0.0
      %684 = vmatprep.subr.mxu0 0.0
      %685 = vmatpush2.msra.mxu0 0.0
      %686 = vmatprep.subr.mxu0 0.0
      %687 = vmatpush2.msra.mxu0 0.0
      %688 = vmatprep.mubr.f32.mxu0 0.0
      %689 = vmatmul.mubr.f32.gmra.mxu0 %v561
      %v690 = vpop.f32.mrf.mxu0
      %v691 = vadd.f32 0.0, %v690
      %v692 = vpop.f32.mrf.mxu0
      %693 = vmatprep.mubr.f32.mxu0 0.0
      %694 = vmatmul.mubr.f32.gmra.mxu0 %v564
      %v695 = vpop.f32.mrf.mxu0
      %v696 = vadd.f32 0.0, %v695
      %v697 = vpop.f32.mrf.mxu0
      %698 = vmatprep.mubr.f32.mxu0 0.0
      %699 = vmatmul.mubr.f32.gmra.mxu0 %v567
      %v700 = vpop.f32.mrf.mxu0
      %v701 = vadd.f32 0.0, %v700
      %v702 = vpop.f32.mrf.mxu0
      %703 = vmatprep.mubr.f32.mxu0 0.0
      %704 = vmatmul.mubr.f32.gmra.mxu0 %v570
      %v705 = vpop.f32.mrf.mxu0
      %v706 = vadd.f32 0.0, %v705
      %v707 = vpop.f32.mrf.mxu0
      %708 = vmatprep.mubr.f32.mxu0 0.0
      %709 = vmatmul.mubr.f32.gmra.mxu0 %v573
      %v710 = vpop.f32.mrf.mxu0
      %v711 = vadd.f32 0.0, %v710
      %v712 = vpop.f32.mrf.mxu0
      %713 = vmatprep.mubr.f32.mxu0 0.0
      %714 = vmatmul.mubr.f32.gmra.mxu0 %v576
      %v715 = vpop.f32.mrf.mxu0
      %v716 = vadd.f32 0.0, %v715
      %v717 = vpop.f32.mrf.mxu0
      %718 = vmatprep.mubr.f32.mxu0 0.0
      %719 = vmatmul.mubr.f32.gmra.mxu0 %v579
      %v720 = vpop.f32.mrf.mxu0
      %v721 = vadd.f32 0.0, %v720
      %v722 = vpop.f32.mrf.mxu0
      %723 = vmatprep.mubr.f32.mxu0 0.0
      %724 = vmatmul.mubr.f32.gmra.mxu0 %v582
      %v725 = vpop.f32.mrf.mxu0
      %v726 = vadd.f32 0.0, %v725
      %v727 = vpop.f32.mrf.mxu0
      %728 = vmatprep.mubr.f32.mxu0 0.0
      %729 = vmatmul.mubr.f32.gmra.mxu0 %v585
      %v730 = vpop.f32.mrf.mxu0
      %v731 = vadd.f32 0.0, %v730
      %v732 = vpop.f32.mrf.mxu0
      %733 = vmatprep.mubr.f32.mxu0 0.0
      %734 = vmatmul.mubr.f32.gmra.mxu0 %v588
      %v735 = vpop.f32.mrf.mxu0
      %v736 = vadd.f32 0.0, %v735
      %v737 = vpop.f32.mrf.mxu0
      %738 = vmatprep.mubr.f32.mxu0 0.0
      %739 = vmatmul.mubr.f32.gmra.mxu0 %v591
      %v740 = vpop.f32.mrf.mxu0
      %v741 = vadd.f32 0.0, %v740
      %v742 = vpop.f32.mrf.mxu0
      %743 = vmatprep.mubr.f32.mxu0 0.0
      %744 = vmatmul.mubr.f32.gmra.mxu0 %v594
      %v745 = vpop.f32.mrf.mxu0
      %v746 = vadd.f32 0.0, %v745
      %v747 = vpop.f32.mrf.mxu0
      %748 = vmatprep.mubr.f32.mxu0 0.0
      %749 = vmatmul.mubr.f32.gmra.mxu0 %v597
      %v750 = vpop.f32.mrf.mxu0
      %v751 = vadd.f32 0.0, %v750
      %v752 = vpop.f32.mrf.mxu0
      %753 = vmatprep.mubr.f32.mxu0 0.0
      %754 = vmatmul.mubr.f32.gmra.mxu0 %v600
      %v755 = vpop.f32.mrf.mxu0
      %v756 = vadd.f32 0.0, %v755
      %v757 = vpop.f32.mrf.mxu0
      %758 = vmatprep.mubr.f32.mxu0 0.0
      %759 = vmatmul.mubr.f32.gmra.mxu0 %v603
      %v760 = vpop.f32.mrf.mxu0
      %v761 = vadd.f32 0.0, %v760
      %v762 = vpop.f32.mrf.mxu0
      %763 = vmatprep.mubr.f32.mxu0 0.0
      %764 = vmatmul.mubr.f32.gmra.mxu0 %v606
      %v765 = vpop.f32.mrf.mxu0
      %v766 = vadd.f32 0.0, %v765
      %v767 = vpop.f32.mrf.mxu0
      %768 = vmatprep.mubr.f32.mxu0 0.0
      %769 = vmatmul.mubr.f32.gmra.mxu0 %v609
      %v770 = vpop.f32.mrf.mxu0
      %v771 = vadd.f32 0.0, %v770
      %v772 = vpop.f32.mrf.mxu0
      %773 = vmatprep.mubr.f32.mxu0 0.0
      %774 = vmatmul.mubr.f32.gmra.mxu0 %v612
      %v775 = vpop.f32.mrf.mxu0
      %v776 = vadd.f32 0.0, %v775
      %v777 = vpop.f32.mrf.mxu0
      %778 = vmatprep.mubr.f32.mxu0 0.0
      %779 = vmatmul.mubr.f32.gmra.mxu0 %v615
      %v780 = vpop.f32.mrf.mxu0
      %v781 = vadd.f32 0.0, %v780
      %v782 = vpop.f32.mrf.mxu0
      %783 = vmatprep.mubr.f32.mxu0 0.0
      %784 = vmatmul.mubr.f32.gmra.mxu0 %v618
      %v785 = vpop.f32.mrf.mxu0
      %v786 = vadd.f32 0.0, %v785
      %v787 = vpop.f32.mrf.mxu0
      %788 = vdwg.mxu0
      %s789 = scalar_lea.vmem %s3, 16
      %v790 = vld [vmem:[%s789] sm:$0xff]
      %v791 = vld [vmem:[%s789 + $0x8] sm:$0x1]
      %v793 = vsel %vm620, %v791, 0
      %795 = vmatprep.subr.mxu0 0.0
      %796 = vmatpush1.msra.mxu0 0.0
      %797 = vmatprep.subr.mxu0 0.0
      %798 = vmatpush1.msra.mxu0 0.0
      %799 = vmatprep.subr.mxu0 0.0
      %800 = vmatpush1.msra.mxu0 0.0
      %801 = vmatprep.subr.mxu0 0.0
      %802 = vmatpush1.msra.mxu0 0.0
      %803 = vmatprep.subr.mxu0 0.0
      %804 = vmatpush1.msra.mxu0 0.0
      %805 = vmatprep.subr.mxu0 0.0
      %806 = vmatpush1.msra.mxu0 0.0
      %807 = vmatprep.subr.mxu0 0.0
      %808 = vmatpush1.msra.mxu0 0.0
      %809 = vmatprep.subr.mxu0 0.0
      %810 = vmatpush1.msra.mxu0 0.0
      %811 = vmatprep.subr.mxu0 0.0
      %812 = vmatpush1.msra.mxu0 0.0
      %813 = vmatprep.subr.mxu0 0.0
      %814 = vmatpush1.msra.mxu0 0.0
      %815 = vmatprep.subr.mxu0 0.0
      %816 = vmatpush1.msra.mxu0 0.0
      %817 = vmatprep.subr.mxu0 0.0
      %818 = vmatpush1.msra.mxu0 0.0
      %819 = vmatprep.subr.mxu0 0.0
      %820 = vmatpush1.msra.mxu0 0.0
      %821 = vmatprep.subr.mxu0 0.0
      %822 = vmatpush1.msra.mxu0 0.0
      %823 = vmatprep.subr.mxu0 0.0
      %824 = vmatpush1.msra.mxu0 %v793
      %825 = vmatprep.subr.mxu0 0.0
      %826 = vmatpush1.msra.mxu0 %v790
      %827 = vmatprep.subr.mxu0 0.0
      %828 = vmatpush2.msra.mxu0 0.0
      %829 = vmatprep.subr.mxu0 0.0
      %830 = vmatpush2.msra.mxu0 0.0
      %831 = vmatprep.subr.mxu0 0.0
      %832 = vmatpush2.msra.mxu0 0.0
      %833 = vmatprep.subr.mxu0 0.0
      %834 = vmatpush2.msra.mxu0 0.0
      %835 = vmatprep.subr.mxu0 0.0
      %836 = vmatpush2.msra.mxu0 0.0
      %837 = vmatprep.subr.mxu0 0.0
      %838 = vmatpush2.msra.mxu0 0.0
      %839 = vmatprep.subr.mxu0 0.0
      %840 = vmatpush2.msra.mxu0 0.0
      %841 = vmatprep.subr.mxu0 0.0
      %842 = vmatpush2.msra.mxu0 0.0
      %843 = vmatprep.subr.mxu0 0.0
      %844 = vmatpush2.msra.mxu0 0.0
      %845 = vmatprep.subr.mxu0 0.0
      %846 = vmatpush2.msra.mxu0 0.0
      %847 = vmatprep.subr.mxu0 0.0
      %848 = vmatpush2.msra.mxu0 0.0
      %849 = vmatprep.subr.mxu0 0.0
      %850 = vmatpush2.msra.mxu0 0.0
      %851 = vmatprep.subr.mxu0 0.0
      %852 = vmatpush2.msra.mxu0 0.0
      %853 = vmatprep.subr.mxu0 0.0
      %854 = vmatpush2.msra.mxu0 0.0
      %855 = vmatprep.subr.mxu0 0.0
      %856 = vmatpush2.msra.mxu0 0.0
      %857 = vmatprep.subr.mxu0 0.0
      %858 = vmatpush2.msra.mxu0 0.0
      %859 = vmatprep.mubr.f32.mxu0 0.0
      %860 = vmatmul.mubr.f32.gmra.mxu0 %v561
      %v861 = vpop.f32.mrf.mxu0
      %v862 = vadd.f32 0.0, %v861
      %v863 = vpop.f32.mrf.mxu0
      %864 = vmatprep.mubr.f32.mxu0 0.0
      %865 = vmatmul.mubr.f32.gmra.mxu0 %v564
      %v866 = vpop.f32.mrf.mxu0
      %v867 = vadd.f32 0.0, %v866
      %v868 = vpop.f32.mrf.mxu0
      %869 = vmatprep.mubr.f32.mxu0 0.0
      %870 = vmatmul.mubr.f32.gmra.mxu0 %v567
      %v871 = vpop.f32.mrf.mxu0
      %v872 = vadd.f32 0.0, %v871
      %v873 = vpop.f32.mrf.mxu0
      %874 = vmatprep.mubr.f32.mxu0 0.0
      %875 = vmatmul.mubr.f32.gmra.mxu0 %v570
      %v876 = vpop.f32.mrf.mxu0
      %v877 = vadd.f32 0.0, %v876
      %v878 = vpop.f32.mrf.mxu0
      %879 = vmatprep.mubr.f32.mxu0 0.0
      %880 = vmatmul.mubr.f32.gmra.mxu0 %v573
      %v881 = vpop.f32.mrf.mxu0
      %v882 = vadd.f32 0.0, %v881
      %v883 = vpop.f32.mrf.mxu0
      %884 = vmatprep.mubr.f32.mxu0 0.0
      %885 = vmatmul.mubr.f32.gmra.mxu0 %v576
      %v886 = vpop.f32.mrf.mxu0
      %v887 = vadd.f32 0.0, %v886
      %v888 = vpop.f32.mrf.mxu0
      %889 = vmatprep.mubr.f32.mxu0 0.0
      %890 = vmatmul.mubr.f32.gmra.mxu0 %v579
      %v891 = vpop.f32.mrf.mxu0
      %v892 = vadd.f32 0.0, %v891
      %v893 = vpop.f32.mrf.mxu0
      %894 = vmatprep.mubr.f32.mxu0 0.0
      %895 = vmatmul.mubr.f32.gmra.mxu0 %v582
      %v896 = vpop.f32.mrf.mxu0
      %v897 = vadd.f32 0.0, %v896
      %v898 = vpop.f32.mrf.mxu0
      %899 = vmatprep.mubr.f32.mxu0 0.0
      %900 = vmatmul.mubr.f32.gmra.mxu0 %v585
      %v901 = vpop.f32.mrf.mxu0
      %v902 = vadd.f32 0.0, %v901
      %v903 = vpop.f32.mrf.mxu0
      %904 = vmatprep.mubr.f32.mxu0 0.0
      %905 = vmatmul.mubr.f32.gmra.mxu0 %v588
      %v906 = vpop.f32.mrf.mxu0
      %v907 = vadd.f32 0.0, %v906
      %v908 = vpop.f32.mrf.mxu0
      %909 = vmatprep.mubr.f32.mxu0 0.0
      %910 = vmatmul.mubr.f32.gmra.mxu0 %v591
      %v911 = vpop.f32.mrf.mxu0
      %v912 = vadd.f32 0.0, %v911
      %v913 = vpop.f32.mrf.mxu0
      %914 = vmatprep.mubr.f32.mxu0 0.0
      %915 = vmatmul.mubr.f32.gmra.mxu0 %v594
      %v916 = vpop.f32.mrf.mxu0
      %v917 = vadd.f32 0.0, %v916
      %v918 = vpop.f32.mrf.mxu0
      %919 = vmatprep.mubr.f32.mxu0 0.0
      %920 = vmatmul.mubr.f32.gmra.mxu0 %v597
      %v921 = vpop.f32.mrf.mxu0
      %v922 = vadd.f32 0.0, %v921
      %v923 = vpop.f32.mrf.mxu0
      %924 = vmatprep.mubr.f32.mxu0 0.0
      %925 = vmatmul.mubr.f32.gmra.mxu0 %v600
      %v926 = vpop.f32.mrf.mxu0
      %v927 = vadd.f32 0.0, %v926
      %v928 = vpop.f32.mrf.mxu0
      %929 = vmatprep.mubr.f32.mxu0 0.0
      %930 = vmatmul.mubr.f32.gmra.mxu0 %v603
      %v931 = vpop.f32.mrf.mxu0
      %v932 = vadd.f32 0.0, %v931
      %v933 = vpop.f32.mrf.mxu0
      %934 = vmatprep.mubr.f32.mxu0 0.0
      %935 = vmatmul.mubr.f32.gmra.mxu0 %v606
      %v936 = vpop.f32.mrf.mxu0
      %v937 = vadd.f32 0.0, %v936
      %v938 = vpop.f32.mrf.mxu0
      %939 = vmatprep.mubr.f32.mxu0 0.0
      %940 = vmatmul.mubr.f32.gmra.mxu0 %v609
      %v941 = vpop.f32.mrf.mxu0
      %v942 = vadd.f32 0.0, %v941
      %v943 = vpop.f32.mrf.mxu0
      %944 = vmatprep.mubr.f32.mxu0 0.0
      %945 = vmatmul.mubr.f32.gmra.mxu0 %v612
      %v946 = vpop.f32.mrf.mxu0
      %v947 = vadd.f32 0.0, %v946
      %v948 = vpop.f32.mrf.mxu0
      %949 = vmatprep.mubr.f32.mxu0 0.0
      %950 = vmatmul.mubr.f32.gmra.mxu0 %v615
      %v951 = vpop.f32.mrf.mxu0
      %v952 = vadd.f32 0.0, %v951
      %v953 = vpop.f32.mrf.mxu0
      %954 = vmatprep.mubr.f32.mxu0 0.0
      %955 = vmatmul.mubr.f32.gmra.mxu0 %v618
      %v956 = vpop.f32.mrf.mxu0
      %v957 = vadd.f32 0.0, %v956
      %v958 = vpop.f32.mrf.mxu0
      %959 = vdwg.mxu0
      %vm960 = vcmask 64512
      %961 = vst.msk [vmem:[#allocation2 + $0x28] sm:$0xff] %vm960, %v691
      %962 = vst.msk [vmem:[#allocation2 + $0x30] sm:$0xff] %vm960, %v696
      %963 = vst.msk [vmem:[#allocation2 + $0x38] sm:$0xff] %vm960, %v701
      %964 = vst.msk [vmem:[#allocation2 + $0x40] sm:$0xff] %vm960, %v706
      %965 = vst.msk [vmem:[#allocation2 + $0x48] sm:$0xff] %vm960, %v711
      %966 = vst.msk [vmem:[#allocation2 + $0x50] sm:$0xff] %vm960, %v862
      %967 = vst.msk [vmem:[#allocation2 + $0x58] sm:$0xff] %vm960, %v867
      %968 = vst.msk [vmem:[#allocation2 + $0x60] sm:$0xff] %vm960, %v872
      %969 = vst.msk [vmem:[#allocation2 + $0x68] sm:$0xff] %vm960, %v877
      %970 = vst.msk [vmem:[#allocation2 + $0x70] sm:$0xff] %vm960, %v882
      %971 = vst.msk [vmem:[#allocation2 + $0x78] sm:$0xff] %vm960, %v716
      %972 = vst.msk [vmem:[#allocation2 + $0x80] sm:$0xff] %vm960, %v721
      %973 = vst.msk [vmem:[#allocation2 + $0x88] sm:$0xff] %vm960, %v726
      %974 = vst.msk [vmem:[#allocation2 + $0x90] sm:$0xff] %vm960, %v731
      %975 = vst.msk [vmem:[#allocation2 + $0x98] sm:$0xff] %vm960, %v736
      %976 = vst.msk [vmem:[#allocation2 + $0xa0] sm:$0xff] %vm960, %v887
      %977 = vst.msk [vmem:[#allocation2 + $0xa8] sm:$0xff] %vm960, %v892
      %978 = vst.msk [vmem:[#allocation2 + $0xb0] sm:$0xff] %vm960, %v897
      %979 = vst.msk [vmem:[#allocation2 + $0xb8] sm:$0xff] %vm960, %v902
      %980 = vst.msk [vmem:[#allocation2 + $0xc0] sm:$0xff] %vm960, %v907
      %981 = vst.msk [vmem:[#allocation2 + $0xc8] sm:$0xff] %vm960, %v741
      %982 = vst.msk [vmem:[#allocation2 + $0xd0] sm:$0xff] %vm960, %v746
      %983 = vst.msk [vmem:[#allocation2 + $0xd8] sm:$0xff] %vm960, %v751
      %984 = vst.msk [vmem:[#allocation2 + $0xe0] sm:$0xff] %vm960, %v756
      %985 = vst.msk [vmem:[#allocation2 + $0xe8] sm:$0xff] %vm960, %v761
      %986 = vst.msk [vmem:[#allocation2 + $0xf0] sm:$0xff] %vm960, %v912
      %987 = vst.msk [vmem:[#allocation2 + $0xf8] sm:$0xff] %vm960, %v917
      %988 = vst.msk [vmem:[#allocation2 + $0x100] sm:$0xff] %vm960, %v922
      %989 = vst.msk [vmem:[#allocation2 + $0x108] sm:$0xff] %vm960, %v927
      %990 = vst.msk [vmem:[#allocation2 + $0x110] sm:$0xff] %vm960, %v932
      %991 = vst.msk [vmem:[#allocation2 + $0x118] sm:$0xff] %vm960, %v766
      %992 = vst.msk [vmem:[#allocation2 + $0x120] sm:$0xff] %vm960, %v771
      %993 = vst.msk [vmem:[#allocation2 + $0x128] sm:$0xff] %vm960, %v776
      %994 = vst.msk [vmem:[#allocation2 + $0x130] sm:$0xff] %vm960, %v781
      %995 = vst.msk [vmem:[#allocation2 + $0x138] sm:$0xff] %vm960, %v786
      %996 = vst.msk [vmem:[#allocation2 + $0x140] sm:$0xff] %vm960, %v937
      %997 = vst.msk [vmem:[#allocation2 + $0x148] sm:$0xff] %vm960, %v942
      %998 = vst.msk [vmem:[#allocation2 + $0x150] sm:$0xff] %vm960, %v947
      %999 = vst.msk [vmem:[#allocation2 + $0x158] sm:$0xff] %vm960, %v952
      %1000 = vst.msk [vmem:[#allocation2 + $0x160] sm:$0xff] %vm960, %v957
      %p1001 = scmp.gt.s32.totalorder %s26, 0
      // Predicated region
      $region49: #{decoder_block_forward.2} parent=47 // pred_check
        %p1002 = pneg %p1001
      $region50: #{decoder_block_forward.2} parent=47 // pred_check_branch
        %1004 = sbr.rel (%p1002) target = $region52
      $region51: #{decoder_block_forward.2} parent=47 // pred_region
        %v1005 = vld [vmem:[%s477] sm:$0xff]
        %v1006 = vld [vmem:[%s477 + $0x8] sm:$0xff]
        %v1007 = vld [vmem:[%s477 + $0x10] sm:$0xff]
        %v1008 = vld [vmem:[%s477 + $0x18] sm:$0xff]
        %v1009 = vld [vmem:[%s477 + $0x20] sm:$0xff]
        %v1010 = vld [vmem:[%s789] sm:$0xff]
        %v1011 = vld [vmem:[%s789 + $0x8] sm:$0x1]
        %v1013 = vsel %vm559, %v1005, 0
        %v1016 = vsel %vm559, %v1006, 0
        %v1019 = vsel %vm559, %v1007, 0
        %v1022 = vsel %vm559, %v1008, 0
        %v1025 = vsel %vm559, %v1009, 0
        %v1028 = vsel %vm620, %v1011, 0
        %1030 = vmatprep.subr.mxu0 0.0
        %1031 = vmatpush1.msra.mxu0 0.0
        %1032 = vmatprep.subr.mxu0 0.0
        %1033 = vmatpush1.msra.mxu0 0.0
        %1034 = vmatprep.subr.mxu0 0.0
        %1035 = vmatpush1.msra.mxu0 0.0
        %1036 = vmatprep.subr.mxu0 0.0
        %1037 = vmatpush1.msra.mxu0 0.0
        %1038 = vmatprep.subr.mxu0 0.0
        %1039 = vmatpush1.msra.mxu0 0.0
        %1040 = vmatprep.subr.mxu0 0.0
        %1041 = vmatpush1.msra.mxu0 0.0
        %1042 = vmatprep.subr.mxu0 0.0
        %1043 = vmatpush1.msra.mxu0 0.0
        %1044 = vmatprep.subr.mxu0 0.0
        %1045 = vmatpush1.msra.mxu0 0.0
        %1046 = vmatprep.subr.mxu0 0.0
        %1047 = vmatpush1.msra.mxu0 0.0
        %1048 = vmatprep.subr.mxu0 0.0
        %1049 = vmatpush1.msra.mxu0 0.0
        %1050 = vmatprep.subr.mxu0 0.0
        %1051 = vmatpush1.msra.mxu0 0.0
        %1052 = vmatprep.subr.mxu0 0.0
        %1053 = vmatpush1.msra.mxu0 0.0
        %1054 = vmatprep.subr.mxu0 0.0
        %1055 = vmatpush1.msra.mxu0 0.0
        %1056 = vmatprep.subr.mxu0 0.0
        %1057 = vmatpush1.msra.mxu0 0.0
        %1058 = vmatprep.subr.mxu0 0.0
        %1059 = vmatpush1.msra.mxu0 %v1028
        %1060 = vmatprep.subr.mxu0 0.0
        %1061 = vmatpush1.msra.mxu0 %v1010
        %1062 = vmatprep.subr.mxu0 0.0
        %1063 = vmatpush2.msra.mxu0 0.0
        %1064 = vmatprep.subr.mxu0 0.0
        %1065 = vmatpush2.msra.mxu0 0.0
        %1066 = vmatprep.subr.mxu0 0.0
        %1067 = vmatpush2.msra.mxu0 0.0
        %1068 = vmatprep.subr.mxu0 0.0
        %1069 = vmatpush2.msra.mxu0 0.0
        %1070 = vmatprep.subr.mxu0 0.0
        %1071 = vmatpush2.msra.mxu0 0.0
        %1072 = vmatprep.subr.mxu0 0.0
        %1073 = vmatpush2.msra.mxu0 0.0
        %1074 = vmatprep.subr.mxu0 0.0
        %1075 = vmatpush2.msra.mxu0 0.0
        %1076 = vmatprep.subr.mxu0 0.0
        %1077 = vmatpush2.msra.mxu0 0.0
        %1078 = vmatprep.subr.mxu0 0.0
        %1079 = vmatpush2.msra.mxu0 0.0
        %1080 = vmatprep.subr.mxu0 0.0
        %1081 = vmatpush2.msra.mxu0 0.0
        %1082 = vmatprep.subr.mxu0 0.0
        %1083 = vmatpush2.msra.mxu0 0.0
        %1084 = vmatprep.subr.mxu0 0.0
        %1085 = vmatpush2.msra.mxu0 0.0
        %1086 = vmatprep.subr.mxu0 0.0
        %1087 = vmatpush2.msra.mxu0 0.0
        %1088 = vmatprep.subr.mxu0 0.0
        %1089 = vmatpush2.msra.mxu0 0.0
        %1090 = vmatprep.subr.mxu0 0.0
        %1091 = vmatpush2.msra.mxu0 0.0
        %1092 = vmatprep.subr.mxu0 0.0
        %1093 = vmatpush2.msra.mxu0 0.0
        %1094 = vmatprep.mubr.f32.mxu0 0.0
        %1095 = vmatmul.mubr.f32.gmra.mxu0 %v1013
        %v1096 = vpop.f32.mrf.mxu0
        %v1097 = vadd.f32 0.0, %v1096
        %v1098 = vpop.f32.mrf.mxu0
        %1099 = vmatprep.mubr.f32.mxu0 0.0
        %1100 = vmatmul.mubr.f32.gmra.mxu0 %v1016
        %v1101 = vpop.f32.mrf.mxu0
        %v1102 = vadd.f32 0.0, %v1101
        %v1103 = vpop.f32.mrf.mxu0
        %1104 = vmatprep.mubr.f32.mxu0 0.0
        %1105 = vmatmul.mubr.f32.gmra.mxu0 %v1019
        %v1106 = vpop.f32.mrf.mxu0
        %v1107 = vadd.f32 0.0, %v1106
        %v1108 = vpop.f32.mrf.mxu0
        %1109 = vmatprep.mubr.f32.mxu0 0.0
        %1110 = vmatmul.mubr.f32.gmra.mxu0 %v1022
        %v1111 = vpop.f32.mrf.mxu0
        %v1112 = vadd.f32 0.0, %v1111
        %v1113 = vpop.f32.mrf.mxu0
        %1114 = vmatprep.mubr.f32.mxu0 0.0
        %1115 = vmatmul.mubr.f32.gmra.mxu0 %v1025
        %v1116 = vpop.f32.mrf.mxu0
        %v1117 = vadd.f32 0.0, %v1116
        %v1118 = vpop.f32.mrf.mxu0
        %1119 = vdwg.mxu0
        %1120 = vst.msk [vmem:[#allocation2] sm:$0xff] %vm960, %v1097
        %1121 = vst.msk [vmem:[#allocation2 + $0x8] sm:$0xff] %vm960, %v1102
        %1122 = vst.msk [vmem:[#allocation2 + $0x10] sm:$0xff] %vm960, %v1107
        %1123 = vst.msk [vmem:[#allocation2 + $0x18] sm:$0xff] %vm960, %v1112
        %1124 = vst.msk [vmem:[#allocation2 + $0x20] sm:$0xff] %vm960, %v1117
      $region52: #{decoder_block_forward.2} parent=47 // pred_fallthru
        _
      %p1125 = scmp.eq.s32.totalorder %s26, 0
      // Predicated region
      $region53: #{decoder_block_forward.2} parent=47 // pred_check
        %p1126 = pneg %p1125
      $region54: #{decoder_block_forward.2} parent=47 // pred_check_branch
        %1128 = sbr.rel (%p1126) target = $region56
      $region55: #{decoder_block_forward.2} parent=47 // pred_region
        %1129 = vst.msk [vmem:[#allocation2] sm:$0xff] %vm960, 0.0
        %1130 = vst.msk [vmem:[#allocation2 + $0x8] sm:$0xff] %vm960, 0.0
        %1131 = vst.msk [vmem:[#allocation2 + $0x10] sm:$0xff] %vm960, 0.0
        %1132 = vst.msk [vmem:[#allocation2 + $0x18] sm:$0xff] %vm960, 0.0
        %1133 = vst.msk [vmem:[#allocation2 + $0x20] sm:$0xff] %vm960, 0.0
      $region56: #{decoder_block_forward.2} parent=47 // pred_fallthru
        _
      %p1134 = scmp.lt.s32.totalorder %s26, 3
      // Predicated region
      $region57: #{decoder_block_forward.2} parent=47 // pred_check
        %p1135 = pneg %p1134
      $region58: #{decoder_block_forward.2} parent=47 // pred_check_branch
        %1137 = sbr.rel (%p1135) target = $region60
      $region59: #{decoder_block_forward.2} parent=47 // pred_region
        %v1138 = vld [vmem:[%s505] sm:$0xff]
        %v1139 = vld [vmem:[%s505 + $0x8] sm:$0xff]
        %v1140 = vld [vmem:[%s505 + $0x10] sm:$0xff]
        %v1141 = vld [vmem:[%s505 + $0x18] sm:$0xff]
        %v1142 = vld [vmem:[%s505 + $0x20] sm:$0xff]
        %v1143 = vld [vmem:[%s3] sm:$0xff]
        %v1144 = vld [vmem:[%s3 + $0x8] sm:$0x1]
        %v1146 = vsel %vm559, %v1138, 0
        %v1149 = vsel %vm559, %v1139, 0
        %v1152 = vsel %vm559, %v1140, 0
        %v1155 = vsel %vm559, %v1141, 0
        %v1158 = vsel %vm559, %v1142, 0
        %v1161 = vsel %vm620, %v1144, 0
        %1163 = vmatprep.subr.mxu0 0.0
        %1164 = vmatpush1.msra.mxu0 0.0
        %1165 = vmatprep.subr.mxu0 0.0
        %1166 = vmatpush1.msra.mxu0 0.0
        %1167 = vmatprep.subr.mxu0 0.0
        %1168 = vmatpush1.msra.mxu0 0.0
        %1169 = vmatprep.subr.mxu0 0.0
        %1170 = vmatpush1.msra.mxu0 0.0
        %1171 = vmatprep.subr.mxu0 0.0
        %1172 = vmatpush1.msra.mxu0 0.0
        %1173 = vmatprep.subr.mxu0 0.0
        %1174 = vmatpush1.msra.mxu0 0.0
        %1175 = vmatprep.subr.mxu0 0.0
        %1176 = vmatpush1.msra.mxu0 0.0
        %1177 = vmatprep.subr.mxu0 0.0
        %1178 = vmatpush1.msra.mxu0 0.0
        %1179 = vmatprep.subr.mxu0 0.0
        %1180 = vmatpush1.msra.mxu0 0.0
        %1181 = vmatprep.subr.mxu0 0.0
        %1182 = vmatpush1.msra.mxu0 0.0
        %1183 = vmatprep.subr.mxu0 0.0
        %1184 = vmatpush1.msra.mxu0 0.0
        %1185 = vmatprep.subr.mxu0 0.0
        %1186 = vmatpush1.msra.mxu0 0.0
        %1187 = vmatprep.subr.mxu0 0.0
        %1188 = vmatpush1.msra.mxu0 0.0
        %1189 = vmatprep.subr.mxu0 0.0
        %1190 = vmatpush1.msra.mxu0 0.0
        %1191 = vmatprep.subr.mxu0 0.0
        %1192 = vmatpush1.msra.mxu0 %v1161
        %1193 = vmatprep.subr.mxu0 0.0
        %1194 = vmatpush1.msra.mxu0 %v1143
        %1195 = vmatprep.subr.mxu0 0.0
        %1196 = vmatpush2.msra.mxu0 0.0
        %1197 = vmatprep.subr.mxu0 0.0
        %1198 = vmatpush2.msra.mxu0 0.0
        %1199 = vmatprep.subr.mxu0 0.0
        %1200 = vmatpush2.msra.mxu0 0.0
        %1201 = vmatprep.subr.mxu0 0.0
        %1202 = vmatpush2.msra.mxu0 0.0
        %1203 = vmatprep.subr.mxu0 0.0
        %1204 = vmatpush2.msra.mxu0 0.0
        %1205 = vmatprep.subr.mxu0 0.0
        %1206 = vmatpush2.msra.mxu0 0.0
        %1207 = vmatprep.subr.mxu0 0.0
        %1208 = vmatpush2.msra.mxu0 0.0
        %1209 = vmatprep.subr.mxu0 0.0
        %1210 = vmatpush2.msra.mxu0 0.0
        %1211 = vmatprep.subr.mxu0 0.0
        %1212 = vmatpush2.msra.mxu0 0.0
        %1213 = vmatprep.subr.mxu0 0.0
        %1214 = vmatpush2.msra.mxu0 0.0
        %1215 = vmatprep.subr.mxu0 0.0
        %1216 = vmatpush2.msra.mxu0 0.0
        %1217 = vmatprep.subr.mxu0 0.0
        %1218 = vmatpush2.msra.mxu0 0.0
        %1219 = vmatprep.subr.mxu0 0.0
        %1220 = vmatpush2.msra.mxu0 0.0
        %1221 = vmatprep.subr.mxu0 0.0
        %1222 = vmatpush2.msra.mxu0 0.0
        %1223 = vmatprep.subr.mxu0 0.0
        %1224 = vmatpush2.msra.mxu0 0.0
        %1225 = vmatprep.subr.mxu0 0.0
        %1226 = vmatpush2.msra.mxu0 0.0
        %1227 = vmatprep.mubr.f32.mxu0 0.0
        %1228 = vmatmul.mubr.f32.gmra.mxu0 %v1146
        %v1229 = vpop.f32.mrf.mxu0
        %v1230 = vadd.f32 0.0, %v1229
        %v1231 = vpop.f32.mrf.mxu0
        %1232 = vmatprep.mubr.f32.mxu0 0.0
        %1233 = vmatmul.mubr.f32.gmra.mxu0 %v1149
        %v1234 = vpop.f32.mrf.mxu0
        %v1235 = vadd.f32 0.0, %v1234
        %v1236 = vpop.f32.mrf.mxu0
        %1237 = vmatprep.mubr.f32.mxu0 0.0
        %1238 = vmatmul.mubr.f32.gmra.mxu0 %v1152
        %v1239 = vpop.f32.mrf.mxu0
        %v1240 = vadd.f32 0.0, %v1239
        %v1241 = vpop.f32.mrf.mxu0
        %1242 = vmatprep.mubr.f32.mxu0 0.0
        %1243 = vmatmul.mubr.f32.gmra.mxu0 %v1155
        %v1244 = vpop.f32.mrf.mxu0
        %v1245 = vadd.f32 0.0, %v1244
        %v1246 = vpop.f32.mrf.mxu0
        %1247 = vmatprep.mubr.f32.mxu0 0.0
        %1248 = vmatmul.mubr.f32.gmra.mxu0 %v1158
        %v1249 = vpop.f32.mrf.mxu0
        %v1250 = vadd.f32 0.0, %v1249
        %v1251 = vpop.f32.mrf.mxu0
        %1252 = vdwg.mxu0
        %1253 = vst.msk [vmem:[#allocation2 + $0x168] sm:$0xff] %vm960, %v1230
        %1254 = vst.msk [vmem:[#allocation2 + $0x170] sm:$0xff] %vm960, %v1235
        %1255 = vst.msk [vmem:[#allocation2 + $0x178] sm:$0xff] %vm960, %v1240
        %1256 = vst.msk [vmem:[#allocation2 + $0x180] sm:$0xff] %vm960, %v1245
        %1257 = vst.msk [vmem:[#allocation2 + $0x188] sm:$0xff] %vm960, %v1250
      $region60: #{decoder_block_forward.2} parent=47 // pred_fallthru
        _
      %p1258 = scmp.eq.s32.totalorder %s26, 3
      // Predicated region
      $region61: #{decoder_block_forward.2} parent=47 // pred_check
        %p1259 = pneg %p1258
      $region62: #{decoder_block_forward.2} parent=47 // pred_check_branch
        %1261 = sbr.rel (%p1259) target = $region64
      $region63: #{decoder_block_forward.2} parent=47 // pred_region
        %1262 = vst.msk [vmem:[#allocation2 + $0x168] sm:$0xff] %vm960, 0.0
        %1263 = vst.msk [vmem:[#allocation2 + $0x170] sm:$0xff] %vm960, 0.0
        %1264 = vst.msk [vmem:[#allocation2 + $0x178] sm:$0xff] %vm960, 0.0
        %1265 = vst.msk [vmem:[#allocation2 + $0x180] sm:$0xff] %vm960, 0.0
        %1266 = vst.msk [vmem:[#allocation2 + $0x188] sm:$0xff] %vm960, 0.0
      $region64: #{decoder_block_forward.2} parent=47 // pred_fallthru
        _
      %1267 = vst.msk [vmem:[#allocation2 + $0x190] sm:$0xff] %vm960, 0.0
      %v1268 = vld [vmem:[#allocation2] sm:$0xff]
      %v1269 = vld [vmem:[#allocation2 + $0x8] sm:$0xff]
      %v1270 = vld [vmem:[#allocation2 + $0x10] sm:$0xff]
      %v1271 = vld [vmem:[#allocation2 + $0x18] sm:$0xff]
      %v1272 = vld [vmem:[#allocation2 + $0x20] sm:$0xff]
      %v1273 = vld [vmem:[#allocation2 + $0x28] sm:$0xff]
      %v1274 = vld [vmem:[#allocation2 + $0x30] sm:$0xff]
      %v1275 = vld [vmem:[#allocation2 + $0x38] sm:$0xff]
      %v1276 = vld [vmem:[#allocation2 + $0x40] sm:$0xff]
      %v1277 = vld [vmem:[#allocation2 + $0x48] sm:$0xff]
      %v1278 = vld [vmem:[#allocation2 + $0x50] sm:$0xff]
      %v1279 = vld [vmem:[#allocation2 + $0x58] sm:$0xff]
      %v1280 = vld [vmem:[#allocation2 + $0x60] sm:$0xff]
      %v1281 = vld [vmem:[#allocation2 + $0x68] sm:$0xff]
      %v1282 = vld [vmem:[#allocation2 + $0x70] sm:$0xff]
      %v1283 = vld [vmem:[#allocation2 + $0x78] sm:$0xff]
      %v1284 = vld [vmem:[#allocation2 + $0x80] sm:$0xff]
      %v1285 = vld [vmem:[#allocation2 + $0x88] sm:$0xff]
      %v1286 = vld [vmem:[#allocation2 + $0x90] sm:$0xff]
      %v1287 = vld [vmem:[#allocation2 + $0x98] sm:$0xff]
      %v1288 = vld [vmem:[#allocation2 + $0xa0] sm:$0xff]
      %v1289 = vld [vmem:[#allocation2 + $0xa8] sm:$0xff]
      %v1290 = vld [vmem:[#allocation2 + $0xb0] sm:$0xff]
      %v1291 = vld [vmem:[#allocation2 + $0xb8] sm:$0xff]
      %v1292 = vld [vmem:[#allocation2 + $0xc0] sm:$0xff]
      %v1293 = vld [vmem:[#allocation2 + $0xc8] sm:$0xff]
      %v1294 = vld [vmem:[#allocation2 + $0xd0] sm:$0xff]
      %v1295 = vld [vmem:[#allocation2 + $0xd8] sm:$0xff]
      %v1296 = vld [vmem:[#allocation2 + $0xe0] sm:$0xff]
      %v1297 = vld [vmem:[#allocation2 + $0xe8] sm:$0xff]
      %v1298 = vld [vmem:[#allocation2 + $0xf0] sm:$0xff]
      %v1299 = vld [vmem:[#allocation2 + $0xf8] sm:$0xff]
      %v1300 = vld [vmem:[#allocation2 + $0x100] sm:$0xff]
      %v1301 = vld [vmem:[#allocation2 + $0x108] sm:$0xff]
      %v1302 = vld [vmem:[#allocation2 + $0x110] sm:$0xff]
      %v1303 = vld [vmem:[#allocation2 + $0x118] sm:$0xff]
      %v1304 = vld [vmem:[#allocation2 + $0x120] sm:$0xff]
      %v1305 = vld [vmem:[#allocation2 + $0x128] sm:$0xff]
      %v1306 = vld [vmem:[#allocation2 + $0x130] sm:$0xff]
      %v1307 = vld [vmem:[#allocation2 + $0x138] sm:$0xff]
      %v1308 = vld [vmem:[%s4] sm:$0xff]
      %v1309 = vld [vmem:[#allocation2 + $0x1] sm:$0xff]
      %v1310 = vld [vmem:[#allocation2 + $0x9] sm:$0xff]
      %v1311 = vld [vmem:[#allocation2 + $0x11] sm:$0xff]
      %v1312 = vld [vmem:[#allocation2 + $0x19] sm:$0xff]
      %v1313 = vld [vmem:[#allocation2 + $0x21] sm:$0xff]
      %v1314 = vld [vmem:[#allocation2 + $0x29] sm:$0xff]
      %v1315 = vld [vmem:[#allocation2 + $0x31] sm:$0xff]
      %v1316 = vld [vmem:[#allocation2 + $0x39] sm:$0xff]
      %v1317 = vld [vmem:[#allocation2 + $0x41] sm:$0xff]
      %v1318 = vld [vmem:[#allocation2 + $0x49] sm:$0xff]
      %v1319 = vld [vmem:[#allocation2 + $0x51] sm:$0xff]
      %v1320 = vld [vmem:[#allocation2 + $0x59] sm:$0xff]
      %v1321 = vld [vmem:[#allocation2 + $0x61] sm:$0xff]
      %v1322 = vld [vmem:[#allocation2 + $0x69] sm:$0xff]
      %v1323 = vld [vmem:[#allocation2 + $0x71] sm:$0xff]
      %v1324 = vld [vmem:[#allocation2 + $0x79] sm:$0xff]
      %v1325 = vld [vmem:[#allocation2 + $0x81] sm:$0xff]
      %v1326 = vld [vmem:[#allocation2 + $0x89] sm:$0xff]
      %v1327 = vld [vmem:[#allocation2 + $0x91] sm:$0xff]
      %v1328 = vld [vmem:[#allocation2 + $0x99] sm:$0xff]
      %v1329 = vld [vmem:[#allocation2 + $0xa1] sm:$0xff]
      %v1330 = vld [vmem:[#allocation2 + $0xa9] sm:$0xff]
      %v1331 = vld [vmem:[#allocation2 + $0xb1] sm:$0xff]
      %v1332 = vld [vmem:[#allocation2 + $0xb9] sm:$0xff]
      %v1333 = vld [vmem:[#allocation2 + $0xc1] sm:$0xff]
      %v1334 = vld [vmem:[#allocation2 + $0xc9] sm:$0xff]
      %v1335 = vld [vmem:[#allocation2 + $0xd1] sm:$0xff]
      %v1336 = vld [vmem:[#allocation2 + $0xd9] sm:$0xff]
      %v1337 = vld [vmem:[#allocation2 + $0xe1] sm:$0xff]
      %v1338 = vld [vmem:[#allocation2 + $0xe9] sm:$0xff]
      %v1339 = vld [vmem:[#allocation2 + $0xf1] sm:$0xff]
      %v1340 = vld [vmem:[#allocation2 + $0xf9] sm:$0xff]
      %v1341 = vld [vmem:[#allocation2 + $0x101] sm:$0xff]
      %v1342 = vld [vmem:[#allocation2 + $0x109] sm:$0xff]
      %v1343 = vld [vmem:[#allocation2 + $0x111] sm:$0xff]
      %v1344 = vld [vmem:[#allocation2 + $0x119] sm:$0xff]
      %v1345 = vld [vmem:[#allocation2 + $0x121] sm:$0xff]
      %v1346 = vld [vmem:[#allocation2 + $0x129] sm:$0xff]
      %v1347 = vld [vmem:[#allocation2 + $0x131] sm:$0xff]
      %v1348 = vld [vmem:[#allocation2 + $0x139] sm:$0xff]
      %s1349 = scalar_lea.vmem %s4, 8
      %v1350 = vld [vmem:[%s1349] sm:$0xff]
      %v1352 = vsel %vm960, %v1309, 0
      %v1355 = vsel %vm960, %v1310, 0
      %v1358 = vsel %vm960, %v1311, 0
      %v1361 = vsel %vm960, %v1312, 0
      %v1364 = vsel %vm960, %v1313, 0
      %v1367 = vsel %vm960, %v1314, 0
      %v1370 = vsel %vm960, %v1315, 0
      %v1373 = vsel %vm960, %v1316, 0
      %v1376 = vsel %vm960, %v1317, 0
      %v1379 = vsel %vm960, %v1318, 0
      %v1382 = vsel %vm960, %v1319, 0
      %v1385 = vsel %vm960, %v1320, 0
      %v1388 = vsel %vm960, %v1321, 0
      %v1391 = vsel %vm960, %v1322, 0
      %v1394 = vsel %vm960, %v1323, 0
      %v1397 = vsel %vm960, %v1324, 0
      %v1400 = vsel %vm960, %v1325, 0
      %v1403 = vsel %vm960, %v1326, 0
      %v1406 = vsel %vm960, %v1327, 0
      %v1409 = vsel %vm960, %v1328, 0
      %v1412 = vsel %vm960, %v1329, 0
      %v1415 = vsel %vm960, %v1330, 0
      %v1418 = vsel %vm960, %v1331, 0
      %v1421 = vsel %vm960, %v1332, 0
      %v1424 = vsel %vm960, %v1333, 0
      %v1427 = vsel %vm960, %v1334, 0
      %v1430 = vsel %vm960, %v1335, 0
      %v1433 = vsel %vm960, %v1336, 0
      %v1436 = vsel %vm960, %v1337, 0
      %v1439 = vsel %vm960, %v1338, 0
      %v1442 = vsel %vm960, %v1339, 0
      %v1445 = vsel %vm960, %v1340, 0
      %v1448 = vsel %vm960, %v1341, 0
      %v1451 = vsel %vm960, %v1342, 0
      %v1454 = vsel %vm960, %v1343, 0
      %v1457 = vsel %vm960, %v1344, 0
      %v1460 = vsel %vm960, %v1345, 0
      %v1463 = vsel %vm960, %v1346, 0
      %v1466 = vsel %vm960, %v1347, 0
      %v1469 = vsel %vm960, %v1348, 0
      %1471 = vmatprep.subr.mxu0 0.0
      %1472 = vmatpush1.msra.mxu0 0.0
      %1473 = vmatprep.subr.mxu0 0.0
      %1474 = vmatpush1.msra.mxu0 0.0
      %1475 = vmatprep.subr.mxu0 0.0
      %1476 = vmatpush1.msra.mxu0 0.0
      %1477 = vmatprep.subr.mxu0 0.0
      %1478 = vmatpush1.msra.mxu0 0.0
      %1479 = vmatprep.subr.mxu0 0.0
      %1480 = vmatpush1.msra.mxu0 0.0
      %1481 = vmatprep.subr.mxu0 0.0
      %1482 = vmatpush1.msra.mxu0 0.0
      %1483 = vmatprep.subr.mxu0 0.0
      %1484 = vmatpush1.msra.mxu0 0.0
      %1485 = vmatprep.subr.mxu0 0.0
      %1486 = vmatpush1.msra.mxu0 0.0
      %1487 = vmatprep.subr.mxu0 0.0
      %1488 = vmatpush1.msra.mxu0 0.0
      %1489 = vmatprep.subr.mxu0 0.0
      %1490 = vmatpush1.msra.mxu0 0.0
      %1491 = vmatprep.subr.mxu0 0.0
      %1492 = vmatpush1.msra.mxu0 0.0
      %1493 = vmatprep.subr.mxu0 0.0
      %1494 = vmatpush1.msra.mxu0 0.0
      %1495 = vmatprep.subr.mxu0 0.0
      %1496 = vmatpush1.msra.mxu0 0.0
      %1497 = vmatprep.subr.mxu0 0.0
      %1498 = vmatpush1.msra.mxu0 0.0
      %1499 = vmatprep.subr.mxu0 0.0
      %1500 = vmatpush1.msra.mxu0 0.0
      %1501 = vmatprep.subr.mxu0 0.0
      %1502 = vmatpush1.msra.mxu0 %v1350
      %1503 = vmatprep.subr.mxu0 0.0
      %1504 = vmatpush2.msra.mxu0 0.0
      %1505 = vmatprep.subr.mxu0 0.0
      %1506 = vmatpush2.msra.mxu0 0.0
      %1507 = vmatprep.subr.mxu0 0.0
      %1508 = vmatpush2.msra.mxu0 0.0
      %1509 = vmatprep.subr.mxu0 0.0
      %1510 = vmatpush2.msra.mxu0 0.0
      %1511 = vmatprep.subr.mxu0 0.0
      %1512 = vmatpush2.msra.mxu0 0.0
      %1513 = vmatprep.subr.mxu0 0.0
      %1514 = vmatpush2.msra.mxu0 0.0
      %1515 = vmatprep.subr.mxu0 0.0
      %1516 = vmatpush2.msra.mxu0 0.0
      %1517 = vmatprep.subr.mxu0 0.0
      %1518 = vmatpush2.msra.mxu0 0.0
      %1519 = vmatprep.subr.mxu0 0.0
      %1520 = vmatpush2.msra.mxu0 0.0
      %1521 = vmatprep.subr.mxu0 0.0
      %1522 = vmatpush2.msra.mxu0 0.0
      %1523 = vmatprep.subr.mxu0 0.0
      %1524 = vmatpush2.msra.mxu0 0.0
      %1525 = vmatprep.subr.mxu0 0.0
      %1526 = vmatpush2.msra.mxu0 0.0
      %1527 = vmatprep.subr.mxu0 0.0
      %1528 = vmatpush2.msra.mxu0 0.0
      %1529 = vmatprep.subr.mxu0 0.0
      %1530 = vmatpush2.msra.mxu0 0.0
      %1531 = vmatprep.subr.mxu0 0.0
      %1532 = vmatpush2.msra.mxu0 0.0
      %1533 = vmatprep.subr.mxu0 0.0
      %1534 = vmatpush2.msra.mxu0 0.0
      %1535 = vmatprep.mubr.f32.mxu0 0.0
      %1536 = vmatmul.mubr.f32.gmra.mxu0 %v1352
      %v1537 = vpop.f32.mrf.mxu0
      %v1538 = vadd.f32 0.0, %v1537
      %v1539 = vpop.f32.mrf.mxu0
      %1540 = vmatprep.mubr.f32.mxu0 0.0
      %1541 = vmatmul.mubr.f32.gmra.mxu0 %v1355
      %v1542 = vpop.f32.mrf.mxu0
      %v1543 = vadd.f32 0.0, %v1542
      %v1544 = vpop.f32.mrf.mxu0
      %1545 = vmatprep.mubr.f32.mxu0 0.0
      %1546 = vmatmul.mubr.f32.gmra.mxu0 %v1358
      %v1547 = vpop.f32.mrf.mxu0
      %v1548 = vadd.f32 0.0, %v1547
      %v1549 = vpop.f32.mrf.mxu0
      %1550 = vmatprep.mubr.f32.mxu0 0.0
      %1551 = vmatmul.mubr.f32.gmra.mxu0 %v1361
      %v1552 = vpop.f32.mrf.mxu0
      %v1553 = vadd.f32 0.0, %v1552
      %v1554 = vpop.f32.mrf.mxu0
      %1555 = vmatprep.mubr.f32.mxu0 0.0
      %1556 = vmatmul.mubr.f32.gmra.mxu0 %v1364
      %v1557 = vpop.f32.mrf.mxu0
      %v1558 = vadd.f32 0.0, %v1557
      %v1559 = vpop.f32.mrf.mxu0
      %1560 = vmatprep.mubr.f32.mxu0 0.0
      %1561 = vmatmul.mubr.f32.gmra.mxu0 %v1367
      %v1562 = vpop.f32.mrf.mxu0
      %v1563 = vadd.f32 0.0, %v1562
      %v1564 = vpop.f32.mrf.mxu0
      %1565 = vmatprep.mubr.f32.mxu0 0.0
      %1566 = vmatmul.mubr.f32.gmra.mxu0 %v1370
      %v1567 = vpop.f32.mrf.mxu0
      %v1568 = vadd.f32 0.0, %v1567
      %v1569 = vpop.f32.mrf.mxu0
      %1570 = vmatprep.mubr.f32.mxu0 0.0
      %1571 = vmatmul.mubr.f32.gmra.mxu0 %v1373
      %v1572 = vpop.f32.mrf.mxu0
      %v1573 = vadd.f32 0.0, %v1572
      %v1574 = vpop.f32.mrf.mxu0
      %1575 = vmatprep.mubr.f32.mxu0 0.0
      %1576 = vmatmul.mubr.f32.gmra.mxu0 %v1376
      %v1577 = vpop.f32.mrf.mxu0
      %v1578 = vadd.f32 0.0, %v1577
      %v1579 = vpop.f32.mrf.mxu0
      %1580 = vmatprep.mubr.f32.mxu0 0.0
      %1581 = vmatmul.mubr.f32.gmra.mxu0 %v1379
      %v1582 = vpop.f32.mrf.mxu0
      %v1583 = vadd.f32 0.0, %v1582
      %v1584 = vpop.f32.mrf.mxu0
      %1585 = vmatprep.mubr.f32.mxu0 0.0
      %1586 = vmatmul.mubr.f32.gmra.mxu0 %v1382
      %v1587 = vpop.f32.mrf.mxu0
      %v1588 = vadd.f32 0.0, %v1587
      %v1589 = vpop.f32.mrf.mxu0
      %1590 = vmatprep.mubr.f32.mxu0 0.0
      %1591 = vmatmul.mubr.f32.gmra.mxu0 %v1385
      %v1592 = vpop.f32.mrf.mxu0
      %v1593 = vadd.f32 0.0, %v1592
      %v1594 = vpop.f32.mrf.mxu0
      %1595 = vmatprep.mubr.f32.mxu0 0.0
      %1596 = vmatmul.mubr.f32.gmra.mxu0 %v1388
      %v1597 = vpop.f32.mrf.mxu0
      %v1598 = vadd.f32 0.0, %v1597
      %v1599 = vpop.f32.mrf.mxu0
      %1600 = vmatprep.mubr.f32.mxu0 0.0
      %1601 = vmatmul.mubr.f32.gmra.mxu0 %v1391
      %v1602 = vpop.f32.mrf.mxu0
      %v1603 = vadd.f32 0.0, %v1602
      %v1604 = vpop.f32.mrf.mxu0
      %1605 = vmatprep.mubr.f32.mxu0 0.0
      %1606 = vmatmul.mubr.f32.gmra.mxu0 %v1394
      %v1607 = vpop.f32.mrf.mxu0
      %v1608 = vadd.f32 0.0, %v1607
      %v1609 = vpop.f32.mrf.mxu0
      %1610 = vmatprep.mubr.f32.mxu0 0.0
      %1611 = vmatmul.mubr.f32.gmra.mxu0 %v1397
      %v1612 = vpop.f32.mrf.mxu0
      %v1613 = vadd.f32 0.0, %v1612
      %v1614 = vpop.f32.mrf.mxu0
      %1615 = vmatprep.mubr.f32.mxu0 0.0
      %1616 = vmatmul.mubr.f32.gmra.mxu0 %v1400
      %v1617 = vpop.f32.mrf.mxu0
      %v1618 = vadd.f32 0.0, %v1617
      %v1619 = vpop.f32.mrf.mxu0
      %1620 = vmatprep.mubr.f32.mxu0 0.0
      %1621 = vmatmul.mubr.f32.gmra.mxu0 %v1403
      %v1622 = vpop.f32.mrf.mxu0
      %v1623 = vadd.f32 0.0, %v1622
      %v1624 = vpop.f32.mrf.mxu0
      %1625 = vmatprep.mubr.f32.mxu0 0.0
      %1626 = vmatmul.mubr.f32.gmra.mxu0 %v1406
      %v1627 = vpop.f32.mrf.mxu0
      %v1628 = vadd.f32 0.0, %v1627
      %v1629 = vpop.f32.mrf.mxu0
      %1630 = vmatprep.mubr.f32.mxu0 0.0
      %1631 = vmatmul.mubr.f32.gmra.mxu0 %v1409
      %v1632 = vpop.f32.mrf.mxu0
      %v1633 = vadd.f32 0.0, %v1632
      %v1634 = vpop.f32.mrf.mxu0
      %1635 = vmatprep.mubr.f32.mxu0 0.0
      %1636 = vmatmul.mubr.f32.gmra.mxu0 %v1412
      %v1637 = vpop.f32.mrf.mxu0
      %v1638 = vadd.f32 0.0, %v1637
      %v1639 = vpop.f32.mrf.mxu0
      %1640 = vmatprep.mubr.f32.mxu0 0.0
      %1641 = vmatmul.mubr.f32.gmra.mxu0 %v1415
      %v1642 = vpop.f32.mrf.mxu0
      %v1643 = vadd.f32 0.0, %v1642
      %v1644 = vpop.f32.mrf.mxu0
      %1645 = vmatprep.mubr.f32.mxu0 0.0
      %1646 = vmatmul.mubr.f32.gmra.mxu0 %v1418
      %v1647 = vpop.f32.mrf.mxu0
      %v1648 = vadd.f32 0.0, %v1647
      %v1649 = vpop.f32.mrf.mxu0
      %1650 = vmatprep.mubr.f32.mxu0 0.0
      %1651 = vmatmul.mubr.f32.gmra.mxu0 %v1421
      %v1652 = vpop.f32.mrf.mxu0
      %v1653 = vadd.f32 0.0, %v1652
      %v1654 = vpop.f32.mrf.mxu0
      %1655 = vmatprep.mubr.f32.mxu0 0.0
      %1656 = vmatmul.mubr.f32.gmra.mxu0 %v1424
      %v1657 = vpop.f32.mrf.mxu0
      %v1658 = vadd.f32 0.0, %v1657
      %v1659 = vpop.f32.mrf.mxu0
      %1660 = vmatprep.mubr.f32.mxu0 0.0
      %1661 = vmatmul.mubr.f32.gmra.mxu0 %v1427
      %v1662 = vpop.f32.mrf.mxu0
      %v1663 = vadd.f32 0.0, %v1662
      %v1664 = vpop.f32.mrf.mxu0
      %1665 = vmatprep.mubr.f32.mxu0 0.0
      %1666 = vmatmul.mubr.f32.gmra.mxu0 %v1430
      %v1667 = vpop.f32.mrf.mxu0
      %v1668 = vadd.f32 0.0, %v1667
      %v1669 = vpop.f32.mrf.mxu0
      %1670 = vmatprep.mubr.f32.mxu0 0.0
      %1671 = vmatmul.mubr.f32.gmra.mxu0 %v1433
      %v1672 = vpop.f32.mrf.mxu0
      %v1673 = vadd.f32 0.0, %v1672
      %v1674 = vpop.f32.mrf.mxu0
      %1675 = vmatprep.mubr.f32.mxu0 0.0
      %1676 = vmatmul.mubr.f32.gmra.mxu0 %v1436
      %v1677 = vpop.f32.mrf.mxu0
      %v1678 = vadd.f32 0.0, %v1677
      %v1679 = vpop.f32.mrf.mxu0
      %1680 = vmatprep.mubr.f32.mxu0 0.0
      %1681 = vmatmul.mubr.f32.gmra.mxu0 %v1439
      %v1682 = vpop.f32.mrf.mxu0
      %v1683 = vadd.f32 0.0, %v1682
      %v1684 = vpop.f32.mrf.mxu0
      %1685 = vmatprep.mubr.f32.mxu0 0.0
      %1686 = vmatmul.mubr.f32.gmra.mxu0 %v1442
      %v1687 = vpop.f32.mrf.mxu0
      %v1688 = vadd.f32 0.0, %v1687
      %v1689 = vpop.f32.mrf.mxu0
      %1690 = vmatprep.mubr.f32.mxu0 0.0
      %1691 = vmatmul.mubr.f32.gmra.mxu0 %v1445
      %v1692 = vpop.f32.mrf.mxu0
      %v1693 = vadd.f32 0.0, %v1692
      %v1694 = vpop.f32.mrf.mxu0
      %1695 = vmatprep.mubr.f32.mxu0 0.0
      %1696 = vmatmul.mubr.f32.gmra.mxu0 %v1448
      %v1697 = vpop.f32.mrf.mxu0
      %v1698 = vadd.f32 0.0, %v1697
      %v1699 = vpop.f32.mrf.mxu0
      %1700 = vmatprep.mubr.f32.mxu0 0.0
      %1701 = vmatmul.mubr.f32.gmra.mxu0 %v1451
      %v1702 = vpop.f32.mrf.mxu0
      %v1703 = vadd.f32 0.0, %v1702
      %v1704 = vpop.f32.mrf.mxu0
      %1705 = vmatprep.mubr.f32.mxu0 0.0
      %1706 = vmatmul.mubr.f32.gmra.mxu0 %v1454
      %v1707 = vpop.f32.mrf.mxu0
      %v1708 = vadd.f32 0.0, %v1707
      %v1709 = vpop.f32.mrf.mxu0
      %1710 = vmatprep.mubr.f32.mxu0 0.0
      %1711 = vmatmul.mubr.f32.gmra.mxu0 %v1457
      %v1712 = vpop.f32.mrf.mxu0
      %v1713 = vadd.f32 0.0, %v1712
      %v1714 = vpop.f32.mrf.mxu0
      %1715 = vmatprep.mubr.f32.mxu0 0.0
      %1716 = vmatmul.mubr.f32.gmra.mxu0 %v1460
      %v1717 = vpop.f32.mrf.mxu0
      %v1718 = vadd.f32 0.0, %v1717
      %v1719 = vpop.f32.mrf.mxu0
      %1720 = vmatprep.mubr.f32.mxu0 0.0
      %1721 = vmatmul.mubr.f32.gmra.mxu0 %v1463
      %v1722 = vpop.f32.mrf.mxu0
      %v1723 = vadd.f32 0.0, %v1722
      %v1724 = vpop.f32.mrf.mxu0
      %1725 = vmatprep.mubr.f32.mxu0 0.0
      %1726 = vmatmul.mubr.f32.gmra.mxu0 %v1466
      %v1727 = vpop.f32.mrf.mxu0
      %v1728 = vadd.f32 0.0, %v1727
      %v1729 = vpop.f32.mrf.mxu0
      %1730 = vmatprep.mubr.f32.mxu0 0.0
      %1731 = vmatmul.mubr.f32.gmra.mxu0 %v1469
      %v1732 = vpop.f32.mrf.mxu0
      %v1733 = vadd.f32 0.0, %v1732
      %v1734 = vpop.f32.mrf.mxu0
      %1735 = vdwg.mxu0
      %v1737 = vsel %vm960, %v1268, 0
      %v1740 = vsel %vm960, %v1269, 0
      %v1743 = vsel %vm960, %v1270, 0
      %v1746 = vsel %vm960, %v1271, 0
      %v1749 = vsel %vm960, %v1272, 0
      %v1752 = vsel %vm960, %v1273, 0
      %v1755 = vsel %vm960, %v1274, 0
      %v1758 = vsel %vm960, %v1275, 0
      %v1761 = vsel %vm960, %v1276, 0
      %v1764 = vsel %vm960, %v1277, 0
      %v1767 = vsel %vm960, %v1278, 0
      %v1770 = vsel %vm960, %v1279, 0
      %v1773 = vsel %vm960, %v1280, 0
      %v1776 = vsel %vm960, %v1281, 0
      %v1779 = vsel %vm960, %v1282, 0
      %v1782 = vsel %vm960, %v1283, 0
      %v1785 = vsel %vm960, %v1284, 0
      %v1788 = vsel %vm960, %v1285, 0
      %v1791 = vsel %vm960, %v1286, 0
      %v1794 = vsel %vm960, %v1287, 0
      %v1797 = vsel %vm960, %v1288, 0
      %v1800 = vsel %vm960, %v1289, 0
      %v1803 = vsel %vm960, %v1290, 0
      %v1806 = vsel %vm960, %v1291, 0
      %v1809 = vsel %vm960, %v1292, 0
      %v1812 = vsel %vm960, %v1293, 0
      %v1815 = vsel %vm960, %v1294, 0
      %v1818 = vsel %vm960, %v1295, 0
      %v1821 = vsel %vm960, %v1296, 0
      %v1824 = vsel %vm960, %v1297, 0
      %v1827 = vsel %vm960, %v1298, 0
      %v1830 = vsel %vm960, %v1299, 0
      %v1833 = vsel %vm960, %v1300, 0
      %v1836 = vsel %vm960, %v1301, 0
      %v1839 = vsel %vm960, %v1302, 0
      %v1842 = vsel %vm960, %v1303, 0
      %v1845 = vsel %vm960, %v1304, 0
      %v1848 = vsel %vm960, %v1305, 0
      %v1851 = vsel %vm960, %v1306, 0
      %v1854 = vsel %vm960, %v1307, 0
      %1856 = vmatprep.subr.mxu0 0.0
      %1857 = vmatpush1.msra.mxu0 0.0
      %1858 = vmatprep.subr.mxu0 0.0
      %1859 = vmatpush1.msra.mxu0 0.0
      %1860 = vmatprep.subr.mxu0 0.0
      %1861 = vmatpush1.msra.mxu0 0.0
      %1862 = vmatprep.subr.mxu0 0.0
      %1863 = vmatpush1.msra.mxu0 0.0
      %1864 = vmatprep.subr.mxu0 0.0
      %1865 = vmatpush1.msra.mxu0 0.0
      %1866 = vmatprep.subr.mxu0 0.0
      %1867 = vmatpush1.msra.mxu0 0.0
      %1868 = vmatprep.subr.mxu0 0.0
      %1869 = vmatpush1.msra.mxu0 0.0
      %1870 = vmatprep.subr.mxu0 0.0
      %1871 = vmatpush1.msra.mxu0 0.0
      %1872 = vmatprep.subr.mxu0 0.0
      %1873 = vmatpush1.msra.mxu0 0.0
      %1874 = vmatprep.subr.mxu0 0.0
      %1875 = vmatpush1.msra.mxu0 0.0
      %1876 = vmatprep.subr.mxu0 0.0
      %1877 = vmatpush1.msra.mxu0 0.0
      %1878 = vmatprep.subr.mxu0 0.0
      %1879 = vmatpush1.msra.mxu0 0.0
      %1880 = vmatprep.subr.mxu0 0.0
      %1881 = vmatpush1.msra.mxu0 0.0
      %1882 = vmatprep.subr.mxu0 0.0
      %1883 = vmatpush1.msra.mxu0 0.0
      %1884 = vmatprep.subr.mxu0 0.0
      %1885 = vmatpush1.msra.mxu0 0.0
      %1886 = vmatprep.subr.mxu0 0.0
      %1887 = vmatpush1.msra.mxu0 %v1308
      %1888 = vmatprep.subr.mxu0 0.0
      %1889 = vmatpush2.msra.mxu0 0.0
      %1890 = vmatprep.subr.mxu0 0.0
      %1891 = vmatpush2.msra.mxu0 0.0
      %1892 = vmatprep.subr.mxu0 0.0
      %1893 = vmatpush2.msra.mxu0 0.0
      %1894 = vmatprep.subr.mxu0 0.0
      %1895 = vmatpush2.msra.mxu0 0.0
      %1896 = vmatprep.subr.mxu0 0.0
      %1897 = vmatpush2.msra.mxu0 0.0
      %1898 = vmatprep.subr.mxu0 0.0
      %1899 = vmatpush2.msra.mxu0 0.0
      %1900 = vmatprep.subr.mxu0 0.0
      %1901 = vmatpush2.msra.mxu0 0.0
      %1902 = vmatprep.subr.mxu0 0.0
      %1903 = vmatpush2.msra.mxu0 0.0
      %1904 = vmatprep.subr.mxu0 0.0
      %1905 = vmatpush2.msra.mxu0 0.0
      %1906 = vmatprep.subr.mxu0 0.0
      %1907 = vmatpush2.msra.mxu0 0.0
      %1908 = vmatprep.subr.mxu0 0.0
      %1909 = vmatpush2.msra.mxu0 0.0
      %1910 = vmatprep.subr.mxu0 0.0
      %1911 = vmatpush2.msra.mxu0 0.0
      %1912 = vmatprep.subr.mxu0 0.0
      %1913 = vmatpush2.msra.mxu0 0.0
      %1914 = vmatprep.subr.mxu0 0.0
      %1915 = vmatpush2.msra.mxu0 0.0
      %1916 = vmatprep.subr.mxu0 0.0
      %1917 = vmatpush2.msra.mxu0 0.0
      %1918 = vmatprep.subr.mxu0 0.0
      %1919 = vmatpush2.msra.mxu0 0.0
      %1920 = vmatprep.mubr.f32.mxu0 0.0
      %1921 = vmatmul.mubr.f32.gmra.mxu0 %v1737
      %v1922 = vpop.f32.mrf.mxu0
      %v1923 = vadd.f32 %v1538, %v1922
      %v1924 = vpop.f32.mrf.mxu0
      %1925 = vmatprep.mubr.f32.mxu0 0.0
      %1926 = vmatmul.mubr.f32.gmra.mxu0 %v1740
      %v1927 = vpop.f32.mrf.mxu0
      %v1928 = vadd.f32 %v1543, %v1927
      %v1929 = vpop.f32.mrf.mxu0
      %1930 = vmatprep.mubr.f32.mxu0 0.0
      %1931 = vmatmul.mubr.f32.gmra.mxu0 %v1743
      %v1932 = vpop.f32.mrf.mxu0
      %v1933 = vadd.f32 %v1548, %v1932
      %v1934 = vpop.f32.mrf.mxu0
      %1935 = vmatprep.mubr.f32.mxu0 0.0
      %1936 = vmatmul.mubr.f32.gmra.mxu0 %v1746
      %v1937 = vpop.f32.mrf.mxu0
      %v1938 = vadd.f32 %v1553, %v1937
      %v1939 = vpop.f32.mrf.mxu0
      %1940 = vmatprep.mubr.f32.mxu0 0.0
      %1941 = vmatmul.mubr.f32.gmra.mxu0 %v1749
      %v1942 = vpop.f32.mrf.mxu0
      %v1943 = vadd.f32 %v1558, %v1942
      %v1944 = vpop.f32.mrf.mxu0
      %1945 = vmatprep.mubr.f32.mxu0 0.0
      %1946 = vmatmul.mubr.f32.gmra.mxu0 %v1752
      %v1947 = vpop.f32.mrf.mxu0
      %v1948 = vadd.f32 %v1563, %v1947
      %v1949 = vpop.f32.mrf.mxu0
      %1950 = vmatprep.mubr.f32.mxu0 0.0
      %1951 = vmatmul.mubr.f32.gmra.mxu0 %v1755
      %v1952 = vpop.f32.mrf.mxu0
      %v1953 = vadd.f32 %v1568, %v1952
      %v1954 = vpop.f32.mrf.mxu0
      %1955 = vmatprep.mubr.f32.mxu0 0.0
      %1956 = vmatmul.mubr.f32.gmra.mxu0 %v1758
      %v1957 = vpop.f32.mrf.mxu0
      %v1958 = vadd.f32 %v1573, %v1957
      %v1959 = vpop.f32.mrf.mxu0
      %1960 = vmatprep.mubr.f32.mxu0 0.0
      %1961 = vmatmul.mubr.f32.gmra.mxu0 %v1761
      %v1962 = vpop.f32.mrf.mxu0
      %v1963 = vadd.f32 %v1578, %v1962
      %v1964 = vpop.f32.mrf.mxu0
      %1965 = vmatprep.mubr.f32.mxu0 0.0
      %1966 = vmatmul.mubr.f32.gmra.mxu0 %v1764
      %v1967 = vpop.f32.mrf.mxu0
      %v1968 = vadd.f32 %v1583, %v1967
      %v1969 = vpop.f32.mrf.mxu0
      %1970 = vmatprep.mubr.f32.mxu0 0.0
      %1971 = vmatmul.mubr.f32.gmra.mxu0 %v1767
      %v1972 = vpop.f32.mrf.mxu0
      %v1973 = vadd.f32 %v1588, %v1972
      %v1974 = vpop.f32.mrf.mxu0
      %1975 = vmatprep.mubr.f32.mxu0 0.0
      %1976 = vmatmul.mubr.f32.gmra.mxu0 %v1770
      %v1977 = vpop.f32.mrf.mxu0
      %v1978 = vadd.f32 %v1593, %v1977
      %v1979 = vpop.f32.mrf.mxu0
      %1980 = vmatprep.mubr.f32.mxu0 0.0
      %1981 = vmatmul.mubr.f32.gmra.mxu0 %v1773
      %v1982 = vpop.f32.mrf.mxu0
      %v1983 = vadd.f32 %v1598, %v1982
      %v1984 = vpop.f32.mrf.mxu0
      %1985 = vmatprep.mubr.f32.mxu0 0.0
      %1986 = vmatmul.mubr.f32.gmra.mxu0 %v1776
      %v1987 = vpop.f32.mrf.mxu0
      %v1988 = vadd.f32 %v1603, %v1987
      %v1989 = vpop.f32.mrf.mxu0
      %1990 = vmatprep.mubr.f32.mxu0 0.0
      %1991 = vmatmul.mubr.f32.gmra.mxu0 %v1779
      %v1992 = vpop.f32.mrf.mxu0
      %v1993 = vadd.f32 %v1608, %v1992
      %v1994 = vpop.f32.mrf.mxu0
      %1995 = vmatprep.mubr.f32.mxu0 0.0
      %1996 = vmatmul.mubr.f32.gmra.mxu0 %v1782
      %v1997 = vpop.f32.mrf.mxu0
      %v1998 = vadd.f32 %v1613, %v1997
      %v1999 = vpop.f32.mrf.mxu0
      %2000 = vmatprep.mubr.f32.mxu0 0.0
      %2001 = vmatmul.mubr.f32.gmra.mxu0 %v1785
      %v2002 = vpop.f32.mrf.mxu0
      %v2003 = vadd.f32 %v1618, %v2002
      %v2004 = vpop.f32.mrf.mxu0
      %2005 = vmatprep.mubr.f32.mxu0 0.0
      %2006 = vmatmul.mubr.f32.gmra.mxu0 %v1788
      %v2007 = vpop.f32.mrf.mxu0
      %v2008 = vadd.f32 %v1623, %v2007
      %v2009 = vpop.f32.mrf.mxu0
      %2010 = vmatprep.mubr.f32.mxu0 0.0
      %2011 = vmatmul.mubr.f32.gmra.mxu0 %v1791
      %v2012 = vpop.f32.mrf.mxu0
      %v2013 = vadd.f32 %v1628, %v2012
      %v2014 = vpop.f32.mrf.mxu0
      %2015 = vmatprep.mubr.f32.mxu0 0.0
      %2016 = vmatmul.mubr.f32.gmra.mxu0 %v1794
      %v2017 = vpop.f32.mrf.mxu0
      %v2018 = vadd.f32 %v1633, %v2017
      %v2019 = vpop.f32.mrf.mxu0
      %2020 = vmatprep.mubr.f32.mxu0 0.0
      %2021 = vmatmul.mubr.f32.gmra.mxu0 %v1797
      %v2022 = vpop.f32.mrf.mxu0
      %v2023 = vadd.f32 %v1638, %v2022
      %v2024 = vpop.f32.mrf.mxu0
      %2025 = vmatprep.mubr.f32.mxu0 0.0
      %2026 = vmatmul.mubr.f32.gmra.mxu0 %v1800
      %v2027 = vpop.f32.mrf.mxu0
      %v2028 = vadd.f32 %v1643, %v2027
      %v2029 = vpop.f32.mrf.mxu0
      %2030 = vmatprep.mubr.f32.mxu0 0.0
      %2031 = vmatmul.mubr.f32.gmra.mxu0 %v1803
      %v2032 = vpop.f32.mrf.mxu0
      %v2033 = vadd.f32 %v1648, %v2032
      %v2034 = vpop.f32.mrf.mxu0
      %2035 = vmatprep.mubr.f32.mxu0 0.0
      %2036 = vmatmul.mubr.f32.gmra.mxu0 %v1806
      %v2037 = vpop.f32.mrf.mxu0
      %v2038 = vadd.f32 %v1653, %v2037
      %v2039 = vpop.f32.mrf.mxu0
      %2040 = vmatprep.mubr.f32.mxu0 0.0
      %2041 = vmatmul.mubr.f32.gmra.mxu0 %v1809
      %v2042 = vpop.f32.mrf.mxu0
      %v2043 = vadd.f32 %v1658, %v2042
      %v2044 = vpop.f32.mrf.mxu0
      %2045 = vmatprep.mubr.f32.mxu0 0.0
      %2046 = vmatmul.mubr.f32.gmra.mxu0 %v1812
      %v2047 = vpop.f32.mrf.mxu0
      %v2048 = vadd.f32 %v1663, %v2047
      %v2049 = vpop.f32.mrf.mxu0
      %2050 = vmatprep.mubr.f32.mxu0 0.0
      %2051 = vmatmul.mubr.f32.gmra.mxu0 %v1815
      %v2052 = vpop.f32.mrf.mxu0
      %v2053 = vadd.f32 %v1668, %v2052
      %v2054 = vpop.f32.mrf.mxu0
      %2055 = vmatprep.mubr.f32.mxu0 0.0
      %2056 = vmatmul.mubr.f32.gmra.mxu0 %v1818
      %v2057 = vpop.f32.mrf.mxu0
      %v2058 = vadd.f32 %v1673, %v2057
      %v2059 = vpop.f32.mrf.mxu0
      %2060 = vmatprep.mubr.f32.mxu0 0.0
      %2061 = vmatmul.mubr.f32.gmra.mxu0 %v1821
      %v2062 = vpop.f32.mrf.mxu0
      %v2063 = vadd.f32 %v1678, %v2062
      %v2064 = vpop.f32.mrf.mxu0
      %2065 = vmatprep.mubr.f32.mxu0 0.0
      %2066 = vmatmul.mubr.f32.gmra.mxu0 %v1824
      %v2067 = vpop.f32.mrf.mxu0
      %v2068 = vadd.f32 %v1683, %v2067
      %v2069 = vpop.f32.mrf.mxu0
      %2070 = vmatprep.mubr.f32.mxu0 0.0
      %2071 = vmatmul.mubr.f32.gmra.mxu0 %v1827
      %v2072 = vpop.f32.mrf.mxu0
      %v2073 = vadd.f32 %v1688, %v2072
      %v2074 = vpop.f32.mrf.mxu0
      %2075 = vmatprep.mubr.f32.mxu0 0.0
      %2076 = vmatmul.mubr.f32.gmra.mxu0 %v1830
      %v2077 = vpop.f32.mrf.mxu0
      %v2078 = vadd.f32 %v1693, %v2077
      %v2079 = vpop.f32.mrf.mxu0
      %2080 = vmatprep.mubr.f32.mxu0 0.0
      %2081 = vmatmul.mubr.f32.gmra.mxu0 %v1833
      %v2082 = vpop.f32.mrf.mxu0
      %v2083 = vadd.f32 %v1698, %v2082
      %v2084 = vpop.f32.mrf.mxu0
      %2085 = vmatprep.mubr.f32.mxu0 0.0
      %2086 = vmatmul.mubr.f32.gmra.mxu0 %v1836
      %v2087 = vpop.f32.mrf.mxu0
      %v2088 = vadd.f32 %v1703, %v2087
      %v2089 = vpop.f32.mrf.mxu0
      %2090 = vmatprep.mubr.f32.mxu0 0.0
      %2091 = vmatmul.mubr.f32.gmra.mxu0 %v1839
      %v2092 = vpop.f32.mrf.mxu0
      %v2093 = vadd.f32 %v1708, %v2092
      %v2094 = vpop.f32.mrf.mxu0
      %2095 = vmatprep.mubr.f32.mxu0 0.0
      %2096 = vmatmul.mubr.f32.gmra.mxu0 %v1842
      %v2097 = vpop.f32.mrf.mxu0
      %v2098 = vadd.f32 %v1713, %v2097
      %v2099 = vpop.f32.mrf.mxu0
      %2100 = vmatprep.mubr.f32.mxu0 0.0
      %2101 = vmatmul.mubr.f32.gmra.mxu0 %v1845
      %v2102 = vpop.f32.mrf.mxu0
      %v2103 = vadd.f32 %v1718, %v2102
      %v2104 = vpop.f32.mrf.mxu0
      %2105 = vmatprep.mubr.f32.mxu0 0.0
      %2106 = vmatmul.mubr.f32.gmra.mxu0 %v1848
      %v2107 = vpop.f32.mrf.mxu0
      %v2108 = vadd.f32 %v1723, %v2107
      %v2109 = vpop.f32.mrf.mxu0
      %2110 = vmatprep.mubr.f32.mxu0 0.0
      %2111 = vmatmul.mubr.f32.gmra.mxu0 %v1851
      %v2112 = vpop.f32.mrf.mxu0
      %v2113 = vadd.f32 %v1728, %v2112
      %v2114 = vpop.f32.mrf.mxu0
      %2115 = vmatprep.mubr.f32.mxu0 0.0
      %2116 = vmatmul.mubr.f32.gmra.mxu0 %v1854
      %v2117 = vpop.f32.mrf.mxu0
      %v2118 = vadd.f32 %v1733, %v2117
      %v2119 = vpop.f32.mrf.mxu0
      %2120 = vdwg.mxu0
      %v2121 = vld [vmem:[#allocation2 + $0x2] sm:$0xff]
      %v2122 = vld [vmem:[#allocation2 + $0xa] sm:$0xff]
      %v2123 = vld [vmem:[#allocation2 + $0x12] sm:$0xff]
      %v2124 = vld [vmem:[#allocation2 + $0x1a] sm:$0xff]
      %v2125 = vld [vmem:[#allocation2 + $0x22] sm:$0xff]
      %v2126 = vld [vmem:[#allocation2 + $0x2a] sm:$0xff]
      %v2127 = vld [vmem:[#allocation2 + $0x32] sm:$0xff]
      %v2128 = vld [vmem:[#allocation2 + $0x3a] sm:$0xff]
      %v2129 = vld [vmem:[#allocation2 + $0x42] sm:$0xff]
      %v2130 = vld [vmem:[#allocation2 + $0x4a] sm:$0xff]
      %v2131 = vld [vmem:[#allocation2 + $0x52] sm:$0xff]
      %v2132 = vld [vmem:[#allocation2 + $0x5a] sm:$0xff]
      %v2133 = vld [vmem:[#allocation2 + $0x62] sm:$0xff]
      %v2134 = vld [vmem:[#allocation2 + $0x6a] sm:$0xff]
      %v2135 = vld [vmem:[#allocation2 + $0x72] sm:$0xff]
      %v2136 = vld [vmem:[#allocation2 + $0x7a] sm:$0xff]
      %v2137 = vld [vmem:[#allocation2 + $0x82] sm:$0xff]
      %v2138 = vld [vmem:[#allocation2 + $0x8a] sm:$0xff]
      %v2139 = vld [vmem:[#allocation2 + $0x92] sm:$0xff]
      %v2140 = vld [vmem:[#allocation2 + $0x9a] sm:$0xff]
      %v2141 = vld [vmem:[#allocation2 + $0xa2] sm:$0xff]
      %v2142 = vld [vmem:[#allocation2 + $0xaa] sm:$0xff]
      %v2143 = vld [vmem:[#allocation2 + $0xb2] sm:$0xff]
      %v2144 = vld [vmem:[#allocation2 + $0xba] sm:$0xff]
      %v2145 = vld [vmem:[#allocation2 + $0xc2] sm:$0xff]
      %v2146 = vld [vmem:[#allocation2 + $0xca] sm:$0xff]
      %v2147 = vld [vmem:[#allocation2 + $0xd2] sm:$0xff]
      %v2148 = vld [vmem:[#allocation2 + $0xda] sm:$0xff]
      %v2149 = vld [vmem:[#allocation2 + $0xe2] sm:$0xff]
      %v2150 = vld [vmem:[#allocation2 + $0xea] sm:$0xff]
      %v2151 = vld [vmem:[#allocation2 + $0xf2] sm:$0xff]
      %v2152 = vld [vmem:[#allocation2 + $0xfa] sm:$0xff]
      %v2153 = vld [vmem:[#allocation2 + $0x102] sm:$0xff]
      %v2154 = vld [vmem:[#allocation2 + $0x10a] sm:$0xff]
      %v2155 = vld [vmem:[#allocation2 + $0x112] sm:$0xff]
      %v2156 = vld [vmem:[#allocation2 + $0x11a] sm:$0xff]
      %v2157 = vld [vmem:[#allocation2 + $0x122] sm:$0xff]
      %v2158 = vld [vmem:[#allocation2 + $0x12a] sm:$0xff]
      %v2159 = vld [vmem:[#allocation2 + $0x132] sm:$0xff]
      %v2160 = vld [vmem:[#allocation2 + $0x13a] sm:$0xff]
      %s2161 = scalar_lea.vmem %s4, 16
      %v2162 = vld [vmem:[%s2161] sm:$0xff]
      %v2164 = vsel %vm960, %v2121, 0
      %v2167 = vsel %vm960, %v2122, 0
      %v2170 = vsel %vm960, %v2123, 0
      %v2173 = vsel %vm960, %v2124, 0
      %v2176 = vsel %vm960, %v2125, 0
      %v2179 = vsel %vm960, %v2126, 0
      %v2182 = vsel %vm960, %v2127, 0
      %v2185 = vsel %vm960, %v2128, 0
      %v2188 = vsel %vm960, %v2129, 0
      %v2191 = vsel %vm960, %v2130, 0
      %v2194 = vsel %vm960, %v2131, 0
      %v2197 = vsel %vm960, %v2132, 0
      %v2200 = vsel %vm960, %v2133, 0
      %v2203 = vsel %vm960, %v2134, 0
      %v2206 = vsel %vm960, %v2135, 0
      %v2209 = vsel %vm960, %v2136, 0
      %v2212 = vsel %vm960, %v2137, 0
      %v2215 = vsel %vm960, %v2138, 0
      %v2218 = vsel %vm960, %v2139, 0
      %v2221 = vsel %vm960, %v2140, 0
      %v2224 = vsel %vm960, %v2141, 0
      %v2227 = vsel %vm960, %v2142, 0
      %v2230 = vsel %vm960, %v2143, 0
      %v2233 = vsel %vm960, %v2144, 0
      %v2236 = vsel %vm960, %v2145, 0
      %v2239 = vsel %vm960, %v2146, 0
      %v2242 = vsel %vm960, %v2147, 0
      %v2245 = vsel %vm960, %v2148, 0
      %v2248 = vsel %vm960, %v2149, 0
      %v2251 = vsel %vm960, %v2150, 0
      %v2254 = vsel %vm960, %v2151, 0
      %v2257 = vsel %vm960, %v2152, 0
      %v2260 = vsel %vm960, %v2153, 0
      %v2263 = vsel %vm960, %v2154, 0
      %v2266 = vsel %vm960, %v2155, 0
      %v2269 = vsel %vm960, %v2156, 0
      %v2272 = vsel %vm960, %v2157, 0
      %v2275 = vsel %vm960, %v2158, 0
      %v2278 = vsel %vm960, %v2159, 0
      %v2281 = vsel %vm960, %v2160, 0
      %2283 = vmatprep.subr.mxu0 0.0
      %2284 = vmatpush1.msra.mxu0 0.0
      %2285 = vmatprep.subr.mxu0 0.0
      %2286 = vmatpush1.msra.mxu0 0.0
      %2287 = vmatprep.subr.mxu0 0.0
      %2288 = vmatpush1.msra.mxu0 0.0
      %2289 = vmatprep.subr.mxu0 0.0
      %2290 = vmatpush1.msra.mxu0 0.0
      %2291 = vmatprep.subr.mxu0 0.0
      %2292 = vmatpush1.msra.mxu0 0.0
      %2293 = vmatprep.subr.mxu0 0.0
      %2294 = vmatpush1.msra.mxu0 0.0
      %2295 = vmatprep.subr.mxu0 0.0
      %2296 = vmatpush1.msra.mxu0 0.0
      %2297 = vmatprep.subr.mxu0 0.0
      %2298 = vmatpush1.msra.mxu0 0.0
      %2299 = vmatprep.subr.mxu0 0.0
      %2300 = vmatpush1.msra.mxu0 0.0
      %2301 = vmatprep.subr.mxu0 0.0
      %2302 = vmatpush1.msra.mxu0 0.0
      %2303 = vmatprep.subr.mxu0 0.0
      %2304 = vmatpush1.msra.mxu0 0.0
      %2305 = vmatprep.subr.mxu0 0.0
      %2306 = vmatpush1.msra.mxu0 0.0
      %2307 = vmatprep.subr.mxu0 0.0
      %2308 = vmatpush1.msra.mxu0 0.0
      %2309 = vmatprep.subr.mxu0 0.0
      %2310 = vmatpush1.msra.mxu0 0.0
      %2311 = vmatprep.subr.mxu0 0.0
      %2312 = vmatpush1.msra.mxu0 0.0
      %2313 = vmatprep.subr.mxu0 0.0
      %2314 = vmatpush1.msra.mxu0 %v2162
      %2315 = vmatprep.subr.mxu0 0.0
      %2316 = vmatpush2.msra.mxu0 0.0
      %2317 = vmatprep.subr.mxu0 0.0
      %2318 = vmatpush2.msra.mxu0 0.0
      %2319 = vmatprep.subr.mxu0 0.0
      %2320 = vmatpush2.msra.mxu0 0.0
      %2321 = vmatprep.subr.mxu0 0.0
      %2322 = vmatpush2.msra.mxu0 0.0
      %2323 = vmatprep.subr.mxu0 0.0
      %2324 = vmatpush2.msra.mxu0 0.0
      %2325 = vmatprep.subr.mxu0 0.0
      %2326 = vmatpush2.msra.mxu0 0.0
      %2327 = vmatprep.subr.mxu0 0.0
      %2328 = vmatpush2.msra.mxu0 0.0
      %2329 = vmatprep.subr.mxu0 0.0
      %2330 = vmatpush2.msra.mxu0 0.0
      %2331 = vmatprep.subr.mxu0 0.0
      %2332 = vmatpush2.msra.mxu0 0.0
      %2333 = vmatprep.subr.mxu0 0.0
      %2334 = vmatpush2.msra.mxu0 0.0
      %2335 = vmatprep.subr.mxu0 0.0
      %2336 = vmatpush2.msra.mxu0 0.0
      %2337 = vmatprep.subr.mxu0 0.0
      %2338 = vmatpush2.msra.mxu0 0.0
      %2339 = vmatprep.subr.mxu0 0.0
      %2340 = vmatpush2.msra.mxu0 0.0
      %2341 = vmatprep.subr.mxu0 0.0
      %2342 = vmatpush2.msra.mxu0 0.0
      %2343 = vmatprep.subr.mxu0 0.0
      %2344 = vmatpush2.msra.mxu0 0.0
      %2345 = vmatprep.subr.mxu0 0.0
      %2346 = vmatpush2.msra.mxu0 0.0
      %2347 = vmatprep.mubr.f32.mxu0 0.0
      %2348 = vmatmul.mubr.f32.gmra.mxu0 %v2164
      %v2349 = vpop.f32.mrf.mxu0
      %v2350 = vadd.f32 0.0, %v2349
      %v2351 = vpop.f32.mrf.mxu0
      %2352 = vmatprep.mubr.f32.mxu0 0.0
      %2353 = vmatmul.mubr.f32.gmra.mxu0 %v2167
      %v2354 = vpop.f32.mrf.mxu0
      %v2355 = vadd.f32 0.0, %v2354
      %v2356 = vpop.f32.mrf.mxu0
      %2357 = vmatprep.mubr.f32.mxu0 0.0
      %2358 = vmatmul.mubr.f32.gmra.mxu0 %v2170
      %v2359 = vpop.f32.mrf.mxu0
      %v2360 = vadd.f32 0.0, %v2359
      %v2361 = vpop.f32.mrf.mxu0
      %2362 = vmatprep.mubr.f32.mxu0 0.0
      %2363 = vmatmul.mubr.f32.gmra.mxu0 %v2173
      %v2364 = vpop.f32.mrf.mxu0
      %v2365 = vadd.f32 0.0, %v2364
      %v2366 = vpop.f32.mrf.mxu0
      %2367 = vmatprep.mubr.f32.mxu0 0.0
      %2368 = vmatmul.mubr.f32.gmra.mxu0 %v2176
      %v2369 = vpop.f32.mrf.mxu0
      %v2370 = vadd.f32 0.0, %v2369
      %v2371 = vpop.f32.mrf.mxu0
      %2372 = vmatprep.mubr.f32.mxu0 0.0
      %2373 = vmatmul.mubr.f32.gmra.mxu0 %v2179
      %v2374 = vpop.f32.mrf.mxu0
      %v2375 = vadd.f32 0.0, %v2374
      %v2376 = vpop.f32.mrf.mxu0
      %2377 = vmatprep.mubr.f32.mxu0 0.0
      %2378 = vmatmul.mubr.f32.gmra.mxu0 %v2182
      %v2379 = vpop.f32.mrf.mxu0
      %v2380 = vadd.f32 0.0, %v2379
      %v2381 = vpop.f32.mrf.mxu0
      %2382 = vmatprep.mubr.f32.mxu0 0.0
      %2383 = vmatmul.mubr.f32.gmra.mxu0 %v2185
      %v2384 = vpop.f32.mrf.mxu0
      %v2385 = vadd.f32 0.0, %v2384
      %v2386 = vpop.f32.mrf.mxu0
      %2387 = vmatprep.mubr.f32.mxu0 0.0
      %2388 = vmatmul.mubr.f32.gmra.mxu0 %v2188
      %v2389 = vpop.f32.mrf.mxu0
      %v2390 = vadd.f32 0.0, %v2389
      %v2391 = vpop.f32.mrf.mxu0
      %2392 = vmatprep.mubr.f32.mxu0 0.0
      %2393 = vmatmul.mubr.f32.gmra.mxu0 %v2191
      %v2394 = vpop.f32.mrf.mxu0
      %v2395 = vadd.f32 0.0, %v2394
      %v2396 = vpop.f32.mrf.mxu0
      %2397 = vmatprep.mubr.f32.mxu0 0.0
      %2398 = vmatmul.mubr.f32.gmra.mxu0 %v2194
      %v2399 = vpop.f32.mrf.mxu0
      %v2400 = vadd.f32 0.0, %v2399
      %v2401 = vpop.f32.mrf.mxu0
      %2402 = vmatprep.mubr.f32.mxu0 0.0
      %2403 = vmatmul.mubr.f32.gmra.mxu0 %v2197
      %v2404 = vpop.f32.mrf.mxu0
      %v2405 = vadd.f32 0.0, %v2404
      %v2406 = vpop.f32.mrf.mxu0
      %2407 = vmatprep.mubr.f32.mxu0 0.0
      %2408 = vmatmul.mubr.f32.gmra.mxu0 %v2200
      %v2409 = vpop.f32.mrf.mxu0
      %v2410 = vadd.f32 0.0, %v2409
      %v2411 = vpop.f32.mrf.mxu0
      %2412 = vmatprep.mubr.f32.mxu0 0.0
      %2413 = vmatmul.mubr.f32.gmra.mxu0 %v2203
      %v2414 = vpop.f32.mrf.mxu0
      %v2415 = vadd.f32 0.0, %v2414
      %v2416 = vpop.f32.mrf.mxu0
      %2417 = vmatprep.mubr.f32.mxu0 0.0
      %2418 = vmatmul.mubr.f32.gmra.mxu0 %v2206
      %v2419 = vpop.f32.mrf.mxu0
      %v2420 = vadd.f32 0.0, %v2419
      %v2421 = vpop.f32.mrf.mxu0
      %2422 = vmatprep.mubr.f32.mxu0 0.0
      %2423 = vmatmul.mubr.f32.gmra.mxu0 %v2209
      %v2424 = vpop.f32.mrf.mxu0
      %v2425 = vadd.f32 0.0, %v2424
      %v2426 = vpop.f32.mrf.mxu0
      %2427 = vmatprep.mubr.f32.mxu0 0.0
      %2428 = vmatmul.mubr.f32.gmra.mxu0 %v2212
      %v2429 = vpop.f32.mrf.mxu0
      %v2430 = vadd.f32 0.0, %v2429
      %v2431 = vpop.f32.mrf.mxu0
      %2432 = vmatprep.mubr.f32.mxu0 0.0
      %2433 = vmatmul.mubr.f32.gmra.mxu0 %v2215
      %v2434 = vpop.f32.mrf.mxu0
      %v2435 = vadd.f32 0.0, %v2434
      %v2436 = vpop.f32.mrf.mxu0
      %2437 = vmatprep.mubr.f32.mxu0 0.0
      %2438 = vmatmul.mubr.f32.gmra.mxu0 %v2218
      %v2439 = vpop.f32.mrf.mxu0
      %v2440 = vadd.f32 0.0, %v2439
      %v2441 = vpop.f32.mrf.mxu0
      %2442 = vmatprep.mubr.f32.mxu0 0.0
      %2443 = vmatmul.mubr.f32.gmra.mxu0 %v2221
      %v2444 = vpop.f32.mrf.mxu0
      %v2445 = vadd.f32 0.0, %v2444
      %v2446 = vpop.f32.mrf.mxu0
      %2447 = vmatprep.mubr.f32.mxu0 0.0
      %2448 = vmatmul.mubr.f32.gmra.mxu0 %v2224
      %v2449 = vpop.f32.mrf.mxu0
      %v2450 = vadd.f32 0.0, %v2449
      %v2451 = vpop.f32.mrf.mxu0
      %2452 = vmatprep.mubr.f32.mxu0 0.0
      %2453 = vmatmul.mubr.f32.gmra.mxu0 %v2227
      %v2454 = vpop.f32.mrf.mxu0
      %v2455 = vadd.f32 0.0, %v2454
      %v2456 = vpop.f32.mrf.mxu0
      %2457 = vmatprep.mubr.f32.mxu0 0.0
      %2458 = vmatmul.mubr.f32.gmra.mxu0 %v2230
      %v2459 = vpop.f32.mrf.mxu0
      %v2460 = vadd.f32 0.0, %v2459
      %v2461 = vpop.f32.mrf.mxu0
      %2462 = vmatprep.mubr.f32.mxu0 0.0
      %2463 = vmatmul.mubr.f32.gmra.mxu0 %v2233
      %v2464 = vpop.f32.mrf.mxu0
      %v2465 = vadd.f32 0.0, %v2464
      %v2466 = vpop.f32.mrf.mxu0
      %2467 = vmatprep.mubr.f32.mxu0 0.0
      %2468 = vmatmul.mubr.f32.gmra.mxu0 %v2236
      %v2469 = vpop.f32.mrf.mxu0
      %v2470 = vadd.f32 0.0, %v2469
      %v2471 = vpop.f32.mrf.mxu0
      %2472 = vmatprep.mubr.f32.mxu0 0.0
      %2473 = vmatmul.mubr.f32.gmra.mxu0 %v2239
      %v2474 = vpop.f32.mrf.mxu0
      %v2475 = vadd.f32 0.0, %v2474
      %v2476 = vpop.f32.mrf.mxu0
      %2477 = vmatprep.mubr.f32.mxu0 0.0
      %2478 = vmatmul.mubr.f32.gmra.mxu0 %v2242
      %v2479 = vpop.f32.mrf.mxu0
      %v2480 = vadd.f32 0.0, %v2479
      %v2481 = vpop.f32.mrf.mxu0
      %2482 = vmatprep.mubr.f32.mxu0 0.0
      %2483 = vmatmul.mubr.f32.gmra.mxu0 %v2245
      %v2484 = vpop.f32.mrf.mxu0
      %v2485 = vadd.f32 0.0, %v2484
      %v2486 = vpop.f32.mrf.mxu0
      %2487 = vmatprep.mubr.f32.mxu0 0.0
      %2488 = vmatmul.mubr.f32.gmra.mxu0 %v2248
      %v2489 = vpop.f32.mrf.mxu0
      %v2490 = vadd.f32 0.0, %v2489
      %v2491 = vpop.f32.mrf.mxu0
      %2492 = vmatprep.mubr.f32.mxu0 0.0
      %2493 = vmatmul.mubr.f32.gmra.mxu0 %v2251
      %v2494 = vpop.f32.mrf.mxu0
      %v2495 = vadd.f32 0.0, %v2494
      %v2496 = vpop.f32.mrf.mxu0
      %2497 = vmatprep.mubr.f32.mxu0 0.0
      %2498 = vmatmul.mubr.f32.gmra.mxu0 %v2254
      %v2499 = vpop.f32.mrf.mxu0
      %v2500 = vadd.f32 0.0, %v2499
      %v2501 = vpop.f32.mrf.mxu0
      %2502 = vmatprep.mubr.f32.mxu0 0.0
      %2503 = vmatmul.mubr.f32.gmra.mxu0 %v2257
      %v2504 = vpop.f32.mrf.mxu0
      %v2505 = vadd.f32 0.0, %v2504
      %v2506 = vpop.f32.mrf.mxu0
      %2507 = vmatprep.mubr.f32.mxu0 0.0
      %2508 = vmatmul.mubr.f32.gmra.mxu0 %v2260
      %v2509 = vpop.f32.mrf.mxu0
      %v2510 = vadd.f32 0.0, %v2509
      %v2511 = vpop.f32.mrf.mxu0
      %2512 = vmatprep.mubr.f32.mxu0 0.0
      %2513 = vmatmul.mubr.f32.gmra.mxu0 %v2263
      %v2514 = vpop.f32.mrf.mxu0
      %v2515 = vadd.f32 0.0, %v2514
      %v2516 = vpop.f32.mrf.mxu0
      %2517 = vmatprep.mubr.f32.mxu0 0.0
      %2518 = vmatmul.mubr.f32.gmra.mxu0 %v2266
      %v2519 = vpop.f32.mrf.mxu0
      %v2520 = vadd.f32 0.0, %v2519
      %v2521 = vpop.f32.mrf.mxu0
      %2522 = vmatprep.mubr.f32.mxu0 0.0
      %2523 = vmatmul.mubr.f32.gmra.mxu0 %v2269
      %v2524 = vpop.f32.mrf.mxu0
      %v2525 = vadd.f32 0.0, %v2524
      %v2526 = vpop.f32.mrf.mxu0
      %2527 = vmatprep.mubr.f32.mxu0 0.0
      %2528 = vmatmul.mubr.f32.gmra.mxu0 %v2272
      %v2529 = vpop.f32.mrf.mxu0
      %v2530 = vadd.f32 0.0, %v2529
      %v2531 = vpop.f32.mrf.mxu0
      %2532 = vmatprep.mubr.f32.mxu0 0.0
      %2533 = vmatmul.mubr.f32.gmra.mxu0 %v2275
      %v2534 = vpop.f32.mrf.mxu0
      %v2535 = vadd.f32 0.0, %v2534
      %v2536 = vpop.f32.mrf.mxu0
      %2537 = vmatprep.mubr.f32.mxu0 0.0
      %2538 = vmatmul.mubr.f32.gmra.mxu0 %v2278
      %v2539 = vpop.f32.mrf.mxu0
      %v2540 = vadd.f32 0.0, %v2539
      %v2541 = vpop.f32.mrf.mxu0
      %2542 = vmatprep.mubr.f32.mxu0 0.0
      %2543 = vmatmul.mubr.f32.gmra.mxu0 %v2281
      %v2544 = vpop.f32.mrf.mxu0
      %v2545 = vadd.f32 0.0, %v2544
      %v2546 = vpop.f32.mrf.mxu0
      %2547 = vdwg.mxu0
      %v2548 = vadd.f32 %v1923, %v2350
      %v2549 = vadd.f32 %v1928, %v2355
      %v2550 = vadd.f32 %v1933, %v2360
      %v2551 = vadd.f32 %v1938, %v2365
      %v2552 = vadd.f32 %v1943, %v2370
      %v2553 = vadd.f32 %v1948, %v2375
      %v2554 = vadd.f32 %v1953, %v2380
      %v2555 = vadd.f32 %v1958, %v2385
      %v2556 = vadd.f32 %v1963, %v2390
      %v2557 = vadd.f32 %v1968, %v2395
      %v2558 = vadd.f32 %v1973, %v2400
      %v2559 = vadd.f32 %v1978, %v2405
      %v2560 = vadd.f32 %v1983, %v2410
      %v2561 = vadd.f32 %v1988, %v2415
      %v2562 = vadd.f32 %v1993, %v2420
      %v2563 = vadd.f32 %v1998, %v2425
      %v2564 = vadd.f32 %v2003, %v2430
      %v2565 = vadd.f32 %v2008, %v2435
      %v2566 = vadd.f32 %v2013, %v2440
      %v2567 = vadd.f32 %v2018, %v2445
      %v2568 = vadd.f32 %v2023, %v2450
      %v2569 = vadd.f32 %v2028, %v2455
      %v2570 = vadd.f32 %v2033, %v2460
      %v2571 = vadd.f32 %v2038, %v2465
      %v2572 = vadd.f32 %v2043, %v2470
      %v2573 = vadd.f32 %v2048, %v2475
      %v2574 = vadd.f32 %v2053, %v2480
      %v2575 = vadd.f32 %v2058, %v2485
      %v2576 = vadd.f32 %v2063, %v2490
      %v2577 = vadd.f32 %v2068, %v2495
      %v2578 = vadd.f32 %v2073, %v2500
      %v2579 = vadd.f32 %v2078, %v2505
      %v2580 = vadd.f32 %v2083, %v2510
      %v2581 = vadd.f32 %v2088, %v2515
      %v2582 = vadd.f32 %v2093, %v2520
      %v2583 = vadd.f32 %v2098, %v2525
      %v2584 = vadd.f32 %v2103, %v2530
      %v2585 = vadd.f32 %v2108, %v2535
      %v2586 = vadd.f32 %v2113, %v2540
      %v2587 = vadd.f32 %v2118, %v2545
      %v2588 = vld [vmem:[#allocation2 + $0x28] sm:$0xff]
      %v2589 = vld [vmem:[#allocation2 + $0x30] sm:$0xff]
      %v2590 = vld [vmem:[#allocation2 + $0x38] sm:$0xff]
      %v2591 = vld [vmem:[#allocation2 + $0x40] sm:$0xff]
      %v2592 = vld [vmem:[#allocation2 + $0x48] sm:$0xff]
      %v2593 = vld [vmem:[#allocation2 + $0x50] sm:$0xff]
      %v2594 = vld [vmem:[#allocation2 + $0x58] sm:$0xff]
      %v2595 = vld [vmem:[#allocation2 + $0x60] sm:$0xff]
      %v2596 = vld [vmem:[#allocation2 + $0x68] sm:$0xff]
      %v2597 = vld [vmem:[#allocation2 + $0x70] sm:$0xff]
      %v2598 = vld [vmem:[#allocation2 + $0x78] sm:$0xff]
      %v2599 = vld [vmem:[#allocation2 + $0x80] sm:$0xff]
      %v2600 = vld [vmem:[#allocation2 + $0x88] sm:$0xff]
      %v2601 = vld [vmem:[#allocation2 + $0x90] sm:$0xff]
      %v2602 = vld [vmem:[#allocation2 + $0x98] sm:$0xff]
      %v2603 = vld [vmem:[#allocation2 + $0xa0] sm:$0xff]
      %v2604 = vld [vmem:[#allocation2 + $0xa8] sm:$0xff]
      %v2605 = vld [vmem:[#allocation2 + $0xb0] sm:$0xff]
      %v2606 = vld [vmem:[#allocation2 + $0xb8] sm:$0xff]
      %v2607 = vld [vmem:[#allocation2 + $0xc0] sm:$0xff]
      %v2608 = vld [vmem:[#allocation2 + $0xc8] sm:$0xff]
      %v2609 = vld [vmem:[#allocation2 + $0xd0] sm:$0xff]
      %v2610 = vld [vmem:[#allocation2 + $0xd8] sm:$0xff]
      %v2611 = vld [vmem:[#allocation2 + $0xe0] sm:$0xff]
      %v2612 = vld [vmem:[#allocation2 + $0xe8] sm:$0xff]
      %v2613 = vld [vmem:[#allocation2 + $0xf0] sm:$0xff]
      %v2614 = vld [vmem:[#allocation2 + $0xf8] sm:$0xff]
      %v2615 = vld [vmem:[#allocation2 + $0x100] sm:$0xff]
      %v2616 = vld [vmem:[#allocation2 + $0x108] sm:$0xff]
      %v2617 = vld [vmem:[#allocation2 + $0x110] sm:$0xff]
      %v2618 = vld [vmem:[#allocation2 + $0x118] sm:$0xff]
      %v2619 = vld [vmem:[#allocation2 + $0x120] sm:$0xff]
      %v2620 = vld [vmem:[#allocation2 + $0x128] sm:$0xff]
      %v2621 = vld [vmem:[#allocation2 + $0x130] sm:$0xff]
      %v2622 = vld [vmem:[#allocation2 + $0x138] sm:$0xff]
      %v2623 = vld [vmem:[#allocation2 + $0x140] sm:$0xff]
      %v2624 = vld [vmem:[#allocation2 + $0x148] sm:$0xff]
      %v2625 = vld [vmem:[#allocation2 + $0x150] sm:$0xff]
      %v2626 = vld [vmem:[#allocation2 + $0x158] sm:$0xff]
      %v2627 = vld [vmem:[#allocation2 + $0x160] sm:$0xff]
      %s2628 = scalar_lea.vmem %s4, 24
      %v2629 = vld [vmem:[%s2628] sm:$0xff]
      %v2631 = vsel %vm960, %v2588, 0
      %v2634 = vsel %vm960, %v2589, 0
      %v2637 = vsel %vm960, %v2590, 0
      %v2640 = vsel %vm960, %v2591, 0
      %v2643 = vsel %vm960, %v2592, 0
      %v2646 = vsel %vm960, %v2593, 0
      %v2649 = vsel %vm960, %v2594, 0
      %v2652 = vsel %vm960, %v2595, 0
      %v2655 = vsel %vm960, %v2596, 0
      %v2658 = vsel %vm960, %v2597, 0
      %v2661 = vsel %vm960, %v2598, 0
      %v2664 = vsel %vm960, %v2599, 0
      %v2667 = vsel %vm960, %v2600, 0
      %v2670 = vsel %vm960, %v2601, 0
      %v2673 = vsel %vm960, %v2602, 0
      %v2676 = vsel %vm960, %v2603, 0
      %v2679 = vsel %vm960, %v2604, 0
      %v2682 = vsel %vm960, %v2605, 0
      %v2685 = vsel %vm960, %v2606, 0
      %v2688 = vsel %vm960, %v2607, 0
      %v2691 = vsel %vm960, %v2608, 0
      %v2694 = vsel %vm960, %v2609, 0
      %v2697 = vsel %vm960, %v2610, 0
      %v2700 = vsel %vm960, %v2611, 0
      %v2703 = vsel %vm960, %v2612, 0
      %v2706 = vsel %vm960, %v2613, 0
      %v2709 = vsel %vm960, %v2614, 0
      %v2712 = vsel %vm960, %v2615, 0
      %v2715 = vsel %vm960, %v2616, 0
      %v2718 = vsel %vm960, %v2617, 0
      %v2721 = vsel %vm960, %v2618, 0
      %v2724 = vsel %vm960, %v2619, 0
      %v2727 = vsel %vm960, %v2620, 0
      %v2730 = vsel %vm960, %v2621, 0
      %v2733 = vsel %vm960, %v2622, 0
      %v2736 = vsel %vm960, %v2623, 0
      %v2739 = vsel %vm960, %v2624, 0
      %v2742 = vsel %vm960, %v2625, 0
      %v2745 = vsel %vm960, %v2626, 0
      %v2748 = vsel %vm960, %v2627, 0
      %2750 = vmatprep.subr.mxu0 0.0
      %2751 = vmatpush1.msra.mxu0 0.0
      %2752 = vmatprep.subr.mxu0 0.0
      %2753 = vmatpush1.msra.mxu0 0.0
      %2754 = vmatprep.subr.mxu0 0.0
      %2755 = vmatpush1.msra.mxu0 0.0
      %2756 = vmatprep.subr.mxu0 0.0
      %2757 = vmatpush1.msra.mxu0 0.0
      %2758 = vmatprep.subr.mxu0 0.0
      %2759 = vmatpush1.msra.mxu0 0.0
      %2760 = vmatprep.subr.mxu0 0.0
      %2761 = vmatpush1.msra.mxu0 0.0
      %2762 = vmatprep.subr.mxu0 0.0
      %2763 = vmatpush1.msra.mxu0 0.0
      %2764 = vmatprep.subr.mxu0 0.0
      %2765 = vmatpush1.msra.mxu0 0.0
      %2766 = vmatprep.subr.mxu0 0.0
      %2767 = vmatpush1.msra.mxu0 0.0
      %2768 = vmatprep.subr.mxu0 0.0
      %2769 = vmatpush1.msra.mxu0 0.0
      %2770 = vmatprep.subr.mxu0 0.0
      %2771 = vmatpush1.msra.mxu0 0.0
      %2772 = vmatprep.subr.mxu0 0.0
      %2773 = vmatpush1.msra.mxu0 0.0
      %2774 = vmatprep.subr.mxu0 0.0
      %2775 = vmatpush1.msra.mxu0 0.0
      %2776 = vmatprep.subr.mxu0 0.0
      %2777 = vmatpush1.msra.mxu0 0.0
      %2778 = vmatprep.subr.mxu0 0.0
      %2779 = vmatpush1.msra.mxu0 0.0
      %2780 = vmatprep.subr.mxu0 0.0
      %2781 = vmatpush1.msra.mxu0 %v2629
      %2782 = vmatprep.subr.mxu0 0.0
      %2783 = vmatpush2.msra.mxu0 0.0
      %2784 = vmatprep.subr.mxu0 0.0
      %2785 = vmatpush2.msra.mxu0 0.0
      %2786 = vmatprep.subr.mxu0 0.0
      %2787 = vmatpush2.msra.mxu0 0.0
      %2788 = vmatprep.subr.mxu0 0.0
      %2789 = vmatpush2.msra.mxu0 0.0
      %2790 = vmatprep.subr.mxu0 0.0
      %2791 = vmatpush2.msra.mxu0 0.0
      %2792 = vmatprep.subr.mxu0 0.0
      %2793 = vmatpush2.msra.mxu0 0.0
      %2794 = vmatprep.subr.mxu0 0.0
      %2795 = vmatpush2.msra.mxu0 0.0
      %2796 = vmatprep.subr.mxu0 0.0
      %2797 = vmatpush2.msra.mxu0 0.0
      %2798 = vmatprep.subr.mxu0 0.0
      %2799 = vmatpush2.msra.mxu0 0.0
      %2800 = vmatprep.subr.mxu0 0.0
      %2801 = vmatpush2.msra.mxu0 0.0
      %2802 = vmatprep.subr.mxu0 0.0
      %2803 = vmatpush2.msra.mxu0 0.0
      %2804 = vmatprep.subr.mxu0 0.0
      %2805 = vmatpush2.msra.mxu0 0.0
      %2806 = vmatprep.subr.mxu0 0.0
      %2807 = vmatpush2.msra.mxu0 0.0
      %2808 = vmatprep.subr.mxu0 0.0
      %2809 = vmatpush2.msra.mxu0 0.0
      %2810 = vmatprep.subr.mxu0 0.0
      %2811 = vmatpush2.msra.mxu0 0.0
      %2812 = vmatprep.subr.mxu0 0.0
      %2813 = vmatpush2.msra.mxu0 0.0
      %2814 = vmatprep.mubr.f32.mxu0 0.0
      %2815 = vmatmul.mubr.f32.gmra.mxu0 %v2631
      %v2816 = vpop.f32.mrf.mxu0
      %v2817 = vadd.f32 0.0, %v2816
      %v2818 = vpop.f32.mrf.mxu0
      %2819 = vmatprep.mubr.f32.mxu0 0.0
      %2820 = vmatmul.mubr.f32.gmra.mxu0 %v2634
      %v2821 = vpop.f32.mrf.mxu0
      %v2822 = vadd.f32 0.0, %v2821
      %v2823 = vpop.f32.mrf.mxu0
      %2824 = vmatprep.mubr.f32.mxu0 0.0
      %2825 = vmatmul.mubr.f32.gmra.mxu0 %v2637
      %v2826 = vpop.f32.mrf.mxu0
      %v2827 = vadd.f32 0.0, %v2826
      %v2828 = vpop.f32.mrf.mxu0
      %2829 = vmatprep.mubr.f32.mxu0 0.0
      %2830 = vmatmul.mubr.f32.gmra.mxu0 %v2640
      %v2831 = vpop.f32.mrf.mxu0
      %v2832 = vadd.f32 0.0, %v2831
      %v2833 = vpop.f32.mrf.mxu0
      %2834 = vmatprep.mubr.f32.mxu0 0.0
      %2835 = vmatmul.mubr.f32.gmra.mxu0 %v2643
      %v2836 = vpop.f32.mrf.mxu0
      %v2837 = vadd.f32 0.0, %v2836
      %v2838 = vpop.f32.mrf.mxu0
      %2839 = vmatprep.mubr.f32.mxu0 0.0
      %2840 = vmatmul.mubr.f32.gmra.mxu0 %v2646
      %v2841 = vpop.f32.mrf.mxu0
      %v2842 = vadd.f32 0.0, %v2841
      %v2843 = vpop.f32.mrf.mxu0
      %2844 = vmatprep.mubr.f32.mxu0 0.0
      %2845 = vmatmul.mubr.f32.gmra.mxu0 %v2649
      %v2846 = vpop.f32.mrf.mxu0
      %v2847 = vadd.f32 0.0, %v2846
      %v2848 = vpop.f32.mrf.mxu0
      %2849 = vmatprep.mubr.f32.mxu0 0.0
      %2850 = vmatmul.mubr.f32.gmra.mxu0 %v2652
      %v2851 = vpop.f32.mrf.mxu0
      %v2852 = vadd.f32 0.0, %v2851
      %v2853 = vpop.f32.mrf.mxu0
      %2854 = vmatprep.mubr.f32.mxu0 0.0
      %2855 = vmatmul.mubr.f32.gmra.mxu0 %v2655
      %v2856 = vpop.f32.mrf.mxu0
      %v2857 = vadd.f32 0.0, %v2856
      %v2858 = vpop.f32.mrf.mxu0
      %2859 = vmatprep.mubr.f32.mxu0 0.0
      %2860 = vmatmul.mubr.f32.gmra.mxu0 %v2658
      %v2861 = vpop.f32.mrf.mxu0
      %v2862 = vadd.f32 0.0, %v2861
      %v2863 = vpop.f32.mrf.mxu0
      %2864 = vmatprep.mubr.f32.mxu0 0.0
      %2865 = vmatmul.mubr.f32.gmra.mxu0 %v2661
      %v2866 = vpop.f32.mrf.mxu0
      %v2867 = vadd.f32 0.0, %v2866
      %v2868 = vpop.f32.mrf.mxu0
      %2869 = vmatprep.mubr.f32.mxu0 0.0
      %2870 = vmatmul.mubr.f32.gmra.mxu0 %v2664
      %v2871 = vpop.f32.mrf.mxu0
      %v2872 = vadd.f32 0.0, %v2871
      %v2873 = vpop.f32.mrf.mxu0
      %2874 = vmatprep.mubr.f32.mxu0 0.0
      %2875 = vmatmul.mubr.f32.gmra.mxu0 %v2667
      %v2876 = vpop.f32.mrf.mxu0
      %v2877 = vadd.f32 0.0, %v2876
      %v2878 = vpop.f32.mrf.mxu0
      %2879 = vmatprep.mubr.f32.mxu0 0.0
      %2880 = vmatmul.mubr.f32.gmra.mxu0 %v2670
      %v2881 = vpop.f32.mrf.mxu0
      %v2882 = vadd.f32 0.0, %v2881
      %v2883 = vpop.f32.mrf.mxu0
      %2884 = vmatprep.mubr.f32.mxu0 0.0
      %2885 = vmatmul.mubr.f32.gmra.mxu0 %v2673
      %v2886 = vpop.f32.mrf.mxu0
      %v2887 = vadd.f32 0.0, %v2886
      %v2888 = vpop.f32.mrf.mxu0
      %2889 = vmatprep.mubr.f32.mxu0 0.0
      %2890 = vmatmul.mubr.f32.gmra.mxu0 %v2676
      %v2891 = vpop.f32.mrf.mxu0
      %v2892 = vadd.f32 0.0, %v2891
      %v2893 = vpop.f32.mrf.mxu0
      %2894 = vmatprep.mubr.f32.mxu0 0.0
      %2895 = vmatmul.mubr.f32.gmra.mxu0 %v2679
      %v2896 = vpop.f32.mrf.mxu0
      %v2897 = vadd.f32 0.0, %v2896
      %v2898 = vpop.f32.mrf.mxu0
      %2899 = vmatprep.mubr.f32.mxu0 0.0
      %2900 = vmatmul.mubr.f32.gmra.mxu0 %v2682
      %v2901 = vpop.f32.mrf.mxu0
      %v2902 = vadd.f32 0.0, %v2901
      %v2903 = vpop.f32.mrf.mxu0
      %2904 = vmatprep.mubr.f32.mxu0 0.0
      %2905 = vmatmul.mubr.f32.gmra.mxu0 %v2685
      %v2906 = vpop.f32.mrf.mxu0
      %v2907 = vadd.f32 0.0, %v2906
      %v2908 = vpop.f32.mrf.mxu0
      %2909 = vmatprep.mubr.f32.mxu0 0.0
      %2910 = vmatmul.mubr.f32.gmra.mxu0 %v2688
      %v2911 = vpop.f32.mrf.mxu0
      %v2912 = vadd.f32 0.0, %v2911
      %v2913 = vpop.f32.mrf.mxu0
      %2914 = vmatprep.mubr.f32.mxu0 0.0
      %2915 = vmatmul.mubr.f32.gmra.mxu0 %v2691
      %v2916 = vpop.f32.mrf.mxu0
      %v2917 = vadd.f32 0.0, %v2916
      %v2918 = vpop.f32.mrf.mxu0
      %2919 = vmatprep.mubr.f32.mxu0 0.0
      %2920 = vmatmul.mubr.f32.gmra.mxu0 %v2694
      %v2921 = vpop.f32.mrf.mxu0
      %v2922 = vadd.f32 0.0, %v2921
      %v2923 = vpop.f32.mrf.mxu0
      %2924 = vmatprep.mubr.f32.mxu0 0.0
      %2925 = vmatmul.mubr.f32.gmra.mxu0 %v2697
      %v2926 = vpop.f32.mrf.mxu0
      %v2927 = vadd.f32 0.0, %v2926
      %v2928 = vpop.f32.mrf.mxu0
      %2929 = vmatprep.mubr.f32.mxu0 0.0
      %2930 = vmatmul.mubr.f32.gmra.mxu0 %v2700
      %v2931 = vpop.f32.mrf.mxu0
      %v2932 = vadd.f32 0.0, %v2931
      %v2933 = vpop.f32.mrf.mxu0
      %2934 = vmatprep.mubr.f32.mxu0 0.0
      %2935 = vmatmul.mubr.f32.gmra.mxu0 %v2703
      %v2936 = vpop.f32.mrf.mxu0
      %v2937 = vadd.f32 0.0, %v2936
      %v2938 = vpop.f32.mrf.mxu0
      %2939 = vmatprep.mubr.f32.mxu0 0.0
      %2940 = vmatmul.mubr.f32.gmra.mxu0 %v2706
      %v2941 = vpop.f32.mrf.mxu0
      %v2942 = vadd.f32 0.0, %v2941
      %v2943 = vpop.f32.mrf.mxu0
      %2944 = vmatprep.mubr.f32.mxu0 0.0
      %2945 = vmatmul.mubr.f32.gmra.mxu0 %v2709
      %v2946 = vpop.f32.mrf.mxu0
      %v2947 = vadd.f32 0.0, %v2946
      %v2948 = vpop.f32.mrf.mxu0
      %2949 = vmatprep.mubr.f32.mxu0 0.0
      %2950 = vmatmul.mubr.f32.gmra.mxu0 %v2712
      %v2951 = vpop.f32.mrf.mxu0
      %v2952 = vadd.f32 0.0, %v2951
      %v2953 = vpop.f32.mrf.mxu0
      %2954 = vmatprep.mubr.f32.mxu0 0.0
      %2955 = vmatmul.mubr.f32.gmra.mxu0 %v2715
      %v2956 = vpop.f32.mrf.mxu0
      %v2957 = vadd.f32 0.0, %v2956
      %v2958 = vpop.f32.mrf.mxu0
      %2959 = vmatprep.mubr.f32.mxu0 0.0
      %2960 = vmatmul.mubr.f32.gmra.mxu0 %v2718
      %v2961 = vpop.f32.mrf.mxu0
      %v2962 = vadd.f32 0.0, %v2961
      %v2963 = vpop.f32.mrf.mxu0
      %2964 = vmatprep.mubr.f32.mxu0 0.0
      %2965 = vmatmul.mubr.f32.gmra.mxu0 %v2721
      %v2966 = vpop.f32.mrf.mxu0
      %v2967 = vadd.f32 0.0, %v2966
      %v2968 = vpop.f32.mrf.mxu0
      %2969 = vmatprep.mubr.f32.mxu0 0.0
      %2970 = vmatmul.mubr.f32.gmra.mxu0 %v2724
      %v2971 = vpop.f32.mrf.mxu0
      %v2972 = vadd.f32 0.0, %v2971
      %v2973 = vpop.f32.mrf.mxu0
      %2974 = vmatprep.mubr.f32.mxu0 0.0
      %2975 = vmatmul.mubr.f32.gmra.mxu0 %v2727
      %v2976 = vpop.f32.mrf.mxu0
      %v2977 = vadd.f32 0.0, %v2976
      %v2978 = vpop.f32.mrf.mxu0
      %2979 = vmatprep.mubr.f32.mxu0 0.0
      %2980 = vmatmul.mubr.f32.gmra.mxu0 %v2730
      %v2981 = vpop.f32.mrf.mxu0
      %v2982 = vadd.f32 0.0, %v2981
      %v2983 = vpop.f32.mrf.mxu0
      %2984 = vmatprep.mubr.f32.mxu0 0.0
      %2985 = vmatmul.mubr.f32.gmra.mxu0 %v2733
      %v2986 = vpop.f32.mrf.mxu0
      %v2987 = vadd.f32 0.0, %v2986
      %v2988 = vpop.f32.mrf.mxu0
      %2989 = vmatprep.mubr.f32.mxu0 0.0
      %2990 = vmatmul.mubr.f32.gmra.mxu0 %v2736
      %v2991 = vpop.f32.mrf.mxu0
      %v2992 = vadd.f32 0.0, %v2991
      %v2993 = vpop.f32.mrf.mxu0
      %2994 = vmatprep.mubr.f32.mxu0 0.0
      %2995 = vmatmul.mubr.f32.gmra.mxu0 %v2739
      %v2996 = vpop.f32.mrf.mxu0
      %v2997 = vadd.f32 0.0, %v2996
      %v2998 = vpop.f32.mrf.mxu0
      %2999 = vmatprep.mubr.f32.mxu0 0.0
      %3000 = vmatmul.mubr.f32.gmra.mxu0 %v2742
      %v3001 = vpop.f32.mrf.mxu0
      %v3002 = vadd.f32 0.0, %v3001
      %v3003 = vpop.f32.mrf.mxu0
      %3004 = vmatprep.mubr.f32.mxu0 0.0
      %3005 = vmatmul.mubr.f32.gmra.mxu0 %v2745
      %v3006 = vpop.f32.mrf.mxu0
      %v3007 = vadd.f32 0.0, %v3006
      %v3008 = vpop.f32.mrf.mxu0
      %3009 = vmatprep.mubr.f32.mxu0 0.0
      %3010 = vmatmul.mubr.f32.gmra.mxu0 %v2748
      %v3011 = vpop.f32.mrf.mxu0
      %v3012 = vadd.f32 0.0, %v3011
      %v3013 = vpop.f32.mrf.mxu0
      %3014 = vdwg.mxu0
      %v3015 = vadd.f32 %v2548, %v2817
      %v3016 = vadd.f32 %v2549, %v2822
      %v3017 = vadd.f32 %v2550, %v2827
      %v3018 = vadd.f32 %v2551, %v2832
      %v3019 = vadd.f32 %v2552, %v2837
      %v3020 = vadd.f32 %v2553, %v2842
      %v3021 = vadd.f32 %v2554, %v2847
      %v3022 = vadd.f32 %v2555, %v2852
      %v3023 = vadd.f32 %v2556, %v2857
      %v3024 = vadd.f32 %v2557, %v2862
      %v3025 = vadd.f32 %v2558, %v2867
      %v3026 = vadd.f32 %v2559, %v2872
      %v3027 = vadd.f32 %v2560, %v2877
      %v3028 = vadd.f32 %v2561, %v2882
      %v3029 = vadd.f32 %v2562, %v2887
      %v3030 = vadd.f32 %v2563, %v2892
      %v3031 = vadd.f32 %v2564, %v2897
      %v3032 = vadd.f32 %v2565, %v2902
      %v3033 = vadd.f32 %v2566, %v2907
      %v3034 = vadd.f32 %v2567, %v2912
      %v3035 = vadd.f32 %v2568, %v2917
      %v3036 = vadd.f32 %v2569, %v2922
      %v3037 = vadd.f32 %v2570, %v2927
      %v3038 = vadd.f32 %v2571, %v2932
      %v3039 = vadd.f32 %v2572, %v2937
      %v3040 = vadd.f32 %v2573, %v2942
      %v3041 = vadd.f32 %v2574, %v2947
      %v3042 = vadd.f32 %v2575, %v2952
      %v3043 = vadd.f32 %v2576, %v2957
      %v3044 = vadd.f32 %v2577, %v2962
      %v3045 = vadd.f32 %v2578, %v2967
      %v3046 = vadd.f32 %v2579, %v2972
      %v3047 = vadd.f32 %v2580, %v2977
      %v3048 = vadd.f32 %v2581, %v2982
      %v3049 = vadd.f32 %v2582, %v2987
      %v3050 = vadd.f32 %v2583, %v2992
      %v3051 = vadd.f32 %v2584, %v2997
      %v3052 = vadd.f32 %v2585, %v3002
      %v3053 = vadd.f32 %v2586, %v3007
      %v3054 = vadd.f32 %v2587, %v3012
      %v3055 = vld [vmem:[#allocation2 + $0x29] sm:$0xff]
      %v3056 = vld [vmem:[#allocation2 + $0x31] sm:$0xff]
      %v3057 = vld [vmem:[#allocation2 + $0x39] sm:$0xff]
      %v3058 = vld [vmem:[#allocation2 + $0x41] sm:$0xff]
      %v3059 = vld [vmem:[#allocation2 + $0x49] sm:$0xff]
      %v3060 = vld [vmem:[#allocation2 + $0x51] sm:$0xff]
      %v3061 = vld [vmem:[#allocation2 + $0x59] sm:$0xff]
      %v3062 = vld [vmem:[#allocation2 + $0x61] sm:$0xff]
      %v3063 = vld [vmem:[#allocation2 + $0x69] sm:$0xff]
      %v3064 = vld [vmem:[#allocation2 + $0x71] sm:$0xff]
      %v3065 = vld [vmem:[#allocation2 + $0x79] sm:$0xff]
      %v3066 = vld [vmem:[#allocation2 + $0x81] sm:$0xff]
      %v3067 = vld [vmem:[#allocation2 + $0x89] sm:$0xff]
      %v3068 = vld [vmem:[#allocation2 + $0x91] sm:$0xff]
      %v3069 = vld [vmem:[#allocation2 + $0x99] sm:$0xff]
      %v3070 = vld [vmem:[#allocation2 + $0xa1] sm:$0xff]
      %v3071 = vld [vmem:[#allocation2 + $0xa9] sm:$0xff]
      %v3072 = vld [vmem:[#allocation2 + $0xb1] sm:$0xff]
      %v3073 = vld [vmem:[#allocation2 + $0xb9] sm:$0xff]
      %v3074 = vld [vmem:[#allocation2 + $0xc1] sm:$0xff]
      %v3075 = vld [vmem:[#allocation2 + $0xc9] sm:$0xff]
      %v3076 = vld [vmem:[#allocation2 + $0xd1] sm:$0xff]
      %v3077 = vld [vmem:[#allocation2 + $0xd9] sm:$0xff]
      %v3078 = vld [vmem:[#allocation2 + $0xe1] sm:$0xff]
      %v3079 = vld [vmem:[#allocation2 + $0xe9] sm:$0xff]
      %v3080 = vld [vmem:[#allocation2 + $0xf1] sm:$0xff]
      %v3081 = vld [vmem:[#allocation2 + $0xf9] sm:$0xff]
      %v3082 = vld [vmem:[#allocation2 + $0x101] sm:$0xff]
      %v3083 = vld [vmem:[#allocation2 + $0x109] sm:$0xff]
      %v3084 = vld [vmem:[#allocation2 + $0x111] sm:$0xff]
      %v3085 = vld [vmem:[#allocation2 + $0x119] sm:$0xff]
      %v3086 = vld [vmem:[#allocation2 + $0x121] sm:$0xff]
      %v3087 = vld [vmem:[#allocation2 + $0x129] sm:$0xff]
      %v3088 = vld [vmem:[#allocation2 + $0x131] sm:$0xff]
      %v3089 = vld [vmem:[#allocation2 + $0x139] sm:$0xff]
      %v3090 = vld [vmem:[#allocation2 + $0x141] sm:$0xff]
      %v3091 = vld [vmem:[#allocation2 + $0x149] sm:$0xff]
      %v3092 = vld [vmem:[#allocation2 + $0x151] sm:$0xff]
      %v3093 = vld [vmem:[#allocation2 + $0x159] sm:$0xff]
      %v3094 = vld [vmem:[#allocation2 + $0x161] sm:$0xff]
      %s3095 = scalar_lea.vmem %s4, 32
      %v3096 = vld [vmem:[%s3095] sm:$0xff]
      %v3098 = vsel %vm960, %v3055, 0
      %v3101 = vsel %vm960, %v3056, 0
      %v3104 = vsel %vm960, %v3057, 0
      %v3107 = vsel %vm960, %v3058, 0
      %v3110 = vsel %vm960, %v3059, 0
      %v3113 = vsel %vm960, %v3060, 0
      %v3116 = vsel %vm960, %v3061, 0
      %v3119 = vsel %vm960, %v3062, 0
      %v3122 = vsel %vm960, %v3063, 0
      %v3125 = vsel %vm960, %v3064, 0
      %v3128 = vsel %vm960, %v3065, 0
      %v3131 = vsel %vm960, %v3066, 0
      %v3134 = vsel %vm960, %v3067, 0
      %v3137 = vsel %vm960, %v3068, 0
      %v3140 = vsel %vm960, %v3069, 0
      %v3143 = vsel %vm960, %v3070, 0
      %v3146 = vsel %vm960, %v3071, 0
      %v3149 = vsel %vm960, %v3072, 0
      %v3152 = vsel %vm960, %v3073, 0
      %v3155 = vsel %vm960, %v3074, 0
      %v3158 = vsel %vm960, %v3075, 0
      %v3161 = vsel %vm960, %v3076, 0
      %v3164 = vsel %vm960, %v3077, 0
      %v3167 = vsel %vm960, %v3078, 0
      %v3170 = vsel %vm960, %v3079, 0
      %v3173 = vsel %vm960, %v3080, 0
      %v3176 = vsel %vm960, %v3081, 0
      %v3179 = vsel %vm960, %v3082, 0
      %v3182 = vsel %vm960, %v3083, 0
      %v3185 = vsel %vm960, %v3084, 0
      %v3188 = vsel %vm960, %v3085, 0
      %v3191 = vsel %vm960, %v3086, 0
      %v3194 = vsel %vm960, %v3087, 0
      %v3197 = vsel %vm960, %v3088, 0
      %v3200 = vsel %vm960, %v3089, 0
      %v3203 = vsel %vm960, %v3090, 0
      %v3206 = vsel %vm960, %v3091, 0
      %v3209 = vsel %vm960, %v3092, 0
      %v3212 = vsel %vm960, %v3093, 0
      %v3215 = vsel %vm960, %v3094, 0
      %3217 = vmatprep.subr.mxu0 0.0
      %3218 = vmatpush1.msra.mxu0 0.0
      %3219 = vmatprep.subr.mxu0 0.0
      %3220 = vmatpush1.msra.mxu0 0.0
      %3221 = vmatprep.subr.mxu0 0.0
      %3222 = vmatpush1.msra.mxu0 0.0
      %3223 = vmatprep.subr.mxu0 0.0
      %3224 = vmatpush1.msra.mxu0 0.0
      %3225 = vmatprep.subr.mxu0 0.0
      %3226 = vmatpush1.msra.mxu0 0.0
      %3227 = vmatprep.subr.mxu0 0.0
      %3228 = vmatpush1.msra.mxu0 0.0
      %3229 = vmatprep.subr.mxu0 0.0
      %3230 = vmatpush1.msra.mxu0 0.0
      %3231 = vmatprep.subr.mxu0 0.0
      %3232 = vmatpush1.msra.mxu0 0.0
      %3233 = vmatprep.subr.mxu0 0.0
      %3234 = vmatpush1.msra.mxu0 0.0
      %3235 = vmatprep.subr.mxu0 0.0
      %3236 = vmatpush1.msra.mxu0 0.0
      %3237 = vmatprep.subr.mxu0 0.0
      %3238 = vmatpush1.msra.mxu0 0.0
      %3239 = vmatprep.subr.mxu0 0.0
      %3240 = vmatpush1.msra.mxu0 0.0
      %3241 = vmatprep.subr.mxu0 0.0
      %3242 = vmatpush1.msra.mxu0 0.0
      %3243 = vmatprep.subr.mxu0 0.0
      %3244 = vmatpush1.msra.mxu0 0.0
      %3245 = vmatprep.subr.mxu0 0.0
      %3246 = vmatpush1.msra.mxu0 0.0
      %3247 = vmatprep.subr.mxu0 0.0
      %3248 = vmatpush1.msra.mxu0 %v3096
      %3249 = vmatprep.subr.mxu0 0.0
      %3250 = vmatpush2.msra.mxu0 0.0
      %3251 = vmatprep.subr.mxu0 0.0
      %3252 = vmatpush2.msra.mxu0 0.0
      %3253 = vmatprep.subr.mxu0 0.0
      %3254 = vmatpush2.msra.mxu0 0.0
      %3255 = vmatprep.subr.mxu0 0.0
      %3256 = vmatpush2.msra.mxu0 0.0
      %3257 = vmatprep.subr.mxu0 0.0
      %3258 = vmatpush2.msra.mxu0 0.0
      %3259 = vmatprep.subr.mxu0 0.0
      %3260 = vmatpush2.msra.mxu0 0.0
      %3261 = vmatprep.subr.mxu0 0.0
      %3262 = vmatpush2.msra.mxu0 0.0
      %3263 = vmatprep.subr.mxu0 0.0
      %3264 = vmatpush2.msra.mxu0 0.0
      %3265 = vmatprep.subr.mxu0 0.0
      %3266 = vmatpush2.msra.mxu0 0.0
      %3267 = vmatprep.subr.mxu0 0.0
      %3268 = vmatpush2.msra.mxu0 0.0
      %3269 = vmatprep.subr.mxu0 0.0
      %3270 = vmatpush2.msra.mxu0 0.0
      %3271 = vmatprep.subr.mxu0 0.0
      %3272 = vmatpush2.msra.mxu0 0.0
      %3273 = vmatprep.subr.mxu0 0.0
      %3274 = vmatpush2.msra.mxu0 0.0
      %3275 = vmatprep.subr.mxu0 0.0
      %3276 = vmatpush2.msra.mxu0 0.0
      %3277 = vmatprep.subr.mxu0 0.0
      %3278 = vmatpush2.msra.mxu0 0.0
      %3279 = vmatprep.subr.mxu0 0.0
      %3280 = vmatpush2.msra.mxu0 0.0
      %3281 = vmatprep.mubr.f32.mxu0 0.0
      %3282 = vmatmul.mubr.f32.gmra.mxu0 %v3098
      %v3283 = vpop.f32.mrf.mxu0
      %v3284 = vadd.f32 0.0, %v3283
      %v3285 = vpop.f32.mrf.mxu0
      %3286 = vmatprep.mubr.f32.mxu0 0.0
      %3287 = vmatmul.mubr.f32.gmra.mxu0 %v3101
      %v3288 = vpop.f32.mrf.mxu0
      %v3289 = vadd.f32 0.0, %v3288
      %v3290 = vpop.f32.mrf.mxu0
      %3291 = vmatprep.mubr.f32.mxu0 0.0
      %3292 = vmatmul.mubr.f32.gmra.mxu0 %v3104
      %v3293 = vpop.f32.mrf.mxu0
      %v3294 = vadd.f32 0.0, %v3293
      %v3295 = vpop.f32.mrf.mxu0
      %3296 = vmatprep.mubr.f32.mxu0 0.0
      %3297 = vmatmul.mubr.f32.gmra.mxu0 %v3107
      %v3298 = vpop.f32.mrf.mxu0
      %v3299 = vadd.f32 0.0, %v3298
      %v3300 = vpop.f32.mrf.mxu0
      %3301 = vmatprep.mubr.f32.mxu0 0.0
      %3302 = vmatmul.mubr.f32.gmra.mxu0 %v3110
      %v3303 = vpop.f32.mrf.mxu0
      %v3304 = vadd.f32 0.0, %v3303
      %v3305 = vpop.f32.mrf.mxu0
      %3306 = vmatprep.mubr.f32.mxu0 0.0
      %3307 = vmatmul.mubr.f32.gmra.mxu0 %v3113
      %v3308 = vpop.f32.mrf.mxu0
      %v3309 = vadd.f32 0.0, %v3308
      %v3310 = vpop.f32.mrf.mxu0
      %3311 = vmatprep.mubr.f32.mxu0 0.0
      %3312 = vmatmul.mubr.f32.gmra.mxu0 %v3116
      %v3313 = vpop.f32.mrf.mxu0
      %v3314 = vadd.f32 0.0, %v3313
      %v3315 = vpop.f32.mrf.mxu0
      %3316 = vmatprep.mubr.f32.mxu0 0.0
      %3317 = vmatmul.mubr.f32.gmra.mxu0 %v3119
      %v3318 = vpop.f32.mrf.mxu0
      %v3319 = vadd.f32 0.0, %v3318
      %v3320 = vpop.f32.mrf.mxu0
      %3321 = vmatprep.mubr.f32.mxu0 0.0
      %3322 = vmatmul.mubr.f32.gmra.mxu0 %v3122
      %v3323 = vpop.f32.mrf.mxu0
      %v3324 = vadd.f32 0.0, %v3323
      %v3325 = vpop.f32.mrf.mxu0
      %3326 = vmatprep.mubr.f32.mxu0 0.0
      %3327 = vmatmul.mubr.f32.gmra.mxu0 %v3125
      %v3328 = vpop.f32.mrf.mxu0
      %v3329 = vadd.f32 0.0, %v3328
      %v3330 = vpop.f32.mrf.mxu0
      %3331 = vmatprep.mubr.f32.mxu0 0.0
      %3332 = vmatmul.mubr.f32.gmra.mxu0 %v3128
      %v3333 = vpop.f32.mrf.mxu0
      %v3334 = vadd.f32 0.0, %v3333
      %v3335 = vpop.f32.mrf.mxu0
      %3336 = vmatprep.mubr.f32.mxu0 0.0
      %3337 = vmatmul.mubr.f32.gmra.mxu0 %v3131
      %v3338 = vpop.f32.mrf.mxu0
      %v3339 = vadd.f32 0.0, %v3338
      %v3340 = vpop.f32.mrf.mxu0
      %3341 = vmatprep.mubr.f32.mxu0 0.0
      %3342 = vmatmul.mubr.f32.gmra.mxu0 %v3134
      %v3343 = vpop.f32.mrf.mxu0
      %v3344 = vadd.f32 0.0, %v3343
      %v3345 = vpop.f32.mrf.mxu0
      %3346 = vmatprep.mubr.f32.mxu0 0.0
      %3347 = vmatmul.mubr.f32.gmra.mxu0 %v3137
      %v3348 = vpop.f32.mrf.mxu0
      %v3349 = vadd.f32 0.0, %v3348
      %v3350 = vpop.f32.mrf.mxu0
      %3351 = vmatprep.mubr.f32.mxu0 0.0
      %3352 = vmatmul.mubr.f32.gmra.mxu0 %v3140
      %v3353 = vpop.f32.mrf.mxu0
      %v3354 = vadd.f32 0.0, %v3353
      %v3355 = vpop.f32.mrf.mxu0
      %3356 = vmatprep.mubr.f32.mxu0 0.0
      %3357 = vmatmul.mubr.f32.gmra.mxu0 %v3143
      %v3358 = vpop.f32.mrf.mxu0
      %v3359 = vadd.f32 0.0, %v3358
      %v3360 = vpop.f32.mrf.mxu0
      %3361 = vmatprep.mubr.f32.mxu0 0.0
      %3362 = vmatmul.mubr.f32.gmra.mxu0 %v3146
      %v3363 = vpop.f32.mrf.mxu0
      %v3364 = vadd.f32 0.0, %v3363
      %v3365 = vpop.f32.mrf.mxu0
      %3366 = vmatprep.mubr.f32.mxu0 0.0
      %3367 = vmatmul.mubr.f32.gmra.mxu0 %v3149
      %v3368 = vpop.f32.mrf.mxu0
      %v3369 = vadd.f32 0.0, %v3368
      %v3370 = vpop.f32.mrf.mxu0
      %3371 = vmatprep.mubr.f32.mxu0 0.0
      %3372 = vmatmul.mubr.f32.gmra.mxu0 %v3152
      %v3373 = vpop.f32.mrf.mxu0
      %v3374 = vadd.f32 0.0, %v3373
      %v3375 = vpop.f32.mrf.mxu0
      %3376 = vmatprep.mubr.f32.mxu0 0.0
      %3377 = vmatmul.mubr.f32.gmra.mxu0 %v3155
      %v3378 = vpop.f32.mrf.mxu0
      %v3379 = vadd.f32 0.0, %v3378
      %v3380 = vpop.f32.mrf.mxu0
      %3381 = vmatprep.mubr.f32.mxu0 0.0
      %3382 = vmatmul.mubr.f32.gmra.mxu0 %v3158
      %v3383 = vpop.f32.mrf.mxu0
      %v3384 = vadd.f32 0.0, %v3383
      %v3385 = vpop.f32.mrf.mxu0
      %3386 = vmatprep.mubr.f32.mxu0 0.0
      %3387 = vmatmul.mubr.f32.gmra.mxu0 %v3161
      %v3388 = vpop.f32.mrf.mxu0
      %v3389 = vadd.f32 0.0, %v3388
      %v3390 = vpop.f32.mrf.mxu0
      %3391 = vmatprep.mubr.f32.mxu0 0.0
      %3392 = vmatmul.mubr.f32.gmra.mxu0 %v3164
      %v3393 = vpop.f32.mrf.mxu0
      %v3394 = vadd.f32 0.0, %v3393
      %v3395 = vpop.f32.mrf.mxu0
      %3396 = vmatprep.mubr.f32.mxu0 0.0
      %3397 = vmatmul.mubr.f32.gmra.mxu0 %v3167
      %v3398 = vpop.f32.mrf.mxu0
      %v3399 = vadd.f32 0.0, %v3398
      %v3400 = vpop.f32.mrf.mxu0
      %3401 = vmatprep.mubr.f32.mxu0 0.0
      %3402 = vmatmul.mubr.f32.gmra.mxu0 %v3170
      %v3403 = vpop.f32.mrf.mxu0
      %v3404 = vadd.f32 0.0, %v3403
      %v3405 = vpop.f32.mrf.mxu0
      %3406 = vmatprep.mubr.f32.mxu0 0.0
      %3407 = vmatmul.mubr.f32.gmra.mxu0 %v3173
      %v3408 = vpop.f32.mrf.mxu0
      %v3409 = vadd.f32 0.0, %v3408
      %v3410 = vpop.f32.mrf.mxu0
      %3411 = vmatprep.mubr.f32.mxu0 0.0
      %3412 = vmatmul.mubr.f32.gmra.mxu0 %v3176
      %v3413 = vpop.f32.mrf.mxu0
      %v3414 = vadd.f32 0.0, %v3413
      %v3415 = vpop.f32.mrf.mxu0
      %3416 = vmatprep.mubr.f32.mxu0 0.0
      %3417 = vmatmul.mubr.f32.gmra.mxu0 %v3179
      %v3418 = vpop.f32.mrf.mxu0
      %v3419 = vadd.f32 0.0, %v3418
      %v3420 = vpop.f32.mrf.mxu0
      %3421 = vmatprep.mubr.f32.mxu0 0.0
      %3422 = vmatmul.mubr.f32.gmra.mxu0 %v3182
      %v3423 = vpop.f32.mrf.mxu0
      %v3424 = vadd.f32 0.0, %v3423
      %v3425 = vpop.f32.mrf.mxu0
      %3426 = vmatprep.mubr.f32.mxu0 0.0
      %3427 = vmatmul.mubr.f32.gmra.mxu0 %v3185
      %v3428 = vpop.f32.mrf.mxu0
      %v3429 = vadd.f32 0.0, %v3428
      %v3430 = vpop.f32.mrf.mxu0
      %3431 = vmatprep.mubr.f32.mxu0 0.0
      %3432 = vmatmul.mubr.f32.gmra.mxu0 %v3188
      %v3433 = vpop.f32.mrf.mxu0
      %v3434 = vadd.f32 0.0, %v3433
      %v3435 = vpop.f32.mrf.mxu0
      %3436 = vmatprep.mubr.f32.mxu0 0.0
      %3437 = vmatmul.mubr.f32.gmra.mxu0 %v3191
      %v3438 = vpop.f32.mrf.mxu0
      %v3439 = vadd.f32 0.0, %v3438
      %v3440 = vpop.f32.mrf.mxu0
      %3441 = vmatprep.mubr.f32.mxu0 0.0
      %3442 = vmatmul.mubr.f32.gmra.mxu0 %v3194
      %v3443 = vpop.f32.mrf.mxu0
      %v3444 = vadd.f32 0.0, %v3443
      %v3445 = vpop.f32.mrf.mxu0
      %3446 = vmatprep.mubr.f32.mxu0 0.0
      %3447 = vmatmul.mubr.f32.gmra.mxu0 %v3197
      %v3448 = vpop.f32.mrf.mxu0
      %v3449 = vadd.f32 0.0, %v3448
      %v3450 = vpop.f32.mrf.mxu0
      %3451 = vmatprep.mubr.f32.mxu0 0.0
      %3452 = vmatmul.mubr.f32.gmra.mxu0 %v3200
      %v3453 = vpop.f32.mrf.mxu0
      %v3454 = vadd.f32 0.0, %v3453
      %v3455 = vpop.f32.mrf.mxu0
      %3456 = vmatprep.mubr.f32.mxu0 0.0
      %3457 = vmatmul.mubr.f32.gmra.mxu0 %v3203
      %v3458 = vpop.f32.mrf.mxu0
      %v3459 = vadd.f32 0.0, %v3458
      %v3460 = vpop.f32.mrf.mxu0
      %3461 = vmatprep.mubr.f32.mxu0 0.0
      %3462 = vmatmul.mubr.f32.gmra.mxu0 %v3206
      %v3463 = vpop.f32.mrf.mxu0
      %v3464 = vadd.f32 0.0, %v3463
      %v3465 = vpop.f32.mrf.mxu0
      %3466 = vmatprep.mubr.f32.mxu0 0.0
      %3467 = vmatmul.mubr.f32.gmra.mxu0 %v3209
      %v3468 = vpop.f32.mrf.mxu0
      %v3469 = vadd.f32 0.0, %v3468
      %v3470 = vpop.f32.mrf.mxu0
      %3471 = vmatprep.mubr.f32.mxu0 0.0
      %3472 = vmatmul.mubr.f32.gmra.mxu0 %v3212
      %v3473 = vpop.f32.mrf.mxu0
      %v3474 = vadd.f32 0.0, %v3473
      %v3475 = vpop.f32.mrf.mxu0
      %3476 = vmatprep.mubr.f32.mxu0 0.0
      %3477 = vmatmul.mubr.f32.gmra.mxu0 %v3215
      %v3478 = vpop.f32.mrf.mxu0
      %v3479 = vadd.f32 0.0, %v3478
      %v3480 = vpop.f32.mrf.mxu0
      %3481 = vdwg.mxu0
      %v3482 = vadd.f32 %v3015, %v3284
      %v3483 = vadd.f32 %v3016, %v3289
      %v3484 = vadd.f32 %v3017, %v3294
      %v3485 = vadd.f32 %v3018, %v3299
      %v3486 = vadd.f32 %v3019, %v3304
      %v3487 = vadd.f32 %v3020, %v3309
      %v3488 = vadd.f32 %v3021, %v3314
      %v3489 = vadd.f32 %v3022, %v3319
      %v3490 = vadd.f32 %v3023, %v3324
      %v3491 = vadd.f32 %v3024, %v3329
      %v3492 = vadd.f32 %v3025, %v3334
      %v3493 = vadd.f32 %v3026, %v3339
      %v3494 = vadd.f32 %v3027, %v3344
      %v3495 = vadd.f32 %v3028, %v3349
      %v3496 = vadd.f32 %v3029, %v3354
      %v3497 = vadd.f32 %v3030, %v3359
      %v3498 = vadd.f32 %v3031, %v3364
      %v3499 = vadd.f32 %v3032, %v3369
      %v3500 = vadd.f32 %v3033, %v3374
      %v3501 = vadd.f32 %v3034, %v3379
      %v3502 = vadd.f32 %v3035, %v3384
      %v3503 = vadd.f32 %v3036, %v3389
      %v3504 = vadd.f32 %v3037, %v3394
      %v3505 = vadd.f32 %v3038, %v3399
      %v3506 = vadd.f32 %v3039, %v3404
      %v3507 = vadd.f32 %v3040, %v3409
      %v3508 = vadd.f32 %v3041, %v3414
      %v3509 = vadd.f32 %v3042, %v3419
      %v3510 = vadd.f32 %v3043, %v3424
      %v3511 = vadd.f32 %v3044, %v3429
      %v3512 = vadd.f32 %v3045, %v3434
      %v3513 = vadd.f32 %v3046, %v3439
      %v3514 = vadd.f32 %v3047, %v3444
      %v3515 = vadd.f32 %v3048, %v3449
      %v3516 = vadd.f32 %v3049, %v3454
      %v3517 = vadd.f32 %v3050, %v3459
      %v3518 = vadd.f32 %v3051, %v3464
      %v3519 = vadd.f32 %v3052, %v3469
      %v3520 = vadd.f32 %v3053, %v3474
      %v3521 = vadd.f32 %v3054, %v3479
      %v3522 = vld [vmem:[#allocation2 + $0x2a] sm:$0xff]
      %v3523 = vld [vmem:[#allocation2 + $0x32] sm:$0xff]
      %v3524 = vld [vmem:[#allocation2 + $0x3a] sm:$0xff]
      %v3525 = vld [vmem:[#allocation2 + $0x42] sm:$0xff]
      %v3526 = vld [vmem:[#allocation2 + $0x4a] sm:$0xff]
      %v3527 = vld [vmem:[#allocation2 + $0x52] sm:$0xff]
      %v3528 = vld [vmem:[#allocation2 + $0x5a] sm:$0xff]
      %v3529 = vld [vmem:[#allocation2 + $0x62] sm:$0xff]
      %v3530 = vld [vmem:[#allocation2 + $0x6a] sm:$0xff]
      %v3531 = vld [vmem:[#allocation2 + $0x72] sm:$0xff]
      %v3532 = vld [vmem:[#allocation2 + $0x7a] sm:$0xff]
      %v3533 = vld [vmem:[#allocation2 + $0x82] sm:$0xff]
      %v3534 = vld [vmem:[#allocation2 + $0x8a] sm:$0xff]
      %v3535 = vld [vmem:[#allocation2 + $0x92] sm:$0xff]
      %v3536 = vld [vmem:[#allocation2 + $0x9a] sm:$0xff]
      %v3537 = vld [vmem:[#allocation2 + $0xa2] sm:$0xff]
      %v3538 = vld [vmem:[#allocation2 + $0xaa] sm:$0xff]
      %v3539 = vld [vmem:[#allocation2 + $0xb2] sm:$0xff]
      %v3540 = vld [vmem:[#allocation2 + $0xba] sm:$0xff]
      %v3541 = vld [vmem:[#allocation2 + $0xc2] sm:$0xff]
      %v3542 = vld [vmem:[#allocation2 + $0xca] sm:$0xff]
      %v3543 = vld [vmem:[#allocation2 + $0xd2] sm:$0xff]
      %v3544 = vld [vmem:[#allocation2 + $0xda] sm:$0xff]
      %v3545 = vld [vmem:[#allocation2 + $0xe2] sm:$0xff]
      %v3546 = vld [vmem:[#allocation2 + $0xea] sm:$0xff]
      %v3547 = vld [vmem:[#allocation2 + $0xf2] sm:$0xff]
      %v3548 = vld [vmem:[#allocation2 + $0xfa] sm:$0xff]
      %v3549 = vld [vmem:[#allocation2 + $0x102] sm:$0xff]
      %v3550 = vld [vmem:[#allocation2 + $0x10a] sm:$0xff]
      %v3551 = vld [vmem:[#allocation2 + $0x112] sm:$0xff]
      %v3552 = vld [vmem:[#allocation2 + $0x11a] sm:$0xff]
      %v3553 = vld [vmem:[#allocation2 + $0x122] sm:$0xff]
      %v3554 = vld [vmem:[#allocation2 + $0x12a] sm:$0xff]
      %v3555 = vld [vmem:[#allocation2 + $0x132] sm:$0xff]
      %v3556 = vld [vmem:[#allocation2 + $0x13a] sm:$0xff]
      %v3557 = vld [vmem:[#allocation2 + $0x142] sm:$0xff]
      %v3558 = vld [vmem:[#allocation2 + $0x14a] sm:$0xff]
      %v3559 = vld [vmem:[#allocation2 + $0x152] sm:$0xff]
      %v3560 = vld [vmem:[#allocation2 + $0x15a] sm:$0xff]
      %v3561 = vld [vmem:[#allocation2 + $0x162] sm:$0xff]
      %s3562 = scalar_lea.vmem %s4, 40
      %v3563 = vld [vmem:[%s3562] sm:$0xff]
      %v3565 = vsel %vm960, %v3522, 0
      %v3568 = vsel %vm960, %v3523, 0
      %v3571 = vsel %vm960, %v3524, 0
      %v3574 = vsel %vm960, %v3525, 0
      %v3577 = vsel %vm960, %v3526, 0
      %v3580 = vsel %vm960, %v3527, 0
      %v3583 = vsel %vm960, %v3528, 0
      %v3586 = vsel %vm960, %v3529, 0
      %v3589 = vsel %vm960, %v3530, 0
      %v3592 = vsel %vm960, %v3531, 0
      %v3595 = vsel %vm960, %v3532, 0
      %v3598 = vsel %vm960, %v3533, 0
      %v3601 = vsel %vm960, %v3534, 0
      %v3604 = vsel %vm960, %v3535, 0
      %v3607 = vsel %vm960, %v3536, 0
      %v3610 = vsel %vm960, %v3537, 0
      %v3613 = vsel %vm960, %v3538, 0
      %v3616 = vsel %vm960, %v3539, 0
      %v3619 = vsel %vm960, %v3540, 0
      %v3622 = vsel %vm960, %v3541, 0
      %v3625 = vsel %vm960, %v3542, 0
      %v3628 = vsel %vm960, %v3543, 0
      %v3631 = vsel %vm960, %v3544, 0
      %v3634 = vsel %vm960, %v3545, 0
      %v3637 = vsel %vm960, %v3546, 0
      %v3640 = vsel %vm960, %v3547, 0
      %v3643 = vsel %vm960, %v3548, 0
      %v3646 = vsel %vm960, %v3549, 0
      %v3649 = vsel %vm960, %v3550, 0
      %v3652 = vsel %vm960, %v3551, 0
      %v3655 = vsel %vm960, %v3552, 0
      %v3658 = vsel %vm960, %v3553, 0
      %v3661 = vsel %vm960, %v3554, 0
      %v3664 = vsel %vm960, %v3555, 0
      %v3667 = vsel %vm960, %v3556, 0
      %v3670 = vsel %vm960, %v3557, 0
      %v3673 = vsel %vm960, %v3558, 0
      %v3676 = vsel %vm960, %v3559, 0
      %v3679 = vsel %vm960, %v3560, 0
      %v3682 = vsel %vm960, %v3561, 0
      %3684 = vmatprep.subr.mxu0 0.0
      %3685 = vmatpush1.msra.mxu0 0.0
      %3686 = vmatprep.subr.mxu0 0.0
      %3687 = vmatpush1.msra.mxu0 0.0
      %3688 = vmatprep.subr.mxu0 0.0
      %3689 = vmatpush1.msra.mxu0 0.0
      %3690 = vmatprep.subr.mxu0 0.0
      %3691 = vmatpush1.msra.mxu0 0.0
      %3692 = vmatprep.subr.mxu0 0.0
      %3693 = vmatpush1.msra.mxu0 0.0
      %3694 = vmatprep.subr.mxu0 0.0
      %3695 = vmatpush1.msra.mxu0 0.0
      %3696 = vmatprep.subr.mxu0 0.0
      %3697 = vmatpush1.msra.mxu0 0.0
      %3698 = vmatprep.subr.mxu0 0.0
      %3699 = vmatpush1.msra.mxu0 0.0
      %3700 = vmatprep.subr.mxu0 0.0
      %3701 = vmatpush1.msra.mxu0 0.0
      %3702 = vmatprep.subr.mxu0 0.0
      %3703 = vmatpush1.msra.mxu0 0.0
      %3704 = vmatprep.subr.mxu0 0.0
      %3705 = vmatpush1.msra.mxu0 0.0
      %3706 = vmatprep.subr.mxu0 0.0
      %3707 = vmatpush1.msra.mxu0 0.0
      %3708 = vmatprep.subr.mxu0 0.0
      %3709 = vmatpush1.msra.mxu0 0.0
      %3710 = vmatprep.subr.mxu0 0.0
      %3711 = vmatpush1.msra.mxu0 0.0
      %3712 = vmatprep.subr.mxu0 0.0
      %3713 = vmatpush1.msra.mxu0 0.0
      %3714 = vmatprep.subr.mxu0 0.0
      %3715 = vmatpush1.msra.mxu0 %v3563
      %3716 = vmatprep.subr.mxu0 0.0
      %3717 = vmatpush2.msra.mxu0 0.0
      %3718 = vmatprep.subr.mxu0 0.0
      %3719 = vmatpush2.msra.mxu0 0.0
      %3720 = vmatprep.subr.mxu0 0.0
      %3721 = vmatpush2.msra.mxu0 0.0
      %3722 = vmatprep.subr.mxu0 0.0
      %3723 = vmatpush2.msra.mxu0 0.0
      %3724 = vmatprep.subr.mxu0 0.0
      %3725 = vmatpush2.msra.mxu0 0.0
      %3726 = vmatprep.subr.mxu0 0.0
      %3727 = vmatpush2.msra.mxu0 0.0
      %3728 = vmatprep.subr.mxu0 0.0
      %3729 = vmatpush2.msra.mxu0 0.0
      %3730 = vmatprep.subr.mxu0 0.0
      %3731 = vmatpush2.msra.mxu0 0.0
      %3732 = vmatprep.subr.mxu0 0.0
      %3733 = vmatpush2.msra.mxu0 0.0
      %3734 = vmatprep.subr.mxu0 0.0
      %3735 = vmatpush2.msra.mxu0 0.0
      %3736 = vmatprep.subr.mxu0 0.0
      %3737 = vmatpush2.msra.mxu0 0.0
      %3738 = vmatprep.subr.mxu0 0.0
      %3739 = vmatpush2.msra.mxu0 0.0
      %3740 = vmatprep.subr.mxu0 0.0
      %3741 = vmatpush2.msra.mxu0 0.0
      %3742 = vmatprep.subr.mxu0 0.0
      %3743 = vmatpush2.msra.mxu0 0.0
      %3744 = vmatprep.subr.mxu0 0.0
      %3745 = vmatpush2.msra.mxu0 0.0
      %3746 = vmatprep.subr.mxu0 0.0
      %3747 = vmatpush2.msra.mxu0 0.0
      %3748 = vmatprep.mubr.f32.mxu0 0.0
      %3749 = vmatmul.mubr.f32.gmra.mxu0 %v3565
      %v3750 = vpop.f32.mrf.mxu0
      %v3751 = vadd.f32 0.0, %v3750
      %v3752 = vpop.f32.mrf.mxu0
      %3753 = vmatprep.mubr.f32.mxu0 0.0
      %3754 = vmatmul.mubr.f32.gmra.mxu0 %v3568
      %v3755 = vpop.f32.mrf.mxu0
      %v3756 = vadd.f32 0.0, %v3755
      %v3757 = vpop.f32.mrf.mxu0
      %3758 = vmatprep.mubr.f32.mxu0 0.0
      %3759 = vmatmul.mubr.f32.gmra.mxu0 %v3571
      %v3760 = vpop.f32.mrf.mxu0
      %v3761 = vadd.f32 0.0, %v3760
      %v3762 = vpop.f32.mrf.mxu0
      %3763 = vmatprep.mubr.f32.mxu0 0.0
      %3764 = vmatmul.mubr.f32.gmra.mxu0 %v3574
      %v3765 = vpop.f32.mrf.mxu0
      %v3766 = vadd.f32 0.0, %v3765
      %v3767 = vpop.f32.mrf.mxu0
      %3768 = vmatprep.mubr.f32.mxu0 0.0
      %3769 = vmatmul.mubr.f32.gmra.mxu0 %v3577
      %v3770 = vpop.f32.mrf.mxu0
      %v3771 = vadd.f32 0.0, %v3770
      %v3772 = vpop.f32.mrf.mxu0
      %3773 = vmatprep.mubr.f32.mxu0 0.0
      %3774 = vmatmul.mubr.f32.gmra.mxu0 %v3580
      %v3775 = vpop.f32.mrf.mxu0
      %v3776 = vadd.f32 0.0, %v3775
      %v3777 = vpop.f32.mrf.mxu0
      %3778 = vmatprep.mubr.f32.mxu0 0.0
      %3779 = vmatmul.mubr.f32.gmra.mxu0 %v3583
      %v3780 = vpop.f32.mrf.mxu0
      %v3781 = vadd.f32 0.0, %v3780
      %v3782 = vpop.f32.mrf.mxu0
      %3783 = vmatprep.mubr.f32.mxu0 0.0
      %3784 = vmatmul.mubr.f32.gmra.mxu0 %v3586
      %v3785 = vpop.f32.mrf.mxu0
      %v3786 = vadd.f32 0.0, %v3785
      %v3787 = vpop.f32.mrf.mxu0
      %3788 = vmatprep.mubr.f32.mxu0 0.0
      %3789 = vmatmul.mubr.f32.gmra.mxu0 %v3589
      %v3790 = vpop.f32.mrf.mxu0
      %v3791 = vadd.f32 0.0, %v3790
      %v3792 = vpop.f32.mrf.mxu0
      %3793 = vmatprep.mubr.f32.mxu0 0.0
      %3794 = vmatmul.mubr.f32.gmra.mxu0 %v3592
      %v3795 = vpop.f32.mrf.mxu0
      %v3796 = vadd.f32 0.0, %v3795
      %v3797 = vpop.f32.mrf.mxu0
      %3798 = vmatprep.mubr.f32.mxu0 0.0
      %3799 = vmatmul.mubr.f32.gmra.mxu0 %v3595
      %v3800 = vpop.f32.mrf.mxu0
      %v3801 = vadd.f32 0.0, %v3800
      %v3802 = vpop.f32.mrf.mxu0
      %3803 = vmatprep.mubr.f32.mxu0 0.0
      %3804 = vmatmul.mubr.f32.gmra.mxu0 %v3598
      %v3805 = vpop.f32.mrf.mxu0
      %v3806 = vadd.f32 0.0, %v3805
      %v3807 = vpop.f32.mrf.mxu0
      %3808 = vmatprep.mubr.f32.mxu0 0.0
      %3809 = vmatmul.mubr.f32.gmra.mxu0 %v3601
      %v3810 = vpop.f32.mrf.mxu0
      %v3811 = vadd.f32 0.0, %v3810
      %v3812 = vpop.f32.mrf.mxu0
      %3813 = vmatprep.mubr.f32.mxu0 0.0
      %3814 = vmatmul.mubr.f32.gmra.mxu0 %v3604
      %v3815 = vpop.f32.mrf.mxu0
      %v3816 = vadd.f32 0.0, %v3815
      %v3817 = vpop.f32.mrf.mxu0
      %3818 = vmatprep.mubr.f32.mxu0 0.0
      %3819 = vmatmul.mubr.f32.gmra.mxu0 %v3607
      %v3820 = vpop.f32.mrf.mxu0
      %v3821 = vadd.f32 0.0, %v3820
      %v3822 = vpop.f32.mrf.mxu0
      %3823 = vmatprep.mubr.f32.mxu0 0.0
      %3824 = vmatmul.mubr.f32.gmra.mxu0 %v3610
      %v3825 = vpop.f32.mrf.mxu0
      %v3826 = vadd.f32 0.0, %v3825
      %v3827 = vpop.f32.mrf.mxu0
      %3828 = vmatprep.mubr.f32.mxu0 0.0
      %3829 = vmatmul.mubr.f32.gmra.mxu0 %v3613
      %v3830 = vpop.f32.mrf.mxu0
      %v3831 = vadd.f32 0.0, %v3830
      %v3832 = vpop.f32.mrf.mxu0
      %3833 = vmatprep.mubr.f32.mxu0 0.0
      %3834 = vmatmul.mubr.f32.gmra.mxu0 %v3616
      %v3835 = vpop.f32.mrf.mxu0
      %v3836 = vadd.f32 0.0, %v3835
      %v3837 = vpop.f32.mrf.mxu0
      %3838 = vmatprep.mubr.f32.mxu0 0.0
      %3839 = vmatmul.mubr.f32.gmra.mxu0 %v3619
      %v3840 = vpop.f32.mrf.mxu0
      %v3841 = vadd.f32 0.0, %v3840
      %v3842 = vpop.f32.mrf.mxu0
      %3843 = vmatprep.mubr.f32.mxu0 0.0
      %3844 = vmatmul.mubr.f32.gmra.mxu0 %v3622
      %v3845 = vpop.f32.mrf.mxu0
      %v3846 = vadd.f32 0.0, %v3845
      %v3847 = vpop.f32.mrf.mxu0
      %3848 = vmatprep.mubr.f32.mxu0 0.0
      %3849 = vmatmul.mubr.f32.gmra.mxu0 %v3625
      %v3850 = vpop.f32.mrf.mxu0
      %v3851 = vadd.f32 0.0, %v3850
      %v3852 = vpop.f32.mrf.mxu0
      %3853 = vmatprep.mubr.f32.mxu0 0.0
      %3854 = vmatmul.mubr.f32.gmra.mxu0 %v3628
      %v3855 = vpop.f32.mrf.mxu0
      %v3856 = vadd.f32 0.0, %v3855
      %v3857 = vpop.f32.mrf.mxu0
      %3858 = vmatprep.mubr.f32.mxu0 0.0
      %3859 = vmatmul.mubr.f32.gmra.mxu0 %v3631
      %v3860 = vpop.f32.mrf.mxu0
      %v3861 = vadd.f32 0.0, %v3860
      %v3862 = vpop.f32.mrf.mxu0
      %3863 = vmatprep.mubr.f32.mxu0 0.0
      %3864 = vmatmul.mubr.f32.gmra.mxu0 %v3634
      %v3865 = vpop.f32.mrf.mxu0
      %v3866 = vadd.f32 0.0, %v3865
      %v3867 = vpop.f32.mrf.mxu0
      %3868 = vmatprep.mubr.f32.mxu0 0.0
      %3869 = vmatmul.mubr.f32.gmra.mxu0 %v3637
      %v3870 = vpop.f32.mrf.mxu0
      %v3871 = vadd.f32 0.0, %v3870
      %v3872 = vpop.f32.mrf.mxu0
      %3873 = vmatprep.mubr.f32.mxu0 0.0
      %3874 = vmatmul.mubr.f32.gmra.mxu0 %v3640
      %v3875 = vpop.f32.mrf.mxu0
      %v3876 = vadd.f32 0.0, %v3875
      %v3877 = vpop.f32.mrf.mxu0
      %3878 = vmatprep.mubr.f32.mxu0 0.0
      %3879 = vmatmul.mubr.f32.gmra.mxu0 %v3643
      %v3880 = vpop.f32.mrf.mxu0
      %v3881 = vadd.f32 0.0, %v3880
      %v3882 = vpop.f32.mrf.mxu0
      %3883 = vmatprep.mubr.f32.mxu0 0.0
      %3884 = vmatmul.mubr.f32.gmra.mxu0 %v3646
      %v3885 = vpop.f32.mrf.mxu0
      %v3886 = vadd.f32 0.0, %v3885
      %v3887 = vpop.f32.mrf.mxu0
      %3888 = vmatprep.mubr.f32.mxu0 0.0
      %3889 = vmatmul.mubr.f32.gmra.mxu0 %v3649
      %v3890 = vpop.f32.mrf.mxu0
      %v3891 = vadd.f32 0.0, %v3890
      %v3892 = vpop.f32.mrf.mxu0
      %3893 = vmatprep.mubr.f32.mxu0 0.0
      %3894 = vmatmul.mubr.f32.gmra.mxu0 %v3652
      %v3895 = vpop.f32.mrf.mxu0
      %v3896 = vadd.f32 0.0, %v3895
      %v3897 = vpop.f32.mrf.mxu0
      %3898 = vmatprep.mubr.f32.mxu0 0.0
      %3899 = vmatmul.mubr.f32.gmra.mxu0 %v3655
      %v3900 = vpop.f32.mrf.mxu0
      %v3901 = vadd.f32 0.0, %v3900
      %v3902 = vpop.f32.mrf.mxu0
      %3903 = vmatprep.mubr.f32.mxu0 0.0
      %3904 = vmatmul.mubr.f32.gmra.mxu0 %v3658
      %v3905 = vpop.f32.mrf.mxu0
      %v3906 = vadd.f32 0.0, %v3905
      %v3907 = vpop.f32.mrf.mxu0
      %3908 = vmatprep.mubr.f32.mxu0 0.0
      %3909 = vmatmul.mubr.f32.gmra.mxu0 %v3661
      %v3910 = vpop.f32.mrf.mxu0
      %v3911 = vadd.f32 0.0, %v3910
      %v3912 = vpop.f32.mrf.mxu0
      %3913 = vmatprep.mubr.f32.mxu0 0.0
      %3914 = vmatmul.mubr.f32.gmra.mxu0 %v3664
      %v3915 = vpop.f32.mrf.mxu0
      %v3916 = vadd.f32 0.0, %v3915
      %v3917 = vpop.f32.mrf.mxu0
      %3918 = vmatprep.mubr.f32.mxu0 0.0
      %3919 = vmatmul.mubr.f32.gmra.mxu0 %v3667
      %v3920 = vpop.f32.mrf.mxu0
      %v3921 = vadd.f32 0.0, %v3920
      %v3922 = vpop.f32.mrf.mxu0
      %3923 = vmatprep.mubr.f32.mxu0 0.0
      %3924 = vmatmul.mubr.f32.gmra.mxu0 %v3670
      %v3925 = vpop.f32.mrf.mxu0
      %v3926 = vadd.f32 0.0, %v3925
      %v3927 = vpop.f32.mrf.mxu0
      %3928 = vmatprep.mubr.f32.mxu0 0.0
      %3929 = vmatmul.mubr.f32.gmra.mxu0 %v3673
      %v3930 = vpop.f32.mrf.mxu0
      %v3931 = vadd.f32 0.0, %v3930
      %v3932 = vpop.f32.mrf.mxu0
      %3933 = vmatprep.mubr.f32.mxu0 0.0
      %3934 = vmatmul.mubr.f32.gmra.mxu0 %v3676
      %v3935 = vpop.f32.mrf.mxu0
      %v3936 = vadd.f32 0.0, %v3935
      %v3937 = vpop.f32.mrf.mxu0
      %3938 = vmatprep.mubr.f32.mxu0 0.0
      %3939 = vmatmul.mubr.f32.gmra.mxu0 %v3679
      %v3940 = vpop.f32.mrf.mxu0
      %v3941 = vadd.f32 0.0, %v3940
      %v3942 = vpop.f32.mrf.mxu0
      %3943 = vmatprep.mubr.f32.mxu0 0.0
      %3944 = vmatmul.mubr.f32.gmra.mxu0 %v3682
      %v3945 = vpop.f32.mrf.mxu0
      %v3946 = vadd.f32 0.0, %v3945
      %v3947 = vpop.f32.mrf.mxu0
      %3948 = vdwg.mxu0
      %v3949 = vadd.f32 %v3482, %v3751
      %v3950 = vadd.f32 %v3483, %v3756
      %v3951 = vadd.f32 %v3484, %v3761
      %v3952 = vadd.f32 %v3485, %v3766
      %v3953 = vadd.f32 %v3486, %v3771
      %v3954 = vadd.f32 %v3487, %v3776
      %v3955 = vadd.f32 %v3488, %v3781
      %v3956 = vadd.f32 %v3489, %v3786
      %v3957 = vadd.f32 %v3490, %v3791
      %v3958 = vadd.f32 %v3491, %v3796
      %v3959 = vadd.f32 %v3492, %v3801
      %v3960 = vadd.f32 %v3493, %v3806
      %v3961 = vadd.f32 %v3494, %v3811
      %v3962 = vadd.f32 %v3495, %v3816
      %v3963 = vadd.f32 %v3496, %v3821
      %v3964 = vadd.f32 %v3497, %v3826
      %v3965 = vadd.f32 %v3498, %v3831
      %v3966 = vadd.f32 %v3499, %v3836
      %v3967 = vadd.f32 %v3500, %v3841
      %v3968 = vadd.f32 %v3501, %v3846
      %v3969 = vadd.f32 %v3502, %v3851
      %v3970 = vadd.f32 %v3503, %v3856
      %v3971 = vadd.f32 %v3504, %v3861
      %v3972 = vadd.f32 %v3505, %v3866
      %v3973 = vadd.f32 %v3506, %v3871
      %v3974 = vadd.f32 %v3507, %v3876
      %v3975 = vadd.f32 %v3508, %v3881
      %v3976 = vadd.f32 %v3509, %v3886
      %v3977 = vadd.f32 %v3510, %v3891
      %v3978 = vadd.f32 %v3511, %v3896
      %v3979 = vadd.f32 %v3512, %v3901
      %v3980 = vadd.f32 %v3513, %v3906
      %v3981 = vadd.f32 %v3514, %v3911
      %v3982 = vadd.f32 %v3515, %v3916
      %v3983 = vadd.f32 %v3516, %v3921
      %v3984 = vadd.f32 %v3517, %v3926
      %v3985 = vadd.f32 %v3518, %v3931
      %v3986 = vadd.f32 %v3519, %v3936
      %v3987 = vadd.f32 %v3520, %v3941
      %v3988 = vadd.f32 %v3521, %v3946
      %v3989 = vld [vmem:[#allocation2 + $0x50] sm:$0xff]
      %v3990 = vld [vmem:[#allocation2 + $0x58] sm:$0xff]
      %v3991 = vld [vmem:[#allocation2 + $0x60] sm:$0xff]
      %v3992 = vld [vmem:[#allocation2 + $0x68] sm:$0xff]
      %v3993 = vld [vmem:[#allocation2 + $0x70] sm:$0xff]
      %v3994 = vld [vmem:[#allocation2 + $0x78] sm:$0xff]
      %v3995 = vld [vmem:[#allocation2 + $0x80] sm:$0xff]
      %v3996 = vld [vmem:[#allocation2 + $0x88] sm:$0xff]
      %v3997 = vld [vmem:[#allocation2 + $0x90] sm:$0xff]
      %v3998 = vld [vmem:[#allocation2 + $0x98] sm:$0xff]
      %v3999 = vld [vmem:[#allocation2 + $0xa0] sm:$0xff]
      %v4000 = vld [vmem:[#allocation2 + $0xa8] sm:$0xff]
      %v4001 = vld [vmem:[#allocation2 + $0xb0] sm:$0xff]
      %v4002 = vld [vmem:[#allocation2 + $0xb8] sm:$0xff]
      %v4003 = vld [vmem:[#allocation2 + $0xc0] sm:$0xff]
      %v4004 = vld [vmem:[#allocation2 + $0xc8] sm:$0xff]
      %v4005 = vld [vmem:[#allocation2 + $0xd0] sm:$0xff]
      %v4006 = vld [vmem:[#allocation2 + $0xd8] sm:$0xff]
      %v4007 = vld [vmem:[#allocation2 + $0xe0] sm:$0xff]
      %v4008 = vld [vmem:[#allocation2 + $0xe8] sm:$0xff]
      %v4009 = vld [vmem:[#allocation2 + $0xf0] sm:$0xff]
      %v4010 = vld [vmem:[#allocation2 + $0xf8] sm:$0xff]
      %v4011 = vld [vmem:[#allocation2 + $0x100] sm:$0xff]
      %v4012 = vld [vmem:[#allocation2 + $0x108] sm:$0xff]
      %v4013 = vld [vmem:[#allocation2 + $0x110] sm:$0xff]
      %v4014 = vld [vmem:[#allocation2 + $0x118] sm:$0xff]
      %v4015 = vld [vmem:[#allocation2 + $0x120] sm:$0xff]
      %v4016 = vld [vmem:[#allocation2 + $0x128] sm:$0xff]
      %v4017 = vld [vmem:[#allocation2 + $0x130] sm:$0xff]
      %v4018 = vld [vmem:[#allocation2 + $0x138] sm:$0xff]
      %v4019 = vld [vmem:[#allocation2 + $0x140] sm:$0xff]
      %v4020 = vld [vmem:[#allocation2 + $0x148] sm:$0xff]
      %v4021 = vld [vmem:[#allocation2 + $0x150] sm:$0xff]
      %v4022 = vld [vmem:[#allocation2 + $0x158] sm:$0xff]
      %v4023 = vld [vmem:[#allocation2 + $0x160] sm:$0xff]
      %v4024 = vld [vmem:[#allocation2 + $0x168] sm:$0xff]
      %v4025 = vld [vmem:[#allocation2 + $0x170] sm:$0xff]
      %v4026 = vld [vmem:[#allocation2 + $0x178] sm:$0xff]
      %v4027 = vld [vmem:[#allocation2 + $0x180] sm:$0xff]
      %v4028 = vld [vmem:[#allocation2 + $0x188] sm:$0xff]
      %s4029 = scalar_lea.vmem %s4, 48
      %v4030 = vld [vmem:[%s4029] sm:$0xff]
      %v4032 = vsel %vm960, %v3989, 0
      %v4035 = vsel %vm960, %v3990, 0
      %v4038 = vsel %vm960, %v3991, 0
      %v4041 = vsel %vm960, %v3992, 0
      %v4044 = vsel %vm960, %v3993, 0
      %v4047 = vsel %vm960, %v3994, 0
      %v4050 = vsel %vm960, %v3995, 0
      %v4053 = vsel %vm960, %v3996, 0
      %v4056 = vsel %vm960, %v3997, 0
      %v4059 = vsel %vm960, %v3998, 0
      %v4062 = vsel %vm960, %v3999, 0
      %v4065 = vsel %vm960, %v4000, 0
      %v4068 = vsel %vm960, %v4001, 0
      %v4071 = vsel %vm960, %v4002, 0
      %v4074 = vsel %vm960, %v4003, 0
      %v4077 = vsel %vm960, %v4004, 0
      %v4080 = vsel %vm960, %v4005, 0
      %v4083 = vsel %vm960, %v4006, 0
      %v4086 = vsel %vm960, %v4007, 0
      %v4089 = vsel %vm960, %v4008, 0
      %v4092 = vsel %vm960, %v4009, 0
      %v4095 = vsel %vm960, %v4010, 0
      %v4098 = vsel %vm960, %v4011, 0
      %v4101 = vsel %vm960, %v4012, 0
      %v4104 = vsel %vm960, %v4013, 0
      %v4107 = vsel %vm960, %v4014, 0
      %v4110 = vsel %vm960, %v4015, 0
      %v4113 = vsel %vm960, %v4016, 0
      %v4116 = vsel %vm960, %v4017, 0
      %v4119 = vsel %vm960, %v4018, 0
      %v4122 = vsel %vm960, %v4019, 0
      %v4125 = vsel %vm960, %v4020, 0
      %v4128 = vsel %vm960, %v4021, 0
      %v4131 = vsel %vm960, %v4022, 0
      %v4134 = vsel %vm960, %v4023, 0
      %v4137 = vsel %vm960, %v4024, 0
      %v4140 = vsel %vm960, %v4025, 0
      %v4143 = vsel %vm960, %v4026, 0
      %v4146 = vsel %vm960, %v4027, 0
      %v4149 = vsel %vm960, %v4028, 0
      %4151 = vmatprep.subr.mxu0 0.0
      %4152 = vmatpush1.msra.mxu0 0.0
      %4153 = vmatprep.subr.mxu0 0.0
      %4154 = vmatpush1.msra.mxu0 0.0
      %4155 = vmatprep.subr.mxu0 0.0
      %4156 = vmatpush1.msra.mxu0 0.0
      %4157 = vmatprep.subr.mxu0 0.0
      %4158 = vmatpush1.msra.mxu0 0.0
      %4159 = vmatprep.subr.mxu0 0.0
      %4160 = vmatpush1.msra.mxu0 0.0
      %4161 = vmatprep.subr.mxu0 0.0
      %4162 = vmatpush1.msra.mxu0 0.0
      %4163 = vmatprep.subr.mxu0 0.0
      %4164 = vmatpush1.msra.mxu0 0.0
      %4165 = vmatprep.subr.mxu0 0.0
      %4166 = vmatpush1.msra.mxu0 0.0
      %4167 = vmatprep.subr.mxu0 0.0
      %4168 = vmatpush1.msra.mxu0 0.0
      %4169 = vmatprep.subr.mxu0 0.0
      %4170 = vmatpush1.msra.mxu0 0.0
      %4171 = vmatprep.subr.mxu0 0.0
      %4172 = vmatpush1.msra.mxu0 0.0
      %4173 = vmatprep.subr.mxu0 0.0
      %4174 = vmatpush1.msra.mxu0 0.0
      %4175 = vmatprep.subr.mxu0 0.0
      %4176 = vmatpush1.msra.mxu0 0.0
      %4177 = vmatprep.subr.mxu0 0.0
      %4178 = vmatpush1.msra.mxu0 0.0
      %4179 = vmatprep.subr.mxu0 0.0
      %4180 = vmatpush1.msra.mxu0 0.0
      %4181 = vmatprep.subr.mxu0 0.0
      %4182 = vmatpush1.msra.mxu0 %v4030
      %4183 = vmatprep.subr.mxu0 0.0
      %4184 = vmatpush2.msra.mxu0 0.0
      %4185 = vmatprep.subr.mxu0 0.0
      %4186 = vmatpush2.msra.mxu0 0.0
      %4187 = vmatprep.subr.mxu0 0.0
      %4188 = vmatpush2.msra.mxu0 0.0
      %4189 = vmatprep.subr.mxu0 0.0
      %4190 = vmatpush2.msra.mxu0 0.0
      %4191 = vmatprep.subr.mxu0 0.0
      %4192 = vmatpush2.msra.mxu0 0.0
      %4193 = vmatprep.subr.mxu0 0.0
      %4194 = vmatpush2.msra.mxu0 0.0
      %4195 = vmatprep.subr.mxu0 0.0
      %4196 = vmatpush2.msra.mxu0 0.0
      %4197 = vmatprep.subr.mxu0 0.0
      %4198 = vmatpush2.msra.mxu0 0.0
      %4199 = vmatprep.subr.mxu0 0.0
      %4200 = vmatpush2.msra.mxu0 0.0
      %4201 = vmatprep.subr.mxu0 0.0
      %4202 = vmatpush2.msra.mxu0 0.0
      %4203 = vmatprep.subr.mxu0 0.0
      %4204 = vmatpush2.msra.mxu0 0.0
      %4205 = vmatprep.subr.mxu0 0.0
      %4206 = vmatpush2.msra.mxu0 0.0
      %4207 = vmatprep.subr.mxu0 0.0
      %4208 = vmatpush2.msra.mxu0 0.0
      %4209 = vmatprep.subr.mxu0 0.0
      %4210 = vmatpush2.msra.mxu0 0.0
      %4211 = vmatprep.subr.mxu0 0.0
      %4212 = vmatpush2.msra.mxu0 0.0
      %4213 = vmatprep.subr.mxu0 0.0
      %4214 = vmatpush2.msra.mxu0 0.0
      %4215 = vmatprep.mubr.f32.mxu0 0.0
      %4216 = vmatmul.mubr.f32.gmra.mxu0 %v4032
      %v4217 = vpop.f32.mrf.mxu0
      %v4218 = vadd.f32 0.0, %v4217
      %v4219 = vpop.f32.mrf.mxu0
      %4220 = vmatprep.mubr.f32.mxu0 0.0
      %4221 = vmatmul.mubr.f32.gmra.mxu0 %v4035
      %v4222 = vpop.f32.mrf.mxu0
      %v4223 = vadd.f32 0.0, %v4222
      %v4224 = vpop.f32.mrf.mxu0
      %4225 = vmatprep.mubr.f32.mxu0 0.0
      %4226 = vmatmul.mubr.f32.gmra.mxu0 %v4038
      %v4227 = vpop.f32.mrf.mxu0
      %v4228 = vadd.f32 0.0, %v4227
      %v4229 = vpop.f32.mrf.mxu0
      %4230 = vmatprep.mubr.f32.mxu0 0.0
      %4231 = vmatmul.mubr.f32.gmra.mxu0 %v4041
      %v4232 = vpop.f32.mrf.mxu0
      %v4233 = vadd.f32 0.0, %v4232
      %v4234 = vpop.f32.mrf.mxu0
      %4235 = vmatprep.mubr.f32.mxu0 0.0
      %4236 = vmatmul.mubr.f32.gmra.mxu0 %v4044
      %v4237 = vpop.f32.mrf.mxu0
      %v4238 = vadd.f32 0.0, %v4237
      %v4239 = vpop.f32.mrf.mxu0
      %4240 = vmatprep.mubr.f32.mxu0 0.0
      %4241 = vmatmul.mubr.f32.gmra.mxu0 %v4047
      %v4242 = vpop.f32.mrf.mxu0
      %v4243 = vadd.f32 0.0, %v4242
      %v4244 = vpop.f32.mrf.mxu0
      %4245 = vmatprep.mubr.f32.mxu0 0.0
      %4246 = vmatmul.mubr.f32.gmra.mxu0 %v4050
      %v4247 = vpop.f32.mrf.mxu0
      %v4248 = vadd.f32 0.0, %v4247
      %v4249 = vpop.f32.mrf.mxu0
      %4250 = vmatprep.mubr.f32.mxu0 0.0
      %4251 = vmatmul.mubr.f32.gmra.mxu0 %v4053
      %v4252 = vpop.f32.mrf.mxu0
      %v4253 = vadd.f32 0.0, %v4252
      %v4254 = vpop.f32.mrf.mxu0
      %4255 = vmatprep.mubr.f32.mxu0 0.0
      %4256 = vmatmul.mubr.f32.gmra.mxu0 %v4056
      %v4257 = vpop.f32.mrf.mxu0
      %v4258 = vadd.f32 0.0, %v4257
      %v4259 = vpop.f32.mrf.mxu0
      %4260 = vmatprep.mubr.f32.mxu0 0.0
      %4261 = vmatmul.mubr.f32.gmra.mxu0 %v4059
      %v4262 = vpop.f32.mrf.mxu0
      %v4263 = vadd.f32 0.0, %v4262
      %v4264 = vpop.f32.mrf.mxu0
      %4265 = vmatprep.mubr.f32.mxu0 0.0
      %4266 = vmatmul.mubr.f32.gmra.mxu0 %v4062
      %v4267 = vpop.f32.mrf.mxu0
      %v4268 = vadd.f32 0.0, %v4267
      %v4269 = vpop.f32.mrf.mxu0
      %4270 = vmatprep.mubr.f32.mxu0 0.0
      %4271 = vmatmul.mubr.f32.gmra.mxu0 %v4065
      %v4272 = vpop.f32.mrf.mxu0
      %v4273 = vadd.f32 0.0, %v4272
      %v4274 = vpop.f32.mrf.mxu0
      %4275 = vmatprep.mubr.f32.mxu0 0.0
      %4276 = vmatmul.mubr.f32.gmra.mxu0 %v4068
      %v4277 = vpop.f32.mrf.mxu0
      %v4278 = vadd.f32 0.0, %v4277
      %v4279 = vpop.f32.mrf.mxu0
      %4280 = vmatprep.mubr.f32.mxu0 0.0
      %4281 = vmatmul.mubr.f32.gmra.mxu0 %v4071
      %v4282 = vpop.f32.mrf.mxu0
      %v4283 = vadd.f32 0.0, %v4282
      %v4284 = vpop.f32.mrf.mxu0
      %4285 = vmatprep.mubr.f32.mxu0 0.0
      %4286 = vmatmul.mubr.f32.gmra.mxu0 %v4074
      %v4287 = vpop.f32.mrf.mxu0
      %v4288 = vadd.f32 0.0, %v4287
      %v4289 = vpop.f32.mrf.mxu0
      %4290 = vmatprep.mubr.f32.mxu0 0.0
      %4291 = vmatmul.mubr.f32.gmra.mxu0 %v4077
      %v4292 = vpop.f32.mrf.mxu0
      %v4293 = vadd.f32 0.0, %v4292
      %v4294 = vpop.f32.mrf.mxu0
      %4295 = vmatprep.mubr.f32.mxu0 0.0
      %4296 = vmatmul.mubr.f32.gmra.mxu0 %v4080
      %v4297 = vpop.f32.mrf.mxu0
      %v4298 = vadd.f32 0.0, %v4297
      %v4299 = vpop.f32.mrf.mxu0
      %4300 = vmatprep.mubr.f32.mxu0 0.0
      %4301 = vmatmul.mubr.f32.gmra.mxu0 %v4083
      %v4302 = vpop.f32.mrf.mxu0
      %v4303 = vadd.f32 0.0, %v4302
      %v4304 = vpop.f32.mrf.mxu0
      %4305 = vmatprep.mubr.f32.mxu0 0.0
      %4306 = vmatmul.mubr.f32.gmra.mxu0 %v4086
      %v4307 = vpop.f32.mrf.mxu0
      %v4308 = vadd.f32 0.0, %v4307
      %v4309 = vpop.f32.mrf.mxu0
      %4310 = vmatprep.mubr.f32.mxu0 0.0
      %4311 = vmatmul.mubr.f32.gmra.mxu0 %v4089
      %v4312 = vpop.f32.mrf.mxu0
      %v4313 = vadd.f32 0.0, %v4312
      %v4314 = vpop.f32.mrf.mxu0
      %4315 = vmatprep.mubr.f32.mxu0 0.0
      %4316 = vmatmul.mubr.f32.gmra.mxu0 %v4092
      %v4317 = vpop.f32.mrf.mxu0
      %v4318 = vadd.f32 0.0, %v4317
      %v4319 = vpop.f32.mrf.mxu0
      %4320 = vmatprep.mubr.f32.mxu0 0.0
      %4321 = vmatmul.mubr.f32.gmra.mxu0 %v4095
      %v4322 = vpop.f32.mrf.mxu0
      %v4323 = vadd.f32 0.0, %v4322
      %v4324 = vpop.f32.mrf.mxu0
      %4325 = vmatprep.mubr.f32.mxu0 0.0
      %4326 = vmatmul.mubr.f32.gmra.mxu0 %v4098
      %v4327 = vpop.f32.mrf.mxu0
      %v4328 = vadd.f32 0.0, %v4327
      %v4329 = vpop.f32.mrf.mxu0
      %4330 = vmatprep.mubr.f32.mxu0 0.0
      %4331 = vmatmul.mubr.f32.gmra.mxu0 %v4101
      %v4332 = vpop.f32.mrf.mxu0
      %v4333 = vadd.f32 0.0, %v4332
      %v4334 = vpop.f32.mrf.mxu0
      %4335 = vmatprep.mubr.f32.mxu0 0.0
      %4336 = vmatmul.mubr.f32.gmra.mxu0 %v4104
      %v4337 = vpop.f32.mrf.mxu0
      %v4338 = vadd.f32 0.0, %v4337
      %v4339 = vpop.f32.mrf.mxu0
      %4340 = vmatprep.mubr.f32.mxu0 0.0
      %4341 = vmatmul.mubr.f32.gmra.mxu0 %v4107
      %v4342 = vpop.f32.mrf.mxu0
      %v4343 = vadd.f32 0.0, %v4342
      %v4344 = vpop.f32.mrf.mxu0
      %4345 = vmatprep.mubr.f32.mxu0 0.0
      %4346 = vmatmul.mubr.f32.gmra.mxu0 %v4110
      %v4347 = vpop.f32.mrf.mxu0
      %v4348 = vadd.f32 0.0, %v4347
      %v4349 = vpop.f32.mrf.mxu0
      %4350 = vmatprep.mubr.f32.mxu0 0.0
      %4351 = vmatmul.mubr.f32.gmra.mxu0 %v4113
      %v4352 = vpop.f32.mrf.mxu0
      %v4353 = vadd.f32 0.0, %v4352
      %v4354 = vpop.f32.mrf.mxu0
      %4355 = vmatprep.mubr.f32.mxu0 0.0
      %4356 = vmatmul.mubr.f32.gmra.mxu0 %v4116
      %v4357 = vpop.f32.mrf.mxu0
      %v4358 = vadd.f32 0.0, %v4357
      %v4359 = vpop.f32.mrf.mxu0
      %4360 = vmatprep.mubr.f32.mxu0 0.0
      %4361 = vmatmul.mubr.f32.gmra.mxu0 %v4119
      %v4362 = vpop.f32.mrf.mxu0
      %v4363 = vadd.f32 0.0, %v4362
      %v4364 = vpop.f32.mrf.mxu0
      %4365 = vmatprep.mubr.f32.mxu0 0.0
      %4366 = vmatmul.mubr.f32.gmra.mxu0 %v4122
      %v4367 = vpop.f32.mrf.mxu0
      %v4368 = vadd.f32 0.0, %v4367
      %v4369 = vpop.f32.mrf.mxu0
      %4370 = vmatprep.mubr.f32.mxu0 0.0
      %4371 = vmatmul.mubr.f32.gmra.mxu0 %v4125
      %v4372 = vpop.f32.mrf.mxu0
      %v4373 = vadd.f32 0.0, %v4372
      %v4374 = vpop.f32.mrf.mxu0
      %4375 = vmatprep.mubr.f32.mxu0 0.0
      %4376 = vmatmul.mubr.f32.gmra.mxu0 %v4128
      %v4377 = vpop.f32.mrf.mxu0
      %v4378 = vadd.f32 0.0, %v4377
      %v4379 = vpop.f32.mrf.mxu0
      %4380 = vmatprep.mubr.f32.mxu0 0.0
      %4381 = vmatmul.mubr.f32.gmra.mxu0 %v4131
      %v4382 = vpop.f32.mrf.mxu0
      %v4383 = vadd.f32 0.0, %v4382
      %v4384 = vpop.f32.mrf.mxu0
      %4385 = vmatprep.mubr.f32.mxu0 0.0
      %4386 = vmatmul.mubr.f32.gmra.mxu0 %v4134
      %v4387 = vpop.f32.mrf.mxu0
      %v4388 = vadd.f32 0.0, %v4387
      %v4389 = vpop.f32.mrf.mxu0
      %4390 = vmatprep.mubr.f32.mxu0 0.0
      %4391 = vmatmul.mubr.f32.gmra.mxu0 %v4137
      %v4392 = vpop.f32.mrf.mxu0
      %v4393 = vadd.f32 0.0, %v4392
      %v4394 = vpop.f32.mrf.mxu0
      %4395 = vmatprep.mubr.f32.mxu0 0.0
      %4396 = vmatmul.mubr.f32.gmra.mxu0 %v4140
      %v4397 = vpop.f32.mrf.mxu0
      %v4398 = vadd.f32 0.0, %v4397
      %v4399 = vpop.f32.mrf.mxu0
      %4400 = vmatprep.mubr.f32.mxu0 0.0
      %4401 = vmatmul.mubr.f32.gmra.mxu0 %v4143
      %v4402 = vpop.f32.mrf.mxu0
      %v4403 = vadd.f32 0.0, %v4402
      %v4404 = vpop.f32.mrf.mxu0
      %4405 = vmatprep.mubr.f32.mxu0 0.0
      %4406 = vmatmul.mubr.f32.gmra.mxu0 %v4146
      %v4407 = vpop.f32.mrf.mxu0
      %v4408 = vadd.f32 0.0, %v4407
      %v4409 = vpop.f32.mrf.mxu0
      %4410 = vmatprep.mubr.f32.mxu0 0.0
      %4411 = vmatmul.mubr.f32.gmra.mxu0 %v4149
      %v4412 = vpop.f32.mrf.mxu0
      %v4413 = vadd.f32 0.0, %v4412
      %v4414 = vpop.f32.mrf.mxu0
      %4415 = vdwg.mxu0
      %v4416 = vadd.f32 %v3949, %v4218
      %v4417 = vadd.f32 %v3950, %v4223
      %v4418 = vadd.f32 %v3951, %v4228
      %v4419 = vadd.f32 %v3952, %v4233
      %v4420 = vadd.f32 %v3953, %v4238
      %v4421 = vadd.f32 %v3954, %v4243
      %v4422 = vadd.f32 %v3955, %v4248
      %v4423 = vadd.f32 %v3956, %v4253
      %v4424 = vadd.f32 %v3957, %v4258
      %v4425 = vadd.f32 %v3958, %v4263
      %v4426 = vadd.f32 %v3959, %v4268
      %v4427 = vadd.f32 %v3960, %v4273
      %v4428 = vadd.f32 %v3961, %v4278
      %v4429 = vadd.f32 %v3962, %v4283
      %v4430 = vadd.f32 %v3963, %v4288
      %v4431 = vadd.f32 %v3964, %v4293
      %v4432 = vadd.f32 %v3965, %v4298
      %v4433 = vadd.f32 %v3966, %v4303
      %v4434 = vadd.f32 %v3967, %v4308
      %v4435 = vadd.f32 %v3968, %v4313
      %v4436 = vadd.f32 %v3969, %v4318
      %v4437 = vadd.f32 %v3970, %v4323
      %v4438 = vadd.f32 %v3971, %v4328
      %v4439 = vadd.f32 %v3972, %v4333
      %v4440 = vadd.f32 %v3973, %v4338
      %v4441 = vadd.f32 %v3974, %v4343
      %v4442 = vadd.f32 %v3975, %v4348
      %v4443 = vadd.f32 %v3976, %v4353
      %v4444 = vadd.f32 %v3977, %v4358
      %v4445 = vadd.f32 %v3978, %v4363
      %v4446 = vadd.f32 %v3979, %v4368
      %v4447 = vadd.f32 %v3980, %v4373
      %v4448 = vadd.f32 %v3981, %v4378
      %v4449 = vadd.f32 %v3982, %v4383
      %v4450 = vadd.f32 %v3983, %v4388
      %v4451 = vadd.f32 %v3984, %v4393
      %v4452 = vadd.f32 %v3985, %v4398
      %v4453 = vadd.f32 %v3986, %v4403
      %v4454 = vadd.f32 %v3987, %v4408
      %v4455 = vadd.f32 %v3988, %v4413
      %v4456 = vld [vmem:[#allocation2 + $0x51] sm:$0xff]
      %v4457 = vld [vmem:[#allocation2 + $0x59] sm:$0xff]
      %v4458 = vld [vmem:[#allocation2 + $0x61] sm:$0xff]
      %v4459 = vld [vmem:[#allocation2 + $0x69] sm:$0xff]
      %v4460 = vld [vmem:[#allocation2 + $0x71] sm:$0xff]
      %v4461 = vld [vmem:[#allocation2 + $0x79] sm:$0xff]
      %v4462 = vld [vmem:[#allocation2 + $0x81] sm:$0xff]
      %v4463 = vld [vmem:[#allocation2 + $0x89] sm:$0xff]
      %v4464 = vld [vmem:[#allocation2 + $0x91] sm:$0xff]
      %v4465 = vld [vmem:[#allocation2 + $0x99] sm:$0xff]
      %v4466 = vld [vmem:[#allocation2 + $0xa1] sm:$0xff]
      %v4467 = vld [vmem:[#allocation2 + $0xa9] sm:$0xff]
      %v4468 = vld [vmem:[#allocation2 + $0xb1] sm:$0xff]
      %v4469 = vld [vmem:[#allocation2 + $0xb9] sm:$0xff]
      %v4470 = vld [vmem:[#allocation2 + $0xc1] sm:$0xff]
      %v4471 = vld [vmem:[#allocation2 + $0xc9] sm:$0xff]
      %v4472 = vld [vmem:[#allocation2 + $0xd1] sm:$0xff]
      %v4473 = vld [vmem:[#allocation2 + $0xd9] sm:$0xff]
      %v4474 = vld [vmem:[#allocation2 + $0xe1] sm:$0xff]
      %v4475 = vld [vmem:[#allocation2 + $0xe9] sm:$0xff]
      %v4476 = vld [vmem:[#allocation2 + $0xf1] sm:$0xff]
      %v4477 = vld [vmem:[#allocation2 + $0xf9] sm:$0xff]
      %v4478 = vld [vmem:[#allocation2 + $0x101] sm:$0xff]
      %v4479 = vld [vmem:[#allocation2 + $0x109] sm:$0xff]
      %v4480 = vld [vmem:[#allocation2 + $0x111] sm:$0xff]
      %v4481 = vld [vmem:[#allocation2 + $0x119] sm:$0xff]
      %v4482 = vld [vmem:[#allocation2 + $0x121] sm:$0xff]
      %v4483 = vld [vmem:[#allocation2 + $0x129] sm:$0xff]
      %v4484 = vld [vmem:[#allocation2 + $0x131] sm:$0xff]
      %v4485 = vld [vmem:[#allocation2 + $0x139] sm:$0xff]
      %v4486 = vld [vmem:[#allocation2 + $0x141] sm:$0xff]
      %v4487 = vld [vmem:[#allocation2 + $0x149] sm:$0xff]
      %v4488 = vld [vmem:[#allocation2 + $0x151] sm:$0xff]
      %v4489 = vld [vmem:[#allocation2 + $0x159] sm:$0xff]
      %v4490 = vld [vmem:[#allocation2 + $0x161] sm:$0xff]
      %v4491 = vld [vmem:[#allocation2 + $0x169] sm:$0xff]
      %v4492 = vld [vmem:[#allocation2 + $0x171] sm:$0xff]
      %v4493 = vld [vmem:[#allocation2 + $0x179] sm:$0xff]
      %v4494 = vld [vmem:[#allocation2 + $0x181] sm:$0xff]
      %v4495 = vld [vmem:[#allocation2 + $0x189] sm:$0xff]
      %s4496 = scalar_lea.vmem %s4, 56
      %v4497 = vld [vmem:[%s4496] sm:$0xff]
      %v4499 = vsel %vm960, %v4456, 0
      %v4502 = vsel %vm960, %v4457, 0
      %v4505 = vsel %vm960, %v4458, 0
      %v4508 = vsel %vm960, %v4459, 0
      %v4511 = vsel %vm960, %v4460, 0
      %v4514 = vsel %vm960, %v4461, 0
      %v4517 = vsel %vm960, %v4462, 0
      %v4520 = vsel %vm960, %v4463, 0
      %v4523 = vsel %vm960, %v4464, 0
      %v4526 = vsel %vm960, %v4465, 0
      %v4529 = vsel %vm960, %v4466, 0
      %v4532 = vsel %vm960, %v4467, 0
      %v4535 = vsel %vm960, %v4468, 0
      %v4538 = vsel %vm960, %v4469, 0
      %v4541 = vsel %vm960, %v4470, 0
      %v4544 = vsel %vm960, %v4471, 0
      %v4547 = vsel %vm960, %v4472, 0
      %v4550 = vsel %vm960, %v4473, 0
      %v4553 = vsel %vm960, %v4474, 0
      %v4556 = vsel %vm960, %v4475, 0
      %v4559 = vsel %vm960, %v4476, 0
      %v4562 = vsel %vm960, %v4477, 0
      %v4565 = vsel %vm960, %v4478, 0
      %v4568 = vsel %vm960, %v4479, 0
      %v4571 = vsel %vm960, %v4480, 0
      %v4574 = vsel %vm960, %v4481, 0
      %v4577 = vsel %vm960, %v4482, 0
      %v4580 = vsel %vm960, %v4483, 0
      %v4583 = vsel %vm960, %v4484, 0
      %v4586 = vsel %vm960, %v4485, 0
      %v4589 = vsel %vm960, %v4486, 0
      %v4592 = vsel %vm960, %v4487, 0
      %v4595 = vsel %vm960, %v4488, 0
      %v4598 = vsel %vm960, %v4489, 0
      %v4601 = vsel %vm960, %v4490, 0
      %v4604 = vsel %vm960, %v4491, 0
      %v4607 = vsel %vm960, %v4492, 0
      %v4610 = vsel %vm960, %v4493, 0
      %v4613 = vsel %vm960, %v4494, 0
      %v4616 = vsel %vm960, %v4495, 0
      %4618 = vmatprep.subr.mxu0 0.0
      %4619 = vmatpush1.msra.mxu0 0.0
      %4620 = vmatprep.subr.mxu0 0.0
      %4621 = vmatpush1.msra.mxu0 0.0
      %4622 = vmatprep.subr.mxu0 0.0
      %4623 = vmatpush1.msra.mxu0 0.0
      %4624 = vmatprep.subr.mxu0 0.0
      %4625 = vmatpush1.msra.mxu0 0.0
      %4626 = vmatprep.subr.mxu0 0.0
      %4627 = vmatpush1.msra.mxu0 0.0
      %4628 = vmatprep.subr.mxu0 0.0
      %4629 = vmatpush1.msra.mxu0 0.0
      %4630 = vmatprep.subr.mxu0 0.0
      %4631 = vmatpush1.msra.mxu0 0.0
      %4632 = vmatprep.subr.mxu0 0.0
      %4633 = vmatpush1.msra.mxu0 0.0
      %4634 = vmatprep.subr.mxu0 0.0
      %4635 = vmatpush1.msra.mxu0 0.0
      %4636 = vmatprep.subr.mxu0 0.0
      %4637 = vmatpush1.msra.mxu0 0.0
      %4638 = vmatprep.subr.mxu0 0.0
      %4639 = vmatpush1.msra.mxu0 0.0
      %4640 = vmatprep.subr.mxu0 0.0
      %4641 = vmatpush1.msra.mxu0 0.0
      %4642 = vmatprep.subr.mxu0 0.0
      %4643 = vmatpush1.msra.mxu0 0.0
      %4644 = vmatprep.subr.mxu0 0.0
      %4645 = vmatpush1.msra.mxu0 0.0
      %4646 = vmatprep.subr.mxu0 0.0
      %4647 = vmatpush1.msra.mxu0 0.0
      %4648 = vmatprep.subr.mxu0 0.0
      %4649 = vmatpush1.msra.mxu0 %v4497
      %4650 = vmatprep.subr.mxu0 0.0
      %4651 = vmatpush2.msra.mxu0 0.0
      %4652 = vmatprep.subr.mxu0 0.0
      %4653 = vmatpush2.msra.mxu0 0.0
      %4654 = vmatprep.subr.mxu0 0.0
      %4655 = vmatpush2.msra.mxu0 0.0
      %4656 = vmatprep.subr.mxu0 0.0
      %4657 = vmatpush2.msra.mxu0 0.0
      %4658 = vmatprep.subr.mxu0 0.0
      %4659 = vmatpush2.msra.mxu0 0.0
      %4660 = vmatprep.subr.mxu0 0.0
      %4661 = vmatpush2.msra.mxu0 0.0
      %4662 = vmatprep.subr.mxu0 0.0
      %4663 = vmatpush2.msra.mxu0 0.0
      %4664 = vmatprep.subr.mxu0 0.0
      %4665 = vmatpush2.msra.mxu0 0.0
      %4666 = vmatprep.subr.mxu0 0.0
      %4667 = vmatpush2.msra.mxu0 0.0
      %4668 = vmatprep.subr.mxu0 0.0
      %4669 = vmatpush2.msra.mxu0 0.0
      %4670 = vmatprep.subr.mxu0 0.0
      %4671 = vmatpush2.msra.mxu0 0.0
      %4672 = vmatprep.subr.mxu0 0.0
      %4673 = vmatpush2.msra.mxu0 0.0
      %4674 = vmatprep.subr.mxu0 0.0
      %4675 = vmatpush2.msra.mxu0 0.0
      %4676 = vmatprep.subr.mxu0 0.0
      %4677 = vmatpush2.msra.mxu0 0.0
      %4678 = vmatprep.subr.mxu0 0.0
      %4679 = vmatpush2.msra.mxu0 0.0
      %4680 = vmatprep.subr.mxu0 0.0
      %4681 = vmatpush2.msra.mxu0 0.0
      %4682 = vmatprep.mubr.f32.mxu0 0.0
      %4683 = vmatmul.mubr.f32.gmra.mxu0 %v4499
      %v4684 = vpop.f32.mrf.mxu0
      %v4685 = vadd.f32 0.0, %v4684
      %v4686 = vpop.f32.mrf.mxu0
      %4687 = vmatprep.mubr.f32.mxu0 0.0
      %4688 = vmatmul.mubr.f32.gmra.mxu0 %v4502
      %v4689 = vpop.f32.mrf.mxu0
      %v4690 = vadd.f32 0.0, %v4689
      %v4691 = vpop.f32.mrf.mxu0
      %4692 = vmatprep.mubr.f32.mxu0 0.0
      %4693 = vmatmul.mubr.f32.gmra.mxu0 %v4505
      %v4694 = vpop.f32.mrf.mxu0
      %v4695 = vadd.f32 0.0, %v4694
      %v4696 = vpop.f32.mrf.mxu0
      %4697 = vmatprep.mubr.f32.mxu0 0.0
      %4698 = vmatmul.mubr.f32.gmra.mxu0 %v4508
      %v4699 = vpop.f32.mrf.mxu0
      %v4700 = vadd.f32 0.0, %v4699
      %v4701 = vpop.f32.mrf.mxu0
      %4702 = vmatprep.mubr.f32.mxu0 0.0
      %4703 = vmatmul.mubr.f32.gmra.mxu0 %v4511
      %v4704 = vpop.f32.mrf.mxu0
      %v4705 = vadd.f32 0.0, %v4704
      %v4706 = vpop.f32.mrf.mxu0
      %4707 = vmatprep.mubr.f32.mxu0 0.0
      %4708 = vmatmul.mubr.f32.gmra.mxu0 %v4514
      %v4709 = vpop.f32.mrf.mxu0
      %v4710 = vadd.f32 0.0, %v4709
      %v4711 = vpop.f32.mrf.mxu0
      %4712 = vmatprep.mubr.f32.mxu0 0.0
      %4713 = vmatmul.mubr.f32.gmra.mxu0 %v4517
      %v4714 = vpop.f32.mrf.mxu0
      %v4715 = vadd.f32 0.0, %v4714
      %v4716 = vpop.f32.mrf.mxu0
      %4717 = vmatprep.mubr.f32.mxu0 0.0
      %4718 = vmatmul.mubr.f32.gmra.mxu0 %v4520
      %v4719 = vpop.f32.mrf.mxu0
      %v4720 = vadd.f32 0.0, %v4719
      %v4721 = vpop.f32.mrf.mxu0
      %4722 = vmatprep.mubr.f32.mxu0 0.0
      %4723 = vmatmul.mubr.f32.gmra.mxu0 %v4523
      %v4724 = vpop.f32.mrf.mxu0
      %v4725 = vadd.f32 0.0, %v4724
      %v4726 = vpop.f32.mrf.mxu0
      %4727 = vmatprep.mubr.f32.mxu0 0.0
      %4728 = vmatmul.mubr.f32.gmra.mxu0 %v4526
      %v4729 = vpop.f32.mrf.mxu0
      %v4730 = vadd.f32 0.0, %v4729
      %v4731 = vpop.f32.mrf.mxu0
      %4732 = vmatprep.mubr.f32.mxu0 0.0
      %4733 = vmatmul.mubr.f32.gmra.mxu0 %v4529
      %v4734 = vpop.f32.mrf.mxu0
      %v4735 = vadd.f32 0.0, %v4734
      %v4736 = vpop.f32.mrf.mxu0
      %4737 = vmatprep.mubr.f32.mxu0 0.0
      %4738 = vmatmul.mubr.f32.gmra.mxu0 %v4532
      %v4739 = vpop.f32.mrf.mxu0
      %v4740 = vadd.f32 0.0, %v4739
      %v4741 = vpop.f32.mrf.mxu0
      %4742 = vmatprep.mubr.f32.mxu0 0.0
      %4743 = vmatmul.mubr.f32.gmra.mxu0 %v4535
      %v4744 = vpop.f32.mrf.mxu0
      %v4745 = vadd.f32 0.0, %v4744
      %v4746 = vpop.f32.mrf.mxu0
      %4747 = vmatprep.mubr.f32.mxu0 0.0
      %4748 = vmatmul.mubr.f32.gmra.mxu0 %v4538
      %v4749 = vpop.f32.mrf.mxu0
      %v4750 = vadd.f32 0.0, %v4749
      %v4751 = vpop.f32.mrf.mxu0
      %4752 = vmatprep.mubr.f32.mxu0 0.0
      %4753 = vmatmul.mubr.f32.gmra.mxu0 %v4541
      %v4754 = vpop.f32.mrf.mxu0
      %v4755 = vadd.f32 0.0, %v4754
      %v4756 = vpop.f32.mrf.mxu0
      %4757 = vmatprep.mubr.f32.mxu0 0.0
      %4758 = vmatmul.mubr.f32.gmra.mxu0 %v4544
      %v4759 = vpop.f32.mrf.mxu0
      %v4760 = vadd.f32 0.0, %v4759
      %v4761 = vpop.f32.mrf.mxu0
      %4762 = vmatprep.mubr.f32.mxu0 0.0
      %4763 = vmatmul.mubr.f32.gmra.mxu0 %v4547
      %v4764 = vpop.f32.mrf.mxu0
      %v4765 = vadd.f32 0.0, %v4764
      %v4766 = vpop.f32.mrf.mxu0
      %4767 = vmatprep.mubr.f32.mxu0 0.0
      %4768 = vmatmul.mubr.f32.gmra.mxu0 %v4550
      %v4769 = vpop.f32.mrf.mxu0
      %v4770 = vadd.f32 0.0, %v4769
      %v4771 = vpop.f32.mrf.mxu0
      %4772 = vmatprep.mubr.f32.mxu0 0.0
      %4773 = vmatmul.mubr.f32.gmra.mxu0 %v4553
      %v4774 = vpop.f32.mrf.mxu0
      %v4775 = vadd.f32 0.0, %v4774
      %v4776 = vpop.f32.mrf.mxu0
      %4777 = vmatprep.mubr.f32.mxu0 0.0
      %4778 = vmatmul.mubr.f32.gmra.mxu0 %v4556
      %v4779 = vpop.f32.mrf.mxu0
      %v4780 = vadd.f32 0.0, %v4779
      %v4781 = vpop.f32.mrf.mxu0
      %4782 = vmatprep.mubr.f32.mxu0 0.0
      %4783 = vmatmul.mubr.f32.gmra.mxu0 %v4559
      %v4784 = vpop.f32.mrf.mxu0
      %v4785 = vadd.f32 0.0, %v4784
      %v4786 = vpop.f32.mrf.mxu0
      %4787 = vmatprep.mubr.f32.mxu0 0.0
      %4788 = vmatmul.mubr.f32.gmra.mxu0 %v4562
      %v4789 = vpop.f32.mrf.mxu0
      %v4790 = vadd.f32 0.0, %v4789
      %v4791 = vpop.f32.mrf.mxu0
      %4792 = vmatprep.mubr.f32.mxu0 0.0
      %4793 = vmatmul.mubr.f32.gmra.mxu0 %v4565
      %v4794 = vpop.f32.mrf.mxu0
      %v4795 = vadd.f32 0.0, %v4794
      %v4796 = vpop.f32.mrf.mxu0
      %4797 = vmatprep.mubr.f32.mxu0 0.0
      %4798 = vmatmul.mubr.f32.gmra.mxu0 %v4568
      %v4799 = vpop.f32.mrf.mxu0
      %v4800 = vadd.f32 0.0, %v4799
      %v4801 = vpop.f32.mrf.mxu0
      %4802 = vmatprep.mubr.f32.mxu0 0.0
      %4803 = vmatmul.mubr.f32.gmra.mxu0 %v4571
      %v4804 = vpop.f32.mrf.mxu0
      %v4805 = vadd.f32 0.0, %v4804
      %v4806 = vpop.f32.mrf.mxu0
      %4807 = vmatprep.mubr.f32.mxu0 0.0
      %4808 = vmatmul.mubr.f32.gmra.mxu0 %v4574
      %v4809 = vpop.f32.mrf.mxu0
      %v4810 = vadd.f32 0.0, %v4809
      %v4811 = vpop.f32.mrf.mxu0
      %4812 = vmatprep.mubr.f32.mxu0 0.0
      %4813 = vmatmul.mubr.f32.gmra.mxu0 %v4577
      %v4814 = vpop.f32.mrf.mxu0
      %v4815 = vadd.f32 0.0, %v4814
      %v4816 = vpop.f32.mrf.mxu0
      %4817 = vmatprep.mubr.f32.mxu0 0.0
      %4818 = vmatmul.mubr.f32.gmra.mxu0 %v4580
      %v4819 = vpop.f32.mrf.mxu0
      %v4820 = vadd.f32 0.0, %v4819
      %v4821 = vpop.f32.mrf.mxu0
      %4822 = vmatprep.mubr.f32.mxu0 0.0
      %4823 = vmatmul.mubr.f32.gmra.mxu0 %v4583
      %v4824 = vpop.f32.mrf.mxu0
      %v4825 = vadd.f32 0.0, %v4824
      %v4826 = vpop.f32.mrf.mxu0
      %4827 = vmatprep.mubr.f32.mxu0 0.0
      %4828 = vmatmul.mubr.f32.gmra.mxu0 %v4586
      %v4829 = vpop.f32.mrf.mxu0
      %v4830 = vadd.f32 0.0, %v4829
      %v4831 = vpop.f32.mrf.mxu0
      %4832 = vmatprep.mubr.f32.mxu0 0.0
      %4833 = vmatmul.mubr.f32.gmra.mxu0 %v4589
      %v4834 = vpop.f32.mrf.mxu0
      %v4835 = vadd.f32 0.0, %v4834
      %v4836 = vpop.f32.mrf.mxu0
      %4837 = vmatprep.mubr.f32.mxu0 0.0
      %4838 = vmatmul.mubr.f32.gmra.mxu0 %v4592
      %v4839 = vpop.f32.mrf.mxu0
      %v4840 = vadd.f32 0.0, %v4839
      %v4841 = vpop.f32.mrf.mxu0
      %4842 = vmatprep.mubr.f32.mxu0 0.0
      %4843 = vmatmul.mubr.f32.gmra.mxu0 %v4595
      %v4844 = vpop.f32.mrf.mxu0
      %v4845 = vadd.f32 0.0, %v4844
      %v4846 = vpop.f32.mrf.mxu0
      %4847 = vmatprep.mubr.f32.mxu0 0.0
      %4848 = vmatmul.mubr.f32.gmra.mxu0 %v4598
      %v4849 = vpop.f32.mrf.mxu0
      %v4850 = vadd.f32 0.0, %v4849
      %v4851 = vpop.f32.mrf.mxu0
      %4852 = vmatprep.mubr.f32.mxu0 0.0
      %4853 = vmatmul.mubr.f32.gmra.mxu0 %v4601
      %v4854 = vpop.f32.mrf.mxu0
      %v4855 = vadd.f32 0.0, %v4854
      %v4856 = vpop.f32.mrf.mxu0
      %4857 = vmatprep.mubr.f32.mxu0 0.0
      %4858 = vmatmul.mubr.f32.gmra.mxu0 %v4604
      %v4859 = vpop.f32.mrf.mxu0
      %v4860 = vadd.f32 0.0, %v4859
      %v4861 = vpop.f32.mrf.mxu0
      %4862 = vmatprep.mubr.f32.mxu0 0.0
      %4863 = vmatmul.mubr.f32.gmra.mxu0 %v4607
      %v4864 = vpop.f32.mrf.mxu0
      %v4865 = vadd.f32 0.0, %v4864
      %v4866 = vpop.f32.mrf.mxu0
      %4867 = vmatprep.mubr.f32.mxu0 0.0
      %4868 = vmatmul.mubr.f32.gmra.mxu0 %v4610
      %v4869 = vpop.f32.mrf.mxu0
      %v4870 = vadd.f32 0.0, %v4869
      %v4871 = vpop.f32.mrf.mxu0
      %4872 = vmatprep.mubr.f32.mxu0 0.0
      %4873 = vmatmul.mubr.f32.gmra.mxu0 %v4613
      %v4874 = vpop.f32.mrf.mxu0
      %v4875 = vadd.f32 0.0, %v4874
      %v4876 = vpop.f32.mrf.mxu0
      %4877 = vmatprep.mubr.f32.mxu0 0.0
      %4878 = vmatmul.mubr.f32.gmra.mxu0 %v4616
      %v4879 = vpop.f32.mrf.mxu0
      %v4880 = vadd.f32 0.0, %v4879
      %v4881 = vpop.f32.mrf.mxu0
      %4882 = vdwg.mxu0
      %v4883 = vadd.f32 %v4416, %v4685
      %v4884 = vadd.f32 %v4417, %v4690
      %v4885 = vadd.f32 %v4418, %v4695
      %v4886 = vadd.f32 %v4419, %v4700
      %v4887 = vadd.f32 %v4420, %v4705
      %v4888 = vadd.f32 %v4421, %v4710
      %v4889 = vadd.f32 %v4422, %v4715
      %v4890 = vadd.f32 %v4423, %v4720
      %v4891 = vadd.f32 %v4424, %v4725
      %v4892 = vadd.f32 %v4425, %v4730
      %v4893 = vadd.f32 %v4426, %v4735
      %v4894 = vadd.f32 %v4427, %v4740
      %v4895 = vadd.f32 %v4428, %v4745
      %v4896 = vadd.f32 %v4429, %v4750
      %v4897 = vadd.f32 %v4430, %v4755
      %v4898 = vadd.f32 %v4431, %v4760
      %v4899 = vadd.f32 %v4432, %v4765
      %v4900 = vadd.f32 %v4433, %v4770
      %v4901 = vadd.f32 %v4434, %v4775
      %v4902 = vadd.f32 %v4435, %v4780
      %v4903 = vadd.f32 %v4436, %v4785
      %v4904 = vadd.f32 %v4437, %v4790
      %v4905 = vadd.f32 %v4438, %v4795
      %v4906 = vadd.f32 %v4439, %v4800
      %v4907 = vadd.f32 %v4440, %v4805
      %v4908 = vadd.f32 %v4441, %v4810
      %v4909 = vadd.f32 %v4442, %v4815
      %v4910 = vadd.f32 %v4443, %v4820
      %v4911 = vadd.f32 %v4444, %v4825
      %v4912 = vadd.f32 %v4445, %v4830
      %v4913 = vadd.f32 %v4446, %v4835
      %v4914 = vadd.f32 %v4447, %v4840
      %v4915 = vadd.f32 %v4448, %v4845
      %v4916 = vadd.f32 %v4449, %v4850
      %v4917 = vadd.f32 %v4450, %v4855
      %v4918 = vadd.f32 %v4451, %v4860
      %v4919 = vadd.f32 %v4452, %v4865
      %v4920 = vadd.f32 %v4453, %v4870
      %v4921 = vadd.f32 %v4454, %v4875
      %v4922 = vadd.f32 %v4455, %v4880
      %v4923 = vld [vmem:[#allocation2 + $0x52] sm:$0xff]
      %v4924 = vld [vmem:[#allocation2 + $0x5a] sm:$0xff]
      %v4925 = vld [vmem:[#allocation2 + $0x62] sm:$0xff]
      %v4926 = vld [vmem:[#allocation2 + $0x6a] sm:$0xff]
      %v4927 = vld [vmem:[#allocation2 + $0x72] sm:$0xff]
      %v4928 = vld [vmem:[#allocation2 + $0x7a] sm:$0xff]
      %v4929 = vld [vmem:[#allocation2 + $0x82] sm:$0xff]
      %v4930 = vld [vmem:[#allocation2 + $0x8a] sm:$0xff]
      %v4931 = vld [vmem:[#allocation2 + $0x92] sm:$0xff]
      %v4932 = vld [vmem:[#allocation2 + $0x9a] sm:$0xff]
      %v4933 = vld [vmem:[#allocation2 + $0xa2] sm:$0xff]
      %v4934 = vld [vmem:[#allocation2 + $0xaa] sm:$0xff]
      %v4935 = vld [vmem:[#allocation2 + $0xb2] sm:$0xff]
      %v4936 = vld [vmem:[#allocation2 + $0xba] sm:$0xff]
      %v4937 = vld [vmem:[#allocation2 + $0xc2] sm:$0xff]
      %v4938 = vld [vmem:[#allocation2 + $0xca] sm:$0xff]
      %v4939 = vld [vmem:[#allocation2 + $0xd2] sm:$0xff]
      %v4940 = vld [vmem:[#allocation2 + $0xda] sm:$0xff]
      %v4941 = vld [vmem:[#allocation2 + $0xe2] sm:$0xff]
      %v4942 = vld [vmem:[#allocation2 + $0xea] sm:$0xff]
      %v4943 = vld [vmem:[#allocation2 + $0xf2] sm:$0xff]
      %v4944 = vld [vmem:[#allocation2 + $0xfa] sm:$0xff]
      %v4945 = vld [vmem:[#allocation2 + $0x102] sm:$0xff]
      %v4946 = vld [vmem:[#allocation2 + $0x10a] sm:$0xff]
      %v4947 = vld [vmem:[#allocation2 + $0x112] sm:$0xff]
      %v4948 = vld [vmem:[#allocation2 + $0x11a] sm:$0xff]
      %v4949 = vld [vmem:[#allocation2 + $0x122] sm:$0xff]
      %v4950 = vld [vmem:[#allocation2 + $0x12a] sm:$0xff]
      %v4951 = vld [vmem:[#allocation2 + $0x132] sm:$0xff]
      %v4952 = vld [vmem:[#allocation2 + $0x13a] sm:$0xff]
      %v4953 = vld [vmem:[#allocation2 + $0x142] sm:$0xff]
      %v4954 = vld [vmem:[#allocation2 + $0x14a] sm:$0xff]
      %v4955 = vld [vmem:[#allocation2 + $0x152] sm:$0xff]
      %v4956 = vld [vmem:[#allocation2 + $0x15a] sm:$0xff]
      %v4957 = vld [vmem:[#allocation2 + $0x162] sm:$0xff]
      %v4958 = vld [vmem:[#allocation2 + $0x16a] sm:$0xff]
      %v4959 = vld [vmem:[#allocation2 + $0x172] sm:$0xff]
      %v4960 = vld [vmem:[#allocation2 + $0x17a] sm:$0xff]
      %v4961 = vld [vmem:[#allocation2 + $0x182] sm:$0xff]
      %v4962 = vld [vmem:[#allocation2 + $0x18a] sm:$0xff]
      %s4963 = scalar_lea.vmem %s4, 64
      %v4964 = vld [vmem:[%s4963] sm:$0xff]
      %v4966 = vsel %vm960, %v4923, 0
      %v4969 = vsel %vm960, %v4924, 0
      %v4972 = vsel %vm960, %v4925, 0
      %v4975 = vsel %vm960, %v4926, 0
      %v4978 = vsel %vm960, %v4927, 0
      %v4981 = vsel %vm960, %v4928, 0
      %v4984 = vsel %vm960, %v4929, 0
      %v4987 = vsel %vm960, %v4930, 0
      %v4990 = vsel %vm960, %v4931, 0
      %v4993 = vsel %vm960, %v4932, 0
      %v4996 = vsel %vm960, %v4933, 0
      %v4999 = vsel %vm960, %v4934, 0
      %v5002 = vsel %vm960, %v4935, 0
      %v5005 = vsel %vm960, %v4936, 0
      %v5008 = vsel %vm960, %v4937, 0
      %v5011 = vsel %vm960, %v4938, 0
      %v5014 = vsel %vm960, %v4939, 0
      %v5017 = vsel %vm960, %v4940, 0
      %v5020 = vsel %vm960, %v4941, 0
      %v5023 = vsel %vm960, %v4942, 0
      %v5026 = vsel %vm960, %v4943, 0
      %v5029 = vsel %vm960, %v4944, 0
      %v5032 = vsel %vm960, %v4945, 0
      %v5035 = vsel %vm960, %v4946, 0
      %v5038 = vsel %vm960, %v4947, 0
      %v5041 = vsel %vm960, %v4948, 0
      %v5044 = vsel %vm960, %v4949, 0
      %v5047 = vsel %vm960, %v4950, 0
      %v5050 = vsel %vm960, %v4951, 0
      %v5053 = vsel %vm960, %v4952, 0
      %v5056 = vsel %vm960, %v4953, 0
      %v5059 = vsel %vm960, %v4954, 0
      %v5062 = vsel %vm960, %v4955, 0
      %v5065 = vsel %vm960, %v4956, 0
      %v5068 = vsel %vm960, %v4957, 0
      %v5071 = vsel %vm960, %v4958, 0
      %v5074 = vsel %vm960, %v4959, 0
      %v5077 = vsel %vm960, %v4960, 0
      %v5080 = vsel %vm960, %v4961, 0
      %v5083 = vsel %vm960, %v4962, 0
      %5085 = vmatprep.subr.mxu0 0.0
      %5086 = vmatpush1.msra.mxu0 0.0
      %5087 = vmatprep.subr.mxu0 0.0
      %5088 = vmatpush1.msra.mxu0 0.0
      %5089 = vmatprep.subr.mxu0 0.0
      %5090 = vmatpush1.msra.mxu0 0.0
      %5091 = vmatprep.subr.mxu0 0.0
      %5092 = vmatpush1.msra.mxu0 0.0
      %5093 = vmatprep.subr.mxu0 0.0
      %5094 = vmatpush1.msra.mxu0 0.0
      %5095 = vmatprep.subr.mxu0 0.0
      %5096 = vmatpush1.msra.mxu0 0.0
      %5097 = vmatprep.subr.mxu0 0.0
      %5098 = vmatpush1.msra.mxu0 0.0
      %5099 = vmatprep.subr.mxu0 0.0
      %5100 = vmatpush1.msra.mxu0 0.0
      %5101 = vmatprep.subr.mxu0 0.0
      %5102 = vmatpush1.msra.mxu0 0.0
      %5103 = vmatprep.subr.mxu0 0.0
      %5104 = vmatpush1.msra.mxu0 0.0
      %5105 = vmatprep.subr.mxu0 0.0
      %5106 = vmatpush1.msra.mxu0 0.0
      %5107 = vmatprep.subr.mxu0 0.0
      %5108 = vmatpush1.msra.mxu0 0.0
      %5109 = vmatprep.subr.mxu0 0.0
      %5110 = vmatpush1.msra.mxu0 0.0
      %5111 = vmatprep.subr.mxu0 0.0
      %5112 = vmatpush1.msra.mxu0 0.0
      %5113 = vmatprep.subr.mxu0 0.0
      %5114 = vmatpush1.msra.mxu0 0.0
      %5115 = vmatprep.subr.mxu0 0.0
      %5116 = vmatpush1.msra.mxu0 %v4964
      %5117 = vmatprep.subr.mxu0 0.0
      %5118 = vmatpush2.msra.mxu0 0.0
      %5119 = vmatprep.subr.mxu0 0.0
      %5120 = vmatpush2.msra.mxu0 0.0
      %5121 = vmatprep.subr.mxu0 0.0
      %5122 = vmatpush2.msra.mxu0 0.0
      %5123 = vmatprep.subr.mxu0 0.0
      %5124 = vmatpush2.msra.mxu0 0.0
      %5125 = vmatprep.subr.mxu0 0.0
      %5126 = vmatpush2.msra.mxu0 0.0
      %5127 = vmatprep.subr.mxu0 0.0
      %5128 = vmatpush2.msra.mxu0 0.0
      %5129 = vmatprep.subr.mxu0 0.0
      %5130 = vmatpush2.msra.mxu0 0.0
      %5131 = vmatprep.subr.mxu0 0.0
      %5132 = vmatpush2.msra.mxu0 0.0
      %5133 = vmatprep.subr.mxu0 0.0
      %5134 = vmatpush2.msra.mxu0 0.0
      %5135 = vmatprep.subr.mxu0 0.0
      %5136 = vmatpush2.msra.mxu0 0.0
      %5137 = vmatprep.subr.mxu0 0.0
      %5138 = vmatpush2.msra.mxu0 0.0
      %5139 = vmatprep.subr.mxu0 0.0
      %5140 = vmatpush2.msra.mxu0 0.0
      %5141 = vmatprep.subr.mxu0 0.0
      %5142 = vmatpush2.msra.mxu0 0.0
      %5143 = vmatprep.subr.mxu0 0.0
      %5144 = vmatpush2.msra.mxu0 0.0
      %5145 = vmatprep.subr.mxu0 0.0
      %5146 = vmatpush2.msra.mxu0 0.0
      %5147 = vmatprep.subr.mxu0 0.0
      %5148 = vmatpush2.msra.mxu0 0.0
      %5149 = vmatprep.mubr.f32.mxu0 0.0
      %5150 = vmatmul.mubr.f32.gmra.mxu0 %v4966
      %v5151 = vpop.f32.mrf.mxu0
      %v5152 = vadd.f32 0.0, %v5151
      %v5153 = vpop.f32.mrf.mxu0
      %5154 = vmatprep.mubr.f32.mxu0 0.0
      %5155 = vmatmul.mubr.f32.gmra.mxu0 %v4969
      %v5156 = vpop.f32.mrf.mxu0
      %v5157 = vadd.f32 0.0, %v5156
      %v5158 = vpop.f32.mrf.mxu0
      %5159 = vmatprep.mubr.f32.mxu0 0.0
      %5160 = vmatmul.mubr.f32.gmra.mxu0 %v4972
      %v5161 = vpop.f32.mrf.mxu0
      %v5162 = vadd.f32 0.0, %v5161
      %v5163 = vpop.f32.mrf.mxu0
      %5164 = vmatprep.mubr.f32.mxu0 0.0
      %5165 = vmatmul.mubr.f32.gmra.mxu0 %v4975
      %v5166 = vpop.f32.mrf.mxu0
      %v5167 = vadd.f32 0.0, %v5166
      %v5168 = vpop.f32.mrf.mxu0
      %5169 = vmatprep.mubr.f32.mxu0 0.0
      %5170 = vmatmul.mubr.f32.gmra.mxu0 %v4978
      %v5171 = vpop.f32.mrf.mxu0
      %v5172 = vadd.f32 0.0, %v5171
      %v5173 = vpop.f32.mrf.mxu0
      %5174 = vmatprep.mubr.f32.mxu0 0.0
      %5175 = vmatmul.mubr.f32.gmra.mxu0 %v4981
      %v5176 = vpop.f32.mrf.mxu0
      %v5177 = vadd.f32 0.0, %v5176
      %v5178 = vpop.f32.mrf.mxu0
      %5179 = vmatprep.mubr.f32.mxu0 0.0
      %5180 = vmatmul.mubr.f32.gmra.mxu0 %v4984
      %v5181 = vpop.f32.mrf.mxu0
      %v5182 = vadd.f32 0.0, %v5181
      %v5183 = vpop.f32.mrf.mxu0
      %5184 = vmatprep.mubr.f32.mxu0 0.0
      %5185 = vmatmul.mubr.f32.gmra.mxu0 %v4987
      %v5186 = vpop.f32.mrf.mxu0
      %v5187 = vadd.f32 0.0, %v5186
      %v5188 = vpop.f32.mrf.mxu0
      %5189 = vmatprep.mubr.f32.mxu0 0.0
      %5190 = vmatmul.mubr.f32.gmra.mxu0 %v4990
      %v5191 = vpop.f32.mrf.mxu0
      %v5192 = vadd.f32 0.0, %v5191
      %v5193 = vpop.f32.mrf.mxu0
      %5194 = vmatprep.mubr.f32.mxu0 0.0
      %5195 = vmatmul.mubr.f32.gmra.mxu0 %v4993
      %v5196 = vpop.f32.mrf.mxu0
      %v5197 = vadd.f32 0.0, %v5196
      %v5198 = vpop.f32.mrf.mxu0
      %5199 = vmatprep.mubr.f32.mxu0 0.0
      %5200 = vmatmul.mubr.f32.gmra.mxu0 %v4996
      %v5201 = vpop.f32.mrf.mxu0
      %v5202 = vadd.f32 0.0, %v5201
      %v5203 = vpop.f32.mrf.mxu0
      %5204 = vmatprep.mubr.f32.mxu0 0.0
      %5205 = vmatmul.mubr.f32.gmra.mxu0 %v4999
      %v5206 = vpop.f32.mrf.mxu0
      %v5207 = vadd.f32 0.0, %v5206
      %v5208 = vpop.f32.mrf.mxu0
      %5209 = vmatprep.mubr.f32.mxu0 0.0
      %5210 = vmatmul.mubr.f32.gmra.mxu0 %v5002
      %v5211 = vpop.f32.mrf.mxu0
      %v5212 = vadd.f32 0.0, %v5211
      %v5213 = vpop.f32.mrf.mxu0
      %5214 = vmatprep.mubr.f32.mxu0 0.0
      %5215 = vmatmul.mubr.f32.gmra.mxu0 %v5005
      %v5216 = vpop.f32.mrf.mxu0
      %v5217 = vadd.f32 0.0, %v5216
      %v5218 = vpop.f32.mrf.mxu0
      %5219 = vmatprep.mubr.f32.mxu0 0.0
      %5220 = vmatmul.mubr.f32.gmra.mxu0 %v5008
      %v5221 = vpop.f32.mrf.mxu0
      %v5222 = vadd.f32 0.0, %v5221
      %v5223 = vpop.f32.mrf.mxu0
      %5224 = vmatprep.mubr.f32.mxu0 0.0
      %5225 = vmatmul.mubr.f32.gmra.mxu0 %v5011
      %v5226 = vpop.f32.mrf.mxu0
      %v5227 = vadd.f32 0.0, %v5226
      %v5228 = vpop.f32.mrf.mxu0
      %5229 = vmatprep.mubr.f32.mxu0 0.0
      %5230 = vmatmul.mubr.f32.gmra.mxu0 %v5014
      %v5231 = vpop.f32.mrf.mxu0
      %v5232 = vadd.f32 0.0, %v5231
      %v5233 = vpop.f32.mrf.mxu0
      %5234 = vmatprep.mubr.f32.mxu0 0.0
      %5235 = vmatmul.mubr.f32.gmra.mxu0 %v5017
      %v5236 = vpop.f32.mrf.mxu0
      %v5237 = vadd.f32 0.0, %v5236
      %v5238 = vpop.f32.mrf.mxu0
      %5239 = vmatprep.mubr.f32.mxu0 0.0
      %5240 = vmatmul.mubr.f32.gmra.mxu0 %v5020
      %v5241 = vpop.f32.mrf.mxu0
      %v5242 = vadd.f32 0.0, %v5241
      %v5243 = vpop.f32.mrf.mxu0
      %5244 = vmatprep.mubr.f32.mxu0 0.0
      %5245 = vmatmul.mubr.f32.gmra.mxu0 %v5023
      %v5246 = vpop.f32.mrf.mxu0
      %v5247 = vadd.f32 0.0, %v5246
      %v5248 = vpop.f32.mrf.mxu0
      %5249 = vmatprep.mubr.f32.mxu0 0.0
      %5250 = vmatmul.mubr.f32.gmra.mxu0 %v5026
      %v5251 = vpop.f32.mrf.mxu0
      %v5252 = vadd.f32 0.0, %v5251
      %v5253 = vpop.f32.mrf.mxu0
      %5254 = vmatprep.mubr.f32.mxu0 0.0
      %5255 = vmatmul.mubr.f32.gmra.mxu0 %v5029
      %v5256 = vpop.f32.mrf.mxu0
      %v5257 = vadd.f32 0.0, %v5256
      %v5258 = vpop.f32.mrf.mxu0
      %5259 = vmatprep.mubr.f32.mxu0 0.0
      %5260 = vmatmul.mubr.f32.gmra.mxu0 %v5032
      %v5261 = vpop.f32.mrf.mxu0
      %v5262 = vadd.f32 0.0, %v5261
      %v5263 = vpop.f32.mrf.mxu0
      %5264 = vmatprep.mubr.f32.mxu0 0.0
      %5265 = vmatmul.mubr.f32.gmra.mxu0 %v5035
      %v5266 = vpop.f32.mrf.mxu0
      %v5267 = vadd.f32 0.0, %v5266
      %v5268 = vpop.f32.mrf.mxu0
      %5269 = vmatprep.mubr.f32.mxu0 0.0
      %5270 = vmatmul.mubr.f32.gmra.mxu0 %v5038
      %v5271 = vpop.f32.mrf.mxu0
      %v5272 = vadd.f32 0.0, %v5271
      %v5273 = vpop.f32.mrf.mxu0
      %5274 = vmatprep.mubr.f32.mxu0 0.0
      %5275 = vmatmul.mubr.f32.gmra.mxu0 %v5041
      %v5276 = vpop.f32.mrf.mxu0
      %v5277 = vadd.f32 0.0, %v5276
      %v5278 = vpop.f32.mrf.mxu0
      %5279 = vmatprep.mubr.f32.mxu0 0.0
      %5280 = vmatmul.mubr.f32.gmra.mxu0 %v5044
      %v5281 = vpop.f32.mrf.mxu0
      %v5282 = vadd.f32 0.0, %v5281
      %v5283 = vpop.f32.mrf.mxu0
      %5284 = vmatprep.mubr.f32.mxu0 0.0
      %5285 = vmatmul.mubr.f32.gmra.mxu0 %v5047
      %v5286 = vpop.f32.mrf.mxu0
      %v5287 = vadd.f32 0.0, %v5286
      %v5288 = vpop.f32.mrf.mxu0
      %5289 = vmatprep.mubr.f32.mxu0 0.0
      %5290 = vmatmul.mubr.f32.gmra.mxu0 %v5050
      %v5291 = vpop.f32.mrf.mxu0
      %v5292 = vadd.f32 0.0, %v5291
      %v5293 = vpop.f32.mrf.mxu0
      %5294 = vmatprep.mubr.f32.mxu0 0.0
      %5295 = vmatmul.mubr.f32.gmra.mxu0 %v5053
      %v5296 = vpop.f32.mrf.mxu0
      %v5297 = vadd.f32 0.0, %v5296
      %v5298 = vpop.f32.mrf.mxu0
      %5299 = vmatprep.mubr.f32.mxu0 0.0
      %5300 = vmatmul.mubr.f32.gmra.mxu0 %v5056
      %v5301 = vpop.f32.mrf.mxu0
      %v5302 = vadd.f32 0.0, %v5301
      %v5303 = vpop.f32.mrf.mxu0
      %5304 = vmatprep.mubr.f32.mxu0 0.0
      %5305 = vmatmul.mubr.f32.gmra.mxu0 %v5059
      %v5306 = vpop.f32.mrf.mxu0
      %v5307 = vadd.f32 0.0, %v5306
      %v5308 = vpop.f32.mrf.mxu0
      %5309 = vmatprep.mubr.f32.mxu0 0.0
      %5310 = vmatmul.mubr.f32.gmra.mxu0 %v5062
      %v5311 = vpop.f32.mrf.mxu0
      %v5312 = vadd.f32 0.0, %v5311
      %v5313 = vpop.f32.mrf.mxu0
      %5314 = vmatprep.mubr.f32.mxu0 0.0
      %5315 = vmatmul.mubr.f32.gmra.mxu0 %v5065
      %v5316 = vpop.f32.mrf.mxu0
      %v5317 = vadd.f32 0.0, %v5316
      %v5318 = vpop.f32.mrf.mxu0
      %5319 = vmatprep.mubr.f32.mxu0 0.0
      %5320 = vmatmul.mubr.f32.gmra.mxu0 %v5068
      %v5321 = vpop.f32.mrf.mxu0
      %v5322 = vadd.f32 0.0, %v5321
      %v5323 = vpop.f32.mrf.mxu0
      %5324 = vmatprep.mubr.f32.mxu0 0.0
      %5325 = vmatmul.mubr.f32.gmra.mxu0 %v5071
      %v5326 = vpop.f32.mrf.mxu0
      %v5327 = vadd.f32 0.0, %v5326
      %v5328 = vpop.f32.mrf.mxu0
      %5329 = vmatprep.mubr.f32.mxu0 0.0
      %5330 = vmatmul.mubr.f32.gmra.mxu0 %v5074
      %v5331 = vpop.f32.mrf.mxu0
      %v5332 = vadd.f32 0.0, %v5331
      %v5333 = vpop.f32.mrf.mxu0
      %5334 = vmatprep.mubr.f32.mxu0 0.0
      %5335 = vmatmul.mubr.f32.gmra.mxu0 %v5077
      %v5336 = vpop.f32.mrf.mxu0
      %v5337 = vadd.f32 0.0, %v5336
      %v5338 = vpop.f32.mrf.mxu0
      %5339 = vmatprep.mubr.f32.mxu0 0.0
      %5340 = vmatmul.mubr.f32.gmra.mxu0 %v5080
      %v5341 = vpop.f32.mrf.mxu0
      %v5342 = vadd.f32 0.0, %v5341
      %v5343 = vpop.f32.mrf.mxu0
      %5344 = vmatprep.mubr.f32.mxu0 0.0
      %5345 = vmatmul.mubr.f32.gmra.mxu0 %v5083
      %v5346 = vpop.f32.mrf.mxu0
      %v5347 = vadd.f32 0.0, %v5346
      %v5348 = vpop.f32.mrf.mxu0
      %5349 = vdwg.mxu0
      %v5350 = vadd.f32 %v4883, %v5152
      %v5351 = vadd.f32 %v4884, %v5157
      %v5352 = vadd.f32 %v4885, %v5162
      %v5353 = vadd.f32 %v4886, %v5167
      %v5354 = vadd.f32 %v4887, %v5172
      %v5355 = vadd.f32 %v4888, %v5177
      %v5356 = vadd.f32 %v4889, %v5182
      %v5357 = vadd.f32 %v4890, %v5187
      %v5358 = vadd.f32 %v4891, %v5192
      %v5359 = vadd.f32 %v4892, %v5197
      %v5360 = vadd.f32 %v4893, %v5202
      %v5361 = vadd.f32 %v4894, %v5207
      %v5362 = vadd.f32 %v4895, %v5212
      %v5363 = vadd.f32 %v4896, %v5217
      %v5364 = vadd.f32 %v4897, %v5222
      %v5365 = vadd.f32 %v4898, %v5227
      %v5366 = vadd.f32 %v4899, %v5232
      %v5367 = vadd.f32 %v4900, %v5237
      %v5368 = vadd.f32 %v4901, %v5242
      %v5369 = vadd.f32 %v4902, %v5247
      %v5370 = vadd.f32 %v4903, %v5252
      %v5371 = vadd.f32 %v4904, %v5257
      %v5372 = vadd.f32 %v4905, %v5262
      %v5373 = vadd.f32 %v4906, %v5267
      %v5374 = vadd.f32 %v4907, %v5272
      %v5375 = vadd.f32 %v4908, %v5277
      %v5376 = vadd.f32 %v4909, %v5282
      %v5377 = vadd.f32 %v4910, %v5287
      %v5378 = vadd.f32 %v4911, %v5292
      %v5379 = vadd.f32 %v4912, %v5297
      %v5380 = vadd.f32 %v4913, %v5302
      %v5381 = vadd.f32 %v4914, %v5307
      %v5382 = vadd.f32 %v4915, %v5312
      %v5383 = vadd.f32 %v4916, %v5317
      %v5384 = vadd.f32 %v4917, %v5322
      %v5385 = vadd.f32 %v4918, %v5327
      %v5386 = vadd.f32 %v4919, %v5332
      %v5387 = vadd.f32 %v4920, %v5337
      %v5388 = vadd.f32 %v4921, %v5342
      %v5389 = vadd.f32 %v4922, %v5347
      %v5390 = vld [vmem:[%s5] sm:$0x1]
      %v5392 = vlaneseq
      %v5393 = vshrl.u32 %v5392, 7
      %v5394 = vsub.s32 0, %v5393
      %v5395 = vrot.slane %v5390, %v5394
      %v5397 = vadd.f32 %v5350, %v5395
      %v5398 = vadd.f32 %v5351, %v5395
      %v5399 = vadd.f32 %v5352, %v5395
      %v5400 = vadd.f32 %v5353, %v5395
      %v5401 = vadd.f32 %v5354, %v5395
      %v5402 = vadd.f32 %v5355, %v5395
      %v5403 = vadd.f32 %v5356, %v5395
      %v5404 = vadd.f32 %v5357, %v5395
      %v5405 = vadd.f32 %v5358, %v5395
      %v5406 = vadd.f32 %v5359, %v5395
      %v5407 = vadd.f32 %v5360, %v5395
      %v5408 = vadd.f32 %v5361, %v5395
      %v5409 = vadd.f32 %v5362, %v5395
      %v5410 = vadd.f32 %v5363, %v5395
      %v5411 = vadd.f32 %v5364, %v5395
      %v5412 = vadd.f32 %v5365, %v5395
      %v5413 = vadd.f32 %v5366, %v5395
      %v5414 = vadd.f32 %v5367, %v5395
      %v5415 = vadd.f32 %v5368, %v5395
      %v5416 = vadd.f32 %v5369, %v5395
      %v5417 = vadd.f32 %v5370, %v5395
      %v5418 = vadd.f32 %v5371, %v5395
      %v5419 = vadd.f32 %v5372, %v5395
      %v5420 = vadd.f32 %v5373, %v5395
      %v5421 = vadd.f32 %v5374, %v5395
      %v5422 = vadd.f32 %v5375, %v5395
      %v5423 = vadd.f32 %v5376, %v5395
      %v5424 = vadd.f32 %v5377, %v5395
      %v5425 = vadd.f32 %v5378, %v5395
      %v5426 = vadd.f32 %v5379, %v5395
      %v5427 = vadd.f32 %v5380, %v5395
      %v5428 = vadd.f32 %v5381, %v5395
      %v5429 = vadd.f32 %v5382, %v5395
      %v5430 = vadd.f32 %v5383, %v5395
      %v5431 = vadd.f32 %v5384, %v5395
      %v5432 = vadd.f32 %v5385, %v5395
      %v5433 = vadd.f32 %v5386, %v5395
      %v5434 = vadd.f32 %v5387, %v5395
      %v5435 = vadd.f32 %v5388, %v5395
      %v5436 = vadd.f32 %v5389, %v5395
      %v5437 = vpack.c.bf16 %v5398, %v5397
      %v5438 = vpack.c.bf16 %v5400, %v5399
      %v5439 = vpack.c.bf16 %v5402, %v5401
      %v5440 = vpack.c.bf16 %v5404, %v5403
      %v5441 = vpack.c.bf16 %v5406, %v5405
      %v5442 = vpack.c.bf16 %v5408, %v5407
      %v5443 = vpack.c.bf16 %v5410, %v5409
      %v5444 = vpack.c.bf16 %v5412, %v5411
      %v5445 = vpack.c.bf16 %v5414, %v5413
      %v5446 = vpack.c.bf16 %v5416, %v5415
      %v5447 = vpack.c.bf16 %v5418, %v5417
      %v5448 = vpack.c.bf16 %v5420, %v5419
      %v5449 = vpack.c.bf16 %v5422, %v5421
      %v5450 = vpack.c.bf16 %v5424, %v5423
      %v5451 = vpack.c.bf16 %v5426, %v5425
      %v5452 = vpack.c.bf16 %v5428, %v5427
      %v5453 = vpack.c.bf16 %v5430, %v5429
      %v5454 = vpack.c.bf16 %v5432, %v5431
      %v5455 = vpack.c.bf16 %v5434, %v5433
      %v5456 = vpack.c.bf16 %v5436, %v5435
      %v5477 = vunpack.c.l.b16 %v5437
      %v5478 = vunpack.c.h.b16 %v5437
      %v5479 = vunpack.c.l.b16 %v5438
      %v5480 = vunpack.c.h.b16 %v5438
      %v5481 = vunpack.c.l.b16 %v5439
      %v5482 = vunpack.c.h.b16 %v5439
      %v5483 = vunpack.c.l.b16 %v5440
      %v5484 = vunpack.c.h.b16 %v5440
      %v5485 = vunpack.c.l.b16 %v5441
      %v5486 = vunpack.c.h.b16 %v5441
      %v5487 = vunpack.c.l.b16 %v5442
      %v5488 = vunpack.c.h.b16 %v5442
      %v5489 = vunpack.c.l.b16 %v5443
      %v5490 = vunpack.c.h.b16 %v5443
      %v5491 = vunpack.c.l.b16 %v5444
      %v5492 = vunpack.c.h.b16 %v5444
      %v5493 = vunpack.c.l.b16 %v5445
      %v5494 = vunpack.c.h.b16 %v5445
      %v5495 = vunpack.c.l.b16 %v5446
      %v5496 = vunpack.c.h.b16 %v5446
      %v5497 = vunpack.c.l.b16 %v5447
      %v5498 = vunpack.c.h.b16 %v5447
      %v5499 = vunpack.c.l.b16 %v5448
      %v5500 = vunpack.c.h.b16 %v5448
      %v5501 = vunpack.c.l.b16 %v5449
      %v5502 = vunpack.c.h.b16 %v5449
      %v5503 = vunpack.c.l.b16 %v5450
      %v5504 = vunpack.c.h.b16 %v5450
      %v5505 = vunpack.c.l.b16 %v5451
      %v5506 = vunpack.c.h.b16 %v5451
      %v5507 = vunpack.c.l.b16 %v5452
      %v5508 = vunpack.c.h.b16 %v5452
      %v5509 = vunpack.c.l.b16 %v5453
      %v5510 = vunpack.c.h.b16 %v5453
      %v5511 = vunpack.c.l.b16 %v5454
      %v5512 = vunpack.c.h.b16 %v5454
      %v5513 = vunpack.c.l.b16 %v5455
      %v5514 = vunpack.c.h.b16 %v5455
      %v5515 = vunpack.c.l.b16 %v5456
      %v5516 = vunpack.c.h.b16 %v5456
      %v5517 = vpack.c.b16 %v5477, %v5477
      %v5518 = vpack.c.b16 %v5478, %v5478
      %v5519 = vpack.c.b16 %v5479, %v5479
      %v5520 = vpack.c.b16 %v5480, %v5480
      %v5521 = vpack.c.b16 %v5481, %v5481
      %v5522 = vpack.c.b16 %v5482, %v5482
      %v5523 = vpack.c.b16 %v5483, %v5483
      %v5524 = vpack.c.b16 %v5484, %v5484
      %v5525 = vpack.c.b16 %v5485, %v5485
      %v5526 = vpack.c.b16 %v5486, %v5486
      %v5527 = vpack.c.b16 %v5487, %v5487
      %v5528 = vpack.c.b16 %v5488, %v5488
      %v5529 = vpack.c.b16 %v5489, %v5489
      %v5530 = vpack.c.b16 %v5490, %v5490
      %v5531 = vpack.c.b16 %v5491, %v5491
      %v5532 = vpack.c.b16 %v5492, %v5492
      %v5533 = vpack.c.b16 %v5493, %v5493
      %v5534 = vpack.c.b16 %v5494, %v5494
      %v5535 = vpack.c.b16 %v5495, %v5495
      %v5536 = vpack.c.b16 %v5496, %v5496
      %v5537 = vpack.c.b16 %v5497, %v5497
      %v5538 = vpack.c.b16 %v5498, %v5498
      %v5539 = vpack.c.b16 %v5499, %v5499
      %v5540 = vpack.c.b16 %v5500, %v5500
      %v5541 = vpack.c.b16 %v5501, %v5501
      %v5542 = vpack.c.b16 %v5502, %v5502
      %v5543 = vpack.c.b16 %v5503, %v5503
      %v5544 = vpack.c.b16 %v5504, %v5504
      %v5545 = vpack.c.b16 %v5505, %v5505
      %v5546 = vpack.c.b16 %v5506, %v5506
      %v5547 = vpack.c.b16 %v5507, %v5507
      %v5548 = vpack.c.b16 %v5508, %v5508
      %v5549 = vpack.c.b16 %v5509, %v5509
      %v5550 = vpack.c.b16 %v5510, %v5510
      %v5551 = vpack.c.b16 %v5511, %v5511
      %v5552 = vpack.c.b16 %v5512, %v5512
      %v5553 = vpack.c.b16 %v5513, %v5513
      %v5554 = vpack.c.b16 %v5514, %v5514
      %v5555 = vpack.c.b16 %v5515, %v5515
      %v5556 = vpack.c.b16 %v5516, %v5516
      %vm5597 = vcmask 60416
      %5598 = vst.msk [vmem:[%s521] sm:$0xf] %vm5597, %v5517
      %5599 = vst.msk [vmem:[%s521 + $0x4] sm:$0xf] %vm5597, %v5518
      %5600 = vst.msk [vmem:[%s521 + $0x8] sm:$0xf] %vm5597, %v5519
      %5601 = vst.msk [vmem:[%s521 + $0xc] sm:$0xf] %vm5597, %v5520
      %5602 = vst.msk [vmem:[%s521 + $0x10] sm:$0xf] %vm5597, %v5521
      %5603 = vst.msk [vmem:[%s521 + $0x14] sm:$0xf] %vm5597, %v5522
      %5604 = vst.msk [vmem:[%s521 + $0x18] sm:$0xf] %vm5597, %v5523
      %5605 = vst.msk [vmem:[%s521 + $0x1c] sm:$0xf] %vm5597, %v5524
      %5606 = vst.msk [vmem:[%s521 + $0x20] sm:$0xf] %vm5597, %v5525
      %5607 = vst.msk [vmem:[%s521 + $0x24] sm:$0xf] %vm5597, %v5526
      %5608 = vst.msk [vmem:[%s521 + $0x28] sm:$0xf] %vm5597, %v5527
      %5609 = vst.msk [vmem:[%s521 + $0x2c] sm:$0xf] %vm5597, %v5528
      %5610 = vst.msk [vmem:[%s521 + $0x30] sm:$0xf] %vm5597, %v5529
      %5611 = vst.msk [vmem:[%s521 + $0x34] sm:$0xf] %vm5597, %v5530
      %5612 = vst.msk [vmem:[%s521 + $0x38] sm:$0xf] %vm5597, %v5531
      %5613 = vst.msk [vmem:[%s521 + $0x3c] sm:$0xf] %vm5597, %v5532
      %5614 = vst.msk [vmem:[%s521 + $0x40] sm:$0xf] %vm5597, %v5533
      %5615 = vst.msk [vmem:[%s521 + $0x44] sm:$0xf] %vm5597, %v5534
      %5616 = vst.msk [vmem:[%s521 + $0x48] sm:$0xf] %vm5597, %v5535
      %5617 = vst.msk [vmem:[%s521 + $0x4c] sm:$0xf] %vm5597, %v5536
      %5618 = vst.msk [vmem:[%s521 + $0x50] sm:$0xf] %vm5597, %v5537
      %5619 = vst.msk [vmem:[%s521 + $0x54] sm:$0xf] %vm5597, %v5538
      %5620 = vst.msk [vmem:[%s521 + $0x58] sm:$0xf] %vm5597, %v5539
      %5621 = vst.msk [vmem:[%s521 + $0x5c] sm:$0xf] %vm5597, %v5540
      %5622 = vst.msk [vmem:[%s521 + $0x60] sm:$0xf] %vm5597, %v5541
      %5623 = vst.msk [vmem:[%s521 + $0x64] sm:$0xf] %vm5597, %v5542
      %5624 = vst.msk [vmem:[%s521 + $0x68] sm:$0xf] %vm5597, %v5543
      %5625 = vst.msk [vmem:[%s521 + $0x6c] sm:$0xf] %vm5597, %v5544
      %5626 = vst.msk [vmem:[%s521 + $0x70] sm:$0xf] %vm5597, %v5545
      %5627 = vst.msk [vmem:[%s521 + $0x74] sm:$0xf] %vm5597, %v5546
      %5628 = vst.msk [vmem:[%s521 + $0x78] sm:$0xf] %vm5597, %v5547
      %5629 = vst.msk [vmem:[%s521 + $0x7c] sm:$0xf] %vm5597, %v5548
      %5630 = vst.msk [vmem:[%s521 + $0x80] sm:$0xf] %vm5597, %v5549
      %5631 = vst.msk [vmem:[%s521 + $0x84] sm:$0xf] %vm5597, %v5550
      %5632 = vst.msk [vmem:[%s521 + $0x88] sm:$0xf] %vm5597, %v5551
      %5633 = vst.msk [vmem:[%s521 + $0x8c] sm:$0xf] %vm5597, %v5552
      %5634 = vst.msk [vmem:[%s521 + $0x90] sm:$0xf] %vm5597, %v5553
      %5635 = vst.msk [vmem:[%s521 + $0x94] sm:$0xf] %vm5597, %v5554
      %5636 = vst.msk [vmem:[%s521 + $0x98] sm:$0xf] %vm5597, %v5555
      %5637 = vst.msk [vmem:[%s521 + $0x9c] sm:$0xf] %vm5597, %v5556
      %v5638 = vld [vmem:[%s6] sm:$0xff]
      %v5639 = vld [vmem:[%s6 + $0x8] sm:$0xff]
      %v5640 = vld [vmem:[%s6 + $0x10] sm:$0xff]
      %v5641 = vld [vmem:[%s6 + $0x18] sm:$0xff]
      %v5642 = vld [vmem:[%s6 + $0x20] sm:$0xff]
      %v5643 = vld [vmem:[%s6 + $0x28] sm:$0xff]
      %v5644 = vld [vmem:[%s6 + $0x30] sm:$0xff]
      %v5645 = vld [vmem:[%s6 + $0x38] sm:$0xff]
      %v5646 = vld [vmem:[%s6 + $0x40] sm:$0xff]
      %v5647 = vld [vmem:[%s6 + $0x48] sm:$0xff]
      %v5648 = vld [vmem:[%s6 + $0x50] sm:$0xff]
      %v5649 = vld [vmem:[%s6 + $0x58] sm:$0xff]
      %v5650 = vld [vmem:[%s6 + $0x60] sm:$0xff]
      %v5651 = vld [vmem:[%s6 + $0x68] sm:$0xff]
      %v5652 = vld [vmem:[%s6 + $0x70] sm:$0xff]
      %v5653 = vld [vmem:[%s6 + $0x78] sm:$0xff]
      %v5654 = vld [vmem:[%s6 + $0x80] sm:$0xff]
      %v5655 = vld [vmem:[%s6 + $0x88] sm:$0xff]
      %v5656 = vld [vmem:[%s6 + $0x90] sm:$0xff]
      %v5657 = vld [vmem:[%s6 + $0x98] sm:$0xff]
      %v5658 = vld [vmem:[%s6 + $0xa0] sm:$0xff]
      %v5659 = vld [vmem:[%s6 + $0xa8] sm:$0xff]
      %v5660 = vld [vmem:[%s6 + $0xb0] sm:$0xff]
      %v5661 = vld [vmem:[%s6 + $0xb8] sm:$0xff]
      %v5662 = vld [vmem:[%s6 + $0xc0] sm:$0xff]
      %v5663 = vld [vmem:[%s6 + $0xc8] sm:$0xff]
      %v5664 = vld [vmem:[%s6 + $0xd0] sm:$0xff]
      %v5665 = vld [vmem:[%s6 + $0xd8] sm:$0xff]
      %v5666 = vld [vmem:[%s6 + $0xe0] sm:$0xff]
      %v5667 = vld [vmem:[%s6 + $0xe8] sm:$0xff]
      %v5668 = vld [vmem:[%s6 + $0xf0] sm:$0xff]
      %v5669 = vld [vmem:[%s6 + $0xf8] sm:$0xff]
      %v5670 = vld [vmem:[%s6 + $0x100] sm:$0xff]
      %v5671 = vld [vmem:[%s6 + $0x108] sm:$0xff]
      %v5672 = vld [vmem:[%s6 + $0x110] sm:$0xff]
      %v5673 = vld [vmem:[%s6 + $0x118] sm:$0xff]
      %v5674 = vld [vmem:[%s6 + $0x120] sm:$0xff]
      %v5675 = vld [vmem:[%s6 + $0x128] sm:$0xff]
      %v5676 = vld [vmem:[%s6 + $0x130] sm:$0xff]
      %v5677 = vld [vmem:[%s6 + $0x138] sm:$0xff]
      %5679 = vset.pattern.permute.xlu0 0
      %5680 = vperm.xlu0 %5679, %v5638
      %v5681 = vpop.permute.xlu0 %5680
      %5684 = vset.pattern.permute.xlu0 0
      %5685 = vperm.xlu0 %5684, %v5639
      %v5686 = vpop.permute.xlu0 %5685
      %5689 = vset.pattern.permute.xlu0 0
      %5690 = vperm.xlu0 %5689, %v5640
      %v5691 = vpop.permute.xlu0 %5690
      %5694 = vset.pattern.permute.xlu0 0
      %5695 = vperm.xlu0 %5694, %v5641
      %v5696 = vpop.permute.xlu0 %5695
      %5699 = vset.pattern.permute.xlu0 0
      %5700 = vperm.xlu0 %5699, %v5642
      %v5701 = vpop.permute.xlu0 %5700
      %5704 = vset.pattern.permute.xlu0 0
      %5705 = vperm.xlu0 %5704, %v5643
      %v5706 = vpop.permute.xlu0 %5705
      %5709 = vset.pattern.permute.xlu0 0
      %5710 = vperm.xlu0 %5709, %v5644
      %v5711 = vpop.permute.xlu0 %5710
      %5714 = vset.pattern.permute.xlu0 0
      %5715 = vperm.xlu0 %5714, %v5645
      %v5716 = vpop.permute.xlu0 %5715
      %5719 = vset.pattern.permute.xlu0 0
      %5720 = vperm.xlu0 %5719, %v5646
      %v5721 = vpop.permute.xlu0 %5720
      %5724 = vset.pattern.permute.xlu0 0
      %5725 = vperm.xlu0 %5724, %v5647
      %v5726 = vpop.permute.xlu0 %5725
      %5729 = vset.pattern.permute.xlu0 0
      %5730 = vperm.xlu0 %5729, %v5648
      %v5731 = vpop.permute.xlu0 %5730
      %5734 = vset.pattern.permute.xlu0 0
      %5735 = vperm.xlu0 %5734, %v5649
      %v5736 = vpop.permute.xlu0 %5735
      %5739 = vset.pattern.permute.xlu0 0
      %5740 = vperm.xlu0 %5739, %v5650
      %v5741 = vpop.permute.xlu0 %5740
      %5744 = vset.pattern.permute.xlu0 0
      %5745 = vperm.xlu0 %5744, %v5651
      %v5746 = vpop.permute.xlu0 %5745
      %5749 = vset.pattern.permute.xlu0 0
      %5750 = vperm.xlu0 %5749, %v5652
      %v5751 = vpop.permute.xlu0 %5750
      %5754 = vset.pattern.permute.xlu0 0
      %5755 = vperm.xlu0 %5754, %v5653
      %v5756 = vpop.permute.xlu0 %5755
      %5759 = vset.pattern.permute.xlu0 0
      %5760 = vperm.xlu0 %5759, %v5654
      %v5761 = vpop.permute.xlu0 %5760
      %5764 = vset.pattern.permute.xlu0 0
      %5765 = vperm.xlu0 %5764, %v5655
      %v5766 = vpop.permute.xlu0 %5765
      %5769 = vset.pattern.permute.xlu0 0
      %5770 = vperm.xlu0 %5769, %v5656
      %v5771 = vpop.permute.xlu0 %5770
      %5774 = vset.pattern.permute.xlu0 0
      %5775 = vperm.xlu0 %5774, %v5657
      %v5776 = vpop.permute.xlu0 %5775
      %5779 = vset.pattern.permute.xlu0 0
      %5780 = vperm.xlu0 %5779, %v5658
      %v5781 = vpop.permute.xlu0 %5780
      %5784 = vset.pattern.permute.xlu0 0
      %5785 = vperm.xlu0 %5784, %v5659
      %v5786 = vpop.permute.xlu0 %5785
      %5789 = vset.pattern.permute.xlu0 0
      %5790 = vperm.xlu0 %5789, %v5660
      %v5791 = vpop.permute.xlu0 %5790
      %5794 = vset.pattern.permute.xlu0 0
      %5795 = vperm.xlu0 %5794, %v5661
      %v5796 = vpop.permute.xlu0 %5795
      %5799 = vset.pattern.permute.xlu0 0
      %5800 = vperm.xlu0 %5799, %v5662
      %v5801 = vpop.permute.xlu0 %5800
      %5804 = vset.pattern.permute.xlu0 0
      %5805 = vperm.xlu0 %5804, %v5663
      %v5806 = vpop.permute.xlu0 %5805
      %5809 = vset.pattern.permute.xlu0 0
      %5810 = vperm.xlu0 %5809, %v5664
      %v5811 = vpop.permute.xlu0 %5810
      %5814 = vset.pattern.permute.xlu0 0
      %5815 = vperm.xlu0 %5814, %v5665
      %v5816 = vpop.permute.xlu0 %5815
      %5819 = vset.pattern.permute.xlu0 0
      %5820 = vperm.xlu0 %5819, %v5666
      %v5821 = vpop.permute.xlu0 %5820
      %5824 = vset.pattern.permute.xlu0 0
      %5825 = vperm.xlu0 %5824, %v5667
      %v5826 = vpop.permute.xlu0 %5825
      %5829 = vset.pattern.permute.xlu0 0
      %5830 = vperm.xlu0 %5829, %v5668
      %v5831 = vpop.permute.xlu0 %5830
      %5834 = vset.pattern.permute.xlu0 0
      %5835 = vperm.xlu0 %5834, %v5669
      %v5836 = vpop.permute.xlu0 %5835
      %5839 = vset.pattern.permute.xlu0 0
      %5840 = vperm.xlu0 %5839, %v5670
      %v5841 = vpop.permute.xlu0 %5840
      %5844 = vset.pattern.permute.xlu0 0
      %5845 = vperm.xlu0 %5844, %v5671
      %v5846 = vpop.permute.xlu0 %5845
      %5849 = vset.pattern.permute.xlu0 0
      %5850 = vperm.xlu0 %5849, %v5672
      %v5851 = vpop.permute.xlu0 %5850
      %5854 = vset.pattern.permute.xlu0 0
      %5855 = vperm.xlu0 %5854, %v5673
      %v5856 = vpop.permute.xlu0 %5855
      %5859 = vset.pattern.permute.xlu0 0
      %5860 = vperm.xlu0 %5859, %v5674
      %v5861 = vpop.permute.xlu0 %5860
      %5864 = vset.pattern.permute.xlu0 0
      %5865 = vperm.xlu0 %5864, %v5675
      %v5866 = vpop.permute.xlu0 %5865
      %5869 = vset.pattern.permute.xlu0 0
      %5870 = vperm.xlu0 %5869, %v5676
      %v5871 = vpop.permute.xlu0 %5870
      %5874 = vset.pattern.permute.xlu0 0
      %5875 = vperm.xlu0 %5874, %v5677
      %v5876 = vpop.permute.xlu0 %5875
      %v5878 = vmul.f32 %v5397, %v5681
      %v5879 = vmul.f32 %v5398, %v5686
      %v5880 = vmul.f32 %v5399, %v5691
      %v5881 = vmul.f32 %v5400, %v5696
      %v5882 = vmul.f32 %v5401, %v5701
      %v5883 = vmul.f32 %v5402, %v5706
      %v5884 = vmul.f32 %v5403, %v5711
      %v5885 = vmul.f32 %v5404, %v5716
      %v5886 = vmul.f32 %v5405, %v5721
      %v5887 = vmul.f32 %v5406, %v5726
      %v5888 = vmul.f32 %v5407, %v5731
      %v5889 = vmul.f32 %v5408, %v5736
      %v5890 = vmul.f32 %v5409, %v5741
      %v5891 = vmul.f32 %v5410, %v5746
      %v5892 = vmul.f32 %v5411, %v5751
      %v5893 = vmul.f32 %v5412, %v5756
      %v5894 = vmul.f32 %v5413, %v5761
      %v5895 = vmul.f32 %v5414, %v5766
      %v5896 = vmul.f32 %v5415, %v5771
      %v5897 = vmul.f32 %v5416, %v5776
      %v5898 = vmul.f32 %v5417, %v5781
      %v5899 = vmul.f32 %v5418, %v5786
      %v5900 = vmul.f32 %v5419, %v5791
      %v5901 = vmul.f32 %v5420, %v5796
      %v5902 = vmul.f32 %v5421, %v5801
      %v5903 = vmul.f32 %v5422, %v5806
      %v5904 = vmul.f32 %v5423, %v5811
      %v5905 = vmul.f32 %v5424, %v5816
      %v5906 = vmul.f32 %v5425, %v5821
      %v5907 = vmul.f32 %v5426, %v5826
      %v5908 = vmul.f32 %v5427, %v5831
      %v5909 = vmul.f32 %v5428, %v5836
      %v5910 = vmul.f32 %v5429, %v5841
      %v5911 = vmul.f32 %v5430, %v5846
      %v5912 = vmul.f32 %v5431, %v5851
      %v5913 = vmul.f32 %v5432, %v5856
      %v5914 = vmul.f32 %v5433, %v5861
      %v5915 = vmul.f32 %v5434, %v5866
      %v5916 = vmul.f32 %v5435, %v5871
      %v5917 = vmul.f32 %v5436, %v5876
      %v5918 = vsel %vm960, %v5878, 0.0
      %v5919 = vsel %vm960, %v5879, 0.0
      %v5920 = vadd.f32 %v5918, %v5919
      %v5921 = vsel %vm960, %v5880, 0.0
      %v5922 = vadd.f32 %v5920, %v5921
      %v5923 = vsel %vm960, %v5881, 0.0
      %v5924 = vadd.f32 %v5922, %v5923
      %v5925 = vsel %vm960, %v5882, 0.0
      %v5926 = vadd.f32 %v5924, %v5925
      %v5927 = vsel %vm960, %v5883, 0.0
      %v5928 = vadd.f32 %v5926, %v5927
      %v5929 = vsel %vm960, %v5884, 0.0
      %v5930 = vadd.f32 %v5928, %v5929
      %v5931 = vsel %vm960, %v5885, 0.0
      %v5932 = vadd.f32 %v5930, %v5931
      %v5933 = vsel %vm960, %v5886, 0.0
      %v5934 = vadd.f32 %v5932, %v5933
      %v5935 = vsel %vm960, %v5887, 0.0
      %v5936 = vadd.f32 %v5934, %v5935
      %v5937 = vsel %vm960, %v5888, 0.0
      %v5938 = vadd.f32 %v5936, %v5937
      %v5939 = vsel %vm960, %v5889, 0.0
      %v5940 = vadd.f32 %v5938, %v5939
      %v5941 = vsel %vm960, %v5890, 0.0
      %v5942 = vadd.f32 %v5940, %v5941
      %v5943 = vsel %vm960, %v5891, 0.0
      %v5944 = vadd.f32 %v5942, %v5943
      %v5945 = vsel %vm960, %v5892, 0.0
      %v5946 = vadd.f32 %v5944, %v5945
      %v5947 = vsel %vm960, %v5893, 0.0
      %v5948 = vadd.f32 %v5946, %v5947
      %v5949 = vsel %vm960, %v5894, 0.0
      %v5950 = vadd.f32 %v5948, %v5949
      %v5951 = vsel %vm960, %v5895, 0.0
      %v5952 = vadd.f32 %v5950, %v5951
      %v5953 = vsel %vm960, %v5896, 0.0
      %v5954 = vadd.f32 %v5952, %v5953
      %v5955 = vsel %vm960, %v5897, 0.0
      %v5956 = vadd.f32 %v5954, %v5955
      %v5957 = vsel %vm960, %v5898, 0.0
      %v5958 = vadd.f32 %v5956, %v5957
      %v5959 = vsel %vm960, %v5899, 0.0
      %v5960 = vadd.f32 %v5958, %v5959
      %v5961 = vsel %vm960, %v5900, 0.0
      %v5962 = vadd.f32 %v5960, %v5961
      %v5963 = vsel %vm960, %v5901, 0.0
      %v5964 = vadd.f32 %v5962, %v5963
      %v5965 = vsel %vm960, %v5902, 0.0
      %v5966 = vadd.f32 %v5964, %v5965
      %v5967 = vsel %vm960, %v5903, 0.0
      %v5968 = vadd.f32 %v5966, %v5967
      %v5969 = vsel %vm960, %v5904, 0.0
      %v5970 = vadd.f32 %v5968, %v5969
      %v5971 = vsel %vm960, %v5905, 0.0
      %v5972 = vadd.f32 %v5970, %v5971
      %v5973 = vsel %vm960, %v5906, 0.0
      %v5974 = vadd.f32 %v5972, %v5973
      %v5975 = vsel %vm960, %v5907, 0.0
      %v5976 = vadd.f32 %v5974, %v5975
      %v5977 = vsel %vm960, %v5908, 0.0
      %v5978 = vadd.f32 %v5976, %v5977
      %v5979 = vsel %vm960, %v5909, 0.0
      %v5980 = vadd.f32 %v5978, %v5979
      %v5981 = vsel %vm960, %v5910, 0.0
      %v5982 = vadd.f32 %v5980, %v5981
      %v5983 = vsel %vm960, %v5911, 0.0
      %v5984 = vadd.f32 %v5982, %v5983
      %v5985 = vsel %vm960, %v5912, 0.0
      %v5986 = vadd.f32 %v5984, %v5985
      %v5987 = vsel %vm960, %v5913, 0.0
      %v5988 = vadd.f32 %v5986, %v5987
      %v5989 = vsel %vm960, %v5914, 0.0
      %v5990 = vadd.f32 %v5988, %v5989
      %v5991 = vsel %vm960, %v5915, 0.0
      %v5992 = vadd.f32 %v5990, %v5991
      %v5993 = vsel %vm960, %v5916, 0.0
      %v5994 = vadd.f32 %v5992, %v5993
      %v5995 = vsel %vm960, %v5917, 0.0
      %v5996 = vadd.f32 %v5994, %v5995
      %v5997 = vrot.slane %v5996, 4
      %v5998 = vadd.f32 %v5996, %v5997
      %v5999 = vrot.slane %v5998, 2
      %v6000 = vadd.f32 %v5998, %v5999
      %v6001 = vrot.slane %v6000, 1
      %v6002 = vadd.f32 %v6000, %v6001
      %vm6003 = vcmask 57344
      %6004 = vst.msk [vmem:[%s529] sm:$0x1] %vm6003, %v6002
      %v6005 = vmul.f32 %v5878, %v5397
      %v6006 = vmul.f32 %v5879, %v5398
      %v6007 = vmul.f32 %v5880, %v5399
      %v6008 = vmul.f32 %v5881, %v5400
      %v6009 = vmul.f32 %v5882, %v5401
      %v6010 = vmul.f32 %v5883, %v5402
      %v6011 = vmul.f32 %v5884, %v5403
      %v6012 = vmul.f32 %v5885, %v5404
      %v6013 = vmul.f32 %v5886, %v5405
      %v6014 = vmul.f32 %v5887, %v5406
      %v6015 = vmul.f32 %v5888, %v5407
      %v6016 = vmul.f32 %v5889, %v5408
      %v6017 = vmul.f32 %v5890, %v5409
      %v6018 = vmul.f32 %v5891, %v5410
      %v6019 = vmul.f32 %v5892, %v5411
      %v6020 = vmul.f32 %v5893, %v5412
      %v6021 = vmul.f32 %v5894, %v5413
      %v6022 = vmul.f32 %v5895, %v5414
      %v6023 = vmul.f32 %v5896, %v5415
      %v6024 = vmul.f32 %v5897, %v5416
      %v6025 = vmul.f32 %v5898, %v5417
      %v6026 = vmul.f32 %v5899, %v5418
      %v6027 = vmul.f32 %v5900, %v5419
      %v6028 = vmul.f32 %v5901, %v5420
      %v6029 = vmul.f32 %v5902, %v5421
      %v6030 = vmul.f32 %v5903, %v5422
      %v6031 = vmul.f32 %v5904, %v5423
      %v6032 = vmul.f32 %v5905, %v5424
      %v6033 = vmul.f32 %v5906, %v5425
      %v6034 = vmul.f32 %v5907, %v5426
      %v6035 = vmul.f32 %v5908, %v5427
      %v6036 = vmul.f32 %v5909, %v5428
      %v6037 = vmul.f32 %v5910, %v5429
      %v6038 = vmul.f32 %v5911, %v5430
      %v6039 = vmul.f32 %v5912, %v5431
      %v6040 = vmul.f32 %v5913, %v5432
      %v6041 = vmul.f32 %v5914, %v5433
      %v6042 = vmul.f32 %v5915, %v5434
      %v6043 = vmul.f32 %v5916, %v5435
      %v6044 = vmul.f32 %v5917, %v5436
      %v6045 = vsel %vm960, %v6005, 0.0
      %v6046 = vsel %vm960, %v6006, 0.0
      %v6047 = vadd.f32 %v6045, %v6046
      %v6048 = vsel %vm960, %v6007, 0.0
      %v6049 = vadd.f32 %v6047, %v6048
      %v6050 = vsel %vm960, %v6008, 0.0
      %v6051 = vadd.f32 %v6049, %v6050
      %v6052 = vsel %vm960, %v6009, 0.0
      %v6053 = vadd.f32 %v6051, %v6052
      %v6054 = vsel %vm960, %v6010, 0.0
      %v6055 = vadd.f32 %v6053, %v6054
      %v6056 = vsel %vm960, %v6011, 0.0
      %v6057 = vadd.f32 %v6055, %v6056
      %v6058 = vsel %vm960, %v6012, 0.0
      %v6059 = vadd.f32 %v6057, %v6058
      %v6060 = vsel %vm960, %v6013, 0.0
      %v6061 = vadd.f32 %v6059, %v6060
      %v6062 = vsel %vm960, %v6014, 0.0
      %v6063 = vadd.f32 %v6061, %v6062
      %v6064 = vsel %vm960, %v6015, 0.0
      %v6065 = vadd.f32 %v6063, %v6064
      %v6066 = vsel %vm960, %v6016, 0.0
      %v6067 = vadd.f32 %v6065, %v6066
      %v6068 = vsel %vm960, %v6017, 0.0
      %v6069 = vadd.f32 %v6067, %v6068
      %v6070 = vsel %vm960, %v6018, 0.0
      %v6071 = vadd.f32 %v6069, %v6070
      %v6072 = vsel %vm960, %v6019, 0.0
      %v6073 = vadd.f32 %v6071, %v6072
      %v6074 = vsel %vm960, %v6020, 0.0
      %v6075 = vadd.f32 %v6073, %v6074
      %v6076 = vsel %vm960, %v6021, 0.0
      %v6077 = vadd.f32 %v6075, %v6076
      %v6078 = vsel %vm960, %v6022, 0.0
      %v6079 = vadd.f32 %v6077, %v6078
      %v6080 = vsel %vm960, %v6023, 0.0
      %v6081 = vadd.f32 %v6079, %v6080
      %v6082 = vsel %vm960, %v6024, 0.0
      %v6083 = vadd.f32 %v6081, %v6082
      %v6084 = vsel %vm960, %v6025, 0.0
      %v6085 = vadd.f32 %v6083, %v6084
      %v6086 = vsel %vm960, %v6026, 0.0
      %v6087 = vadd.f32 %v6085, %v6086
      %v6088 = vsel %vm960, %v6027, 0.0
      %v6089 = vadd.f32 %v6087, %v6088
      %v6090 = vsel %vm960, %v6028, 0.0
      %v6091 = vadd.f32 %v6089, %v6090
      %v6092 = vsel %vm960, %v6029, 0.0
      %v6093 = vadd.f32 %v6091, %v6092
      %v6094 = vsel %vm960, %v6030, 0.0
      %v6095 = vadd.f32 %v6093, %v6094
      %v6096 = vsel %vm960, %v6031, 0.0
      %v6097 = vadd.f32 %v6095, %v6096
      %v6098 = vsel %vm960, %v6032, 0.0
      %v6099 = vadd.f32 %v6097, %v6098
      %v6100 = vsel %vm960, %v6033, 0.0
      %v6101 = vadd.f32 %v6099, %v6100
      %v6102 = vsel %vm960, %v6034, 0.0
      %v6103 = vadd.f32 %v6101, %v6102
      %v6104 = vsel %vm960, %v6035, 0.0
      %v6105 = vadd.f32 %v6103, %v6104
      %v6106 = vsel %vm960, %v6036, 0.0
      %v6107 = vadd.f32 %v6105, %v6106
      %v6108 = vsel %vm960, %v6037, 0.0
      %v6109 = vadd.f32 %v6107, %v6108
      %v6110 = vsel %vm960, %v6038, 0.0
      %v6111 = vadd.f32 %v6109, %v6110
      %v6112 = vsel %vm960, %v6039, 0.0
      %v6113 = vadd.f32 %v6111, %v6112
      %v6114 = vsel %vm960, %v6040, 0.0
      %v6115 = vadd.f32 %v6113, %v6114
      %v6116 = vsel %vm960, %v6041, 0.0
      %v6117 = vadd.f32 %v6115, %v6116
      %v6118 = vsel %vm960, %v6042, 0.0
      %v6119 = vadd.f32 %v6117, %v6118
      %v6120 = vsel %vm960, %v6043, 0.0
      %v6121 = vadd.f32 %v6119, %v6120
      %v6122 = vsel %vm960, %v6044, 0.0
      %v6123 = vadd.f32 %v6121, %v6122
      %v6124 = vrot.slane %v6123, 4
      %v6125 = vadd.f32 %v6123, %v6124
      %v6126 = vrot.slane %v6125, 2
      %v6127 = vadd.f32 %v6125, %v6126
      %v6128 = vrot.slane %v6127, 1
      %v6129 = vadd.f32 %v6127, %v6128
      %6130 = vst.msk [vmem:[%s536] sm:$0x1] %vm6003, %v6129
      %s6131 = smul.u32 40, %s26
      %p6132 = scmp.lt.s32.totalorder %s25, 1
      %s6133 = scalar_select %p6132, %s25, 1
      %p6134 = scmp.lt.s32.totalorder %s6131, 159
      %s6135 = scalar_select %p6134, %s6131, 159
      %s6136 = smul.addr %s6133, 160
      %s6137 = sadd.s32 %s6135, %s6136
      %s6138 = smul.addr %s6137, 4
      %s6139 = scalar_lea.vmem %s7, %s6138
      %p6140 = scmp.lt.s32.totalorder %s25, 1
      %s6141 = scalar_select %p6140, %s25, 1
      %p6142 = scmp.lt.s32.totalorder %s26, 3
      %s6143 = scalar_select %p6142, %s26, 3
      %s6144 = smul.addr %s6141, 4
      %s6145 = sadd.s32 %s6143, %s6144
      %s6146 = scalar_lea.vmem %s8, %s6145
      %p6147 = scmp.lt.s32.totalorder %s25, 1
      %s6148 = scalar_select %p6147, %s25, 1
      %p6149 = scmp.lt.s32.totalorder %s26, 3
      %s6150 = scalar_select %p6149, %s26, 3
      %s6151 = smul.addr %s6148, 4
      %s6152 = sadd.s32 %s6150, %s6151
      %s6153 = scalar_lea.vmem %s9, %s6152
      // Predicated region
      $region65: #{decoder_block_forward.2} parent=47 // pred_check
        %p6154 = pneg %p243
      $region66: #{decoder_block_forward.2} parent=47 // pred_check_branch
        %6156 = sbr.rel (%p6154) target = $region68
      $region67: #{decoder_block_forward.2} parent=47 // pred_region
        %s6157 = smul.u32 40, %s26
      $region68: #{decoder_block_forward.2} parent=47 // pred_fallthru
        _
      // Predicated region
      $region69: #{decoder_block_forward.2} parent=47 // pred_check
        %p6158 = pneg %p271
      $region70: #{decoder_block_forward.2} parent=47 // pred_check_branch
        %6160 = sbr.rel (%p6158) target = $region72
      $region71: #{decoder_block_forward.2} parent=47 // pred_region
        _
      $region72: #{decoder_block_forward.2} parent=47 // pred_fallthru
        _
      // Predicated region
      $region73: #{decoder_block_forward.2} parent=47 // pred_check
        %p6161 = pneg %p299
      $region74: #{decoder_block_forward.2} parent=47 // pred_check_branch
        %6163 = sbr.rel (%p6161) target = $region76
      $region75: #{decoder_block_forward.2} parent=47 // pred_region
        _
      $region76: #{decoder_block_forward.2} parent=47 // pred_fallthru
        _
    $region48: #{decoder_block_forward.2} parent=5 // pred_fallthru
      _
    %p6164 = scmp.le.s32.totalorder 2, %s16
    // Predicated region
    $region77: #{decoder_block_forward.2} parent=5 // pred_check
      %p6165 = pneg %p6164
    $region78: #{decoder_block_forward.2} parent=5 // pred_check_branch
      %6167 = sbr.rel (%p6165) target = $region80
    $region79: #{decoder_block_forward.2} parent=5 // pred_region
      %s6168 = ssub.s32 %s16, 2
      // Predicated region
      $region81: #{decoder_block_forward.2} parent=79 // pred_check
        %p6169 = pneg %p249
      $region82: #{decoder_block_forward.2} parent=79 // pred_check_branch
        %6171 = sbr.rel (%p6169) target = $region84
      $region83: #{decoder_block_forward.2} parent=79 // pred_region
        %s6172 = smul.u32 40, %s28
        %p6173 = scmp.lt.s32.totalorder %s27, 1
        %s6174 = scalar_select %p6173, %s27, 1
        %p6175 = scmp.lt.s32.totalorder %s6172, 159
        %s6176 = scalar_select %p6175, %s6172, 159
        %s6177 = smul.addr %s6174, 160
        %s6178 = sadd.s32 %s6176, %s6177
        %s6179 = smul.addr %s6178, 4
        %s6180 = scalar_lea.vmem %s7, %s6179
      $region84: #{decoder_block_forward.2} parent=79 // pred_fallthru
        _
      // Predicated region
      $region85: #{decoder_block_forward.2} parent=79 // pred_check
        %p6181 = pneg %p277
      $region86: #{decoder_block_forward.2} parent=79 // pred_check_branch
        %6183 = sbr.rel (%p6181) target = $region88
      $region87: #{decoder_block_forward.2} parent=79 // pred_region
        %p6184 = scmp.lt.s32.totalorder %s27, 1
        %s6185 = scalar_select %p6184, %s27, 1
        %p6186 = scmp.lt.s32.totalorder %s28, 3
        %s6187 = scalar_select %p6186, %s28, 3
        %s6188 = smul.addr %s6185, 4
        %s6189 = sadd.s32 %s6187, %s6188
        %s6190 = scalar_lea.vmem %s8, %s6189
      $region88: #{decoder_block_forward.2} parent=79 // pred_fallthru
        _
      // Predicated region
      $region89: #{decoder_block_forward.2} parent=79 // pred_check
        %p6191 = pneg %p305
      $region90: #{decoder_block_forward.2} parent=79 // pred_check_branch
        %6193 = sbr.rel (%p6191) target = $region92
      $region91: #{decoder_block_forward.2} parent=79 // pred_region
        %p6194 = scmp.lt.s32.totalorder %s27, 1
        %s6195 = scalar_select %p6194, %s27, 1
        %p6196 = scmp.lt.s32.totalorder %s28, 3
        %s6197 = scalar_select %p6196, %s28, 3
        %s6198 = smul.addr %s6195, 4
        %s6199 = sadd.s32 %s6197, %s6198
        %s6200 = scalar_lea.vmem %s9, %s6199
      $region92: #{decoder_block_forward.2} parent=79 // pred_fallthru
        _
    $region80: #{decoder_block_forward.2} parent=5 // pred_fallthru
      _
  $region6: #{decoder_block_forward.2} parent=0 // loop_footer
    %s20 = sadd.s32 1, %s16
  $region7: #{decoder_block_forward.2} parent=0 // loop_footer_branch
    %15 = sbr.rel target = $region3
  $region8: #{decoder_block_forward.2} parent=0 // loop_exit
    _

</llo_original>
